<compile_context>
chip_gen: v6e
topology: v6e:2x2x1
jax: 0.10.0
libtpu: 0.0.40
codegen_flags: <defaults>
</compile_context>

<pallas_src>
import numpy as np
import jax
import jax.numpy as jnp
from jax import lax
from jax.experimental import pallas as pl
from jax.experimental.pallas import tpu as pltpu


def _acconv2d_kernel(x_ref, w1_ref, w2_ref, scale_ref, bias_ref, alpha_ref, o_ref):
    # x_ref    : [Hp, Wp, Cin]   padded input image (resident across row tiles)
    # w1_ref   : [K, Cin, Cout]  1xK conv weights, tap-major
    # w2_ref   : [K, Cin, Cout]  Kx1 conv weights, tap-major
    # scale_ref: [1, Cout]       folded BN scale   (gamma / sqrt(var + eps))
    # bias_ref : [1, Cout]       folded bias       ((b1 + b2 - mean) * scale + beta)
    # alpha_ref: [1, Cout]       PReLU slope(s)
    # o_ref    : [TH, W, Cout]   output row tile
    TH, W, Cout = o_ref.shape
    K, Cin, _ = w1_ref.shape
    P = K // 2

    hb = pl.program_id(1)
    row0 = pl.multiple_of(hb * TH, TH)

    acc = jnp.zeros((TH * W, Cout), jnp.float32)

    # 1xK branch: interior rows, columns shifted by the tap index.
    for kw in range(K):
        patch = x_ref[pl.ds(row0 + P, TH), pl.ds(kw, W), :]            # [TH, W, Cin]
        acc += jnp.dot(patch.reshape(TH * W, Cin), w1_ref[kw],
                       preferred_element_type=jnp.float32,
                       precision=lax.Precision.HIGHEST)

    # Kx1 branch: rows shifted by the tap index, interior columns.
    for kh in range(K):
        patch = x_ref[pl.ds(row0 + kh, TH), pl.ds(P, W), :]            # [TH, W, Cin]
        acc += jnp.dot(patch.reshape(TH * W, Cin), w2_ref[kh],
                       preferred_element_type=jnp.float32,
                       precision=lax.Precision.HIGHEST)

    # Folded (conv biases + BatchNorm) affine, then PReLU.
    z = acc * scale_ref[...] + bias_ref[...]                           # [TH*W, Cout]
    y = jnp.where(z >= 0.0, z, z * alpha_ref[...])
    o_ref[...] = y.reshape(TH, W, Cout).astype(o_ref.dtype)


def acconv2d(x_nchw, w_ac1, b_ac1, w_ac2, b_ac2,
             bn_gamma, bn_beta, bn_mean, bn_var, prelu_alpha,
             *, stride=1, padding=1, eps=1e-5, block_h=None):
    """ACConv2d forward.  x_nchw: [N, Cin, H, W] (torch layout); returns [N, Cout, H, W]."""
    assert stride == 1, "only stride=1 (the module default) is implemented"
    N, Cin, H, W = x_nchw.shape
    Cout, Cin_w, one, K = w_ac1.shape
    assert Cin_w == Cin and one == 1
    assert w_ac2.shape == (Cout, Cin, K, 1)
    P = int(padding)
    assert 2 * P == K - 1, "ac1/ac2 shapes only match for 'same' padding (P = (K-1)/2)"

    if block_h is None:
        block_h = H
        for cand in (64, 32, 16, 8):
            if H >= 2 * cand and H % cand == 0:
                block_h = cand
                break
    assert H % block_h == 0

    # --- host-side layout plumbing (static) ---------------------------------
    # NCHW -> NHWC (channels on the lane axis) and spatial zero-padding.
    x = jnp.transpose(x_nchw, (0, 2, 3, 1)).astype(jnp.float32)
    xp = jnp.pad(x, ((0, 0), (P, P), (P, P), (0, 0)))
    Hp, Wp = H + 2 * P, W + 2 * P

    # Conv weights, tap-major [K, Cin, Cout].
    w1 = jnp.transpose(w_ac1[:, :, 0, :], (2, 1, 0)).astype(jnp.float32)
    w2 = jnp.transpose(w_ac2[:, :, :, 0], (2, 1, 0)).astype(jnp.float32)

    # Fold inference-mode BatchNorm and both conv biases into scale/bias.
    s = (bn_gamma / jnp.sqrt(bn_var + eps)).astype(jnp.float32)
    t = ((b_ac1 + b_ac2 - bn_mean) * s + bn_beta).astype(jnp.float32)
    scale = s.reshape(1, Cout)
    bias = t.reshape(1, Cout)

    a = jnp.asarray(prelu_alpha, jnp.float32).reshape(-1)
    if a.size == Cout:
        alpha_vec = a.reshape(1, Cout)
    else:
        alpha_vec = jnp.full((1, Cout), a[0], jnp.float32)

    # --- fused Pallas kernel -------------------------------------------------
    grid = (N, H // block_h)
    out = pl.pallas_call(
        _acconv2d_kernel,
        out_shape=jax.ShapeDtypeStruct((N, H, W, Cout), jnp.float32),
        grid=grid,
        in_specs=[
            # padded image: resident per batch step (re-DMA'd only when n changes)
            pl.BlockSpec((None, Hp, Wp, Cin), lambda n, hb: (n, 0, 0, 0)),
            pl.BlockSpec((K, Cin, Cout), lambda n, hb: (0, 0, 0)),
            pl.BlockSpec((K, Cin, Cout), lambda n, hb: (0, 0, 0)),
            pl.BlockSpec((1, Cout), lambda n, hb: (0, 0)),
            pl.BlockSpec((1, Cout), lambda n, hb: (0, 0)),
            pl.BlockSpec((1, Cout), lambda n, hb: (0, 0)),
        ],
        out_specs=pl.BlockSpec((None, block_h, W, Cout), lambda n, hb: (n, hb, 0, 0)),
        compiler_params=pltpu.CompilerParams(
            dimension_semantics=("parallel", "parallel"),
            vmem_limit_bytes=32 * 1024 * 1024,
        ),
    )(xp, w1, w2, scale, bias, alpha_vec)

    return jnp.transpose(out, (0, 3, 1, 2))   # NHWC -> NCHW


def acconv2d_reference(x, w1, b1, w2, b2, gamma, beta, mean, var, alpha,
                       eps=1e-5, padding=1):
    """Pure-NumPy re-implementation of the PyTorch forward (inference-mode BN)."""
    x = np.asarray(x, np.float32)
    w1 = np.asarray(w1, np.float32)
    w2 = np.asarray(w2, np.float32)
    N, Cin, H, W = x.shape
    Cout, _, _, K = w1.shape
    P = padding

    xp_w = np.pad(x, ((0, 0), (0, 0), (0, 0), (P, P)))
    xp_h = np.pad(x, ((0, 0), (0, 0), (P, P), (0, 0)))
    ac1 = np.zeros((N, Cout, H, W), np.float32)
    ac2 = np.zeros((N, Cout, H, W), np.float32)
    for k in range(K):
        ac1 += np.einsum("nchw,oc->nohw", xp_w[:, :, :, k:k + W], w1[:, :, 0, k])
        ac2 += np.einsum("nchw,oc->nohw", xp_h[:, :, k:k + H, :], w2[:, :, k, 0])
    z = (ac1 + np.asarray(b1, np.float32).reshape(1, -1, 1, 1)
         + ac2 + np.asarray(b2, np.float32).reshape(1, -1, 1, 1))

    g = np.asarray(gamma, np.float32).reshape(1, -1, 1, 1)
    bt = np.asarray(beta, np.float32).reshape(1, -1, 1, 1)
    mu = np.asarray(mean, np.float32).reshape(1, -1, 1, 1)
    vv = np.asarray(var, np.float32).reshape(1, -1, 1, 1)
    z = (z - mu) / np.sqrt(vv + eps) * g + bt
    a = float(np.asarray(alpha).reshape(-1)[0])
    return np.where(z >= 0.0, z, a * z)


if __name__ == "__main__":
    N, Cin, Cout, H, W, K, P = 2, 4, 8, 16, 16, 3, 1

    key = jax.random.PRNGKey(0)
    ks = jax.random.split(key, 9)
    x = jax.random.normal(ks[0], (N, Cin, H, W), dtype=jnp.float32)
    w_ac1 = jax.random.normal(ks[1], (Cout, Cin, 1, K), dtype=jnp.float32) * 0.25
    b_ac1 = jax.random.normal(ks[2], (Cout,), dtype=jnp.float32) * 0.1
    w_ac2 = jax.random.normal(ks[3], (Cout, Cin, K, 1), dtype=jnp.float32) * 0.25
    b_ac2 = jax.random.normal(ks[4], (Cout,), dtype=jnp.float32) * 0.1
    bn_gamma = 1.0 + 0.1 * jax.random.normal(ks[5], (Cout,), dtype=jnp.float32)
    bn_beta = 0.1 * jax.random.normal(ks[6], (Cout,), dtype=jnp.float32)
    bn_mean = 0.1 * jax.random.normal(ks[7], (Cout,), dtype=jnp.float32)
    bn_var = jax.random.uniform(ks[8], (Cout,), dtype=jnp.float32, minval=0.5, maxval=1.5)
    prelu_alpha = jnp.asarray([0.25], jnp.float32)   # nn.PReLU() default single slope

    out = acconv2d(x, w_ac1, b_ac1, w_ac2, b_ac2,
                   bn_gamma, bn_beta, bn_mean, bn_var, prelu_alpha,
                   stride=1, padding=P, block_h=8)
    out = jax.block_until_ready(out)

    ref = acconv2d_reference(np.asarray(x), np.asarray(w_ac1), np.asarray(b_ac1),
                             np.asarray(w_ac2), np.asarray(b_ac2),
                             np.asarray(bn_gamma), np.asarray(bn_beta),
                             np.asarray(bn_mean), np.asarray(bn_var),
                             np.asarray(prelu_alpha), padding=P)
    np.testing.assert_allclose(np.asarray(out), ref, rtol=2e-3, atol=2e-3)

    print("KERNEL_OK")
</pallas_src>

<mosaic_0001>
module attributes {stable_mosaic.version = 11 : i64} {
  func.func @_acconv2d_kernel(%arg0: i32, %arg1: i32, %arg2: memref<1x18x18x4xf32, #tpu.memory_space<vmem>>, %arg3: memref<3x4x8xf32, #tpu.memory_space<vmem>>, %arg4: memref<3x4x8xf32, #tpu.memory_space<vmem>>, %arg5: memref<1x8xf32, #tpu.memory_space<vmem>>, %arg6: memref<1x8xf32, #tpu.memory_space<vmem>>, %arg7: memref<1x8xf32, #tpu.memory_space<vmem>>, %arg8: memref<1x8x16x8xf32, #tpu.memory_space<vmem>>) attributes {dimension_semantics = [#tpu.dimension_semantics<parallel>, #tpu.dimension_semantics<parallel>], iteration_bounds = array<i64: 2, 2>, scalar_prefetch = 0 : i64, scratch_operands = 0 : i64, tpu.core_type = #tpu.core_type<tc>, window_params = [{transform_indices = @transform_0, window_bounds = array<i64: 1, 18, 18, 4>}, {pipeline_mode = #tpu.pipeline_mode<synchronous>, transform_indices = @transform_1, window_bounds = array<i64: 3, 4, 8>}, {pipeline_mode = #tpu.pipeline_mode<synchronous>, transform_indices = @transform_2, window_bounds = array<i64: 3, 4, 8>}, {pipeline_mode = #tpu.pipeline_mode<synchronous>, transform_indices = @transform_3, window_bounds = array<i64: 1, 8>}, {pipeline_mode = #tpu.pipeline_mode<synchronous>, transform_indices = @transform_4, window_bounds = array<i64: 1, 8>}, {pipeline_mode = #tpu.pipeline_mode<synchronous>, transform_indices = @transform_5, window_bounds = array<i64: 1, 8>}, {transform_indices = @transform_6, window_bounds = array<i64: 1, 8, 16, 8>}]} {
    %c8_i32 = arith.constant 8 : i32
    %0 = arith.muli %arg1, %c8_i32 : i32
    %1 = tpu.assume_multiple %0, 8 : i32
    %cst = arith.constant 0.000000e+00 : f32
    %2 = vector.broadcast %cst : f32 to vector<128x8xf32>
    %c1_i32 = arith.constant 1 : i32
    %3 = arith.addi %1, %c1_i32 : i32
    %c0 = arith.constant 0 : index
    %4 = arith.index_cast %3 : i32 to index
    %c0_0 = arith.constant 0 : index
    %c0_1 = arith.constant 0 : index
    %5 = vector.load %arg2[%c0, %4, %c0_0, %c0_1] : memref<1x18x18x4xf32, #tpu.memory_space<vmem>>, vector<1x8x16x4xf32>
    %6 = vector.shape_cast %5 : vector<1x8x16x4xf32> to vector<8x16x4xf32>
    %7 = vector.shape_cast %6 : vector<8x16x4xf32> to vector<128x4xf32>
    %c0_2 = arith.constant 0 : index
    %c0_3 = arith.constant 0 : index
    %c0_4 = arith.constant 0 : index
    %8 = vector.load %arg3[%c0_2, %c0_3, %c0_4] : memref<3x4x8xf32, #tpu.memory_space<vmem>>, vector<1x4x8xf32>
    %9 = vector.shape_cast %8 : vector<1x4x8xf32> to vector<4x8xf32>
    %cst_5 = arith.constant dense<0.000000e+00> : vector<128x8xf32>
    %10 = tpu.matmul %7, %9, %cst_5 {dimension_numbers = #tpu.dot_dimension_numbers<[1], [0], [0], [1], [0, 0, 1, 1], [], []>, precision = #tpu.contract_precision<fp32>} : vector<128x4xf32>, vector<4x8xf32>, vector<128x8xf32> -> vector<128x8xf32>
    %11 = arith.addf %2, %10 : vector<128x8xf32>
    %c1_i32_6 = arith.constant 1 : i32
    %12 = arith.addi %1, %c1_i32_6 : i32
    %c0_7 = arith.constant 0 : index
    %13 = arith.index_cast %12 : i32 to index
    %c1 = arith.constant 1 : index
    %c0_8 = arith.constant 0 : index
    %14 = vector.load %arg2[%c0_7, %13, %c1, %c0_8] : memref<1x18x18x4xf32, #tpu.memory_space<vmem>>, vector<1x8x16x4xf32>
    %15 = vector.shape_cast %14 : vector<1x8x16x4xf32> to vector<8x16x4xf32>
    %16 = vector.shape_cast %15 : vector<8x16x4xf32> to vector<128x4xf32>
    %c1_9 = arith.constant 1 : index
    %c0_10 = arith.constant 0 : index
    %c0_11 = arith.constant 0 : index
    %17 = vector.load %arg3[%c1_9, %c0_10, %c0_11] : memref<3x4x8xf32, #tpu.memory_space<vmem>>, vector<1x4x8xf32>
    %18 = vector.shape_cast %17 : vector<1x4x8xf32> to vector<4x8xf32>
    %cst_12 = arith.constant dense<0.000000e+00> : vector<128x8xf32>
    %19 = tpu.matmul %16, %18, %cst_12 {dimension_numbers = #tpu.dot_dimension_numbers<[1], [0], [0], [1], [0, 0, 1, 1], [], []>, precision = #tpu.contract_precision<fp32>} : vector<128x4xf32>, vector<4x8xf32>, vector<128x8xf32> -> vector<128x8xf32>
    %20 = arith.addf %11, %19 : vector<128x8xf32>
    %c1_i32_13 = arith.constant 1 : i32
    %21 = arith.addi %1, %c1_i32_13 : i32
    %c0_14 = arith.constant 0 : index
    %22 = arith.index_cast %21 : i32 to index
    %c2 = arith.constant 2 : index
    %c0_15 = arith.constant 0 : index
    %23 = vector.load %arg2[%c0_14, %22, %c2, %c0_15] : memref<1x18x18x4xf32, #tpu.memory_space<vmem>>, vector<1x8x16x4xf32>
    %24 = vector.shape_cast %23 : vector<1x8x16x4xf32> to vector<8x16x4xf32>
    %25 = vector.shape_cast %24 : vector<8x16x4xf32> to vector<128x4xf32>
    %c2_16 = arith.constant 2 : index
    %c0_17 = arith.constant 0 : index
    %c0_18 = arith.constant 0 : index
    %26 = vector.load %arg3[%c2_16, %c0_17, %c0_18] : memref<3x4x8xf32, #tpu.memory_space<vmem>>, vector<1x4x8xf32>
    %27 = vector.shape_cast %26 : vector<1x4x8xf32> to vector<4x8xf32>
    %cst_19 = arith.constant dense<0.000000e+00> : vector<128x8xf32>
    %28 = tpu.matmul %25, %27, %cst_19 {dimension_numbers = #tpu.dot_dimension_numbers<[1], [0], [0], [1], [0, 0, 1, 1], [], []>, precision = #tpu.contract_precision<fp32>} : vector<128x4xf32>, vector<4x8xf32>, vector<128x8xf32> -> vector<128x8xf32>
    %29 = arith.addf %20, %28 : vector<128x8xf32>
    %c0_i32 = arith.constant 0 : i32
    %30 = arith.addi %1, %c0_i32 : i32
    %c0_20 = arith.constant 0 : index
    %31 = arith.index_cast %30 : i32 to index
    %c1_21 = arith.constant 1 : index
    %c0_22 = arith.constant 0 : index
    %32 = vector.load %arg2[%c0_20, %31, %c1_21, %c0_22] : memref<1x18x18x4xf32, #tpu.memory_space<vmem>>, vector<1x8x16x4xf32>
    %33 = vector.shape_cast %32 : vector<1x8x16x4xf32> to vector<8x16x4xf32>
    %34 = vector.shape_cast %33 : vector<8x16x4xf32> to vector<128x4xf32>
    %c0_23 = arith.constant 0 : index
    %c0_24 = arith.constant 0 : index
    %c0_25 = arith.constant 0 : index
    %35 = vector.load %arg4[%c0_23, %c0_24, %c0_25] : memref<3x4x8xf32, #tpu.memory_space<vmem>>, vector<1x4x8xf32>
    %36 = vector.shape_cast %35 : vector<1x4x8xf32> to vector<4x8xf32>
    %cst_26 = arith.constant dense<0.000000e+00> : vector<128x8xf32>
    %37 = tpu.matmul %34, %36, %cst_26 {dimension_numbers = #tpu.dot_dimension_numbers<[1], [0], [0], [1], [0, 0, 1, 1], [], []>, precision = #tpu.contract_precision<fp32>} : vector<128x4xf32>, vector<4x8xf32>, vector<128x8xf32> -> vector<128x8xf32>
    %38 = arith.addf %29, %37 : vector<128x8xf32>
    %c1_i32_27 = arith.constant 1 : i32
    %39 = arith.addi %1, %c1_i32_27 : i32
    %c0_28 = arith.constant 0 : index
    %40 = arith.index_cast %39 : i32 to index
    %c1_29 = arith.constant 1 : index
    %c0_30 = arith.constant 0 : index
    %41 = vector.load %arg2[%c0_28, %40, %c1_29, %c0_30] : memref<1x18x18x4xf32, #tpu.memory_space<vmem>>, vector<1x8x16x4xf32>
    %42 = vector.shape_cast %41 : vector<1x8x16x4xf32> to vector<8x16x4xf32>
    %43 = vector.shape_cast %42 : vector<8x16x4xf32> to vector<128x4xf32>
    %c1_31 = arith.constant 1 : index
    %c0_32 = arith.constant 0 : index
    %c0_33 = arith.constant 0 : index
    %44 = vector.load %arg4[%c1_31, %c0_32, %c0_33] : memref<3x4x8xf32, #tpu.memory_space<vmem>>, vector<1x4x8xf32>
    %45 = vector.shape_cast %44 : vector<1x4x8xf32> to vector<4x8xf32>
    %cst_34 = arith.constant dense<0.000000e+00> : vector<128x8xf32>
    %46 = tpu.matmul %43, %45, %cst_34 {dimension_numbers = #tpu.dot_dimension_numbers<[1], [0], [0], [1], [0, 0, 1, 1], [], []>, precision = #tpu.contract_precision<fp32>} : vector<128x4xf32>, vector<4x8xf32>, vector<128x8xf32> -> vector<128x8xf32>
    %47 = arith.addf %38, %46 : vector<128x8xf32>
    %c2_i32 = arith.constant 2 : i32
    %48 = arith.addi %1, %c2_i32 : i32
    %c0_35 = arith.constant 0 : index
    %49 = arith.index_cast %48 : i32 to index
    %c1_36 = arith.constant 1 : index
    %c0_37 = arith.constant 0 : index
    %50 = vector.load %arg2[%c0_35, %49, %c1_36, %c0_37] : memref<1x18x18x4xf32, #tpu.memory_space<vmem>>, vector<1x8x16x4xf32>
    %51 = vector.shape_cast %50 : vector<1x8x16x4xf32> to vector<8x16x4xf32>
    %52 = vector.shape_cast %51 : vector<8x16x4xf32> to vector<128x4xf32>
    %c2_38 = arith.constant 2 : index
    %c0_39 = arith.constant 0 : index
    %c0_40 = arith.constant 0 : index
    %53 = vector.load %arg4[%c2_38, %c0_39, %c0_40] : memref<3x4x8xf32, #tpu.memory_space<vmem>>, vector<1x4x8xf32>
    %54 = vector.shape_cast %53 : vector<1x4x8xf32> to vector<4x8xf32>
    %cst_41 = arith.constant dense<0.000000e+00> : vector<128x8xf32>
    %55 = tpu.matmul %52, %54, %cst_41 {dimension_numbers = #tpu.dot_dimension_numbers<[1], [0], [0], [1], [0, 0, 1, 1], [], []>, precision = #tpu.contract_precision<fp32>} : vector<128x4xf32>, vector<4x8xf32>, vector<128x8xf32> -> vector<128x8xf32>
    %56 = arith.addf %47, %55 : vector<128x8xf32>
    %c0_42 = arith.constant 0 : index
    %c0_43 = arith.constant 0 : index
    %57 = vector.load %arg5[%c0_42, %c0_43] : memref<1x8xf32, #tpu.memory_space<vmem>>, vector<1x8xf32>
    %58 = vector.broadcast %57 : vector<1x8xf32> to vector<128x8xf32>
    %59 = arith.mulf %56, %58 : vector<128x8xf32>
    %c0_44 = arith.constant 0 : index
    %c0_45 = arith.constant 0 : index
    %60 = vector.load %arg6[%c0_44, %c0_45] : memref<1x8xf32, #tpu.memory_space<vmem>>, vector<1x8xf32>
    %61 = vector.broadcast %60 : vector<1x8xf32> to vector<128x8xf32>
    %62 = arith.addf %59, %61 : vector<128x8xf32>
    %cst_46 = arith.constant 0.000000e+00 : f32
    %63 = vector.broadcast %cst_46 : f32 to vector<128x8xf32>
    %64 = arith.cmpf oge, %62, %63 : vector<128x8xf32>
    %c0_47 = arith.constant 0 : index
    %c0_48 = arith.constant 0 : index
    %65 = vector.load %arg7[%c0_47, %c0_48] : memref<1x8xf32, #tpu.memory_space<vmem>>, vector<1x8xf32>
    %66 = vector.broadcast %65 : vector<1x8xf32> to vector<128x8xf32>
    %67 = arith.mulf %62, %66 : vector<128x8xf32>
    %68 = arith.select %64, %62, %67 : vector<128x8xi1>, vector<128x8xf32>
    %69 = vector.shape_cast %68 : vector<128x8xf32> to vector<8x16x8xf32>
    %c0_49 = arith.constant 0 : index
    %c0_50 = arith.constant 0 : index
    %c0_51 = arith.constant 0 : index
    %c0_52 = arith.constant 0 : index
    %70 = vector.load %arg8[%c0_49, %c0_50, %c0_51, %c0_52] : memref<1x8x16x8xf32, #tpu.memory_space<vmem>>, vector<1x8x16x8xf32>
    %71 = vector.shape_cast %70 : vector<1x8x16x8xf32> to vector<8x16x8xf32>
    %72 = vector.shape_cast %69 : vector<8x16x8xf32> to vector<1x8x16x8xf32>
    tpu.vector_store %arg8[%c0_49, %c0_50, %c0_51, %c0_52], %72 {strides = array<i32>} : memref<1x8x16x8xf32, #tpu.memory_space<vmem>>, vector<1x8x16x8xf32>,
    return
  }
  func.func @transform_0(%arg0: i32, %arg1: i32) -> (i32, i32, i32, i32) {
    %c0_i32 = arith.constant 0 : i32
    %c0_i32_0 = arith.constant 0 : i32
    %c0_i32_1 = arith.constant 0 : i32
    %c0_i32_2 = arith.constant 0 : i32
    return %arg0, %c0_i32, %c0_i32_0, %c0_i32_1 : i32, i32, i32, i32
  }
  func.func @transform_1(%arg0: i32, %arg1: i32) -> (i32, i32, i32) {
    %c0_i32 = arith.constant 0 : i32
    %c0_i32_0 = arith.constant 0 : i32
    %c0_i32_1 = arith.constant 0 : i32
    %c0_i32_2 = arith.constant 0 : i32
    return %c0_i32, %c0_i32_0, %c0_i32_1 : i32, i32, i32
  }
  func.func @transform_2(%arg0: i32, %arg1: i32) -> (i32, i32, i32) {
    %c0_i32 = arith.constant 0 : i32
    %c0_i32_0 = arith.constant 0 : i32
    %c0_i32_1 = arith.constant 0 : i32
    %c0_i32_2 = arith.constant 0 : i32
    return %c0_i32, %c0_i32_0, %c0_i32_1 : i32, i32, i32
  }
  func.func @transform_3(%arg0: i32, %arg1: i32) -> (i32, i32) {
    %c0_i32 = arith.constant 0 : i32
    %c0_i32_0 = arith.constant 0 : i32
    %c0_i32_1 = arith.constant 0 : i32
    return %c0_i32, %c0_i32_0 : i32, i32
  }
  func.func @transform_4(%arg0: i32, %arg1: i32) -> (i32, i32) {
    %c0_i32 = arith.constant 0 : i32
    %c0_i32_0 = arith.constant 0 : i32
    %c0_i32_1 = arith.constant 0 : i32
    return %c0_i32, %c0_i32_0 : i32, i32
  }
  func.func @transform_5(%arg0: i32, %arg1: i32) -> (i32, i32) {
    %c0_i32 = arith.constant 0 : i32
    %c0_i32_0 = arith.constant 0 : i32
    %c0_i32_1 = arith.constant 0 : i32
    return %c0_i32, %c0_i32_0 : i32, i32
  }
  func.func @transform_6(%arg0: i32, %arg1: i32) -> (i32, i32, i32, i32) {
    %c0_i32 = arith.constant 0 : i32
    %c0_i32_0 = arith.constant 0 : i32
    %c0_i32_1 = arith.constant 0 : i32
    return %arg0, %arg1, %c0_i32, %c0_i32_0 : i32, i32, i32, i32
  }
}

</mosaic_0001>

<llo_original>
// kernel: tpu_custom_call.1
$region0: #{tpu_custom_call.1}
  #allocation0 [shape = 'u32[]', space=smem, size = 0x4, offset = 0x4, fixed_abs, tag = 'smem constant byte address 0x4 - core index']
  #allocation1 [shape = 'u32[144,128]{1,0:T(1,128)}', space=vmem, size = 0x12000, scoped, tag = 'internal scratch']
  %s0 = inlined_call_operand.vmem [shape: f32[2,18,18,4], index: 0, kind: input, shape index: {}]
  %s1 = inlined_call_operand.vmem [shape: f32[3,4,8], index: 1, kind: input, shape index: {}]
  %s2 = inlined_call_operand.vmem [shape: f32[3,4,8], index: 2, kind: input, shape index: {}]
  %s3 = inlined_call_operand.vmem [shape: f32[1,8], index: 3, kind: input, shape index: {}]
  %s4 = inlined_call_operand.vmem [shape: f32[1,8], index: 4, kind: input, shape index: {}]
  %s5 = inlined_call_operand.vmem [shape: f32[1,8], index: 5, kind: input, shape index: {}]
  %s6 = inlined_call_operand.vmem [shape: f32[2,16,16,8], index: 6, kind: output, shape index: {}]
  %s7 = sld [smem:[#allocation0]]
  $region57: #{tpu_custom_call.1} parent=0
    _
  %s9 = ssub.s32 1, %s7
  %s10 = scalar_select 0, %s9, %s7
  loop: start=0, step=1, limit=6
  $region2: #{tpu_custom_call.1} parent=0 // loop_pre_header
    _
  $region3: #{tpu_custom_call.1} parent=0 // loop_header
    %s12 = sphi 0, %s16
    %p13 = scmp.ge.s32.totalorder %s12, 6
    %s19 = sphi 0, %s31
    %s20 = sphi 0, %s27
    %s21 = sphi 0, %s19
    %s22 = sphi 0, %s20
    %s23 = sphi 0, %s21
    %s24 = sphi 0, %s22
    %s34 = sphi 0, %s36
    %s37 = sphi 0, %s34
    %s38 = sphi 0, %s37
    %s54 = sphi 0, %s38
    %s58 = sphi 0, %s58
    %s60 = sphi 0, %s58
    %s61 = sphi 0, %s60
    %s75 = sphi 0, %s61
    %s79 = sphi 0, %s79
    %s81 = sphi 0, %s79
    %s82 = sphi 0, %s81
    %s96 = sphi 0, %s82
    %s100 = sphi 0, %s100
    %s102 = sphi 0, %s100
    %s103 = sphi 0, %s102
    %s117 = sphi 0, %s103
    %s121 = sphi 0, %s121
    %s123 = sphi 0, %s121
    %s124 = sphi 0, %s123
    %s138 = sphi 0, %s124
    %s142 = sphi 0, %s142
    %s144 = sphi 0, %s142
    %s145 = sphi 0, %s144
    %s159 = sphi 0, %s145
    %s167 = sphi 0, %s169
    %s170 = sphi 0, %s167
    %s171 = sphi 0, %s170
    %s187 = sphi 0, %s171
  $region4: #{tpu_custom_call.1} parent=0 // loop_header_branch
    %15 = sbr.rel (%p13) target = $region8
  $region5: #{tpu_custom_call.1} parent=0 // loop_body
    %s17 = ssub.s32 %s12, 1
    %s18 = ssub.s32 %s12, 2
    %s25 = sadd.s32 1, %s20
    %p26 = scmp.ge.s32.totalorder %s25, 2
    %s27 = scalar_select %p26, 0, %s25
    %s28 = sadd.s32 1, %s19
    %s29 = scalar_select %p26, %s28, %s19
    %p30 = scmp.ge.s32.totalorder %s29, 2
    %s31 = scalar_select %p30, 0, %s29
    %s32 = ssub.s32 %s19, %s31
    %p33 = scmp.eq.s32.totalorder %s32, 0
    %s35 = sadd.s32 %s34, 1
    %s36 = scalar_select %p33, %s34, %s35
    %p39 = pneg %p33
    %p40 = scmp.eq.s32.totalorder %s12, 3
    %p41 = por %p39, %p40
    %p42 = scmp.ne.s32.totalorder %s34, %s37
    %p43 = scmp.eq.s32.totalorder %s12, 0
    %p44 = por %p42, %p43
    %p45 = scmp.ne.s32.totalorder %s34, %s37
    %p46 = scmp.eq.s32.totalorder %s17, 3
    %p47 = por %p45, %p46
    %p48 = scmp.ne.s32.totalorder %s37, %s38
    %p49 = scmp.eq.s32.totalorder %s17, 0
    %p50 = por %p48, %p49
    %p51 = scmp.ne.s32.totalorder %s37, %s38
    %p52 = scmp.eq.s32.totalorder %s18, 3
    %p53 = por %p51, %p52
    %p55 = scmp.ne.s32.totalorder %s38, %s54
    %p56 = scmp.eq.s32.totalorder %s18, 0
    %p57 = por %p55, %p56
    %s59 = sadd.s32 %s58, 1
    %p62 = scmp.eq.s32.totalorder %s12, 3
    %p63 = scmp.ne.s32.totalorder %s58, %s60
    %p64 = scmp.eq.s32.totalorder %s12, 0
    %p65 = por %p63, %p64
    %p66 = scmp.ne.s32.totalorder %s58, %s60
    %p67 = scmp.eq.s32.totalorder %s17, 3
    %p68 = por %p66, %p67
    %p69 = scmp.ne.s32.totalorder %s60, %s61
    %p70 = scmp.eq.s32.totalorder %s17, 0
    %p71 = por %p69, %p70
    %p72 = scmp.ne.s32.totalorder %s60, %s61
    %p73 = scmp.eq.s32.totalorder %s18, 3
    %p74 = por %p72, %p73
    %p76 = scmp.ne.s32.totalorder %s61, %s75
    %p77 = scmp.eq.s32.totalorder %s18, 0
    %p78 = por %p76, %p77
    %s80 = sadd.s32 %s79, 1
    %p83 = scmp.eq.s32.totalorder %s12, 3
    %p84 = scmp.ne.s32.totalorder %s79, %s81
    %p85 = scmp.eq.s32.totalorder %s12, 0
    %p86 = por %p84, %p85
    %p87 = scmp.ne.s32.totalorder %s79, %s81
    %p88 = scmp.eq.s32.totalorder %s17, 3
    %p89 = por %p87, %p88
    %p90 = scmp.ne.s32.totalorder %s81, %s82
    %p91 = scmp.eq.s32.totalorder %s17, 0
    %p92 = por %p90, %p91
    %p93 = scmp.ne.s32.totalorder %s81, %s82
    %p94 = scmp.eq.s32.totalorder %s18, 3
    %p95 = por %p93, %p94
    %p97 = scmp.ne.s32.totalorder %s82, %s96
    %p98 = scmp.eq.s32.totalorder %s18, 0
    %p99 = por %p97, %p98
    %s101 = sadd.s32 %s100, 1
    %p104 = scmp.eq.s32.totalorder %s12, 3
    %p105 = scmp.ne.s32.totalorder %s100, %s102
    %p106 = scmp.eq.s32.totalorder %s12, 0
    %p107 = por %p105, %p106
    %p108 = scmp.ne.s32.totalorder %s100, %s102
    %p109 = scmp.eq.s32.totalorder %s17, 3
    %p110 = por %p108, %p109
    %p111 = scmp.ne.s32.totalorder %s102, %s103
    %p112 = scmp.eq.s32.totalorder %s17, 0
    %p113 = por %p111, %p112
    %p114 = scmp.ne.s32.totalorder %s102, %s103
    %p115 = scmp.eq.s32.totalorder %s18, 3
    %p116 = por %p114, %p115
    %p118 = scmp.ne.s32.totalorder %s103, %s117
    %p119 = scmp.eq.s32.totalorder %s18, 0
    %p120 = por %p118, %p119
    %s122 = sadd.s32 %s121, 1
    %p125 = scmp.eq.s32.totalorder %s12, 3
    %p126 = scmp.ne.s32.totalorder %s121, %s123
    %p127 = scmp.eq.s32.totalorder %s12, 0
    %p128 = por %p126, %p127
    %p129 = scmp.ne.s32.totalorder %s121, %s123
    %p130 = scmp.eq.s32.totalorder %s17, 3
    %p131 = por %p129, %p130
    %p132 = scmp.ne.s32.totalorder %s123, %s124
    %p133 = scmp.eq.s32.totalorder %s17, 0
    %p134 = por %p132, %p133
    %p135 = scmp.ne.s32.totalorder %s123, %s124
    %p136 = scmp.eq.s32.totalorder %s18, 3
    %p137 = por %p135, %p136
    %p139 = scmp.ne.s32.totalorder %s124, %s138
    %p140 = scmp.eq.s32.totalorder %s18, 0
    %p141 = por %p139, %p140
    %s143 = sadd.s32 %s142, 1
    %p146 = scmp.eq.s32.totalorder %s12, 3
    %p147 = scmp.ne.s32.totalorder %s142, %s144
    %p148 = scmp.eq.s32.totalorder %s12, 0
    %p149 = por %p147, %p148
    %p150 = scmp.ne.s32.totalorder %s142, %s144
    %p151 = scmp.eq.s32.totalorder %s17, 3
    %p152 = por %p150, %p151
    %p153 = scmp.ne.s32.totalorder %s144, %s145
    %p154 = scmp.eq.s32.totalorder %s17, 0
    %p155 = por %p153, %p154
    %p156 = scmp.ne.s32.totalorder %s144, %s145
    %p157 = scmp.eq.s32.totalorder %s18, 3
    %p158 = por %p156, %p157
    %p160 = scmp.ne.s32.totalorder %s145, %s159
    %p161 = scmp.eq.s32.totalorder %s18, 0
    %p162 = por %p160, %p161
    %s163 = ssub.s32 %s19, %s31
    %s164 = ssub.s32 %s20, %s27
    %s165 = sor.u32 %s163, %s164
    %p166 = scmp.eq.s32.totalorder %s165, 0
    %s168 = sadd.s32 %s167, 1
    %s169 = scalar_select %p166, %s167, %s168
    %p172 = pneg %p166
    %p173 = scmp.eq.s32.totalorder %s12, 3
    %p174 = por %p172, %p173
    %p175 = scmp.ne.s32.totalorder %s167, %s170
    %p176 = scmp.eq.s32.totalorder %s12, 0
    %p177 = por %p175, %p176
    %p178 = scmp.ne.s32.totalorder %s167, %s170
    %p179 = scmp.eq.s32.totalorder %s17, 3
    %p180 = por %p178, %p179
    %p181 = scmp.ne.s32.totalorder %s170, %s171
    %p182 = scmp.eq.s32.totalorder %s17, 0
    %p183 = por %p181, %p182
    %p184 = scmp.ne.s32.totalorder %s170, %s171
    %p185 = scmp.eq.s32.totalorder %s18, 3
    %p186 = por %p184, %p185
    %p188 = scmp.ne.s32.totalorder %s171, %s187
    %p189 = scmp.eq.s32.totalorder %s18, 0
    %p190 = por %p188, %p189
    %p191 = scmp.le.s32.totalorder 1, %s12
    %p192 = scmp.lt.s32.totalorder %s12, 5
    %p193 = pnand %p191, %p192
    %p194 = pneg %p193
    // Predicated region
    $region9: #{tpu_custom_call.1} parent=5 // pred_check
      _
    $region10: #{tpu_custom_call.1} parent=5 // pred_check_branch
      %196 = sbr.rel (%p193) target = $region12
    $region11: #{tpu_custom_call.1} parent=5 // pred_region
      %s197 = ssub.s32 %s12, 1
      // Predicated region
      $region13: #{tpu_custom_call.1} parent=11 // pred_check
        %p198 = pneg %p71
      $region14: #{tpu_custom_call.1} parent=11 // pred_check_branch
        %200 = sbr.rel (%p198) target = $region16
      $region15: #{tpu_custom_call.1} parent=11 // pred_region
        _
      $region16: #{tpu_custom_call.1} parent=11 // pred_fallthru
        _
      // Predicated region
      $region17: #{tpu_custom_call.1} parent=11 // pred_check
        %p201 = pneg %p92
      $region18: #{tpu_custom_call.1} parent=11 // pred_check_branch
        %203 = sbr.rel (%p201) target = $region20
      $region19: #{tpu_custom_call.1} parent=11 // pred_region
        _
      $region20: #{tpu_custom_call.1} parent=11 // pred_fallthru
        _
      // Predicated region
      $region21: #{tpu_custom_call.1} parent=11 // pred_check
        %p204 = pneg %p113
      $region22: #{tpu_custom_call.1} parent=11 // pred_check_branch
        %206 = sbr.rel (%p204) target = $region24
      $region23: #{tpu_custom_call.1} parent=11 // pred_region
        _
      $region24: #{tpu_custom_call.1} parent=11 // pred_fallthru
        _
      // Predicated region
      $region25: #{tpu_custom_call.1} parent=11 // pred_check
        %p207 = pneg %p134
      $region26: #{tpu_custom_call.1} parent=11 // pred_check_branch
        %209 = sbr.rel (%p207) target = $region28
      $region27: #{tpu_custom_call.1} parent=11 // pred_region
        _
      $region28: #{tpu_custom_call.1} parent=11 // pred_fallthru
        _
      // Predicated region
      $region29: #{tpu_custom_call.1} parent=11 // pred_check
        %p210 = pneg %p155
      $region30: #{tpu_custom_call.1} parent=11 // pred_check_branch
        %212 = sbr.rel (%p210) target = $region32
      $region31: #{tpu_custom_call.1} parent=11 // pred_region
        _
      $region32: #{tpu_custom_call.1} parent=11 // pred_fallthru
        _
    $region12: #{tpu_custom_call.1} parent=5 // pred_fallthru
      _
    %p213 = scmp.lt.s32.totalorder %s12, 4
    // Predicated region
    $region33: #{tpu_custom_call.1} parent=5 // pred_check
      %p214 = pneg %p213
    $region34: #{tpu_custom_call.1} parent=5 // pred_check_branch
      %216 = sbr.rel (%p214) target = $region36
    $region35: #{tpu_custom_call.1} parent=5 // pred_region
      // Predicated region
      $region37: #{tpu_custom_call.1} parent=35 // pred_check
        %p217 = pneg %p44
      $region38: #{tpu_custom_call.1} parent=35 // pred_check_branch
        %219 = sbr.rel (%p217) target = $region40
      $region39: #{tpu_custom_call.1} parent=35 // pred_region
        %p220 = scmp.lt.s32.totalorder %s19, 1
        %s221 = scalar_select %p220, %s19, 1
        %s222 = smul.addr %s221, 54
        %s223 = smul.addr %s222, 8
        %s224 = scalar_lea.vmem %s0, %s223
      $region40: #{tpu_custom_call.1} parent=35 // pred_fallthru
        _
    $region36: #{tpu_custom_call.1} parent=5 // pred_fallthru
      _
    %p225 = scmp.le.s32.totalorder 1, %s12
    %p226 = scmp.lt.s32.totalorder %s12, 5
    %p227 = pnand %p225, %p226
    %p228 = pneg %p227
    // Predicated region
    $region41: #{tpu_custom_call.1} parent=5 // pred_check
      _
    $region42: #{tpu_custom_call.1} parent=5 // pred_check_branch
      %230 = sbr.rel (%p227) target = $region44
    $region43: #{tpu_custom_call.1} parent=5 // pred_region
      %s231 = ssub.s32 %s12, 1
      %p232 = scmp.lt.s32.totalorder %s21, 1
      %s233 = scalar_select %p232, %s21, 1
      %s234 = smul.addr %s233, 54
      %s235 = smul.addr %s234, 8
      %s236 = scalar_lea.vmem %s0, %s235
      %p237 = pneg %p50
      %p238 = pneg %p47
      %p239 = pneg %p71
      %p240 = pneg %p68
      %p241 = pneg %p92
      %p242 = pneg %p89
      %p243 = pneg %p113
      %p244 = pneg %p110
      %p245 = pneg %p134
      %p246 = pneg %p131
      %p247 = pneg %p155
      %p248 = pneg %p152
      %p249 = pneg %p183
      %p250 = pneg %p180
      %s251 = smul.u32 8, %s22
      %p252 = scmp.lt.s32.totalorder %s21, 1
      %s253 = scalar_select %p252, %s21, 1
      %p254 = scmp.lt.s32.totalorder %s251, 15
      %s255 = scalar_select %p254, %s251, 15
      %s256 = smul.addr %s255, 2
      %s257 = smul.addr %s253, 32
      %s258 = sadd.s32 %s256, %s257
      %s259 = smul.addr %s258, 8
      %s260 = scalar_lea.vmem %s6, %s259
      %p261 = scmp.lt.s32.totalorder %s21, 1
      %s262 = scalar_select %p261, %s21, 1
      %s263 = smul.addr %s262, 54
      %s264 = smul.addr %s263, 8
      %s265 = scalar_lea.vmem %s0, %s264
      %s266 = smul.u32 8, %s22
      %p267 = scmp.lt.s32.totalorder %s21, 1
      %s268 = scalar_select %p267, %s21, 1
      %p269 = scmp.lt.s32.totalorder %s266, 15
      %s270 = scalar_select %p269, %s266, 15
      %s271 = smul.addr %s270, 2
      %s272 = smul.addr %s268, 32
      %s273 = sadd.s32 %s271, %s272
      %s274 = smul.addr %s273, 8
      %s275 = scalar_lea.vmem %s6, %s274
      %s276 = smul.u32 8, %s22
      %s277 = smul.u32 %s22, 8
      %s278 = sadd.s32 %s277, 1
      %s279 = smul.u32 %s278, 24
      %s280 = scalar_lea.vmem %s265, %s279
      %v281 = vld [vmem:[%s280] sm:$0xff]
      %v282 = vld [vmem:[%s280 + $0x8] sm:$0xff]
      %v283 = vld [vmem:[%s280 + $0x18] sm:$0xff]
      %v284 = vld [vmem:[%s280 + $0x20] sm:$0xff]
      %v285 = vld [vmem:[%s280 + $0x30] sm:$0xff]
      %v286 = vld [vmem:[%s280 + $0x38] sm:$0xff]
      %v287 = vld [vmem:[%s280 + $0x48] sm:$0xff]
      %v288 = vld [vmem:[%s280 + $0x50] sm:$0xff]
      %v289 = vld [vmem:[%s280 + $0x60] sm:$0xff]
      %v290 = vld [vmem:[%s280 + $0x68] sm:$0xff]
      %v291 = vld [vmem:[%s280 + $0x78] sm:$0xff]
      %v292 = vld [vmem:[%s280 + $0x80] sm:$0xff]
      %v293 = vld [vmem:[%s280 + $0x90] sm:$0xff]
      %v294 = vld [vmem:[%s280 + $0x98] sm:$0xff]
      %v295 = vld [vmem:[%s280 + $0xa8] sm:$0xff]
      %v296 = vld [vmem:[%s280 + $0xb0] sm:$0xff]
      %v297 = vld [vmem:[%s1] sm:$0xf]
      %v298 = vld [vmem:[%s280 + $0x1] sm:$0xff]
      %v299 = vld [vmem:[%s280 + $0x9] sm:$0xff]
      %v300 = vld [vmem:[%s280 + $0x19] sm:$0xff]
      %v301 = vld [vmem:[%s280 + $0x21] sm:$0xff]
      %v302 = vld [vmem:[%s280 + $0x31] sm:$0xff]
      %v303 = vld [vmem:[%s280 + $0x39] sm:$0xff]
      %v304 = vld [vmem:[%s280 + $0x49] sm:$0xff]
      %v305 = vld [vmem:[%s280 + $0x51] sm:$0xff]
      %v306 = vld [vmem:[%s280 + $0x61] sm:$0xff]
      %v307 = vld [vmem:[%s280 + $0x69] sm:$0xff]
      %v308 = vld [vmem:[%s280 + $0x79] sm:$0xff]
      %v309 = vld [vmem:[%s280 + $0x81] sm:$0xff]
      %v310 = vld [vmem:[%s280 + $0x91] sm:$0xff]
      %v311 = vld [vmem:[%s280 + $0x99] sm:$0xff]
      %v312 = vld [vmem:[%s280 + $0xa9] sm:$0xff]
      %v313 = vld [vmem:[%s280 + $0xb1] sm:$0xff]
      %s314 = scalar_lea.vmem %s1, 4
      %v315 = vld [vmem:[%s314] sm:$0xf]
      %vm316 = vcmask 31744
      %v318 = vsel %vm316, %v298, 0
      %v321 = vsel %vm316, %v299, 0
      %v324 = vsel %vm316, %v300, 0
      %v327 = vsel %vm316, %v301, 0
      %v330 = vsel %vm316, %v302, 0
      %v333 = vsel %vm316, %v303, 0
      %v336 = vsel %vm316, %v304, 0
      %v339 = vsel %vm316, %v305, 0
      %v342 = vsel %vm316, %v306, 0
      %v345 = vsel %vm316, %v307, 0
      %v348 = vsel %vm316, %v308, 0
      %v351 = vsel %vm316, %v309, 0
      %v354 = vsel %vm316, %v310, 0
      %v357 = vsel %vm316, %v311, 0
      %v360 = vsel %vm316, %v312, 0
      %v363 = vsel %vm316, %v313, 0
      %vm365 = vcmask 1043456
      %v367 = vsel %vm365, %v315, 0
      %369 = vmatprep.subr.mxu0 0.0
      %370 = vmatpush1.msra.mxu0 0.0
      %371 = vmatprep.subr.mxu0 0.0
      %372 = vmatpush1.msra.mxu0 0.0
      %373 = vmatprep.subr.mxu0 0.0
      %374 = vmatpush1.msra.mxu0 0.0
      %375 = vmatprep.subr.mxu0 0.0
      %376 = vmatpush1.msra.mxu0 0.0
      %377 = vmatprep.subr.mxu0 0.0
      %378 = vmatpush1.msra.mxu0 0.0
      %379 = vmatprep.subr.mxu0 0.0
      %380 = vmatpush1.msra.mxu0 0.0
      %381 = vmatprep.subr.mxu0 0.0
      %382 = vmatpush1.msra.mxu0 0.0
      %383 = vmatprep.subr.mxu0 0.0
      %384 = vmatpush1.msra.mxu0 0.0
      %385 = vmatprep.subr.mxu0 0.0
      %386 = vmatpush1.msra.mxu0 0.0
      %387 = vmatprep.subr.mxu0 0.0
      %388 = vmatpush1.msra.mxu0 0.0
      %389 = vmatprep.subr.mxu0 0.0
      %390 = vmatpush1.msra.mxu0 0.0
      %391 = vmatprep.subr.mxu0 0.0
      %392 = vmatpush1.msra.mxu0 0.0
      %393 = vmatprep.subr.mxu0 0.0
      %394 = vmatpush1.msra.mxu0 0.0
      %395 = vmatprep.subr.mxu0 0.0
      %396 = vmatpush1.msra.mxu0 0.0
      %397 = vmatprep.subr.mxu0 0.0
      %398 = vmatpush1.msra.mxu0 0.0
      %399 = vmatprep.subr.mxu0 0.0
      %v400 = vand.u32 %v367, 4294901760
      %401 = vmatpush1.msra.mxu0 %v400
      %402 = vmatprep.subr.mxu0 0.0
      %403 = vmatpush2.msra.mxu0 0.0
      %404 = vmatprep.subr.mxu0 0.0
      %405 = vmatpush2.msra.mxu0 0.0
      %406 = vmatprep.subr.mxu0 0.0
      %407 = vmatpush2.msra.mxu0 0.0
      %408 = vmatprep.subr.mxu0 0.0
      %409 = vmatpush2.msra.mxu0 0.0
      %410 = vmatprep.subr.mxu0 0.0
      %411 = vmatpush2.msra.mxu0 0.0
      %412 = vmatprep.subr.mxu0 0.0
      %413 = vmatpush2.msra.mxu0 0.0
      %414 = vmatprep.subr.mxu0 0.0
      %415 = vmatpush2.msra.mxu0 0.0
      %416 = vmatprep.subr.mxu0 0.0
      %417 = vmatpush2.msra.mxu0 0.0
      %418 = vmatprep.subr.mxu0 0.0
      %419 = vmatpush2.msra.mxu0 0.0
      %420 = vmatprep.subr.mxu0 0.0
      %421 = vmatpush2.msra.mxu0 0.0
      %422 = vmatprep.subr.mxu0 0.0
      %423 = vmatpush2.msra.mxu0 0.0
      %424 = vmatprep.subr.mxu0 0.0
      %425 = vmatpush2.msra.mxu0 0.0
      %426 = vmatprep.subr.mxu0 0.0
      %427 = vmatpush2.msra.mxu0 0.0
      %428 = vmatprep.subr.mxu0 0.0
      %429 = vmatpush2.msra.mxu0 0.0
      %430 = vmatprep.subr.mxu0 0.0
      %431 = vmatpush2.msra.mxu0 0.0
      %432 = vmatprep.subr.mxu0 0.0
      %433 = vmatpush2.msra.mxu0 0.0
      %434 = vmatprep.mubr.f32.mxu0 0.0
      %v435 = vand.u32 %v318, 4294901760
      %v436 = vsub.f32 %v318, %v435
      %v437 = vand.u32 %v436, 4294901760
      %v438 = vsub.f32 %v436, %v437
      %v439 = vand.u32 %v438, 4294901760
      %440 = vmatmul.mubr.f32.gmra.mxu0 %v439
      %v441 = vpop.f32.mrf.mxu0
      %v442 = vadd.f32 0.0, %v441
      %v443 = vpop.f32.mrf.mxu0
      %444 = vmatprep.mubr.f32.mxu0 0.0
      %v445 = vand.u32 %v321, 4294901760
      %v446 = vsub.f32 %v321, %v445
      %v447 = vand.u32 %v446, 4294901760
      %v448 = vsub.f32 %v446, %v447
      %v449 = vand.u32 %v448, 4294901760
      %450 = vmatmul.mubr.f32.gmra.mxu0 %v449
      %v451 = vpop.f32.mrf.mxu0
      %v452 = vadd.f32 0.0, %v451
      %v453 = vpop.f32.mrf.mxu0
      %454 = vmatprep.mubr.f32.mxu0 0.0
      %v455 = vand.u32 %v324, 4294901760
      %v456 = vsub.f32 %v324, %v455
      %v457 = vand.u32 %v456, 4294901760
      %v458 = vsub.f32 %v456, %v457
      %v459 = vand.u32 %v458, 4294901760
      %460 = vmatmul.mubr.f32.gmra.mxu0 %v459
      %v461 = vpop.f32.mrf.mxu0
      %v462 = vadd.f32 0.0, %v461
      %v463 = vpop.f32.mrf.mxu0
      %464 = vmatprep.mubr.f32.mxu0 0.0
      %v465 = vand.u32 %v327, 4294901760
      %v466 = vsub.f32 %v327, %v465
      %v467 = vand.u32 %v466, 4294901760
      %v468 = vsub.f32 %v466, %v467
      %v469 = vand.u32 %v468, 4294901760
      %470 = vmatmul.mubr.f32.gmra.mxu0 %v469
      %v471 = vpop.f32.mrf.mxu0
      %v472 = vadd.f32 0.0, %v471
      %v473 = vpop.f32.mrf.mxu0
      %474 = vmatprep.mubr.f32.mxu0 0.0
      %v475 = vand.u32 %v330, 4294901760
      %v476 = vsub.f32 %v330, %v475
      %v477 = vand.u32 %v476, 4294901760
      %v478 = vsub.f32 %v476, %v477
      %v479 = vand.u32 %v478, 4294901760
      %480 = vmatmul.mubr.f32.gmra.mxu0 %v479
      %v481 = vpop.f32.mrf.mxu0
      %v482 = vadd.f32 0.0, %v481
      %v483 = vpop.f32.mrf.mxu0
      %484 = vmatprep.mubr.f32.mxu0 0.0
      %v485 = vand.u32 %v333, 4294901760
      %v486 = vsub.f32 %v333, %v485
      %v487 = vand.u32 %v486, 4294901760
      %v488 = vsub.f32 %v486, %v487
      %v489 = vand.u32 %v488, 4294901760
      %490 = vmatmul.mubr.f32.gmra.mxu0 %v489
      %v491 = vpop.f32.mrf.mxu0
      %v492 = vadd.f32 0.0, %v491
      %v493 = vpop.f32.mrf.mxu0
      %494 = vmatprep.mubr.f32.mxu0 0.0
      %v495 = vand.u32 %v336, 4294901760
      %v496 = vsub.f32 %v336, %v495
      %v497 = vand.u32 %v496, 4294901760
      %v498 = vsub.f32 %v496, %v497
      %v499 = vand.u32 %v498, 4294901760
      %500 = vmatmul.mubr.f32.gmra.mxu0 %v499
      %v501 = vpop.f32.mrf.mxu0
      %v502 = vadd.f32 0.0, %v501
      %v503 = vpop.f32.mrf.mxu0
      %504 = vmatprep.mubr.f32.mxu0 0.0
      %v505 = vand.u32 %v339, 4294901760
      %v506 = vsub.f32 %v339, %v505
      %v507 = vand.u32 %v506, 4294901760
      %v508 = vsub.f32 %v506, %v507
      %v509 = vand.u32 %v508, 4294901760
      %510 = vmatmul.mubr.f32.gmra.mxu0 %v509
      %v511 = vpop.f32.mrf.mxu0
      %v512 = vadd.f32 0.0, %v511
      %v513 = vpop.f32.mrf.mxu0
      %514 = vmatprep.mubr.f32.mxu0 0.0
      %v515 = vand.u32 %v342, 4294901760
      %v516 = vsub.f32 %v342, %v515
      %v517 = vand.u32 %v516, 4294901760
      %v518 = vsub.f32 %v516, %v517
      %v519 = vand.u32 %v518, 4294901760
      %520 = vmatmul.mubr.f32.gmra.mxu0 %v519
      %v521 = vpop.f32.mrf.mxu0
      %v522 = vadd.f32 0.0, %v521
      %v523 = vpop.f32.mrf.mxu0
      %524 = vmatprep.mubr.f32.mxu0 0.0
      %v525 = vand.u32 %v345, 4294901760
      %v526 = vsub.f32 %v345, %v525
      %v527 = vand.u32 %v526, 4294901760
      %v528 = vsub.f32 %v526, %v527
      %v529 = vand.u32 %v528, 4294901760
      %530 = vmatmul.mubr.f32.gmra.mxu0 %v529
      %v531 = vpop.f32.mrf.mxu0
      %v532 = vadd.f32 0.0, %v531
      %v533 = vpop.f32.mrf.mxu0
      %534 = vmatprep.mubr.f32.mxu0 0.0
      %v535 = vand.u32 %v348, 4294901760
      %v536 = vsub.f32 %v348, %v535
      %v537 = vand.u32 %v536, 4294901760
      %v538 = vsub.f32 %v536, %v537
      %v539 = vand.u32 %v538, 4294901760
      %540 = vmatmul.mubr.f32.gmra.mxu0 %v539
      %v541 = vpop.f32.mrf.mxu0
      %v542 = vadd.f32 0.0, %v541
      %v543 = vpop.f32.mrf.mxu0
      %544 = vmatprep.mubr.f32.mxu0 0.0
      %v545 = vand.u32 %v351, 4294901760
      %v546 = vsub.f32 %v351, %v545
      %v547 = vand.u32 %v546, 4294901760
      %v548 = vsub.f32 %v546, %v547
      %v549 = vand.u32 %v548, 4294901760
      %550 = vmatmul.mubr.f32.gmra.mxu0 %v549
      %v551 = vpop.f32.mrf.mxu0
      %v552 = vadd.f32 0.0, %v551
      %v553 = vpop.f32.mrf.mxu0
      %554 = vmatprep.mubr.f32.mxu0 0.0
      %v555 = vand.u32 %v354, 4294901760
      %v556 = vsub.f32 %v354, %v555
      %v557 = vand.u32 %v556, 4294901760
      %v558 = vsub.f32 %v556, %v557
      %v559 = vand.u32 %v558, 4294901760
      %560 = vmatmul.mubr.f32.gmra.mxu0 %v559
      %v561 = vpop.f32.mrf.mxu0
      %v562 = vadd.f32 0.0, %v561
      %v563 = vpop.f32.mrf.mxu0
      %564 = vmatprep.mubr.f32.mxu0 0.0
      %v565 = vand.u32 %v357, 4294901760
      %v566 = vsub.f32 %v357, %v565
      %v567 = vand.u32 %v566, 4294901760
      %v568 = vsub.f32 %v566, %v567
      %v569 = vand.u32 %v568, 4294901760
      %570 = vmatmul.mubr.f32.gmra.mxu0 %v569
      %v571 = vpop.f32.mrf.mxu0
      %v572 = vadd.f32 0.0, %v571
      %v573 = vpop.f32.mrf.mxu0
      %574 = vmatprep.mubr.f32.mxu0 0.0
      %v575 = vand.u32 %v360, 4294901760
      %v576 = vsub.f32 %v360, %v575
      %v577 = vand.u32 %v576, 4294901760
      %v578 = vsub.f32 %v576, %v577
      %v579 = vand.u32 %v578, 4294901760
      %580 = vmatmul.mubr.f32.gmra.mxu0 %v579
      %v581 = vpop.f32.mrf.mxu0
      %v582 = vadd.f32 0.0, %v581
      %v583 = vpop.f32.mrf.mxu0
      %584 = vmatprep.mubr.f32.mxu0 0.0
      %v585 = vand.u32 %v363, 4294901760
      %v586 = vsub.f32 %v363, %v585
      %v587 = vand.u32 %v586, 4294901760
      %v588 = vsub.f32 %v586, %v587
      %v589 = vand.u32 %v588, 4294901760
      %590 = vmatmul.mubr.f32.gmra.mxu0 %v589
      %v591 = vpop.f32.mrf.mxu0
      %v592 = vadd.f32 0.0, %v591
      %v593 = vpop.f32.mrf.mxu0
      %594 = vdwg.mxu0
      %595 = vmatprep.subr.mxu0 0.0
      %596 = vmatpush1.msra.mxu0 0.0
      %597 = vmatprep.subr.mxu0 0.0
      %598 = vmatpush1.msra.mxu0 0.0
      %599 = vmatprep.subr.mxu0 0.0
      %600 = vmatpush1.msra.mxu0 0.0
      %601 = vmatprep.subr.mxu0 0.0
      %602 = vmatpush1.msra.mxu0 0.0
      %603 = vmatprep.subr.mxu0 0.0
      %604 = vmatpush1.msra.mxu0 0.0
      %605 = vmatprep.subr.mxu0 0.0
      %606 = vmatpush1.msra.mxu0 0.0
      %607 = vmatprep.subr.mxu0 0.0
      %608 = vmatpush1.msra.mxu0 0.0
      %609 = vmatprep.subr.mxu0 0.0
      %610 = vmatpush1.msra.mxu0 0.0
      %611 = vmatprep.subr.mxu0 0.0
      %612 = vmatpush1.msra.mxu0 0.0
      %613 = vmatprep.subr.mxu0 0.0
      %614 = vmatpush1.msra.mxu0 0.0
      %615 = vmatprep.subr.mxu0 0.0
      %616 = vmatpush1.msra.mxu0 0.0
      %617 = vmatprep.subr.mxu0 0.0
      %618 = vmatpush1.msra.mxu0 0.0
      %619 = vmatprep.subr.mxu0 0.0
      %620 = vmatpush1.msra.mxu0 0.0
      %621 = vmatprep.subr.mxu0 0.0
      %622 = vmatpush1.msra.mxu0 0.0
      %623 = vmatprep.subr.mxu0 0.0
      %624 = vmatpush1.msra.mxu0 0.0
      %625 = vmatprep.subr.mxu0 0.0
      %v626 = vand.u32 %v367, 4294901760
      %v627 = vsub.f32 %v367, %v626
      %v628 = vand.u32 %v627, 4294901760
      %v629 = vsub.f32 %v627, %v628
      %v630 = vand.u32 %v629, 4294901760
      %631 = vmatpush1.msra.mxu0 %v630
      %632 = vmatprep.subr.mxu0 0.0
      %633 = vmatpush2.msra.mxu0 0.0
      %634 = vmatprep.subr.mxu0 0.0
      %635 = vmatpush2.msra.mxu0 0.0
      %636 = vmatprep.subr.mxu0 0.0
      %637 = vmatpush2.msra.mxu0 0.0
      %638 = vmatprep.subr.mxu0 0.0
      %639 = vmatpush2.msra.mxu0 0.0
      %640 = vmatprep.subr.mxu0 0.0
      %641 = vmatpush2.msra.mxu0 0.0
      %642 = vmatprep.subr.mxu0 0.0
      %643 = vmatpush2.msra.mxu0 0.0
      %644 = vmatprep.subr.mxu0 0.0
      %645 = vmatpush2.msra.mxu0 0.0
      %646 = vmatprep.subr.mxu0 0.0
      %647 = vmatpush2.msra.mxu0 0.0
      %648 = vmatprep.subr.mxu0 0.0
      %649 = vmatpush2.msra.mxu0 0.0
      %650 = vmatprep.subr.mxu0 0.0
      %651 = vmatpush2.msra.mxu0 0.0
      %652 = vmatprep.subr.mxu0 0.0
      %653 = vmatpush2.msra.mxu0 0.0
      %654 = vmatprep.subr.mxu0 0.0
      %655 = vmatpush2.msra.mxu0 0.0
      %656 = vmatprep.subr.mxu0 0.0
      %657 = vmatpush2.msra.mxu0 0.0
      %658 = vmatprep.subr.mxu0 0.0
      %659 = vmatpush2.msra.mxu0 0.0
      %660 = vmatprep.subr.mxu0 0.0
      %661 = vmatpush2.msra.mxu0 0.0
      %662 = vmatprep.subr.mxu0 0.0
      %663 = vmatpush2.msra.mxu0 0.0
      %664 = vmatprep.mubr.f32.mxu0 0.0
      %v665 = vand.u32 %v318, 4294901760
      %666 = vmatmul.mubr.f32.gmra.mxu0 %v665
      %v667 = vpop.f32.mrf.mxu0
      %v668 = vadd.f32 %v442, %v667
      %v669 = vpop.f32.mrf.mxu0
      %670 = vmatprep.mubr.f32.mxu0 0.0
      %v671 = vand.u32 %v321, 4294901760
      %672 = vmatmul.mubr.f32.gmra.mxu0 %v671
      %v673 = vpop.f32.mrf.mxu0
      %v674 = vadd.f32 %v452, %v673
      %v675 = vpop.f32.mrf.mxu0
      %676 = vmatprep.mubr.f32.mxu0 0.0
      %v677 = vand.u32 %v324, 4294901760
      %678 = vmatmul.mubr.f32.gmra.mxu0 %v677
      %v679 = vpop.f32.mrf.mxu0
      %v680 = vadd.f32 %v462, %v679
      %v681 = vpop.f32.mrf.mxu0
      %682 = vmatprep.mubr.f32.mxu0 0.0
      %v683 = vand.u32 %v327, 4294901760
      %684 = vmatmul.mubr.f32.gmra.mxu0 %v683
      %v685 = vpop.f32.mrf.mxu0
      %v686 = vadd.f32 %v472, %v685
      %v687 = vpop.f32.mrf.mxu0
      %688 = vmatprep.mubr.f32.mxu0 0.0
      %v689 = vand.u32 %v330, 4294901760
      %690 = vmatmul.mubr.f32.gmra.mxu0 %v689
      %v691 = vpop.f32.mrf.mxu0
      %v692 = vadd.f32 %v482, %v691
      %v693 = vpop.f32.mrf.mxu0
      %694 = vmatprep.mubr.f32.mxu0 0.0
      %v695 = vand.u32 %v333, 4294901760
      %696 = vmatmul.mubr.f32.gmra.mxu0 %v695
      %v697 = vpop.f32.mrf.mxu0
      %v698 = vadd.f32 %v492, %v697
      %v699 = vpop.f32.mrf.mxu0
      %700 = vmatprep.mubr.f32.mxu0 0.0
      %v701 = vand.u32 %v336, 4294901760
      %702 = vmatmul.mubr.f32.gmra.mxu0 %v701
      %v703 = vpop.f32.mrf.mxu0
      %v704 = vadd.f32 %v502, %v703
      %v705 = vpop.f32.mrf.mxu0
      %706 = vmatprep.mubr.f32.mxu0 0.0
      %v707 = vand.u32 %v339, 4294901760
      %708 = vmatmul.mubr.f32.gmra.mxu0 %v707
      %v709 = vpop.f32.mrf.mxu0
      %v710 = vadd.f32 %v512, %v709
      %v711 = vpop.f32.mrf.mxu0
      %712 = vmatprep.mubr.f32.mxu0 0.0
      %v713 = vand.u32 %v342, 4294901760
      %714 = vmatmul.mubr.f32.gmra.mxu0 %v713
      %v715 = vpop.f32.mrf.mxu0
      %v716 = vadd.f32 %v522, %v715
      %v717 = vpop.f32.mrf.mxu0
      %718 = vmatprep.mubr.f32.mxu0 0.0
      %v719 = vand.u32 %v345, 4294901760
      %720 = vmatmul.mubr.f32.gmra.mxu0 %v719
      %v721 = vpop.f32.mrf.mxu0
      %v722 = vadd.f32 %v532, %v721
      %v723 = vpop.f32.mrf.mxu0
      %724 = vmatprep.mubr.f32.mxu0 0.0
      %v725 = vand.u32 %v348, 4294901760
      %726 = vmatmul.mubr.f32.gmra.mxu0 %v725
      %v727 = vpop.f32.mrf.mxu0
      %v728 = vadd.f32 %v542, %v727
      %v729 = vpop.f32.mrf.mxu0
      %730 = vmatprep.mubr.f32.mxu0 0.0
      %v731 = vand.u32 %v351, 4294901760
      %732 = vmatmul.mubr.f32.gmra.mxu0 %v731
      %v733 = vpop.f32.mrf.mxu0
      %v734 = vadd.f32 %v552, %v733
      %v735 = vpop.f32.mrf.mxu0
      %736 = vmatprep.mubr.f32.mxu0 0.0
      %v737 = vand.u32 %v354, 4294901760
      %738 = vmatmul.mubr.f32.gmra.mxu0 %v737
      %v739 = vpop.f32.mrf.mxu0
      %v740 = vadd.f32 %v562, %v739
      %v741 = vpop.f32.mrf.mxu0
      %742 = vmatprep.mubr.f32.mxu0 0.0
      %v743 = vand.u32 %v357, 4294901760
      %744 = vmatmul.mubr.f32.gmra.mxu0 %v743
      %v745 = vpop.f32.mrf.mxu0
      %v746 = vadd.f32 %v572, %v745
      %v747 = vpop.f32.mrf.mxu0
      %748 = vmatprep.mubr.f32.mxu0 0.0
      %v749 = vand.u32 %v360, 4294901760
      %750 = vmatmul.mubr.f32.gmra.mxu0 %v749
      %v751 = vpop.f32.mrf.mxu0
      %v752 = vadd.f32 %v582, %v751
      %v753 = vpop.f32.mrf.mxu0
      %754 = vmatprep.mubr.f32.mxu0 0.0
      %v755 = vand.u32 %v363, 4294901760
      %756 = vmatmul.mubr.f32.gmra.mxu0 %v755
      %v757 = vpop.f32.mrf.mxu0
      %v758 = vadd.f32 %v592, %v757
      %v759 = vpop.f32.mrf.mxu0
      %760 = vdwg.mxu0
      %761 = vmatprep.subr.mxu0 0.0
      %762 = vmatpush1.msra.mxu0 0.0
      %763 = vmatprep.subr.mxu0 0.0
      %764 = vmatpush1.msra.mxu0 0.0
      %765 = vmatprep.subr.mxu0 0.0
      %766 = vmatpush1.msra.mxu0 0.0
      %767 = vmatprep.subr.mxu0 0.0
      %768 = vmatpush1.msra.mxu0 0.0
      %769 = vmatprep.subr.mxu0 0.0
      %770 = vmatpush1.msra.mxu0 0.0
      %771 = vmatprep.subr.mxu0 0.0
      %772 = vmatpush1.msra.mxu0 0.0
      %773 = vmatprep.subr.mxu0 0.0
      %774 = vmatpush1.msra.mxu0 0.0
      %775 = vmatprep.subr.mxu0 0.0
      %776 = vmatpush1.msra.mxu0 0.0
      %777 = vmatprep.subr.mxu0 0.0
      %778 = vmatpush1.msra.mxu0 0.0
      %779 = vmatprep.subr.mxu0 0.0
      %780 = vmatpush1.msra.mxu0 0.0
      %781 = vmatprep.subr.mxu0 0.0
      %782 = vmatpush1.msra.mxu0 0.0
      %783 = vmatprep.subr.mxu0 0.0
      %784 = vmatpush1.msra.mxu0 0.0
      %785 = vmatprep.subr.mxu0 0.0
      %786 = vmatpush1.msra.mxu0 0.0
      %787 = vmatprep.subr.mxu0 0.0
      %788 = vmatpush1.msra.mxu0 0.0
      %789 = vmatprep.subr.mxu0 0.0
      %790 = vmatpush1.msra.mxu0 0.0
      %791 = vmatprep.subr.mxu0 0.0
      %v792 = vand.u32 %v367, 4294901760
      %v793 = vsub.f32 %v367, %v792
      %794 = vmatpush1.msra.mxu0 %v793
      %795 = vmatprep.subr.mxu0 0.0
      %796 = vmatpush2.msra.mxu0 0.0
      %797 = vmatprep.subr.mxu0 0.0
      %798 = vmatpush2.msra.mxu0 0.0
      %799 = vmatprep.subr.mxu0 0.0
      %800 = vmatpush2.msra.mxu0 0.0
      %801 = vmatprep.subr.mxu0 0.0
      %802 = vmatpush2.msra.mxu0 0.0
      %803 = vmatprep.subr.mxu0 0.0
      %804 = vmatpush2.msra.mxu0 0.0
      %805 = vmatprep.subr.mxu0 0.0
      %806 = vmatpush2.msra.mxu0 0.0
      %807 = vmatprep.subr.mxu0 0.0
      %808 = vmatpush2.msra.mxu0 0.0
      %809 = vmatprep.subr.mxu0 0.0
      %810 = vmatpush2.msra.mxu0 0.0
      %811 = vmatprep.subr.mxu0 0.0
      %812 = vmatpush2.msra.mxu0 0.0
      %813 = vmatprep.subr.mxu0 0.0
      %814 = vmatpush2.msra.mxu0 0.0
      %815 = vmatprep.subr.mxu0 0.0
      %816 = vmatpush2.msra.mxu0 0.0
      %817 = vmatprep.subr.mxu0 0.0
      %818 = vmatpush2.msra.mxu0 0.0
      %819 = vmatprep.subr.mxu0 0.0
      %820 = vmatpush2.msra.mxu0 0.0
      %821 = vmatprep.subr.mxu0 0.0
      %822 = vmatpush2.msra.mxu0 0.0
      %823 = vmatprep.subr.mxu0 0.0
      %824 = vmatpush2.msra.mxu0 0.0
      %825 = vmatprep.subr.mxu0 0.0
      %826 = vmatpush2.msra.mxu0 0.0
      %827 = vmatprep.mubr.f32.mxu0 0.0
      %v828 = vand.u32 %v318, 4294901760
      %v829 = vsub.f32 %v318, %v828
      %830 = vmatmul.mubr.f32.gmra.mxu0 %v829
      %v831 = vpop.f32.mrf.mxu0
      %v832 = vadd.f32 %v668, %v831
      %v833 = vpop.f32.mrf.mxu0
      %834 = vmatprep.mubr.f32.mxu0 0.0
      %v835 = vand.u32 %v321, 4294901760
      %v836 = vsub.f32 %v321, %v835
      %837 = vmatmul.mubr.f32.gmra.mxu0 %v836
      %v838 = vpop.f32.mrf.mxu0
      %v839 = vadd.f32 %v674, %v838
      %v840 = vpop.f32.mrf.mxu0
      %841 = vmatprep.mubr.f32.mxu0 0.0
      %v842 = vand.u32 %v324, 4294901760
      %v843 = vsub.f32 %v324, %v842
      %844 = vmatmul.mubr.f32.gmra.mxu0 %v843
      %v845 = vpop.f32.mrf.mxu0
      %v846 = vadd.f32 %v680, %v845
      %v847 = vpop.f32.mrf.mxu0
      %848 = vmatprep.mubr.f32.mxu0 0.0
      %v849 = vand.u32 %v327, 4294901760
      %v850 = vsub.f32 %v327, %v849
      %851 = vmatmul.mubr.f32.gmra.mxu0 %v850
      %v852 = vpop.f32.mrf.mxu0
      %v853 = vadd.f32 %v686, %v852
      %v854 = vpop.f32.mrf.mxu0
      %855 = vmatprep.mubr.f32.mxu0 0.0
      %v856 = vand.u32 %v330, 4294901760
      %v857 = vsub.f32 %v330, %v856
      %858 = vmatmul.mubr.f32.gmra.mxu0 %v857
      %v859 = vpop.f32.mrf.mxu0
      %v860 = vadd.f32 %v692, %v859
      %v861 = vpop.f32.mrf.mxu0
      %862 = vmatprep.mubr.f32.mxu0 0.0
      %v863 = vand.u32 %v333, 4294901760
      %v864 = vsub.f32 %v333, %v863
      %865 = vmatmul.mubr.f32.gmra.mxu0 %v864
      %v866 = vpop.f32.mrf.mxu0
      %v867 = vadd.f32 %v698, %v866
      %v868 = vpop.f32.mrf.mxu0
      %869 = vmatprep.mubr.f32.mxu0 0.0
      %v870 = vand.u32 %v336, 4294901760
      %v871 = vsub.f32 %v336, %v870
      %872 = vmatmul.mubr.f32.gmra.mxu0 %v871
      %v873 = vpop.f32.mrf.mxu0
      %v874 = vadd.f32 %v704, %v873
      %v875 = vpop.f32.mrf.mxu0
      %876 = vmatprep.mubr.f32.mxu0 0.0
      %v877 = vand.u32 %v339, 4294901760
      %v878 = vsub.f32 %v339, %v877
      %879 = vmatmul.mubr.f32.gmra.mxu0 %v878
      %v880 = vpop.f32.mrf.mxu0
      %v881 = vadd.f32 %v710, %v880
      %v882 = vpop.f32.mrf.mxu0
      %883 = vmatprep.mubr.f32.mxu0 0.0
      %v884 = vand.u32 %v342, 4294901760
      %v885 = vsub.f32 %v342, %v884
      %886 = vmatmul.mubr.f32.gmra.mxu0 %v885
      %v887 = vpop.f32.mrf.mxu0
      %v888 = vadd.f32 %v716, %v887
      %v889 = vpop.f32.mrf.mxu0
      %890 = vmatprep.mubr.f32.mxu0 0.0
      %v891 = vand.u32 %v345, 4294901760
      %v892 = vsub.f32 %v345, %v891
      %893 = vmatmul.mubr.f32.gmra.mxu0 %v892
      %v894 = vpop.f32.mrf.mxu0
      %v895 = vadd.f32 %v722, %v894
      %v896 = vpop.f32.mrf.mxu0
      %897 = vmatprep.mubr.f32.mxu0 0.0
      %v898 = vand.u32 %v348, 4294901760
      %v899 = vsub.f32 %v348, %v898
      %900 = vmatmul.mubr.f32.gmra.mxu0 %v899
      %v901 = vpop.f32.mrf.mxu0
      %v902 = vadd.f32 %v728, %v901
      %v903 = vpop.f32.mrf.mxu0
      %904 = vmatprep.mubr.f32.mxu0 0.0
      %v905 = vand.u32 %v351, 4294901760
      %v906 = vsub.f32 %v351, %v905
      %907 = vmatmul.mubr.f32.gmra.mxu0 %v906
      %v908 = vpop.f32.mrf.mxu0
      %v909 = vadd.f32 %v734, %v908
      %v910 = vpop.f32.mrf.mxu0
      %911 = vmatprep.mubr.f32.mxu0 0.0
      %v912 = vand.u32 %v354, 4294901760
      %v913 = vsub.f32 %v354, %v912
      %914 = vmatmul.mubr.f32.gmra.mxu0 %v913
      %v915 = vpop.f32.mrf.mxu0
      %v916 = vadd.f32 %v740, %v915
      %v917 = vpop.f32.mrf.mxu0
      %918 = vmatprep.mubr.f32.mxu0 0.0
      %v919 = vand.u32 %v357, 4294901760
      %v920 = vsub.f32 %v357, %v919
      %921 = vmatmul.mubr.f32.gmra.mxu0 %v920
      %v922 = vpop.f32.mrf.mxu0
      %v923 = vadd.f32 %v746, %v922
      %v924 = vpop.f32.mrf.mxu0
      %925 = vmatprep.mubr.f32.mxu0 0.0
      %v926 = vand.u32 %v360, 4294901760
      %v927 = vsub.f32 %v360, %v926
      %928 = vmatmul.mubr.f32.gmra.mxu0 %v927
      %v929 = vpop.f32.mrf.mxu0
      %v930 = vadd.f32 %v752, %v929
      %v931 = vpop.f32.mrf.mxu0
      %932 = vmatprep.mubr.f32.mxu0 0.0
      %v933 = vand.u32 %v363, 4294901760
      %v934 = vsub.f32 %v363, %v933
      %935 = vmatmul.mubr.f32.gmra.mxu0 %v934
      %v936 = vpop.f32.mrf.mxu0
      %v937 = vadd.f32 %v758, %v936
      %v938 = vpop.f32.mrf.mxu0
      %939 = vdwg.mxu0
      %940 = vmatprep.subr.mxu0 0.0
      %941 = vmatpush1.msra.mxu0 0.0
      %942 = vmatprep.subr.mxu0 0.0
      %943 = vmatpush1.msra.mxu0 0.0
      %944 = vmatprep.subr.mxu0 0.0
      %945 = vmatpush1.msra.mxu0 0.0
      %946 = vmatprep.subr.mxu0 0.0
      %947 = vmatpush1.msra.mxu0 0.0
      %948 = vmatprep.subr.mxu0 0.0
      %949 = vmatpush1.msra.mxu0 0.0
      %950 = vmatprep.subr.mxu0 0.0
      %951 = vmatpush1.msra.mxu0 0.0
      %952 = vmatprep.subr.mxu0 0.0
      %953 = vmatpush1.msra.mxu0 0.0
      %954 = vmatprep.subr.mxu0 0.0
      %955 = vmatpush1.msra.mxu0 0.0
      %956 = vmatprep.subr.mxu0 0.0
      %957 = vmatpush1.msra.mxu0 0.0
      %958 = vmatprep.subr.mxu0 0.0
      %959 = vmatpush1.msra.mxu0 0.0
      %960 = vmatprep.subr.mxu0 0.0
      %961 = vmatpush1.msra.mxu0 0.0
      %962 = vmatprep.subr.mxu0 0.0
      %963 = vmatpush1.msra.mxu0 0.0
      %964 = vmatprep.subr.mxu0 0.0
      %965 = vmatpush1.msra.mxu0 0.0
      %966 = vmatprep.subr.mxu0 0.0
      %967 = vmatpush1.msra.mxu0 0.0
      %968 = vmatprep.subr.mxu0 0.0
      %969 = vmatpush1.msra.mxu0 0.0
      %970 = vmatprep.subr.mxu0 0.0
      %v971 = vand.u32 %v367, 4294901760
      %972 = vmatpush1.msra.mxu0 %v971
      %973 = vmatprep.subr.mxu0 0.0
      %974 = vmatpush2.msra.mxu0 0.0
      %975 = vmatprep.subr.mxu0 0.0
      %976 = vmatpush2.msra.mxu0 0.0
      %977 = vmatprep.subr.mxu0 0.0
      %978 = vmatpush2.msra.mxu0 0.0
      %979 = vmatprep.subr.mxu0 0.0
      %980 = vmatpush2.msra.mxu0 0.0
      %981 = vmatprep.subr.mxu0 0.0
      %982 = vmatpush2.msra.mxu0 0.0
      %983 = vmatprep.subr.mxu0 0.0
      %984 = vmatpush2.msra.mxu0 0.0
      %985 = vmatprep.subr.mxu0 0.0
      %986 = vmatpush2.msra.mxu0 0.0
      %987 = vmatprep.subr.mxu0 0.0
      %988 = vmatpush2.msra.mxu0 0.0
      %989 = vmatprep.subr.mxu0 0.0
      %990 = vmatpush2.msra.mxu0 0.0
      %991 = vmatprep.subr.mxu0 0.0
      %992 = vmatpush2.msra.mxu0 0.0
      %993 = vmatprep.subr.mxu0 0.0
      %994 = vmatpush2.msra.mxu0 0.0
      %995 = vmatprep.subr.mxu0 0.0
      %996 = vmatpush2.msra.mxu0 0.0
      %997 = vmatprep.subr.mxu0 0.0
      %998 = vmatpush2.msra.mxu0 0.0
      %999 = vmatprep.subr.mxu0 0.0
      %1000 = vmatpush2.msra.mxu0 0.0
      %1001 = vmatprep.subr.mxu0 0.0
      %1002 = vmatpush2.msra.mxu0 0.0
      %1003 = vmatprep.subr.mxu0 0.0
      %1004 = vmatpush2.msra.mxu0 0.0
      %1005 = vmatprep.mubr.f32.mxu0 0.0
      %v1006 = vand.u32 %v318, 4294901760
      %v1007 = vsub.f32 %v318, %v1006
      %v1008 = vand.u32 %v1007, 4294901760
      %1009 = vmatmul.mubr.f32.gmra.mxu0 %v1008
      %v1010 = vpop.f32.mrf.mxu0
      %v1011 = vadd.f32 %v832, %v1010
      %v1012 = vpop.f32.mrf.mxu0
      %1013 = vmatprep.mubr.f32.mxu0 0.0
      %v1014 = vand.u32 %v321, 4294901760
      %v1015 = vsub.f32 %v321, %v1014
      %v1016 = vand.u32 %v1015, 4294901760
      %1017 = vmatmul.mubr.f32.gmra.mxu0 %v1016
      %v1018 = vpop.f32.mrf.mxu0
      %v1019 = vadd.f32 %v839, %v1018
      %v1020 = vpop.f32.mrf.mxu0
      %1021 = vmatprep.mubr.f32.mxu0 0.0
      %v1022 = vand.u32 %v324, 4294901760
      %v1023 = vsub.f32 %v324, %v1022
      %v1024 = vand.u32 %v1023, 4294901760
      %1025 = vmatmul.mubr.f32.gmra.mxu0 %v1024
      %v1026 = vpop.f32.mrf.mxu0
      %v1027 = vadd.f32 %v846, %v1026
      %v1028 = vpop.f32.mrf.mxu0
      %1029 = vmatprep.mubr.f32.mxu0 0.0
      %v1030 = vand.u32 %v327, 4294901760
      %v1031 = vsub.f32 %v327, %v1030
      %v1032 = vand.u32 %v1031, 4294901760
      %1033 = vmatmul.mubr.f32.gmra.mxu0 %v1032
      %v1034 = vpop.f32.mrf.mxu0
      %v1035 = vadd.f32 %v853, %v1034
      %v1036 = vpop.f32.mrf.mxu0
      %1037 = vmatprep.mubr.f32.mxu0 0.0
      %v1038 = vand.u32 %v330, 4294901760
      %v1039 = vsub.f32 %v330, %v1038
      %v1040 = vand.u32 %v1039, 4294901760
      %1041 = vmatmul.mubr.f32.gmra.mxu0 %v1040
      %v1042 = vpop.f32.mrf.mxu0
      %v1043 = vadd.f32 %v860, %v1042
      %v1044 = vpop.f32.mrf.mxu0
      %1045 = vmatprep.mubr.f32.mxu0 0.0
      %v1046 = vand.u32 %v333, 4294901760
      %v1047 = vsub.f32 %v333, %v1046
      %v1048 = vand.u32 %v1047, 4294901760
      %1049 = vmatmul.mubr.f32.gmra.mxu0 %v1048
      %v1050 = vpop.f32.mrf.mxu0
      %v1051 = vadd.f32 %v867, %v1050
      %v1052 = vpop.f32.mrf.mxu0
      %1053 = vmatprep.mubr.f32.mxu0 0.0
      %v1054 = vand.u32 %v336, 4294901760
      %v1055 = vsub.f32 %v336, %v1054
      %v1056 = vand.u32 %v1055, 4294901760
      %1057 = vmatmul.mubr.f32.gmra.mxu0 %v1056
      %v1058 = vpop.f32.mrf.mxu0
      %v1059 = vadd.f32 %v874, %v1058
      %v1060 = vpop.f32.mrf.mxu0
      %1061 = vmatprep.mubr.f32.mxu0 0.0
      %v1062 = vand.u32 %v339, 4294901760
      %v1063 = vsub.f32 %v339, %v1062
      %v1064 = vand.u32 %v1063, 4294901760
      %1065 = vmatmul.mubr.f32.gmra.mxu0 %v1064
      %v1066 = vpop.f32.mrf.mxu0
      %v1067 = vadd.f32 %v881, %v1066
      %v1068 = vpop.f32.mrf.mxu0
      %1069 = vmatprep.mubr.f32.mxu0 0.0
      %v1070 = vand.u32 %v342, 4294901760
      %v1071 = vsub.f32 %v342, %v1070
      %v1072 = vand.u32 %v1071, 4294901760
      %1073 = vmatmul.mubr.f32.gmra.mxu0 %v1072
      %v1074 = vpop.f32.mrf.mxu0
      %v1075 = vadd.f32 %v888, %v1074
      %v1076 = vpop.f32.mrf.mxu0
      %1077 = vmatprep.mubr.f32.mxu0 0.0
      %v1078 = vand.u32 %v345, 4294901760
      %v1079 = vsub.f32 %v345, %v1078
      %v1080 = vand.u32 %v1079, 4294901760
      %1081 = vmatmul.mubr.f32.gmra.mxu0 %v1080
      %v1082 = vpop.f32.mrf.mxu0
      %v1083 = vadd.f32 %v895, %v1082
      %v1084 = vpop.f32.mrf.mxu0
      %1085 = vmatprep.mubr.f32.mxu0 0.0
      %v1086 = vand.u32 %v348, 4294901760
      %v1087 = vsub.f32 %v348, %v1086
      %v1088 = vand.u32 %v1087, 4294901760
      %1089 = vmatmul.mubr.f32.gmra.mxu0 %v1088
      %v1090 = vpop.f32.mrf.mxu0
      %v1091 = vadd.f32 %v902, %v1090
      %v1092 = vpop.f32.mrf.mxu0
      %1093 = vmatprep.mubr.f32.mxu0 0.0
      %v1094 = vand.u32 %v351, 4294901760
      %v1095 = vsub.f32 %v351, %v1094
      %v1096 = vand.u32 %v1095, 4294901760
      %1097 = vmatmul.mubr.f32.gmra.mxu0 %v1096
      %v1098 = vpop.f32.mrf.mxu0
      %v1099 = vadd.f32 %v909, %v1098
      %v1100 = vpop.f32.mrf.mxu0
      %1101 = vmatprep.mubr.f32.mxu0 0.0
      %v1102 = vand.u32 %v354, 4294901760
      %v1103 = vsub.f32 %v354, %v1102
      %v1104 = vand.u32 %v1103, 4294901760
      %1105 = vmatmul.mubr.f32.gmra.mxu0 %v1104
      %v1106 = vpop.f32.mrf.mxu0
      %v1107 = vadd.f32 %v916, %v1106
      %v1108 = vpop.f32.mrf.mxu0
      %1109 = vmatprep.mubr.f32.mxu0 0.0
      %v1110 = vand.u32 %v357, 4294901760
      %v1111 = vsub.f32 %v357, %v1110
      %v1112 = vand.u32 %v1111, 4294901760
      %1113 = vmatmul.mubr.f32.gmra.mxu0 %v1112
      %v1114 = vpop.f32.mrf.mxu0
      %v1115 = vadd.f32 %v923, %v1114
      %v1116 = vpop.f32.mrf.mxu0
      %1117 = vmatprep.mubr.f32.mxu0 0.0
      %v1118 = vand.u32 %v360, 4294901760
      %v1119 = vsub.f32 %v360, %v1118
      %v1120 = vand.u32 %v1119, 4294901760
      %1121 = vmatmul.mubr.f32.gmra.mxu0 %v1120
      %v1122 = vpop.f32.mrf.mxu0
      %v1123 = vadd.f32 %v930, %v1122
      %v1124 = vpop.f32.mrf.mxu0
      %1125 = vmatprep.mubr.f32.mxu0 0.0
      %v1126 = vand.u32 %v363, 4294901760
      %v1127 = vsub.f32 %v363, %v1126
      %v1128 = vand.u32 %v1127, 4294901760
      %1129 = vmatmul.mubr.f32.gmra.mxu0 %v1128
      %v1130 = vpop.f32.mrf.mxu0
      %v1131 = vadd.f32 %v937, %v1130
      %v1132 = vpop.f32.mrf.mxu0
      %1133 = vdwg.mxu0
      %1134 = vmatprep.subr.mxu0 0.0
      %1135 = vmatpush1.msra.mxu0 0.0
      %1136 = vmatprep.subr.mxu0 0.0
      %1137 = vmatpush1.msra.mxu0 0.0
      %1138 = vmatprep.subr.mxu0 0.0
      %1139 = vmatpush1.msra.mxu0 0.0
      %1140 = vmatprep.subr.mxu0 0.0
      %1141 = vmatpush1.msra.mxu0 0.0
      %1142 = vmatprep.subr.mxu0 0.0
      %1143 = vmatpush1.msra.mxu0 0.0
      %1144 = vmatprep.subr.mxu0 0.0
      %1145 = vmatpush1.msra.mxu0 0.0
      %1146 = vmatprep.subr.mxu0 0.0
      %1147 = vmatpush1.msra.mxu0 0.0
      %1148 = vmatprep.subr.mxu0 0.0
      %1149 = vmatpush1.msra.mxu0 0.0
      %1150 = vmatprep.subr.mxu0 0.0
      %1151 = vmatpush1.msra.mxu0 0.0
      %1152 = vmatprep.subr.mxu0 0.0
      %1153 = vmatpush1.msra.mxu0 0.0
      %1154 = vmatprep.subr.mxu0 0.0
      %1155 = vmatpush1.msra.mxu0 0.0
      %1156 = vmatprep.subr.mxu0 0.0
      %1157 = vmatpush1.msra.mxu0 0.0
      %1158 = vmatprep.subr.mxu0 0.0
      %1159 = vmatpush1.msra.mxu0 0.0
      %1160 = vmatprep.subr.mxu0 0.0
      %1161 = vmatpush1.msra.mxu0 0.0
      %1162 = vmatprep.subr.mxu0 0.0
      %1163 = vmatpush1.msra.mxu0 0.0
      %1164 = vmatprep.subr.mxu0 0.0
      %v1165 = vand.u32 %v367, 4294901760
      %v1166 = vsub.f32 %v367, %v1165
      %v1167 = vand.u32 %v1166, 4294901760
      %1168 = vmatpush1.msra.mxu0 %v1167
      %1169 = vmatprep.subr.mxu0 0.0
      %1170 = vmatpush2.msra.mxu0 0.0
      %1171 = vmatprep.subr.mxu0 0.0
      %1172 = vmatpush2.msra.mxu0 0.0
      %1173 = vmatprep.subr.mxu0 0.0
      %1174 = vmatpush2.msra.mxu0 0.0
      %1175 = vmatprep.subr.mxu0 0.0
      %1176 = vmatpush2.msra.mxu0 0.0
      %1177 = vmatprep.subr.mxu0 0.0
      %1178 = vmatpush2.msra.mxu0 0.0
      %1179 = vmatprep.subr.mxu0 0.0
      %1180 = vmatpush2.msra.mxu0 0.0
      %1181 = vmatprep.subr.mxu0 0.0
      %1182 = vmatpush2.msra.mxu0 0.0
      %1183 = vmatprep.subr.mxu0 0.0
      %1184 = vmatpush2.msra.mxu0 0.0
      %1185 = vmatprep.subr.mxu0 0.0
      %1186 = vmatpush2.msra.mxu0 0.0
      %1187 = vmatprep.subr.mxu0 0.0
      %1188 = vmatpush2.msra.mxu0 0.0
      %1189 = vmatprep.subr.mxu0 0.0
      %1190 = vmatpush2.msra.mxu0 0.0
      %1191 = vmatprep.subr.mxu0 0.0
      %1192 = vmatpush2.msra.mxu0 0.0
      %1193 = vmatprep.subr.mxu0 0.0
      %1194 = vmatpush2.msra.mxu0 0.0
      %1195 = vmatprep.subr.mxu0 0.0
      %1196 = vmatpush2.msra.mxu0 0.0
      %1197 = vmatprep.subr.mxu0 0.0
      %1198 = vmatpush2.msra.mxu0 0.0
      %1199 = vmatprep.subr.mxu0 0.0
      %1200 = vmatpush2.msra.mxu0 0.0
      %1201 = vmatprep.mubr.f32.mxu0 0.0
      %v1202 = vand.u32 %v318, 4294901760
      %1203 = vmatmul.mubr.f32.gmra.mxu0 %v1202
      %v1204 = vpop.f32.mrf.mxu0
      %v1205 = vadd.f32 %v1011, %v1204
      %v1206 = vpop.f32.mrf.mxu0
      %1207 = vmatprep.mubr.f32.mxu0 0.0
      %v1208 = vand.u32 %v321, 4294901760
      %1209 = vmatmul.mubr.f32.gmra.mxu0 %v1208
      %v1210 = vpop.f32.mrf.mxu0
      %v1211 = vadd.f32 %v1019, %v1210
      %v1212 = vpop.f32.mrf.mxu0
      %1213 = vmatprep.mubr.f32.mxu0 0.0
      %v1214 = vand.u32 %v324, 4294901760
      %1215 = vmatmul.mubr.f32.gmra.mxu0 %v1214
      %v1216 = vpop.f32.mrf.mxu0
      %v1217 = vadd.f32 %v1027, %v1216
      %v1218 = vpop.f32.mrf.mxu0
      %1219 = vmatprep.mubr.f32.mxu0 0.0
      %v1220 = vand.u32 %v327, 4294901760
      %1221 = vmatmul.mubr.f32.gmra.mxu0 %v1220
      %v1222 = vpop.f32.mrf.mxu0
      %v1223 = vadd.f32 %v1035, %v1222
      %v1224 = vpop.f32.mrf.mxu0
      %1225 = vmatprep.mubr.f32.mxu0 0.0
      %v1226 = vand.u32 %v330, 4294901760
      %1227 = vmatmul.mubr.f32.gmra.mxu0 %v1226
      %v1228 = vpop.f32.mrf.mxu0
      %v1229 = vadd.f32 %v1043, %v1228
      %v1230 = vpop.f32.mrf.mxu0
      %1231 = vmatprep.mubr.f32.mxu0 0.0
      %v1232 = vand.u32 %v333, 4294901760
      %1233 = vmatmul.mubr.f32.gmra.mxu0 %v1232
      %v1234 = vpop.f32.mrf.mxu0
      %v1235 = vadd.f32 %v1051, %v1234
      %v1236 = vpop.f32.mrf.mxu0
      %1237 = vmatprep.mubr.f32.mxu0 0.0
      %v1238 = vand.u32 %v336, 4294901760
      %1239 = vmatmul.mubr.f32.gmra.mxu0 %v1238
      %v1240 = vpop.f32.mrf.mxu0
      %v1241 = vadd.f32 %v1059, %v1240
      %v1242 = vpop.f32.mrf.mxu0
      %1243 = vmatprep.mubr.f32.mxu0 0.0
      %v1244 = vand.u32 %v339, 4294901760
      %1245 = vmatmul.mubr.f32.gmra.mxu0 %v1244
      %v1246 = vpop.f32.mrf.mxu0
      %v1247 = vadd.f32 %v1067, %v1246
      %v1248 = vpop.f32.mrf.mxu0
      %1249 = vmatprep.mubr.f32.mxu0 0.0
      %v1250 = vand.u32 %v342, 4294901760
      %1251 = vmatmul.mubr.f32.gmra.mxu0 %v1250
      %v1252 = vpop.f32.mrf.mxu0
      %v1253 = vadd.f32 %v1075, %v1252
      %v1254 = vpop.f32.mrf.mxu0
      %1255 = vmatprep.mubr.f32.mxu0 0.0
      %v1256 = vand.u32 %v345, 4294901760
      %1257 = vmatmul.mubr.f32.gmra.mxu0 %v1256
      %v1258 = vpop.f32.mrf.mxu0
      %v1259 = vadd.f32 %v1083, %v1258
      %v1260 = vpop.f32.mrf.mxu0
      %1261 = vmatprep.mubr.f32.mxu0 0.0
      %v1262 = vand.u32 %v348, 4294901760
      %1263 = vmatmul.mubr.f32.gmra.mxu0 %v1262
      %v1264 = vpop.f32.mrf.mxu0
      %v1265 = vadd.f32 %v1091, %v1264
      %v1266 = vpop.f32.mrf.mxu0
      %1267 = vmatprep.mubr.f32.mxu0 0.0
      %v1268 = vand.u32 %v351, 4294901760
      %1269 = vmatmul.mubr.f32.gmra.mxu0 %v1268
      %v1270 = vpop.f32.mrf.mxu0
      %v1271 = vadd.f32 %v1099, %v1270
      %v1272 = vpop.f32.mrf.mxu0
      %1273 = vmatprep.mubr.f32.mxu0 0.0
      %v1274 = vand.u32 %v354, 4294901760
      %1275 = vmatmul.mubr.f32.gmra.mxu0 %v1274
      %v1276 = vpop.f32.mrf.mxu0
      %v1277 = vadd.f32 %v1107, %v1276
      %v1278 = vpop.f32.mrf.mxu0
      %1279 = vmatprep.mubr.f32.mxu0 0.0
      %v1280 = vand.u32 %v357, 4294901760
      %1281 = vmatmul.mubr.f32.gmra.mxu0 %v1280
      %v1282 = vpop.f32.mrf.mxu0
      %v1283 = vadd.f32 %v1115, %v1282
      %v1284 = vpop.f32.mrf.mxu0
      %1285 = vmatprep.mubr.f32.mxu0 0.0
      %v1286 = vand.u32 %v360, 4294901760
      %1287 = vmatmul.mubr.f32.gmra.mxu0 %v1286
      %v1288 = vpop.f32.mrf.mxu0
      %v1289 = vadd.f32 %v1123, %v1288
      %v1290 = vpop.f32.mrf.mxu0
      %1291 = vmatprep.mubr.f32.mxu0 0.0
      %v1292 = vand.u32 %v363, 4294901760
      %1293 = vmatmul.mubr.f32.gmra.mxu0 %v1292
      %v1294 = vpop.f32.mrf.mxu0
      %v1295 = vadd.f32 %v1131, %v1294
      %v1296 = vpop.f32.mrf.mxu0
      %1297 = vdwg.mxu0
      %1298 = vmatprep.subr.mxu0 0.0
      %1299 = vmatpush1.msra.mxu0 0.0
      %1300 = vmatprep.subr.mxu0 0.0
      %1301 = vmatpush1.msra.mxu0 0.0
      %1302 = vmatprep.subr.mxu0 0.0
      %1303 = vmatpush1.msra.mxu0 0.0
      %1304 = vmatprep.subr.mxu0 0.0
      %1305 = vmatpush1.msra.mxu0 0.0
      %1306 = vmatprep.subr.mxu0 0.0
      %1307 = vmatpush1.msra.mxu0 0.0
      %1308 = vmatprep.subr.mxu0 0.0
      %1309 = vmatpush1.msra.mxu0 0.0
      %1310 = vmatprep.subr.mxu0 0.0
      %1311 = vmatpush1.msra.mxu0 0.0
      %1312 = vmatprep.subr.mxu0 0.0
      %1313 = vmatpush1.msra.mxu0 0.0
      %1314 = vmatprep.subr.mxu0 0.0
      %1315 = vmatpush1.msra.mxu0 0.0
      %1316 = vmatprep.subr.mxu0 0.0
      %1317 = vmatpush1.msra.mxu0 0.0
      %1318 = vmatprep.subr.mxu0 0.0
      %1319 = vmatpush1.msra.mxu0 0.0
      %1320 = vmatprep.subr.mxu0 0.0
      %1321 = vmatpush1.msra.mxu0 0.0
      %1322 = vmatprep.subr.mxu0 0.0
      %1323 = vmatpush1.msra.mxu0 0.0
      %1324 = vmatprep.subr.mxu0 0.0
      %1325 = vmatpush1.msra.mxu0 0.0
      %1326 = vmatprep.subr.mxu0 0.0
      %1327 = vmatpush1.msra.mxu0 0.0
      %1328 = vmatprep.subr.mxu0 0.0
      %v1329 = vand.u32 %v367, 4294901760
      %1330 = vmatpush1.msra.mxu0 %v1329
      %1331 = vmatprep.subr.mxu0 0.0
      %1332 = vmatpush2.msra.mxu0 0.0
      %1333 = vmatprep.subr.mxu0 0.0
      %1334 = vmatpush2.msra.mxu0 0.0
      %1335 = vmatprep.subr.mxu0 0.0
      %1336 = vmatpush2.msra.mxu0 0.0
      %1337 = vmatprep.subr.mxu0 0.0
      %1338 = vmatpush2.msra.mxu0 0.0
      %1339 = vmatprep.subr.mxu0 0.0
      %1340 = vmatpush2.msra.mxu0 0.0
      %1341 = vmatprep.subr.mxu0 0.0
      %1342 = vmatpush2.msra.mxu0 0.0
      %1343 = vmatprep.subr.mxu0 0.0
      %1344 = vmatpush2.msra.mxu0 0.0
      %1345 = vmatprep.subr.mxu0 0.0
      %1346 = vmatpush2.msra.mxu0 0.0
      %1347 = vmatprep.subr.mxu0 0.0
      %1348 = vmatpush2.msra.mxu0 0.0
      %1349 = vmatprep.subr.mxu0 0.0
      %1350 = vmatpush2.msra.mxu0 0.0
      %1351 = vmatprep.subr.mxu0 0.0
      %1352 = vmatpush2.msra.mxu0 0.0
      %1353 = vmatprep.subr.mxu0 0.0
      %1354 = vmatpush2.msra.mxu0 0.0
      %1355 = vmatprep.subr.mxu0 0.0
      %1356 = vmatpush2.msra.mxu0 0.0
      %1357 = vmatprep.subr.mxu0 0.0
      %1358 = vmatpush2.msra.mxu0 0.0
      %1359 = vmatprep.subr.mxu0 0.0
      %1360 = vmatpush2.msra.mxu0 0.0
      %1361 = vmatprep.subr.mxu0 0.0
      %1362 = vmatpush2.msra.mxu0 0.0
      %1363 = vmatprep.mubr.f32.mxu0 0.0
      %v1364 = vand.u32 %v318, 4294901760
      %1365 = vmatmul.mubr.f32.gmra.mxu0 %v1364
      %v1366 = vpop.f32.mrf.mxu0
      %v1367 = vadd.f32 %v1205, %v1366
      %v1368 = vpop.f32.mrf.mxu0
      %1369 = vmatprep.mubr.f32.mxu0 0.0
      %v1370 = vand.u32 %v321, 4294901760
      %1371 = vmatmul.mubr.f32.gmra.mxu0 %v1370
      %v1372 = vpop.f32.mrf.mxu0
      %v1373 = vadd.f32 %v1211, %v1372
      %v1374 = vpop.f32.mrf.mxu0
      %1375 = vmatprep.mubr.f32.mxu0 0.0
      %v1376 = vand.u32 %v324, 4294901760
      %1377 = vmatmul.mubr.f32.gmra.mxu0 %v1376
      %v1378 = vpop.f32.mrf.mxu0
      %v1379 = vadd.f32 %v1217, %v1378
      %v1380 = vpop.f32.mrf.mxu0
      %1381 = vmatprep.mubr.f32.mxu0 0.0
      %v1382 = vand.u32 %v327, 4294901760
      %1383 = vmatmul.mubr.f32.gmra.mxu0 %v1382
      %v1384 = vpop.f32.mrf.mxu0
      %v1385 = vadd.f32 %v1223, %v1384
      %v1386 = vpop.f32.mrf.mxu0
      %1387 = vmatprep.mubr.f32.mxu0 0.0
      %v1388 = vand.u32 %v330, 4294901760
      %1389 = vmatmul.mubr.f32.gmra.mxu0 %v1388
      %v1390 = vpop.f32.mrf.mxu0
      %v1391 = vadd.f32 %v1229, %v1390
      %v1392 = vpop.f32.mrf.mxu0
      %1393 = vmatprep.mubr.f32.mxu0 0.0
      %v1394 = vand.u32 %v333, 4294901760
      %1395 = vmatmul.mubr.f32.gmra.mxu0 %v1394
      %v1396 = vpop.f32.mrf.mxu0
      %v1397 = vadd.f32 %v1235, %v1396
      %v1398 = vpop.f32.mrf.mxu0
      %1399 = vmatprep.mubr.f32.mxu0 0.0
      %v1400 = vand.u32 %v336, 4294901760
      %1401 = vmatmul.mubr.f32.gmra.mxu0 %v1400
      %v1402 = vpop.f32.mrf.mxu0
      %v1403 = vadd.f32 %v1241, %v1402
      %v1404 = vpop.f32.mrf.mxu0
      %1405 = vmatprep.mubr.f32.mxu0 0.0
      %v1406 = vand.u32 %v339, 4294901760
      %1407 = vmatmul.mubr.f32.gmra.mxu0 %v1406
      %v1408 = vpop.f32.mrf.mxu0
      %v1409 = vadd.f32 %v1247, %v1408
      %v1410 = vpop.f32.mrf.mxu0
      %1411 = vmatprep.mubr.f32.mxu0 0.0
      %v1412 = vand.u32 %v342, 4294901760
      %1413 = vmatmul.mubr.f32.gmra.mxu0 %v1412
      %v1414 = vpop.f32.mrf.mxu0
      %v1415 = vadd.f32 %v1253, %v1414
      %v1416 = vpop.f32.mrf.mxu0
      %1417 = vmatprep.mubr.f32.mxu0 0.0
      %v1418 = vand.u32 %v345, 4294901760
      %1419 = vmatmul.mubr.f32.gmra.mxu0 %v1418
      %v1420 = vpop.f32.mrf.mxu0
      %v1421 = vadd.f32 %v1259, %v1420
      %v1422 = vpop.f32.mrf.mxu0
      %1423 = vmatprep.mubr.f32.mxu0 0.0
      %v1424 = vand.u32 %v348, 4294901760
      %1425 = vmatmul.mubr.f32.gmra.mxu0 %v1424
      %v1426 = vpop.f32.mrf.mxu0
      %v1427 = vadd.f32 %v1265, %v1426
      %v1428 = vpop.f32.mrf.mxu0
      %1429 = vmatprep.mubr.f32.mxu0 0.0
      %v1430 = vand.u32 %v351, 4294901760
      %1431 = vmatmul.mubr.f32.gmra.mxu0 %v1430
      %v1432 = vpop.f32.mrf.mxu0
      %v1433 = vadd.f32 %v1271, %v1432
      %v1434 = vpop.f32.mrf.mxu0
      %1435 = vmatprep.mubr.f32.mxu0 0.0
      %v1436 = vand.u32 %v354, 4294901760
      %1437 = vmatmul.mubr.f32.gmra.mxu0 %v1436
      %v1438 = vpop.f32.mrf.mxu0
      %v1439 = vadd.f32 %v1277, %v1438
      %v1440 = vpop.f32.mrf.mxu0
      %1441 = vmatprep.mubr.f32.mxu0 0.0
      %v1442 = vand.u32 %v357, 4294901760
      %1443 = vmatmul.mubr.f32.gmra.mxu0 %v1442
      %v1444 = vpop.f32.mrf.mxu0
      %v1445 = vadd.f32 %v1283, %v1444
      %v1446 = vpop.f32.mrf.mxu0
      %1447 = vmatprep.mubr.f32.mxu0 0.0
      %v1448 = vand.u32 %v360, 4294901760
      %1449 = vmatmul.mubr.f32.gmra.mxu0 %v1448
      %v1450 = vpop.f32.mrf.mxu0
      %v1451 = vadd.f32 %v1289, %v1450
      %v1452 = vpop.f32.mrf.mxu0
      %1453 = vmatprep.mubr.f32.mxu0 0.0
      %v1454 = vand.u32 %v363, 4294901760
      %1455 = vmatmul.mubr.f32.gmra.mxu0 %v1454
      %v1456 = vpop.f32.mrf.mxu0
      %v1457 = vadd.f32 %v1295, %v1456
      %v1458 = vpop.f32.mrf.mxu0
      %1459 = vdwg.mxu0
      %v1461 = vsel %vm316, %v281, 0
      %v1464 = vsel %vm316, %v282, 0
      %v1467 = vsel %vm316, %v283, 0
      %v1470 = vsel %vm316, %v284, 0
      %v1473 = vsel %vm316, %v285, 0
      %v1476 = vsel %vm316, %v286, 0
      %v1479 = vsel %vm316, %v287, 0
      %v1482 = vsel %vm316, %v288, 0
      %v1485 = vsel %vm316, %v289, 0
      %v1488 = vsel %vm316, %v290, 0
      %v1491 = vsel %vm316, %v291, 0
      %v1494 = vsel %vm316, %v292, 0
      %v1497 = vsel %vm316, %v293, 0
      %v1500 = vsel %vm316, %v294, 0
      %v1503 = vsel %vm316, %v295, 0
      %v1506 = vsel %vm316, %v296, 0
      %v1509 = vsel %vm365, %v297, 0
      %1511 = vmatprep.subr.mxu0 0.0
      %1512 = vmatpush1.msra.mxu0 0.0
      %1513 = vmatprep.subr.mxu0 0.0
      %1514 = vmatpush1.msra.mxu0 0.0
      %1515 = vmatprep.subr.mxu0 0.0
      %1516 = vmatpush1.msra.mxu0 0.0
      %1517 = vmatprep.subr.mxu0 0.0
      %1518 = vmatpush1.msra.mxu0 0.0
      %1519 = vmatprep.subr.mxu0 0.0
      %1520 = vmatpush1.msra.mxu0 0.0
      %1521 = vmatprep.subr.mxu0 0.0
      %1522 = vmatpush1.msra.mxu0 0.0
      %1523 = vmatprep.subr.mxu0 0.0
      %1524 = vmatpush1.msra.mxu0 0.0
      %1525 = vmatprep.subr.mxu0 0.0
      %1526 = vmatpush1.msra.mxu0 0.0
      %1527 = vmatprep.subr.mxu0 0.0
      %1528 = vmatpush1.msra.mxu0 0.0
      %1529 = vmatprep.subr.mxu0 0.0
      %1530 = vmatpush1.msra.mxu0 0.0
      %1531 = vmatprep.subr.mxu0 0.0
      %1532 = vmatpush1.msra.mxu0 0.0
      %1533 = vmatprep.subr.mxu0 0.0
      %1534 = vmatpush1.msra.mxu0 0.0
      %1535 = vmatprep.subr.mxu0 0.0
      %1536 = vmatpush1.msra.mxu0 0.0
      %1537 = vmatprep.subr.mxu0 0.0
      %1538 = vmatpush1.msra.mxu0 0.0
      %1539 = vmatprep.subr.mxu0 0.0
      %1540 = vmatpush1.msra.mxu0 0.0
      %1541 = vmatprep.subr.mxu0 0.0
      %v1542 = vand.u32 %v1509, 4294901760
      %1543 = vmatpush1.msra.mxu0 %v1542
      %1544 = vmatprep.subr.mxu0 0.0
      %1545 = vmatpush2.msra.mxu0 0.0
      %1546 = vmatprep.subr.mxu0 0.0
      %1547 = vmatpush2.msra.mxu0 0.0
      %1548 = vmatprep.subr.mxu0 0.0
      %1549 = vmatpush2.msra.mxu0 0.0
      %1550 = vmatprep.subr.mxu0 0.0
      %1551 = vmatpush2.msra.mxu0 0.0
      %1552 = vmatprep.subr.mxu0 0.0
      %1553 = vmatpush2.msra.mxu0 0.0
      %1554 = vmatprep.subr.mxu0 0.0
      %1555 = vmatpush2.msra.mxu0 0.0
      %1556 = vmatprep.subr.mxu0 0.0
      %1557 = vmatpush2.msra.mxu0 0.0
      %1558 = vmatprep.subr.mxu0 0.0
      %1559 = vmatpush2.msra.mxu0 0.0
      %1560 = vmatprep.subr.mxu0 0.0
      %1561 = vmatpush2.msra.mxu0 0.0
      %1562 = vmatprep.subr.mxu0 0.0
      %1563 = vmatpush2.msra.mxu0 0.0
      %1564 = vmatprep.subr.mxu0 0.0
      %1565 = vmatpush2.msra.mxu0 0.0
      %1566 = vmatprep.subr.mxu0 0.0
      %1567 = vmatpush2.msra.mxu0 0.0
      %1568 = vmatprep.subr.mxu0 0.0
      %1569 = vmatpush2.msra.mxu0 0.0
      %1570 = vmatprep.subr.mxu0 0.0
      %1571 = vmatpush2.msra.mxu0 0.0
      %1572 = vmatprep.subr.mxu0 0.0
      %1573 = vmatpush2.msra.mxu0 0.0
      %1574 = vmatprep.subr.mxu0 0.0
      %1575 = vmatpush2.msra.mxu0 0.0
      %1576 = vmatprep.mubr.f32.mxu0 0.0
      %v1577 = vand.u32 %v1461, 4294901760
      %v1578 = vsub.f32 %v1461, %v1577
      %v1579 = vand.u32 %v1578, 4294901760
      %v1580 = vsub.f32 %v1578, %v1579
      %v1581 = vand.u32 %v1580, 4294901760
      %1582 = vmatmul.mubr.f32.gmra.mxu0 %v1581
      %v1583 = vpop.f32.mrf.mxu0
      %v1584 = vadd.f32 %v1367, %v1583
      %v1585 = vpop.f32.mrf.mxu0
      %1586 = vmatprep.mubr.f32.mxu0 0.0
      %v1587 = vand.u32 %v1464, 4294901760
      %v1588 = vsub.f32 %v1464, %v1587
      %v1589 = vand.u32 %v1588, 4294901760
      %v1590 = vsub.f32 %v1588, %v1589
      %v1591 = vand.u32 %v1590, 4294901760
      %1592 = vmatmul.mubr.f32.gmra.mxu0 %v1591
      %v1593 = vpop.f32.mrf.mxu0
      %v1594 = vadd.f32 %v1373, %v1593
      %v1595 = vpop.f32.mrf.mxu0
      %1596 = vmatprep.mubr.f32.mxu0 0.0
      %v1597 = vand.u32 %v1467, 4294901760
      %v1598 = vsub.f32 %v1467, %v1597
      %v1599 = vand.u32 %v1598, 4294901760
      %v1600 = vsub.f32 %v1598, %v1599
      %v1601 = vand.u32 %v1600, 4294901760
      %1602 = vmatmul.mubr.f32.gmra.mxu0 %v1601
      %v1603 = vpop.f32.mrf.mxu0
      %v1604 = vadd.f32 %v1379, %v1603
      %v1605 = vpop.f32.mrf.mxu0
      %1606 = vmatprep.mubr.f32.mxu0 0.0
      %v1607 = vand.u32 %v1470, 4294901760
      %v1608 = vsub.f32 %v1470, %v1607
      %v1609 = vand.u32 %v1608, 4294901760
      %v1610 = vsub.f32 %v1608, %v1609
      %v1611 = vand.u32 %v1610, 4294901760
      %1612 = vmatmul.mubr.f32.gmra.mxu0 %v1611
      %v1613 = vpop.f32.mrf.mxu0
      %v1614 = vadd.f32 %v1385, %v1613
      %v1615 = vpop.f32.mrf.mxu0
      %1616 = vmatprep.mubr.f32.mxu0 0.0
      %v1617 = vand.u32 %v1473, 4294901760
      %v1618 = vsub.f32 %v1473, %v1617
      %v1619 = vand.u32 %v1618, 4294901760
      %v1620 = vsub.f32 %v1618, %v1619
      %v1621 = vand.u32 %v1620, 4294901760
      %1622 = vmatmul.mubr.f32.gmra.mxu0 %v1621
      %v1623 = vpop.f32.mrf.mxu0
      %v1624 = vadd.f32 %v1391, %v1623
      %v1625 = vpop.f32.mrf.mxu0
      %1626 = vmatprep.mubr.f32.mxu0 0.0
      %v1627 = vand.u32 %v1476, 4294901760
      %v1628 = vsub.f32 %v1476, %v1627
      %v1629 = vand.u32 %v1628, 4294901760
      %v1630 = vsub.f32 %v1628, %v1629
      %v1631 = vand.u32 %v1630, 4294901760
      %1632 = vmatmul.mubr.f32.gmra.mxu0 %v1631
      %v1633 = vpop.f32.mrf.mxu0
      %v1634 = vadd.f32 %v1397, %v1633
      %v1635 = vpop.f32.mrf.mxu0
      %1636 = vmatprep.mubr.f32.mxu0 0.0
      %v1637 = vand.u32 %v1479, 4294901760
      %v1638 = vsub.f32 %v1479, %v1637
      %v1639 = vand.u32 %v1638, 4294901760
      %v1640 = vsub.f32 %v1638, %v1639
      %v1641 = vand.u32 %v1640, 4294901760
      %1642 = vmatmul.mubr.f32.gmra.mxu0 %v1641
      %v1643 = vpop.f32.mrf.mxu0
      %v1644 = vadd.f32 %v1403, %v1643
      %v1645 = vpop.f32.mrf.mxu0
      %1646 = vmatprep.mubr.f32.mxu0 0.0
      %v1647 = vand.u32 %v1482, 4294901760
      %v1648 = vsub.f32 %v1482, %v1647
      %v1649 = vand.u32 %v1648, 4294901760
      %v1650 = vsub.f32 %v1648, %v1649
      %v1651 = vand.u32 %v1650, 4294901760
      %1652 = vmatmul.mubr.f32.gmra.mxu0 %v1651
      %v1653 = vpop.f32.mrf.mxu0
      %v1654 = vadd.f32 %v1409, %v1653
      %v1655 = vpop.f32.mrf.mxu0
      %1656 = vmatprep.mubr.f32.mxu0 0.0
      %v1657 = vand.u32 %v1485, 4294901760
      %v1658 = vsub.f32 %v1485, %v1657
      %v1659 = vand.u32 %v1658, 4294901760
      %v1660 = vsub.f32 %v1658, %v1659
      %v1661 = vand.u32 %v1660, 4294901760
      %1662 = vmatmul.mubr.f32.gmra.mxu0 %v1661
      %v1663 = vpop.f32.mrf.mxu0
      %v1664 = vadd.f32 %v1415, %v1663
      %v1665 = vpop.f32.mrf.mxu0
      %1666 = vmatprep.mubr.f32.mxu0 0.0
      %v1667 = vand.u32 %v1488, 4294901760
      %v1668 = vsub.f32 %v1488, %v1667
      %v1669 = vand.u32 %v1668, 4294901760
      %v1670 = vsub.f32 %v1668, %v1669
      %v1671 = vand.u32 %v1670, 4294901760
      %1672 = vmatmul.mubr.f32.gmra.mxu0 %v1671
      %v1673 = vpop.f32.mrf.mxu0
      %v1674 = vadd.f32 %v1421, %v1673
      %v1675 = vpop.f32.mrf.mxu0
      %1676 = vmatprep.mubr.f32.mxu0 0.0
      %v1677 = vand.u32 %v1491, 4294901760
      %v1678 = vsub.f32 %v1491, %v1677
      %v1679 = vand.u32 %v1678, 4294901760
      %v1680 = vsub.f32 %v1678, %v1679
      %v1681 = vand.u32 %v1680, 4294901760
      %1682 = vmatmul.mubr.f32.gmra.mxu0 %v1681
      %v1683 = vpop.f32.mrf.mxu0
      %v1684 = vadd.f32 %v1427, %v1683
      %v1685 = vpop.f32.mrf.mxu0
      %1686 = vmatprep.mubr.f32.mxu0 0.0
      %v1687 = vand.u32 %v1494, 4294901760
      %v1688 = vsub.f32 %v1494, %v1687
      %v1689 = vand.u32 %v1688, 4294901760
      %v1690 = vsub.f32 %v1688, %v1689
      %v1691 = vand.u32 %v1690, 4294901760
      %1692 = vmatmul.mubr.f32.gmra.mxu0 %v1691
      %v1693 = vpop.f32.mrf.mxu0
      %v1694 = vadd.f32 %v1433, %v1693
      %v1695 = vpop.f32.mrf.mxu0
      %1696 = vmatprep.mubr.f32.mxu0 0.0
      %v1697 = vand.u32 %v1497, 4294901760
      %v1698 = vsub.f32 %v1497, %v1697
      %v1699 = vand.u32 %v1698, 4294901760
      %v1700 = vsub.f32 %v1698, %v1699
      %v1701 = vand.u32 %v1700, 4294901760
      %1702 = vmatmul.mubr.f32.gmra.mxu0 %v1701
      %v1703 = vpop.f32.mrf.mxu0
      %v1704 = vadd.f32 %v1439, %v1703
      %v1705 = vpop.f32.mrf.mxu0
      %1706 = vmatprep.mubr.f32.mxu0 0.0
      %v1707 = vand.u32 %v1500, 4294901760
      %v1708 = vsub.f32 %v1500, %v1707
      %v1709 = vand.u32 %v1708, 4294901760
      %v1710 = vsub.f32 %v1708, %v1709
      %v1711 = vand.u32 %v1710, 4294901760
      %1712 = vmatmul.mubr.f32.gmra.mxu0 %v1711
      %v1713 = vpop.f32.mrf.mxu0
      %v1714 = vadd.f32 %v1445, %v1713
      %v1715 = vpop.f32.mrf.mxu0
      %1716 = vmatprep.mubr.f32.mxu0 0.0
      %v1717 = vand.u32 %v1503, 4294901760
      %v1718 = vsub.f32 %v1503, %v1717
      %v1719 = vand.u32 %v1718, 4294901760
      %v1720 = vsub.f32 %v1718, %v1719
      %v1721 = vand.u32 %v1720, 4294901760
      %1722 = vmatmul.mubr.f32.gmra.mxu0 %v1721
      %v1723 = vpop.f32.mrf.mxu0
      %v1724 = vadd.f32 %v1451, %v1723
      %v1725 = vpop.f32.mrf.mxu0
      %1726 = vmatprep.mubr.f32.mxu0 0.0
      %v1727 = vand.u32 %v1506, 4294901760
      %v1728 = vsub.f32 %v1506, %v1727
      %v1729 = vand.u32 %v1728, 4294901760
      %v1730 = vsub.f32 %v1728, %v1729
      %v1731 = vand.u32 %v1730, 4294901760
      %1732 = vmatmul.mubr.f32.gmra.mxu0 %v1731
      %v1733 = vpop.f32.mrf.mxu0
      %v1734 = vadd.f32 %v1457, %v1733
      %v1735 = vpop.f32.mrf.mxu0
      %1736 = vdwg.mxu0
      %1737 = vmatprep.subr.mxu0 0.0
      %1738 = vmatpush1.msra.mxu0 0.0
      %1739 = vmatprep.subr.mxu0 0.0
      %1740 = vmatpush1.msra.mxu0 0.0
      %1741 = vmatprep.subr.mxu0 0.0
      %1742 = vmatpush1.msra.mxu0 0.0
      %1743 = vmatprep.subr.mxu0 0.0
      %1744 = vmatpush1.msra.mxu0 0.0
      %1745 = vmatprep.subr.mxu0 0.0
      %1746 = vmatpush1.msra.mxu0 0.0
      %1747 = vmatprep.subr.mxu0 0.0
      %1748 = vmatpush1.msra.mxu0 0.0
      %1749 = vmatprep.subr.mxu0 0.0
      %1750 = vmatpush1.msra.mxu0 0.0
      %1751 = vmatprep.subr.mxu0 0.0
      %1752 = vmatpush1.msra.mxu0 0.0
      %1753 = vmatprep.subr.mxu0 0.0
      %1754 = vmatpush1.msra.mxu0 0.0
      %1755 = vmatprep.subr.mxu0 0.0
      %1756 = vmatpush1.msra.mxu0 0.0
      %1757 = vmatprep.subr.mxu0 0.0
      %1758 = vmatpush1.msra.mxu0 0.0
      %1759 = vmatprep.subr.mxu0 0.0
      %1760 = vmatpush1.msra.mxu0 0.0
      %1761 = vmatprep.subr.mxu0 0.0
      %1762 = vmatpush1.msra.mxu0 0.0
      %1763 = vmatprep.subr.mxu0 0.0
      %1764 = vmatpush1.msra.mxu0 0.0
      %1765 = vmatprep.subr.mxu0 0.0
      %1766 = vmatpush1.msra.mxu0 0.0
      %1767 = vmatprep.subr.mxu0 0.0
      %v1768 = vand.u32 %v1509, 4294901760
      %v1769 = vsub.f32 %v1509, %v1768
      %v1770 = vand.u32 %v1769, 4294901760
      %v1771 = vsub.f32 %v1769, %v1770
      %v1772 = vand.u32 %v1771, 4294901760
      %1773 = vmatpush1.msra.mxu0 %v1772
      %1774 = vmatprep.subr.mxu0 0.0
      %1775 = vmatpush2.msra.mxu0 0.0
      %1776 = vmatprep.subr.mxu0 0.0
      %1777 = vmatpush2.msra.mxu0 0.0
      %1778 = vmatprep.subr.mxu0 0.0
      %1779 = vmatpush2.msra.mxu0 0.0
      %1780 = vmatprep.subr.mxu0 0.0
      %1781 = vmatpush2.msra.mxu0 0.0
      %1782 = vmatprep.subr.mxu0 0.0
      %1783 = vmatpush2.msra.mxu0 0.0
      %1784 = vmatprep.subr.mxu0 0.0
      %1785 = vmatpush2.msra.mxu0 0.0
      %1786 = vmatprep.subr.mxu0 0.0
      %1787 = vmatpush2.msra.mxu0 0.0
      %1788 = vmatprep.subr.mxu0 0.0
      %1789 = vmatpush2.msra.mxu0 0.0
      %1790 = vmatprep.subr.mxu0 0.0
      %1791 = vmatpush2.msra.mxu0 0.0
      %1792 = vmatprep.subr.mxu0 0.0
      %1793 = vmatpush2.msra.mxu0 0.0
      %1794 = vmatprep.subr.mxu0 0.0
      %1795 = vmatpush2.msra.mxu0 0.0
      %1796 = vmatprep.subr.mxu0 0.0
      %1797 = vmatpush2.msra.mxu0 0.0
      %1798 = vmatprep.subr.mxu0 0.0
      %1799 = vmatpush2.msra.mxu0 0.0
      %1800 = vmatprep.subr.mxu0 0.0
      %1801 = vmatpush2.msra.mxu0 0.0
      %1802 = vmatprep.subr.mxu0 0.0
      %1803 = vmatpush2.msra.mxu0 0.0
      %1804 = vmatprep.subr.mxu0 0.0
      %1805 = vmatpush2.msra.mxu0 0.0
      %1806 = vmatprep.mubr.f32.mxu0 0.0
      %v1807 = vand.u32 %v1461, 4294901760
      %1808 = vmatmul.mubr.f32.gmra.mxu0 %v1807
      %v1809 = vpop.f32.mrf.mxu0
      %v1810 = vadd.f32 %v1584, %v1809
      %v1811 = vpop.f32.mrf.mxu0
      %1812 = vmatprep.mubr.f32.mxu0 0.0
      %v1813 = vand.u32 %v1464, 4294901760
      %1814 = vmatmul.mubr.f32.gmra.mxu0 %v1813
      %v1815 = vpop.f32.mrf.mxu0
      %v1816 = vadd.f32 %v1594, %v1815
      %v1817 = vpop.f32.mrf.mxu0
      %1818 = vmatprep.mubr.f32.mxu0 0.0
      %v1819 = vand.u32 %v1467, 4294901760
      %1820 = vmatmul.mubr.f32.gmra.mxu0 %v1819
      %v1821 = vpop.f32.mrf.mxu0
      %v1822 = vadd.f32 %v1604, %v1821
      %v1823 = vpop.f32.mrf.mxu0
      %1824 = vmatprep.mubr.f32.mxu0 0.0
      %v1825 = vand.u32 %v1470, 4294901760
      %1826 = vmatmul.mubr.f32.gmra.mxu0 %v1825
      %v1827 = vpop.f32.mrf.mxu0
      %v1828 = vadd.f32 %v1614, %v1827
      %v1829 = vpop.f32.mrf.mxu0
      %1830 = vmatprep.mubr.f32.mxu0 0.0
      %v1831 = vand.u32 %v1473, 4294901760
      %1832 = vmatmul.mubr.f32.gmra.mxu0 %v1831
      %v1833 = vpop.f32.mrf.mxu0
      %v1834 = vadd.f32 %v1624, %v1833
      %v1835 = vpop.f32.mrf.mxu0
      %1836 = vmatprep.mubr.f32.mxu0 0.0
      %v1837 = vand.u32 %v1476, 4294901760
      %1838 = vmatmul.mubr.f32.gmra.mxu0 %v1837
      %v1839 = vpop.f32.mrf.mxu0
      %v1840 = vadd.f32 %v1634, %v1839
      %v1841 = vpop.f32.mrf.mxu0
      %1842 = vmatprep.mubr.f32.mxu0 0.0
      %v1843 = vand.u32 %v1479, 4294901760
      %1844 = vmatmul.mubr.f32.gmra.mxu0 %v1843
      %v1845 = vpop.f32.mrf.mxu0
      %v1846 = vadd.f32 %v1644, %v1845
      %v1847 = vpop.f32.mrf.mxu0
      %1848 = vmatprep.mubr.f32.mxu0 0.0
      %v1849 = vand.u32 %v1482, 4294901760
      %1850 = vmatmul.mubr.f32.gmra.mxu0 %v1849
      %v1851 = vpop.f32.mrf.mxu0
      %v1852 = vadd.f32 %v1654, %v1851
      %v1853 = vpop.f32.mrf.mxu0
      %1854 = vmatprep.mubr.f32.mxu0 0.0
      %v1855 = vand.u32 %v1485, 4294901760
      %1856 = vmatmul.mubr.f32.gmra.mxu0 %v1855
      %v1857 = vpop.f32.mrf.mxu0
      %v1858 = vadd.f32 %v1664, %v1857
      %v1859 = vpop.f32.mrf.mxu0
      %1860 = vmatprep.mubr.f32.mxu0 0.0
      %v1861 = vand.u32 %v1488, 4294901760
      %1862 = vmatmul.mubr.f32.gmra.mxu0 %v1861
      %v1863 = vpop.f32.mrf.mxu0
      %v1864 = vadd.f32 %v1674, %v1863
      %v1865 = vpop.f32.mrf.mxu0
      %1866 = vmatprep.mubr.f32.mxu0 0.0
      %v1867 = vand.u32 %v1491, 4294901760
      %1868 = vmatmul.mubr.f32.gmra.mxu0 %v1867
      %v1869 = vpop.f32.mrf.mxu0
      %v1870 = vadd.f32 %v1684, %v1869
      %v1871 = vpop.f32.mrf.mxu0
      %1872 = vmatprep.mubr.f32.mxu0 0.0
      %v1873 = vand.u32 %v1494, 4294901760
      %1874 = vmatmul.mubr.f32.gmra.mxu0 %v1873
      %v1875 = vpop.f32.mrf.mxu0
      %v1876 = vadd.f32 %v1694, %v1875
      %v1877 = vpop.f32.mrf.mxu0
      %1878 = vmatprep.mubr.f32.mxu0 0.0
      %v1879 = vand.u32 %v1497, 4294901760
      %1880 = vmatmul.mubr.f32.gmra.mxu0 %v1879
      %v1881 = vpop.f32.mrf.mxu0
      %v1882 = vadd.f32 %v1704, %v1881
      %v1883 = vpop.f32.mrf.mxu0
      %1884 = vmatprep.mubr.f32.mxu0 0.0
      %v1885 = vand.u32 %v1500, 4294901760
      %1886 = vmatmul.mubr.f32.gmra.mxu0 %v1885
      %v1887 = vpop.f32.mrf.mxu0
      %v1888 = vadd.f32 %v1714, %v1887
      %v1889 = vpop.f32.mrf.mxu0
      %1890 = vmatprep.mubr.f32.mxu0 0.0
      %v1891 = vand.u32 %v1503, 4294901760
      %1892 = vmatmul.mubr.f32.gmra.mxu0 %v1891
      %v1893 = vpop.f32.mrf.mxu0
      %v1894 = vadd.f32 %v1724, %v1893
      %v1895 = vpop.f32.mrf.mxu0
      %1896 = vmatprep.mubr.f32.mxu0 0.0
      %v1897 = vand.u32 %v1506, 4294901760
      %1898 = vmatmul.mubr.f32.gmra.mxu0 %v1897
      %v1899 = vpop.f32.mrf.mxu0
      %v1900 = vadd.f32 %v1734, %v1899
      %v1901 = vpop.f32.mrf.mxu0
      %1902 = vdwg.mxu0
      %1903 = vmatprep.subr.mxu0 0.0
      %1904 = vmatpush1.msra.mxu0 0.0
      %1905 = vmatprep.subr.mxu0 0.0
      %1906 = vmatpush1.msra.mxu0 0.0
      %1907 = vmatprep.subr.mxu0 0.0
      %1908 = vmatpush1.msra.mxu0 0.0
      %1909 = vmatprep.subr.mxu0 0.0
      %1910 = vmatpush1.msra.mxu0 0.0
      %1911 = vmatprep.subr.mxu0 0.0
      %1912 = vmatpush1.msra.mxu0 0.0
      %1913 = vmatprep.subr.mxu0 0.0
      %1914 = vmatpush1.msra.mxu0 0.0
      %1915 = vmatprep.subr.mxu0 0.0
      %1916 = vmatpush1.msra.mxu0 0.0
      %1917 = vmatprep.subr.mxu0 0.0
      %1918 = vmatpush1.msra.mxu0 0.0
      %1919 = vmatprep.subr.mxu0 0.0
      %1920 = vmatpush1.msra.mxu0 0.0
      %1921 = vmatprep.subr.mxu0 0.0
      %1922 = vmatpush1.msra.mxu0 0.0
      %1923 = vmatprep.subr.mxu0 0.0
      %1924 = vmatpush1.msra.mxu0 0.0
      %1925 = vmatprep.subr.mxu0 0.0
      %1926 = vmatpush1.msra.mxu0 0.0
      %1927 = vmatprep.subr.mxu0 0.0
      %1928 = vmatpush1.msra.mxu0 0.0
      %1929 = vmatprep.subr.mxu0 0.0
      %1930 = vmatpush1.msra.mxu0 0.0
      %1931 = vmatprep.subr.mxu0 0.0
      %1932 = vmatpush1.msra.mxu0 0.0
      %1933 = vmatprep.subr.mxu0 0.0
      %v1934 = vand.u32 %v1509, 4294901760
      %v1935 = vsub.f32 %v1509, %v1934
      %1936 = vmatpush1.msra.mxu0 %v1935
      %1937 = vmatprep.subr.mxu0 0.0
      %1938 = vmatpush2.msra.mxu0 0.0
      %1939 = vmatprep.subr.mxu0 0.0
      %1940 = vmatpush2.msra.mxu0 0.0
      %1941 = vmatprep.subr.mxu0 0.0
      %1942 = vmatpush2.msra.mxu0 0.0
      %1943 = vmatprep.subr.mxu0 0.0
      %1944 = vmatpush2.msra.mxu0 0.0
      %1945 = vmatprep.subr.mxu0 0.0
      %1946 = vmatpush2.msra.mxu0 0.0
      %1947 = vmatprep.subr.mxu0 0.0
      %1948 = vmatpush2.msra.mxu0 0.0
      %1949 = vmatprep.subr.mxu0 0.0
      %1950 = vmatpush2.msra.mxu0 0.0
      %1951 = vmatprep.subr.mxu0 0.0
      %1952 = vmatpush2.msra.mxu0 0.0
      %1953 = vmatprep.subr.mxu0 0.0
      %1954 = vmatpush2.msra.mxu0 0.0
      %1955 = vmatprep.subr.mxu0 0.0
      %1956 = vmatpush2.msra.mxu0 0.0
      %1957 = vmatprep.subr.mxu0 0.0
      %1958 = vmatpush2.msra.mxu0 0.0
      %1959 = vmatprep.subr.mxu0 0.0
      %1960 = vmatpush2.msra.mxu0 0.0
      %1961 = vmatprep.subr.mxu0 0.0
      %1962 = vmatpush2.msra.mxu0 0.0
      %1963 = vmatprep.subr.mxu0 0.0
      %1964 = vmatpush2.msra.mxu0 0.0
      %1965 = vmatprep.subr.mxu0 0.0
      %1966 = vmatpush2.msra.mxu0 0.0
      %1967 = vmatprep.subr.mxu0 0.0
      %1968 = vmatpush2.msra.mxu0 0.0
      %1969 = vmatprep.mubr.f32.mxu0 0.0
      %v1970 = vand.u32 %v1461, 4294901760
      %v1971 = vsub.f32 %v1461, %v1970
      %1972 = vmatmul.mubr.f32.gmra.mxu0 %v1971
      %v1973 = vpop.f32.mrf.mxu0
      %v1974 = vadd.f32 %v1810, %v1973
      %v1975 = vpop.f32.mrf.mxu0
      %1976 = vmatprep.mubr.f32.mxu0 0.0
      %v1977 = vand.u32 %v1464, 4294901760
      %v1978 = vsub.f32 %v1464, %v1977
      %1979 = vmatmul.mubr.f32.gmra.mxu0 %v1978
      %v1980 = vpop.f32.mrf.mxu0
      %v1981 = vadd.f32 %v1816, %v1980
      %v1982 = vpop.f32.mrf.mxu0
      %1983 = vmatprep.mubr.f32.mxu0 0.0
      %v1984 = vand.u32 %v1467, 4294901760
      %v1985 = vsub.f32 %v1467, %v1984
      %1986 = vmatmul.mubr.f32.gmra.mxu0 %v1985
      %v1987 = vpop.f32.mrf.mxu0
      %v1988 = vadd.f32 %v1822, %v1987
      %v1989 = vpop.f32.mrf.mxu0
      %1990 = vmatprep.mubr.f32.mxu0 0.0
      %v1991 = vand.u32 %v1470, 4294901760
      %v1992 = vsub.f32 %v1470, %v1991
      %1993 = vmatmul.mubr.f32.gmra.mxu0 %v1992
      %v1994 = vpop.f32.mrf.mxu0
      %v1995 = vadd.f32 %v1828, %v1994
      %v1996 = vpop.f32.mrf.mxu0
      %1997 = vmatprep.mubr.f32.mxu0 0.0
      %v1998 = vand.u32 %v1473, 4294901760
      %v1999 = vsub.f32 %v1473, %v1998
      %2000 = vmatmul.mubr.f32.gmra.mxu0 %v1999
      %v2001 = vpop.f32.mrf.mxu0
      %v2002 = vadd.f32 %v1834, %v2001
      %v2003 = vpop.f32.mrf.mxu0
      %2004 = vmatprep.mubr.f32.mxu0 0.0
      %v2005 = vand.u32 %v1476, 4294901760
      %v2006 = vsub.f32 %v1476, %v2005
      %2007 = vmatmul.mubr.f32.gmra.mxu0 %v2006
      %v2008 = vpop.f32.mrf.mxu0
      %v2009 = vadd.f32 %v1840, %v2008
      %v2010 = vpop.f32.mrf.mxu0
      %2011 = vmatprep.mubr.f32.mxu0 0.0
      %v2012 = vand.u32 %v1479, 4294901760
      %v2013 = vsub.f32 %v1479, %v2012
      %2014 = vmatmul.mubr.f32.gmra.mxu0 %v2013
      %v2015 = vpop.f32.mrf.mxu0
      %v2016 = vadd.f32 %v1846, %v2015
      %v2017 = vpop.f32.mrf.mxu0
      %2018 = vmatprep.mubr.f32.mxu0 0.0
      %v2019 = vand.u32 %v1482, 4294901760
      %v2020 = vsub.f32 %v1482, %v2019
      %2021 = vmatmul.mubr.f32.gmra.mxu0 %v2020
      %v2022 = vpop.f32.mrf.mxu0
      %v2023 = vadd.f32 %v1852, %v2022
      %v2024 = vpop.f32.mrf.mxu0
      %2025 = vmatprep.mubr.f32.mxu0 0.0
      %v2026 = vand.u32 %v1485, 4294901760
      %v2027 = vsub.f32 %v1485, %v2026
      %2028 = vmatmul.mubr.f32.gmra.mxu0 %v2027
      %v2029 = vpop.f32.mrf.mxu0
      %v2030 = vadd.f32 %v1858, %v2029
      %v2031 = vpop.f32.mrf.mxu0
      %2032 = vmatprep.mubr.f32.mxu0 0.0
      %v2033 = vand.u32 %v1488, 4294901760
      %v2034 = vsub.f32 %v1488, %v2033
      %2035 = vmatmul.mubr.f32.gmra.mxu0 %v2034
      %v2036 = vpop.f32.mrf.mxu0
      %v2037 = vadd.f32 %v1864, %v2036
      %v2038 = vpop.f32.mrf.mxu0
      %2039 = vmatprep.mubr.f32.mxu0 0.0
      %v2040 = vand.u32 %v1491, 4294901760
      %v2041 = vsub.f32 %v1491, %v2040
      %2042 = vmatmul.mubr.f32.gmra.mxu0 %v2041
      %v2043 = vpop.f32.mrf.mxu0
      %v2044 = vadd.f32 %v1870, %v2043
      %v2045 = vpop.f32.mrf.mxu0
      %2046 = vmatprep.mubr.f32.mxu0 0.0
      %v2047 = vand.u32 %v1494, 4294901760
      %v2048 = vsub.f32 %v1494, %v2047
      %2049 = vmatmul.mubr.f32.gmra.mxu0 %v2048
      %v2050 = vpop.f32.mrf.mxu0
      %v2051 = vadd.f32 %v1876, %v2050
      %v2052 = vpop.f32.mrf.mxu0
      %2053 = vmatprep.mubr.f32.mxu0 0.0
      %v2054 = vand.u32 %v1497, 4294901760
      %v2055 = vsub.f32 %v1497, %v2054
      %2056 = vmatmul.mubr.f32.gmra.mxu0 %v2055
      %v2057 = vpop.f32.mrf.mxu0
      %v2058 = vadd.f32 %v1882, %v2057
      %v2059 = vpop.f32.mrf.mxu0
      %2060 = vmatprep.mubr.f32.mxu0 0.0
      %v2061 = vand.u32 %v1500, 4294901760
      %v2062 = vsub.f32 %v1500, %v2061
      %2063 = vmatmul.mubr.f32.gmra.mxu0 %v2062
      %v2064 = vpop.f32.mrf.mxu0
      %v2065 = vadd.f32 %v1888, %v2064
      %v2066 = vpop.f32.mrf.mxu0
      %2067 = vmatprep.mubr.f32.mxu0 0.0
      %v2068 = vand.u32 %v1503, 4294901760
      %v2069 = vsub.f32 %v1503, %v2068
      %2070 = vmatmul.mubr.f32.gmra.mxu0 %v2069
      %v2071 = vpop.f32.mrf.mxu0
      %v2072 = vadd.f32 %v1894, %v2071
      %v2073 = vpop.f32.mrf.mxu0
      %2074 = vmatprep.mubr.f32.mxu0 0.0
      %v2075 = vand.u32 %v1506, 4294901760
      %v2076 = vsub.f32 %v1506, %v2075
      %2077 = vmatmul.mubr.f32.gmra.mxu0 %v2076
      %v2078 = vpop.f32.mrf.mxu0
      %v2079 = vadd.f32 %v1900, %v2078
      %v2080 = vpop.f32.mrf.mxu0
      %2081 = vdwg.mxu0
      %2082 = vmatprep.subr.mxu0 0.0
      %2083 = vmatpush1.msra.mxu0 0.0
      %2084 = vmatprep.subr.mxu0 0.0
      %2085 = vmatpush1.msra.mxu0 0.0
      %2086 = vmatprep.subr.mxu0 0.0
      %2087 = vmatpush1.msra.mxu0 0.0
      %2088 = vmatprep.subr.mxu0 0.0
      %2089 = vmatpush1.msra.mxu0 0.0
      %2090 = vmatprep.subr.mxu0 0.0
      %2091 = vmatpush1.msra.mxu0 0.0
      %2092 = vmatprep.subr.mxu0 0.0
      %2093 = vmatpush1.msra.mxu0 0.0
      %2094 = vmatprep.subr.mxu0 0.0
      %2095 = vmatpush1.msra.mxu0 0.0
      %2096 = vmatprep.subr.mxu0 0.0
      %2097 = vmatpush1.msra.mxu0 0.0
      %2098 = vmatprep.subr.mxu0 0.0
      %2099 = vmatpush1.msra.mxu0 0.0
      %2100 = vmatprep.subr.mxu0 0.0
      %2101 = vmatpush1.msra.mxu0 0.0
      %2102 = vmatprep.subr.mxu0 0.0
      %2103 = vmatpush1.msra.mxu0 0.0
      %2104 = vmatprep.subr.mxu0 0.0
      %2105 = vmatpush1.msra.mxu0 0.0
      %2106 = vmatprep.subr.mxu0 0.0
      %2107 = vmatpush1.msra.mxu0 0.0
      %2108 = vmatprep.subr.mxu0 0.0
      %2109 = vmatpush1.msra.mxu0 0.0
      %2110 = vmatprep.subr.mxu0 0.0
      %2111 = vmatpush1.msra.mxu0 0.0
      %2112 = vmatprep.subr.mxu0 0.0
      %v2113 = vand.u32 %v1509, 4294901760
      %2114 = vmatpush1.msra.mxu0 %v2113
      %2115 = vmatprep.subr.mxu0 0.0
      %2116 = vmatpush2.msra.mxu0 0.0
      %2117 = vmatprep.subr.mxu0 0.0
      %2118 = vmatpush2.msra.mxu0 0.0
      %2119 = vmatprep.subr.mxu0 0.0
      %2120 = vmatpush2.msra.mxu0 0.0
      %2121 = vmatprep.subr.mxu0 0.0
      %2122 = vmatpush2.msra.mxu0 0.0
      %2123 = vmatprep.subr.mxu0 0.0
      %2124 = vmatpush2.msra.mxu0 0.0
      %2125 = vmatprep.subr.mxu0 0.0
      %2126 = vmatpush2.msra.mxu0 0.0
      %2127 = vmatprep.subr.mxu0 0.0
      %2128 = vmatpush2.msra.mxu0 0.0
      %2129 = vmatprep.subr.mxu0 0.0
      %2130 = vmatpush2.msra.mxu0 0.0
      %2131 = vmatprep.subr.mxu0 0.0
      %2132 = vmatpush2.msra.mxu0 0.0
      %2133 = vmatprep.subr.mxu0 0.0
      %2134 = vmatpush2.msra.mxu0 0.0
      %2135 = vmatprep.subr.mxu0 0.0
      %2136 = vmatpush2.msra.mxu0 0.0
      %2137 = vmatprep.subr.mxu0 0.0
      %2138 = vmatpush2.msra.mxu0 0.0
      %2139 = vmatprep.subr.mxu0 0.0
      %2140 = vmatpush2.msra.mxu0 0.0
      %2141 = vmatprep.subr.mxu0 0.0
      %2142 = vmatpush2.msra.mxu0 0.0
      %2143 = vmatprep.subr.mxu0 0.0
      %2144 = vmatpush2.msra.mxu0 0.0
      %2145 = vmatprep.subr.mxu0 0.0
      %2146 = vmatpush2.msra.mxu0 0.0
      %2147 = vmatprep.mubr.f32.mxu0 0.0
      %v2148 = vand.u32 %v1461, 4294901760
      %v2149 = vsub.f32 %v1461, %v2148
      %v2150 = vand.u32 %v2149, 4294901760
      %2151 = vmatmul.mubr.f32.gmra.mxu0 %v2150
      %v2152 = vpop.f32.mrf.mxu0
      %v2153 = vadd.f32 %v1974, %v2152
      %v2154 = vpop.f32.mrf.mxu0
      %2155 = vmatprep.mubr.f32.mxu0 0.0
      %v2156 = vand.u32 %v1464, 4294901760
      %v2157 = vsub.f32 %v1464, %v2156
      %v2158 = vand.u32 %v2157, 4294901760
      %2159 = vmatmul.mubr.f32.gmra.mxu0 %v2158
      %v2160 = vpop.f32.mrf.mxu0
      %v2161 = vadd.f32 %v1981, %v2160
      %v2162 = vpop.f32.mrf.mxu0
      %2163 = vmatprep.mubr.f32.mxu0 0.0
      %v2164 = vand.u32 %v1467, 4294901760
      %v2165 = vsub.f32 %v1467, %v2164
      %v2166 = vand.u32 %v2165, 4294901760
      %2167 = vmatmul.mubr.f32.gmra.mxu0 %v2166
      %v2168 = vpop.f32.mrf.mxu0
      %v2169 = vadd.f32 %v1988, %v2168
      %v2170 = vpop.f32.mrf.mxu0
      %2171 = vmatprep.mubr.f32.mxu0 0.0
      %v2172 = vand.u32 %v1470, 4294901760
      %v2173 = vsub.f32 %v1470, %v2172
      %v2174 = vand.u32 %v2173, 4294901760
      %2175 = vmatmul.mubr.f32.gmra.mxu0 %v2174
      %v2176 = vpop.f32.mrf.mxu0
      %v2177 = vadd.f32 %v1995, %v2176
      %v2178 = vpop.f32.mrf.mxu0
      %2179 = vmatprep.mubr.f32.mxu0 0.0
      %v2180 = vand.u32 %v1473, 4294901760
      %v2181 = vsub.f32 %v1473, %v2180
      %v2182 = vand.u32 %v2181, 4294901760
      %2183 = vmatmul.mubr.f32.gmra.mxu0 %v2182
      %v2184 = vpop.f32.mrf.mxu0
      %v2185 = vadd.f32 %v2002, %v2184
      %v2186 = vpop.f32.mrf.mxu0
      %2187 = vmatprep.mubr.f32.mxu0 0.0
      %v2188 = vand.u32 %v1476, 4294901760
      %v2189 = vsub.f32 %v1476, %v2188
      %v2190 = vand.u32 %v2189, 4294901760
      %2191 = vmatmul.mubr.f32.gmra.mxu0 %v2190
      %v2192 = vpop.f32.mrf.mxu0
      %v2193 = vadd.f32 %v2009, %v2192
      %v2194 = vpop.f32.mrf.mxu0
      %2195 = vmatprep.mubr.f32.mxu0 0.0
      %v2196 = vand.u32 %v1479, 4294901760
      %v2197 = vsub.f32 %v1479, %v2196
      %v2198 = vand.u32 %v2197, 4294901760
      %2199 = vmatmul.mubr.f32.gmra.mxu0 %v2198
      %v2200 = vpop.f32.mrf.mxu0
      %v2201 = vadd.f32 %v2016, %v2200
      %v2202 = vpop.f32.mrf.mxu0
      %2203 = vmatprep.mubr.f32.mxu0 0.0
      %v2204 = vand.u32 %v1482, 4294901760
      %v2205 = vsub.f32 %v1482, %v2204
      %v2206 = vand.u32 %v2205, 4294901760
      %2207 = vmatmul.mubr.f32.gmra.mxu0 %v2206
      %v2208 = vpop.f32.mrf.mxu0
      %v2209 = vadd.f32 %v2023, %v2208
      %v2210 = vpop.f32.mrf.mxu0
      %2211 = vmatprep.mubr.f32.mxu0 0.0
      %v2212 = vand.u32 %v1485, 4294901760
      %v2213 = vsub.f32 %v1485, %v2212
      %v2214 = vand.u32 %v2213, 4294901760
      %2215 = vmatmul.mubr.f32.gmra.mxu0 %v2214
      %v2216 = vpop.f32.mrf.mxu0
      %v2217 = vadd.f32 %v2030, %v2216
      %v2218 = vpop.f32.mrf.mxu0
      %2219 = vmatprep.mubr.f32.mxu0 0.0
      %v2220 = vand.u32 %v1488, 4294901760
      %v2221 = vsub.f32 %v1488, %v2220
      %v2222 = vand.u32 %v2221, 4294901760
      %2223 = vmatmul.mubr.f32.gmra.mxu0 %v2222
      %v2224 = vpop.f32.mrf.mxu0
      %v2225 = vadd.f32 %v2037, %v2224
      %v2226 = vpop.f32.mrf.mxu0
      %2227 = vmatprep.mubr.f32.mxu0 0.0
      %v2228 = vand.u32 %v1491, 4294901760
      %v2229 = vsub.f32 %v1491, %v2228
      %v2230 = vand.u32 %v2229, 4294901760
      %2231 = vmatmul.mubr.f32.gmra.mxu0 %v2230
      %v2232 = vpop.f32.mrf.mxu0
      %v2233 = vadd.f32 %v2044, %v2232
      %v2234 = vpop.f32.mrf.mxu0
      %2235 = vmatprep.mubr.f32.mxu0 0.0
      %v2236 = vand.u32 %v1494, 4294901760
      %v2237 = vsub.f32 %v1494, %v2236
      %v2238 = vand.u32 %v2237, 4294901760
      %2239 = vmatmul.mubr.f32.gmra.mxu0 %v2238
      %v2240 = vpop.f32.mrf.mxu0
      %v2241 = vadd.f32 %v2051, %v2240
      %v2242 = vpop.f32.mrf.mxu0
      %2243 = vmatprep.mubr.f32.mxu0 0.0
      %v2244 = vand.u32 %v1497, 4294901760
      %v2245 = vsub.f32 %v1497, %v2244
      %v2246 = vand.u32 %v2245, 4294901760
      %2247 = vmatmul.mubr.f32.gmra.mxu0 %v2246
      %v2248 = vpop.f32.mrf.mxu0
      %v2249 = vadd.f32 %v2058, %v2248
      %v2250 = vpop.f32.mrf.mxu0
      %2251 = vmatprep.mubr.f32.mxu0 0.0
      %v2252 = vand.u32 %v1500, 4294901760
      %v2253 = vsub.f32 %v1500, %v2252
      %v2254 = vand.u32 %v2253, 4294901760
      %2255 = vmatmul.mubr.f32.gmra.mxu0 %v2254
      %v2256 = vpop.f32.mrf.mxu0
      %v2257 = vadd.f32 %v2065, %v2256
      %v2258 = vpop.f32.mrf.mxu0
      %2259 = vmatprep.mubr.f32.mxu0 0.0
      %v2260 = vand.u32 %v1503, 4294901760
      %v2261 = vsub.f32 %v1503, %v2260
      %v2262 = vand.u32 %v2261, 4294901760
      %2263 = vmatmul.mubr.f32.gmra.mxu0 %v2262
      %v2264 = vpop.f32.mrf.mxu0
      %v2265 = vadd.f32 %v2072, %v2264
      %v2266 = vpop.f32.mrf.mxu0
      %2267 = vmatprep.mubr.f32.mxu0 0.0
      %v2268 = vand.u32 %v1506, 4294901760
      %v2269 = vsub.f32 %v1506, %v2268
      %v2270 = vand.u32 %v2269, 4294901760
      %2271 = vmatmul.mubr.f32.gmra.mxu0 %v2270
      %v2272 = vpop.f32.mrf.mxu0
      %v2273 = vadd.f32 %v2079, %v2272
      %v2274 = vpop.f32.mrf.mxu0
      %2275 = vdwg.mxu0
      %2276 = vmatprep.subr.mxu0 0.0
      %2277 = vmatpush1.msra.mxu0 0.0
      %2278 = vmatprep.subr.mxu0 0.0
      %2279 = vmatpush1.msra.mxu0 0.0
      %2280 = vmatprep.subr.mxu0 0.0
      %2281 = vmatpush1.msra.mxu0 0.0
      %2282 = vmatprep.subr.mxu0 0.0
      %2283 = vmatpush1.msra.mxu0 0.0
      %2284 = vmatprep.subr.mxu0 0.0
      %2285 = vmatpush1.msra.mxu0 0.0
      %2286 = vmatprep.subr.mxu0 0.0
      %2287 = vmatpush1.msra.mxu0 0.0
      %2288 = vmatprep.subr.mxu0 0.0
      %2289 = vmatpush1.msra.mxu0 0.0
      %2290 = vmatprep.subr.mxu0 0.0
      %2291 = vmatpush1.msra.mxu0 0.0
      %2292 = vmatprep.subr.mxu0 0.0
      %2293 = vmatpush1.msra.mxu0 0.0
      %2294 = vmatprep.subr.mxu0 0.0
      %2295 = vmatpush1.msra.mxu0 0.0
      %2296 = vmatprep.subr.mxu0 0.0
      %2297 = vmatpush1.msra.mxu0 0.0
      %2298 = vmatprep.subr.mxu0 0.0
      %2299 = vmatpush1.msra.mxu0 0.0
      %2300 = vmatprep.subr.mxu0 0.0
      %2301 = vmatpush1.msra.mxu0 0.0
      %2302 = vmatprep.subr.mxu0 0.0
      %2303 = vmatpush1.msra.mxu0 0.0
      %2304 = vmatprep.subr.mxu0 0.0
      %2305 = vmatpush1.msra.mxu0 0.0
      %2306 = vmatprep.subr.mxu0 0.0
      %v2307 = vand.u32 %v1509, 4294901760
      %v2308 = vsub.f32 %v1509, %v2307
      %v2309 = vand.u32 %v2308, 4294901760
      %2310 = vmatpush1.msra.mxu0 %v2309
      %2311 = vmatprep.subr.mxu0 0.0
      %2312 = vmatpush2.msra.mxu0 0.0
      %2313 = vmatprep.subr.mxu0 0.0
      %2314 = vmatpush2.msra.mxu0 0.0
      %2315 = vmatprep.subr.mxu0 0.0
      %2316 = vmatpush2.msra.mxu0 0.0
      %2317 = vmatprep.subr.mxu0 0.0
      %2318 = vmatpush2.msra.mxu0 0.0
      %2319 = vmatprep.subr.mxu0 0.0
      %2320 = vmatpush2.msra.mxu0 0.0
      %2321 = vmatprep.subr.mxu0 0.0
      %2322 = vmatpush2.msra.mxu0 0.0
      %2323 = vmatprep.subr.mxu0 0.0
      %2324 = vmatpush2.msra.mxu0 0.0
      %2325 = vmatprep.subr.mxu0 0.0
      %2326 = vmatpush2.msra.mxu0 0.0
      %2327 = vmatprep.subr.mxu0 0.0
      %2328 = vmatpush2.msra.mxu0 0.0
      %2329 = vmatprep.subr.mxu0 0.0
      %2330 = vmatpush2.msra.mxu0 0.0
      %2331 = vmatprep.subr.mxu0 0.0
      %2332 = vmatpush2.msra.mxu0 0.0
      %2333 = vmatprep.subr.mxu0 0.0
      %2334 = vmatpush2.msra.mxu0 0.0
      %2335 = vmatprep.subr.mxu0 0.0
      %2336 = vmatpush2.msra.mxu0 0.0
      %2337 = vmatprep.subr.mxu0 0.0
      %2338 = vmatpush2.msra.mxu0 0.0
      %2339 = vmatprep.subr.mxu0 0.0
      %2340 = vmatpush2.msra.mxu0 0.0
      %2341 = vmatprep.subr.mxu0 0.0
      %2342 = vmatpush2.msra.mxu0 0.0
      %2343 = vmatprep.mubr.f32.mxu0 0.0
      %v2344 = vand.u32 %v1461, 4294901760
      %2345 = vmatmul.mubr.f32.gmra.mxu0 %v2344
      %v2346 = vpop.f32.mrf.mxu0
      %v2347 = vadd.f32 %v2153, %v2346
      %v2348 = vpop.f32.mrf.mxu0
      %2349 = vmatprep.mubr.f32.mxu0 0.0
      %v2350 = vand.u32 %v1464, 4294901760
      %2351 = vmatmul.mubr.f32.gmra.mxu0 %v2350
      %v2352 = vpop.f32.mrf.mxu0
      %v2353 = vadd.f32 %v2161, %v2352
      %v2354 = vpop.f32.mrf.mxu0
      %2355 = vmatprep.mubr.f32.mxu0 0.0
      %v2356 = vand.u32 %v1467, 4294901760
      %2357 = vmatmul.mubr.f32.gmra.mxu0 %v2356
      %v2358 = vpop.f32.mrf.mxu0
      %v2359 = vadd.f32 %v2169, %v2358
      %v2360 = vpop.f32.mrf.mxu0
      %2361 = vmatprep.mubr.f32.mxu0 0.0
      %v2362 = vand.u32 %v1470, 4294901760
      %2363 = vmatmul.mubr.f32.gmra.mxu0 %v2362
      %v2364 = vpop.f32.mrf.mxu0
      %v2365 = vadd.f32 %v2177, %v2364
      %v2366 = vpop.f32.mrf.mxu0
      %2367 = vmatprep.mubr.f32.mxu0 0.0
      %v2368 = vand.u32 %v1473, 4294901760
      %2369 = vmatmul.mubr.f32.gmra.mxu0 %v2368
      %v2370 = vpop.f32.mrf.mxu0
      %v2371 = vadd.f32 %v2185, %v2370
      %v2372 = vpop.f32.mrf.mxu0
      %2373 = vmatprep.mubr.f32.mxu0 0.0
      %v2374 = vand.u32 %v1476, 4294901760
      %2375 = vmatmul.mubr.f32.gmra.mxu0 %v2374
      %v2376 = vpop.f32.mrf.mxu0
      %v2377 = vadd.f32 %v2193, %v2376
      %v2378 = vpop.f32.mrf.mxu0
      %2379 = vmatprep.mubr.f32.mxu0 0.0
      %v2380 = vand.u32 %v1479, 4294901760
      %2381 = vmatmul.mubr.f32.gmra.mxu0 %v2380
      %v2382 = vpop.f32.mrf.mxu0
      %v2383 = vadd.f32 %v2201, %v2382
      %v2384 = vpop.f32.mrf.mxu0
      %2385 = vmatprep.mubr.f32.mxu0 0.0
      %v2386 = vand.u32 %v1482, 4294901760
      %2387 = vmatmul.mubr.f32.gmra.mxu0 %v2386
      %v2388 = vpop.f32.mrf.mxu0
      %v2389 = vadd.f32 %v2209, %v2388
      %v2390 = vpop.f32.mrf.mxu0
      %2391 = vmatprep.mubr.f32.mxu0 0.0
      %v2392 = vand.u32 %v1485, 4294901760
      %2393 = vmatmul.mubr.f32.gmra.mxu0 %v2392
      %v2394 = vpop.f32.mrf.mxu0
      %v2395 = vadd.f32 %v2217, %v2394
      %v2396 = vpop.f32.mrf.mxu0
      %2397 = vmatprep.mubr.f32.mxu0 0.0
      %v2398 = vand.u32 %v1488, 4294901760
      %2399 = vmatmul.mubr.f32.gmra.mxu0 %v2398
      %v2400 = vpop.f32.mrf.mxu0
      %v2401 = vadd.f32 %v2225, %v2400
      %v2402 = vpop.f32.mrf.mxu0
      %2403 = vmatprep.mubr.f32.mxu0 0.0
      %v2404 = vand.u32 %v1491, 4294901760
      %2405 = vmatmul.mubr.f32.gmra.mxu0 %v2404
      %v2406 = vpop.f32.mrf.mxu0
      %v2407 = vadd.f32 %v2233, %v2406
      %v2408 = vpop.f32.mrf.mxu0
      %2409 = vmatprep.mubr.f32.mxu0 0.0
      %v2410 = vand.u32 %v1494, 4294901760
      %2411 = vmatmul.mubr.f32.gmra.mxu0 %v2410
      %v2412 = vpop.f32.mrf.mxu0
      %v2413 = vadd.f32 %v2241, %v2412
      %v2414 = vpop.f32.mrf.mxu0
      %2415 = vmatprep.mubr.f32.mxu0 0.0
      %v2416 = vand.u32 %v1497, 4294901760
      %2417 = vmatmul.mubr.f32.gmra.mxu0 %v2416
      %v2418 = vpop.f32.mrf.mxu0
      %v2419 = vadd.f32 %v2249, %v2418
      %v2420 = vpop.f32.mrf.mxu0
      %2421 = vmatprep.mubr.f32.mxu0 0.0
      %v2422 = vand.u32 %v1500, 4294901760
      %2423 = vmatmul.mubr.f32.gmra.mxu0 %v2422
      %v2424 = vpop.f32.mrf.mxu0
      %v2425 = vadd.f32 %v2257, %v2424
      %v2426 = vpop.f32.mrf.mxu0
      %2427 = vmatprep.mubr.f32.mxu0 0.0
      %v2428 = vand.u32 %v1503, 4294901760
      %2429 = vmatmul.mubr.f32.gmra.mxu0 %v2428
      %v2430 = vpop.f32.mrf.mxu0
      %v2431 = vadd.f32 %v2265, %v2430
      %v2432 = vpop.f32.mrf.mxu0
      %2433 = vmatprep.mubr.f32.mxu0 0.0
      %v2434 = vand.u32 %v1506, 4294901760
      %2435 = vmatmul.mubr.f32.gmra.mxu0 %v2434
      %v2436 = vpop.f32.mrf.mxu0
      %v2437 = vadd.f32 %v2273, %v2436
      %v2438 = vpop.f32.mrf.mxu0
      %2439 = vdwg.mxu0
      %2440 = vmatprep.subr.mxu0 0.0
      %2441 = vmatpush1.msra.mxu0 0.0
      %2442 = vmatprep.subr.mxu0 0.0
      %2443 = vmatpush1.msra.mxu0 0.0
      %2444 = vmatprep.subr.mxu0 0.0
      %2445 = vmatpush1.msra.mxu0 0.0
      %2446 = vmatprep.subr.mxu0 0.0
      %2447 = vmatpush1.msra.mxu0 0.0
      %2448 = vmatprep.subr.mxu0 0.0
      %2449 = vmatpush1.msra.mxu0 0.0
      %2450 = vmatprep.subr.mxu0 0.0
      %2451 = vmatpush1.msra.mxu0 0.0
      %2452 = vmatprep.subr.mxu0 0.0
      %2453 = vmatpush1.msra.mxu0 0.0
      %2454 = vmatprep.subr.mxu0 0.0
      %2455 = vmatpush1.msra.mxu0 0.0
      %2456 = vmatprep.subr.mxu0 0.0
      %2457 = vmatpush1.msra.mxu0 0.0
      %2458 = vmatprep.subr.mxu0 0.0
      %2459 = vmatpush1.msra.mxu0 0.0
      %2460 = vmatprep.subr.mxu0 0.0
      %2461 = vmatpush1.msra.mxu0 0.0
      %2462 = vmatprep.subr.mxu0 0.0
      %2463 = vmatpush1.msra.mxu0 0.0
      %2464 = vmatprep.subr.mxu0 0.0
      %2465 = vmatpush1.msra.mxu0 0.0
      %2466 = vmatprep.subr.mxu0 0.0
      %2467 = vmatpush1.msra.mxu0 0.0
      %2468 = vmatprep.subr.mxu0 0.0
      %2469 = vmatpush1.msra.mxu0 0.0
      %2470 = vmatprep.subr.mxu0 0.0
      %v2471 = vand.u32 %v1509, 4294901760
      %2472 = vmatpush1.msra.mxu0 %v2471
      %2473 = vmatprep.subr.mxu0 0.0
      %2474 = vmatpush2.msra.mxu0 0.0
      %2475 = vmatprep.subr.mxu0 0.0
      %2476 = vmatpush2.msra.mxu0 0.0
      %2477 = vmatprep.subr.mxu0 0.0
      %2478 = vmatpush2.msra.mxu0 0.0
      %2479 = vmatprep.subr.mxu0 0.0
      %2480 = vmatpush2.msra.mxu0 0.0
      %2481 = vmatprep.subr.mxu0 0.0
      %2482 = vmatpush2.msra.mxu0 0.0
      %2483 = vmatprep.subr.mxu0 0.0
      %2484 = vmatpush2.msra.mxu0 0.0
      %2485 = vmatprep.subr.mxu0 0.0
      %2486 = vmatpush2.msra.mxu0 0.0
      %2487 = vmatprep.subr.mxu0 0.0
      %2488 = vmatpush2.msra.mxu0 0.0
      %2489 = vmatprep.subr.mxu0 0.0
      %2490 = vmatpush2.msra.mxu0 0.0
      %2491 = vmatprep.subr.mxu0 0.0
      %2492 = vmatpush2.msra.mxu0 0.0
      %2493 = vmatprep.subr.mxu0 0.0
      %2494 = vmatpush2.msra.mxu0 0.0
      %2495 = vmatprep.subr.mxu0 0.0
      %2496 = vmatpush2.msra.mxu0 0.0
      %2497 = vmatprep.subr.mxu0 0.0
      %2498 = vmatpush2.msra.mxu0 0.0
      %2499 = vmatprep.subr.mxu0 0.0
      %2500 = vmatpush2.msra.mxu0 0.0
      %2501 = vmatprep.subr.mxu0 0.0
      %2502 = vmatpush2.msra.mxu0 0.0
      %2503 = vmatprep.subr.mxu0 0.0
      %2504 = vmatpush2.msra.mxu0 0.0
      %2505 = vmatprep.mubr.f32.mxu0 0.0
      %v2506 = vand.u32 %v1461, 4294901760
      %2507 = vmatmul.mubr.f32.gmra.mxu0 %v2506
      %v2508 = vpop.f32.mrf.mxu0
      %v2509 = vadd.f32 %v2347, %v2508
      %v2510 = vpop.f32.mrf.mxu0
      %2511 = vmatprep.mubr.f32.mxu0 0.0
      %v2512 = vand.u32 %v1464, 4294901760
      %2513 = vmatmul.mubr.f32.gmra.mxu0 %v2512
      %v2514 = vpop.f32.mrf.mxu0
      %v2515 = vadd.f32 %v2353, %v2514
      %v2516 = vpop.f32.mrf.mxu0
      %2517 = vmatprep.mubr.f32.mxu0 0.0
      %v2518 = vand.u32 %v1467, 4294901760
      %2519 = vmatmul.mubr.f32.gmra.mxu0 %v2518
      %v2520 = vpop.f32.mrf.mxu0
      %v2521 = vadd.f32 %v2359, %v2520
      %v2522 = vpop.f32.mrf.mxu0
      %2523 = vmatprep.mubr.f32.mxu0 0.0
      %v2524 = vand.u32 %v1470, 4294901760
      %2525 = vmatmul.mubr.f32.gmra.mxu0 %v2524
      %v2526 = vpop.f32.mrf.mxu0
      %v2527 = vadd.f32 %v2365, %v2526
      %v2528 = vpop.f32.mrf.mxu0
      %2529 = vmatprep.mubr.f32.mxu0 0.0
      %v2530 = vand.u32 %v1473, 4294901760
      %2531 = vmatmul.mubr.f32.gmra.mxu0 %v2530
      %v2532 = vpop.f32.mrf.mxu0
      %v2533 = vadd.f32 %v2371, %v2532
      %v2534 = vpop.f32.mrf.mxu0
      %2535 = vmatprep.mubr.f32.mxu0 0.0
      %v2536 = vand.u32 %v1476, 4294901760
      %2537 = vmatmul.mubr.f32.gmra.mxu0 %v2536
      %v2538 = vpop.f32.mrf.mxu0
      %v2539 = vadd.f32 %v2377, %v2538
      %v2540 = vpop.f32.mrf.mxu0
      %2541 = vmatprep.mubr.f32.mxu0 0.0
      %v2542 = vand.u32 %v1479, 4294901760
      %2543 = vmatmul.mubr.f32.gmra.mxu0 %v2542
      %v2544 = vpop.f32.mrf.mxu0
      %v2545 = vadd.f32 %v2383, %v2544
      %v2546 = vpop.f32.mrf.mxu0
      %2547 = vmatprep.mubr.f32.mxu0 0.0
      %v2548 = vand.u32 %v1482, 4294901760
      %2549 = vmatmul.mubr.f32.gmra.mxu0 %v2548
      %v2550 = vpop.f32.mrf.mxu0
      %v2551 = vadd.f32 %v2389, %v2550
      %v2552 = vpop.f32.mrf.mxu0
      %2553 = vmatprep.mubr.f32.mxu0 0.0
      %v2554 = vand.u32 %v1485, 4294901760
      %2555 = vmatmul.mubr.f32.gmra.mxu0 %v2554
      %v2556 = vpop.f32.mrf.mxu0
      %v2557 = vadd.f32 %v2395, %v2556
      %v2558 = vpop.f32.mrf.mxu0
      %2559 = vmatprep.mubr.f32.mxu0 0.0
      %v2560 = vand.u32 %v1488, 4294901760
      %2561 = vmatmul.mubr.f32.gmra.mxu0 %v2560
      %v2562 = vpop.f32.mrf.mxu0
      %v2563 = vadd.f32 %v2401, %v2562
      %v2564 = vpop.f32.mrf.mxu0
      %2565 = vmatprep.mubr.f32.mxu0 0.0
      %v2566 = vand.u32 %v1491, 4294901760
      %2567 = vmatmul.mubr.f32.gmra.mxu0 %v2566
      %v2568 = vpop.f32.mrf.mxu0
      %v2569 = vadd.f32 %v2407, %v2568
      %v2570 = vpop.f32.mrf.mxu0
      %2571 = vmatprep.mubr.f32.mxu0 0.0
      %v2572 = vand.u32 %v1494, 4294901760
      %2573 = vmatmul.mubr.f32.gmra.mxu0 %v2572
      %v2574 = vpop.f32.mrf.mxu0
      %v2575 = vadd.f32 %v2413, %v2574
      %v2576 = vpop.f32.mrf.mxu0
      %2577 = vmatprep.mubr.f32.mxu0 0.0
      %v2578 = vand.u32 %v1497, 4294901760
      %2579 = vmatmul.mubr.f32.gmra.mxu0 %v2578
      %v2580 = vpop.f32.mrf.mxu0
      %v2581 = vadd.f32 %v2419, %v2580
      %v2582 = vpop.f32.mrf.mxu0
      %2583 = vmatprep.mubr.f32.mxu0 0.0
      %v2584 = vand.u32 %v1500, 4294901760
      %2585 = vmatmul.mubr.f32.gmra.mxu0 %v2584
      %v2586 = vpop.f32.mrf.mxu0
      %v2587 = vadd.f32 %v2425, %v2586
      %v2588 = vpop.f32.mrf.mxu0
      %2589 = vmatprep.mubr.f32.mxu0 0.0
      %v2590 = vand.u32 %v1503, 4294901760
      %2591 = vmatmul.mubr.f32.gmra.mxu0 %v2590
      %v2592 = vpop.f32.mrf.mxu0
      %v2593 = vadd.f32 %v2431, %v2592
      %v2594 = vpop.f32.mrf.mxu0
      %2595 = vmatprep.mubr.f32.mxu0 0.0
      %v2596 = vand.u32 %v1506, 4294901760
      %2597 = vmatmul.mubr.f32.gmra.mxu0 %v2596
      %v2598 = vpop.f32.mrf.mxu0
      %v2599 = vadd.f32 %v2437, %v2598
      %v2600 = vpop.f32.mrf.mxu0
      %2601 = vdwg.mxu0
      %v2602 = vld [vmem:[%s280 + $0x2] sm:$0xff]
      %v2603 = vld [vmem:[%s280 + $0xa] sm:$0xff]
      %v2604 = vld [vmem:[%s280 + $0x1a] sm:$0xff]
      %v2605 = vld [vmem:[%s280 + $0x22] sm:$0xff]
      %v2606 = vld [vmem:[%s280 + $0x32] sm:$0xff]
      %v2607 = vld [vmem:[%s280 + $0x3a] sm:$0xff]
      %v2608 = vld [vmem:[%s280 + $0x4a] sm:$0xff]
      %v2609 = vld [vmem:[%s280 + $0x52] sm:$0xff]
      %v2610 = vld [vmem:[%s280 + $0x62] sm:$0xff]
      %v2611 = vld [vmem:[%s280 + $0x6a] sm:$0xff]
      %v2612 = vld [vmem:[%s280 + $0x7a] sm:$0xff]
      %v2613 = vld [vmem:[%s280 + $0x82] sm:$0xff]
      %v2614 = vld [vmem:[%s280 + $0x92] sm:$0xff]
      %v2615 = vld [vmem:[%s280 + $0x9a] sm:$0xff]
      %v2616 = vld [vmem:[%s280 + $0xaa] sm:$0xff]
      %v2617 = vld [vmem:[%s280 + $0xb2] sm:$0xff]
      %s2618 = scalar_lea.vmem %s1, 8
      %v2619 = vld [vmem:[%s2618] sm:$0xf]
      %v2621 = vsel %vm316, %v2602, 0
      %v2624 = vsel %vm316, %v2603, 0
      %v2627 = vsel %vm316, %v2604, 0
      %v2630 = vsel %vm316, %v2605, 0
      %v2633 = vsel %vm316, %v2606, 0
      %v2636 = vsel %vm316, %v2607, 0
      %v2639 = vsel %vm316, %v2608, 0
      %v2642 = vsel %vm316, %v2609, 0
      %v2645 = vsel %vm316, %v2610, 0
      %v2648 = vsel %vm316, %v2611, 0
      %v2651 = vsel %vm316, %v2612, 0
      %v2654 = vsel %vm316, %v2613, 0
      %v2657 = vsel %vm316, %v2614, 0
      %v2660 = vsel %vm316, %v2615, 0
      %v2663 = vsel %vm316, %v2616, 0
      %v2666 = vsel %vm316, %v2617, 0
      %v2669 = vsel %vm365, %v2619, 0
      %2671 = vmatprep.subr.mxu0 0.0
      %2672 = vmatpush1.msra.mxu0 0.0
      %2673 = vmatprep.subr.mxu0 0.0
      %2674 = vmatpush1.msra.mxu0 0.0
      %2675 = vmatprep.subr.mxu0 0.0
      %2676 = vmatpush1.msra.mxu0 0.0
      %2677 = vmatprep.subr.mxu0 0.0
      %2678 = vmatpush1.msra.mxu0 0.0
      %2679 = vmatprep.subr.mxu0 0.0
      %2680 = vmatpush1.msra.mxu0 0.0
      %2681 = vmatprep.subr.mxu0 0.0
      %2682 = vmatpush1.msra.mxu0 0.0
      %2683 = vmatprep.subr.mxu0 0.0
      %2684 = vmatpush1.msra.mxu0 0.0
      %2685 = vmatprep.subr.mxu0 0.0
      %2686 = vmatpush1.msra.mxu0 0.0
      %2687 = vmatprep.subr.mxu0 0.0
      %2688 = vmatpush1.msra.mxu0 0.0
      %2689 = vmatprep.subr.mxu0 0.0
      %2690 = vmatpush1.msra.mxu0 0.0
      %2691 = vmatprep.subr.mxu0 0.0
      %2692 = vmatpush1.msra.mxu0 0.0
      %2693 = vmatprep.subr.mxu0 0.0
      %2694 = vmatpush1.msra.mxu0 0.0
      %2695 = vmatprep.subr.mxu0 0.0
      %2696 = vmatpush1.msra.mxu0 0.0
      %2697 = vmatprep.subr.mxu0 0.0
      %2698 = vmatpush1.msra.mxu0 0.0
      %2699 = vmatprep.subr.mxu0 0.0
      %2700 = vmatpush1.msra.mxu0 0.0
      %2701 = vmatprep.subr.mxu0 0.0
      %v2702 = vand.u32 %v2669, 4294901760
      %2703 = vmatpush1.msra.mxu0 %v2702
      %2704 = vmatprep.subr.mxu0 0.0
      %2705 = vmatpush2.msra.mxu0 0.0
      %2706 = vmatprep.subr.mxu0 0.0
      %2707 = vmatpush2.msra.mxu0 0.0
      %2708 = vmatprep.subr.mxu0 0.0
      %2709 = vmatpush2.msra.mxu0 0.0
      %2710 = vmatprep.subr.mxu0 0.0
      %2711 = vmatpush2.msra.mxu0 0.0
      %2712 = vmatprep.subr.mxu0 0.0
      %2713 = vmatpush2.msra.mxu0 0.0
      %2714 = vmatprep.subr.mxu0 0.0
      %2715 = vmatpush2.msra.mxu0 0.0
      %2716 = vmatprep.subr.mxu0 0.0
      %2717 = vmatpush2.msra.mxu0 0.0
      %2718 = vmatprep.subr.mxu0 0.0
      %2719 = vmatpush2.msra.mxu0 0.0
      %2720 = vmatprep.subr.mxu0 0.0
      %2721 = vmatpush2.msra.mxu0 0.0
      %2722 = vmatprep.subr.mxu0 0.0
      %2723 = vmatpush2.msra.mxu0 0.0
      %2724 = vmatprep.subr.mxu0 0.0
      %2725 = vmatpush2.msra.mxu0 0.0
      %2726 = vmatprep.subr.mxu0 0.0
      %2727 = vmatpush2.msra.mxu0 0.0
      %2728 = vmatprep.subr.mxu0 0.0
      %2729 = vmatpush2.msra.mxu0 0.0
      %2730 = vmatprep.subr.mxu0 0.0
      %2731 = vmatpush2.msra.mxu0 0.0
      %2732 = vmatprep.subr.mxu0 0.0
      %2733 = vmatpush2.msra.mxu0 0.0
      %2734 = vmatprep.subr.mxu0 0.0
      %2735 = vmatpush2.msra.mxu0 0.0
      %2736 = vmatprep.mubr.f32.mxu0 0.0
      %v2737 = vand.u32 %v2621, 4294901760
      %v2738 = vsub.f32 %v2621, %v2737
      %v2739 = vand.u32 %v2738, 4294901760
      %v2740 = vsub.f32 %v2738, %v2739
      %v2741 = vand.u32 %v2740, 4294901760
      %2742 = vmatmul.mubr.f32.gmra.mxu0 %v2741
      %v2743 = vpop.f32.mrf.mxu0
      %v2744 = vadd.f32 0.0, %v2743
      %v2745 = vpop.f32.mrf.mxu0
      %2746 = vmatprep.mubr.f32.mxu0 0.0
      %v2747 = vand.u32 %v2624, 4294901760
      %v2748 = vsub.f32 %v2624, %v2747
      %v2749 = vand.u32 %v2748, 4294901760
      %v2750 = vsub.f32 %v2748, %v2749
      %v2751 = vand.u32 %v2750, 4294901760
      %2752 = vmatmul.mubr.f32.gmra.mxu0 %v2751
      %v2753 = vpop.f32.mrf.mxu0
      %v2754 = vadd.f32 0.0, %v2753
      %v2755 = vpop.f32.mrf.mxu0
      %2756 = vmatprep.mubr.f32.mxu0 0.0
      %v2757 = vand.u32 %v2627, 4294901760
      %v2758 = vsub.f32 %v2627, %v2757
      %v2759 = vand.u32 %v2758, 4294901760
      %v2760 = vsub.f32 %v2758, %v2759
      %v2761 = vand.u32 %v2760, 4294901760
      %2762 = vmatmul.mubr.f32.gmra.mxu0 %v2761
      %v2763 = vpop.f32.mrf.mxu0
      %v2764 = vadd.f32 0.0, %v2763
      %v2765 = vpop.f32.mrf.mxu0
      %2766 = vmatprep.mubr.f32.mxu0 0.0
      %v2767 = vand.u32 %v2630, 4294901760
      %v2768 = vsub.f32 %v2630, %v2767
      %v2769 = vand.u32 %v2768, 4294901760
      %v2770 = vsub.f32 %v2768, %v2769
      %v2771 = vand.u32 %v2770, 4294901760
      %2772 = vmatmul.mubr.f32.gmra.mxu0 %v2771
      %v2773 = vpop.f32.mrf.mxu0
      %v2774 = vadd.f32 0.0, %v2773
      %v2775 = vpop.f32.mrf.mxu0
      %2776 = vmatprep.mubr.f32.mxu0 0.0
      %v2777 = vand.u32 %v2633, 4294901760
      %v2778 = vsub.f32 %v2633, %v2777
      %v2779 = vand.u32 %v2778, 4294901760
      %v2780 = vsub.f32 %v2778, %v2779
      %v2781 = vand.u32 %v2780, 4294901760
      %2782 = vmatmul.mubr.f32.gmra.mxu0 %v2781
      %v2783 = vpop.f32.mrf.mxu0
      %v2784 = vadd.f32 0.0, %v2783
      %v2785 = vpop.f32.mrf.mxu0
      %2786 = vmatprep.mubr.f32.mxu0 0.0
      %v2787 = vand.u32 %v2636, 4294901760
      %v2788 = vsub.f32 %v2636, %v2787
      %v2789 = vand.u32 %v2788, 4294901760
      %v2790 = vsub.f32 %v2788, %v2789
      %v2791 = vand.u32 %v2790, 4294901760
      %2792 = vmatmul.mubr.f32.gmra.mxu0 %v2791
      %v2793 = vpop.f32.mrf.mxu0
      %v2794 = vadd.f32 0.0, %v2793
      %v2795 = vpop.f32.mrf.mxu0
      %2796 = vmatprep.mubr.f32.mxu0 0.0
      %v2797 = vand.u32 %v2639, 4294901760
      %v2798 = vsub.f32 %v2639, %v2797
      %v2799 = vand.u32 %v2798, 4294901760
      %v2800 = vsub.f32 %v2798, %v2799
      %v2801 = vand.u32 %v2800, 4294901760
      %2802 = vmatmul.mubr.f32.gmra.mxu0 %v2801
      %v2803 = vpop.f32.mrf.mxu0
      %v2804 = vadd.f32 0.0, %v2803
      %v2805 = vpop.f32.mrf.mxu0
      %2806 = vmatprep.mubr.f32.mxu0 0.0
      %v2807 = vand.u32 %v2642, 4294901760
      %v2808 = vsub.f32 %v2642, %v2807
      %v2809 = vand.u32 %v2808, 4294901760
      %v2810 = vsub.f32 %v2808, %v2809
      %v2811 = vand.u32 %v2810, 4294901760
      %2812 = vmatmul.mubr.f32.gmra.mxu0 %v2811
      %v2813 = vpop.f32.mrf.mxu0
      %v2814 = vadd.f32 0.0, %v2813
      %v2815 = vpop.f32.mrf.mxu0
      %2816 = vmatprep.mubr.f32.mxu0 0.0
      %v2817 = vand.u32 %v2645, 4294901760
      %v2818 = vsub.f32 %v2645, %v2817
      %v2819 = vand.u32 %v2818, 4294901760
      %v2820 = vsub.f32 %v2818, %v2819
      %v2821 = vand.u32 %v2820, 4294901760
      %2822 = vmatmul.mubr.f32.gmra.mxu0 %v2821
      %v2823 = vpop.f32.mrf.mxu0
      %v2824 = vadd.f32 0.0, %v2823
      %v2825 = vpop.f32.mrf.mxu0
      %2826 = vmatprep.mubr.f32.mxu0 0.0
      %v2827 = vand.u32 %v2648, 4294901760
      %v2828 = vsub.f32 %v2648, %v2827
      %v2829 = vand.u32 %v2828, 4294901760
      %v2830 = vsub.f32 %v2828, %v2829
      %v2831 = vand.u32 %v2830, 4294901760
      %2832 = vmatmul.mubr.f32.gmra.mxu0 %v2831
      %v2833 = vpop.f32.mrf.mxu0
      %v2834 = vadd.f32 0.0, %v2833
      %v2835 = vpop.f32.mrf.mxu0
      %2836 = vmatprep.mubr.f32.mxu0 0.0
      %v2837 = vand.u32 %v2651, 4294901760
      %v2838 = vsub.f32 %v2651, %v2837
      %v2839 = vand.u32 %v2838, 4294901760
      %v2840 = vsub.f32 %v2838, %v2839
      %v2841 = vand.u32 %v2840, 4294901760
      %2842 = vmatmul.mubr.f32.gmra.mxu0 %v2841
      %v2843 = vpop.f32.mrf.mxu0
      %v2844 = vadd.f32 0.0, %v2843
      %v2845 = vpop.f32.mrf.mxu0
      %2846 = vmatprep.mubr.f32.mxu0 0.0
      %v2847 = vand.u32 %v2654, 4294901760
      %v2848 = vsub.f32 %v2654, %v2847
      %v2849 = vand.u32 %v2848, 4294901760
      %v2850 = vsub.f32 %v2848, %v2849
      %v2851 = vand.u32 %v2850, 4294901760
      %2852 = vmatmul.mubr.f32.gmra.mxu0 %v2851
      %v2853 = vpop.f32.mrf.mxu0
      %v2854 = vadd.f32 0.0, %v2853
      %v2855 = vpop.f32.mrf.mxu0
      %2856 = vmatprep.mubr.f32.mxu0 0.0
      %v2857 = vand.u32 %v2657, 4294901760
      %v2858 = vsub.f32 %v2657, %v2857
      %v2859 = vand.u32 %v2858, 4294901760
      %v2860 = vsub.f32 %v2858, %v2859
      %v2861 = vand.u32 %v2860, 4294901760
      %2862 = vmatmul.mubr.f32.gmra.mxu0 %v2861
      %v2863 = vpop.f32.mrf.mxu0
      %v2864 = vadd.f32 0.0, %v2863
      %v2865 = vpop.f32.mrf.mxu0
      %2866 = vmatprep.mubr.f32.mxu0 0.0
      %v2867 = vand.u32 %v2660, 4294901760
      %v2868 = vsub.f32 %v2660, %v2867
      %v2869 = vand.u32 %v2868, 4294901760
      %v2870 = vsub.f32 %v2868, %v2869
      %v2871 = vand.u32 %v2870, 4294901760
      %2872 = vmatmul.mubr.f32.gmra.mxu0 %v2871
      %v2873 = vpop.f32.mrf.mxu0
      %v2874 = vadd.f32 0.0, %v2873
      %v2875 = vpop.f32.mrf.mxu0
      %2876 = vmatprep.mubr.f32.mxu0 0.0
      %v2877 = vand.u32 %v2663, 4294901760
      %v2878 = vsub.f32 %v2663, %v2877
      %v2879 = vand.u32 %v2878, 4294901760
      %v2880 = vsub.f32 %v2878, %v2879
      %v2881 = vand.u32 %v2880, 4294901760
      %2882 = vmatmul.mubr.f32.gmra.mxu0 %v2881
      %v2883 = vpop.f32.mrf.mxu0
      %v2884 = vadd.f32 0.0, %v2883
      %v2885 = vpop.f32.mrf.mxu0
      %2886 = vmatprep.mubr.f32.mxu0 0.0
      %v2887 = vand.u32 %v2666, 4294901760
      %v2888 = vsub.f32 %v2666, %v2887
      %v2889 = vand.u32 %v2888, 4294901760
      %v2890 = vsub.f32 %v2888, %v2889
      %v2891 = vand.u32 %v2890, 4294901760
      %2892 = vmatmul.mubr.f32.gmra.mxu0 %v2891
      %v2893 = vpop.f32.mrf.mxu0
      %v2894 = vadd.f32 0.0, %v2893
      %v2895 = vpop.f32.mrf.mxu0
      %2896 = vdwg.mxu0
      %2897 = vmatprep.subr.mxu0 0.0
      %2898 = vmatpush1.msra.mxu0 0.0
      %2899 = vmatprep.subr.mxu0 0.0
      %2900 = vmatpush1.msra.mxu0 0.0
      %2901 = vmatprep.subr.mxu0 0.0
      %2902 = vmatpush1.msra.mxu0 0.0
      %2903 = vmatprep.subr.mxu0 0.0
      %2904 = vmatpush1.msra.mxu0 0.0
      %2905 = vmatprep.subr.mxu0 0.0
      %2906 = vmatpush1.msra.mxu0 0.0
      %2907 = vmatprep.subr.mxu0 0.0
      %2908 = vmatpush1.msra.mxu0 0.0
      %2909 = vmatprep.subr.mxu0 0.0
      %2910 = vmatpush1.msra.mxu0 0.0
      %2911 = vmatprep.subr.mxu0 0.0
      %2912 = vmatpush1.msra.mxu0 0.0
      %2913 = vmatprep.subr.mxu0 0.0
      %2914 = vmatpush1.msra.mxu0 0.0
      %2915 = vmatprep.subr.mxu0 0.0
      %2916 = vmatpush1.msra.mxu0 0.0
      %2917 = vmatprep.subr.mxu0 0.0
      %2918 = vmatpush1.msra.mxu0 0.0
      %2919 = vmatprep.subr.mxu0 0.0
      %2920 = vmatpush1.msra.mxu0 0.0
      %2921 = vmatprep.subr.mxu0 0.0
      %2922 = vmatpush1.msra.mxu0 0.0
      %2923 = vmatprep.subr.mxu0 0.0
      %2924 = vmatpush1.msra.mxu0 0.0
      %2925 = vmatprep.subr.mxu0 0.0
      %2926 = vmatpush1.msra.mxu0 0.0
      %2927 = vmatprep.subr.mxu0 0.0
      %v2928 = vand.u32 %v2669, 4294901760
      %v2929 = vsub.f32 %v2669, %v2928
      %v2930 = vand.u32 %v2929, 4294901760
      %v2931 = vsub.f32 %v2929, %v2930
      %v2932 = vand.u32 %v2931, 4294901760
      %2933 = vmatpush1.msra.mxu0 %v2932
      %2934 = vmatprep.subr.mxu0 0.0
      %2935 = vmatpush2.msra.mxu0 0.0
      %2936 = vmatprep.subr.mxu0 0.0
      %2937 = vmatpush2.msra.mxu0 0.0
      %2938 = vmatprep.subr.mxu0 0.0
      %2939 = vmatpush2.msra.mxu0 0.0
      %2940 = vmatprep.subr.mxu0 0.0
      %2941 = vmatpush2.msra.mxu0 0.0
      %2942 = vmatprep.subr.mxu0 0.0
      %2943 = vmatpush2.msra.mxu0 0.0
      %2944 = vmatprep.subr.mxu0 0.0
      %2945 = vmatpush2.msra.mxu0 0.0
      %2946 = vmatprep.subr.mxu0 0.0
      %2947 = vmatpush2.msra.mxu0 0.0
      %2948 = vmatprep.subr.mxu0 0.0
      %2949 = vmatpush2.msra.mxu0 0.0
      %2950 = vmatprep.subr.mxu0 0.0
      %2951 = vmatpush2.msra.mxu0 0.0
      %2952 = vmatprep.subr.mxu0 0.0
      %2953 = vmatpush2.msra.mxu0 0.0
      %2954 = vmatprep.subr.mxu0 0.0
      %2955 = vmatpush2.msra.mxu0 0.0
      %2956 = vmatprep.subr.mxu0 0.0
      %2957 = vmatpush2.msra.mxu0 0.0
      %2958 = vmatprep.subr.mxu0 0.0
      %2959 = vmatpush2.msra.mxu0 0.0
      %2960 = vmatprep.subr.mxu0 0.0
      %2961 = vmatpush2.msra.mxu0 0.0
      %2962 = vmatprep.subr.mxu0 0.0
      %2963 = vmatpush2.msra.mxu0 0.0
      %2964 = vmatprep.subr.mxu0 0.0
      %2965 = vmatpush2.msra.mxu0 0.0
      %2966 = vmatprep.mubr.f32.mxu0 0.0
      %v2967 = vand.u32 %v2621, 4294901760
      %2968 = vmatmul.mubr.f32.gmra.mxu0 %v2967
      %v2969 = vpop.f32.mrf.mxu0
      %v2970 = vadd.f32 %v2744, %v2969
      %v2971 = vpop.f32.mrf.mxu0
      %2972 = vmatprep.mubr.f32.mxu0 0.0
      %v2973 = vand.u32 %v2624, 4294901760
      %2974 = vmatmul.mubr.f32.gmra.mxu0 %v2973
      %v2975 = vpop.f32.mrf.mxu0
      %v2976 = vadd.f32 %v2754, %v2975
      %v2977 = vpop.f32.mrf.mxu0
      %2978 = vmatprep.mubr.f32.mxu0 0.0
      %v2979 = vand.u32 %v2627, 4294901760
      %2980 = vmatmul.mubr.f32.gmra.mxu0 %v2979
      %v2981 = vpop.f32.mrf.mxu0
      %v2982 = vadd.f32 %v2764, %v2981
      %v2983 = vpop.f32.mrf.mxu0
      %2984 = vmatprep.mubr.f32.mxu0 0.0
      %v2985 = vand.u32 %v2630, 4294901760
      %2986 = vmatmul.mubr.f32.gmra.mxu0 %v2985
      %v2987 = vpop.f32.mrf.mxu0
      %v2988 = vadd.f32 %v2774, %v2987
      %v2989 = vpop.f32.mrf.mxu0
      %2990 = vmatprep.mubr.f32.mxu0 0.0
      %v2991 = vand.u32 %v2633, 4294901760
      %2992 = vmatmul.mubr.f32.gmra.mxu0 %v2991
      %v2993 = vpop.f32.mrf.mxu0
      %v2994 = vadd.f32 %v2784, %v2993
      %v2995 = vpop.f32.mrf.mxu0
      %2996 = vmatprep.mubr.f32.mxu0 0.0
      %v2997 = vand.u32 %v2636, 4294901760
      %2998 = vmatmul.mubr.f32.gmra.mxu0 %v2997
      %v2999 = vpop.f32.mrf.mxu0
      %v3000 = vadd.f32 %v2794, %v2999
      %v3001 = vpop.f32.mrf.mxu0
      %3002 = vmatprep.mubr.f32.mxu0 0.0
      %v3003 = vand.u32 %v2639, 4294901760
      %3004 = vmatmul.mubr.f32.gmra.mxu0 %v3003
      %v3005 = vpop.f32.mrf.mxu0
      %v3006 = vadd.f32 %v2804, %v3005
      %v3007 = vpop.f32.mrf.mxu0
      %3008 = vmatprep.mubr.f32.mxu0 0.0
      %v3009 = vand.u32 %v2642, 4294901760
      %3010 = vmatmul.mubr.f32.gmra.mxu0 %v3009
      %v3011 = vpop.f32.mrf.mxu0
      %v3012 = vadd.f32 %v2814, %v3011
      %v3013 = vpop.f32.mrf.mxu0
      %3014 = vmatprep.mubr.f32.mxu0 0.0
      %v3015 = vand.u32 %v2645, 4294901760
      %3016 = vmatmul.mubr.f32.gmra.mxu0 %v3015
      %v3017 = vpop.f32.mrf.mxu0
      %v3018 = vadd.f32 %v2824, %v3017
      %v3019 = vpop.f32.mrf.mxu0
      %3020 = vmatprep.mubr.f32.mxu0 0.0
      %v3021 = vand.u32 %v2648, 4294901760
      %3022 = vmatmul.mubr.f32.gmra.mxu0 %v3021
      %v3023 = vpop.f32.mrf.mxu0
      %v3024 = vadd.f32 %v2834, %v3023
      %v3025 = vpop.f32.mrf.mxu0
      %3026 = vmatprep.mubr.f32.mxu0 0.0
      %v3027 = vand.u32 %v2651, 4294901760
      %3028 = vmatmul.mubr.f32.gmra.mxu0 %v3027
      %v3029 = vpop.f32.mrf.mxu0
      %v3030 = vadd.f32 %v2844, %v3029
      %v3031 = vpop.f32.mrf.mxu0
      %3032 = vmatprep.mubr.f32.mxu0 0.0
      %v3033 = vand.u32 %v2654, 4294901760
      %3034 = vmatmul.mubr.f32.gmra.mxu0 %v3033
      %v3035 = vpop.f32.mrf.mxu0
      %v3036 = vadd.f32 %v2854, %v3035
      %v3037 = vpop.f32.mrf.mxu0
      %3038 = vmatprep.mubr.f32.mxu0 0.0
      %v3039 = vand.u32 %v2657, 4294901760
      %3040 = vmatmul.mubr.f32.gmra.mxu0 %v3039
      %v3041 = vpop.f32.mrf.mxu0
      %v3042 = vadd.f32 %v2864, %v3041
      %v3043 = vpop.f32.mrf.mxu0
      %3044 = vmatprep.mubr.f32.mxu0 0.0
      %v3045 = vand.u32 %v2660, 4294901760
      %3046 = vmatmul.mubr.f32.gmra.mxu0 %v3045
      %v3047 = vpop.f32.mrf.mxu0
      %v3048 = vadd.f32 %v2874, %v3047
      %v3049 = vpop.f32.mrf.mxu0
      %3050 = vmatprep.mubr.f32.mxu0 0.0
      %v3051 = vand.u32 %v2663, 4294901760
      %3052 = vmatmul.mubr.f32.gmra.mxu0 %v3051
      %v3053 = vpop.f32.mrf.mxu0
      %v3054 = vadd.f32 %v2884, %v3053
      %v3055 = vpop.f32.mrf.mxu0
      %3056 = vmatprep.mubr.f32.mxu0 0.0
      %v3057 = vand.u32 %v2666, 4294901760
      %3058 = vmatmul.mubr.f32.gmra.mxu0 %v3057
      %v3059 = vpop.f32.mrf.mxu0
      %v3060 = vadd.f32 %v2894, %v3059
      %v3061 = vpop.f32.mrf.mxu0
      %3062 = vdwg.mxu0
      %3063 = vmatprep.subr.mxu0 0.0
      %3064 = vmatpush1.msra.mxu0 0.0
      %3065 = vmatprep.subr.mxu0 0.0
      %3066 = vmatpush1.msra.mxu0 0.0
      %3067 = vmatprep.subr.mxu0 0.0
      %3068 = vmatpush1.msra.mxu0 0.0
      %3069 = vmatprep.subr.mxu0 0.0
      %3070 = vmatpush1.msra.mxu0 0.0
      %3071 = vmatprep.subr.mxu0 0.0
      %3072 = vmatpush1.msra.mxu0 0.0
      %3073 = vmatprep.subr.mxu0 0.0
      %3074 = vmatpush1.msra.mxu0 0.0
      %3075 = vmatprep.subr.mxu0 0.0
      %3076 = vmatpush1.msra.mxu0 0.0
      %3077 = vmatprep.subr.mxu0 0.0
      %3078 = vmatpush1.msra.mxu0 0.0
      %3079 = vmatprep.subr.mxu0 0.0
      %3080 = vmatpush1.msra.mxu0 0.0
      %3081 = vmatprep.subr.mxu0 0.0
      %3082 = vmatpush1.msra.mxu0 0.0
      %3083 = vmatprep.subr.mxu0 0.0
      %3084 = vmatpush1.msra.mxu0 0.0
      %3085 = vmatprep.subr.mxu0 0.0
      %3086 = vmatpush1.msra.mxu0 0.0
      %3087 = vmatprep.subr.mxu0 0.0
      %3088 = vmatpush1.msra.mxu0 0.0
      %3089 = vmatprep.subr.mxu0 0.0
      %3090 = vmatpush1.msra.mxu0 0.0
      %3091 = vmatprep.subr.mxu0 0.0
      %3092 = vmatpush1.msra.mxu0 0.0
      %3093 = vmatprep.subr.mxu0 0.0
      %v3094 = vand.u32 %v2669, 4294901760
      %v3095 = vsub.f32 %v2669, %v3094
      %3096 = vmatpush1.msra.mxu0 %v3095
      %3097 = vmatprep.subr.mxu0 0.0
      %3098 = vmatpush2.msra.mxu0 0.0
      %3099 = vmatprep.subr.mxu0 0.0
      %3100 = vmatpush2.msra.mxu0 0.0
      %3101 = vmatprep.subr.mxu0 0.0
      %3102 = vmatpush2.msra.mxu0 0.0
      %3103 = vmatprep.subr.mxu0 0.0
      %3104 = vmatpush2.msra.mxu0 0.0
      %3105 = vmatprep.subr.mxu0 0.0
      %3106 = vmatpush2.msra.mxu0 0.0
      %3107 = vmatprep.subr.mxu0 0.0
      %3108 = vmatpush2.msra.mxu0 0.0
      %3109 = vmatprep.subr.mxu0 0.0
      %3110 = vmatpush2.msra.mxu0 0.0
      %3111 = vmatprep.subr.mxu0 0.0
      %3112 = vmatpush2.msra.mxu0 0.0
      %3113 = vmatprep.subr.mxu0 0.0
      %3114 = vmatpush2.msra.mxu0 0.0
      %3115 = vmatprep.subr.mxu0 0.0
      %3116 = vmatpush2.msra.mxu0 0.0
      %3117 = vmatprep.subr.mxu0 0.0
      %3118 = vmatpush2.msra.mxu0 0.0
      %3119 = vmatprep.subr.mxu0 0.0
      %3120 = vmatpush2.msra.mxu0 0.0
      %3121 = vmatprep.subr.mxu0 0.0
      %3122 = vmatpush2.msra.mxu0 0.0
      %3123 = vmatprep.subr.mxu0 0.0
      %3124 = vmatpush2.msra.mxu0 0.0
      %3125 = vmatprep.subr.mxu0 0.0
      %3126 = vmatpush2.msra.mxu0 0.0
      %3127 = vmatprep.subr.mxu0 0.0
      %3128 = vmatpush2.msra.mxu0 0.0
      %3129 = vmatprep.mubr.f32.mxu0 0.0
      %v3130 = vand.u32 %v2621, 4294901760
      %v3131 = vsub.f32 %v2621, %v3130
      %3132 = vmatmul.mubr.f32.gmra.mxu0 %v3131
      %v3133 = vpop.f32.mrf.mxu0
      %v3134 = vadd.f32 %v2970, %v3133
      %v3135 = vpop.f32.mrf.mxu0
      %3136 = vmatprep.mubr.f32.mxu0 0.0
      %v3137 = vand.u32 %v2624, 4294901760
      %v3138 = vsub.f32 %v2624, %v3137
      %3139 = vmatmul.mubr.f32.gmra.mxu0 %v3138
      %v3140 = vpop.f32.mrf.mxu0
      %v3141 = vadd.f32 %v2976, %v3140
      %v3142 = vpop.f32.mrf.mxu0
      %3143 = vmatprep.mubr.f32.mxu0 0.0
      %v3144 = vand.u32 %v2627, 4294901760
      %v3145 = vsub.f32 %v2627, %v3144
      %3146 = vmatmul.mubr.f32.gmra.mxu0 %v3145
      %v3147 = vpop.f32.mrf.mxu0
      %v3148 = vadd.f32 %v2982, %v3147
      %v3149 = vpop.f32.mrf.mxu0
      %3150 = vmatprep.mubr.f32.mxu0 0.0
      %v3151 = vand.u32 %v2630, 4294901760
      %v3152 = vsub.f32 %v2630, %v3151
      %3153 = vmatmul.mubr.f32.gmra.mxu0 %v3152
      %v3154 = vpop.f32.mrf.mxu0
      %v3155 = vadd.f32 %v2988, %v3154
      %v3156 = vpop.f32.mrf.mxu0
      %3157 = vmatprep.mubr.f32.mxu0 0.0
      %v3158 = vand.u32 %v2633, 4294901760
      %v3159 = vsub.f32 %v2633, %v3158
      %3160 = vmatmul.mubr.f32.gmra.mxu0 %v3159
      %v3161 = vpop.f32.mrf.mxu0
      %v3162 = vadd.f32 %v2994, %v3161
      %v3163 = vpop.f32.mrf.mxu0
      %3164 = vmatprep.mubr.f32.mxu0 0.0
      %v3165 = vand.u32 %v2636, 4294901760
      %v3166 = vsub.f32 %v2636, %v3165
      %3167 = vmatmul.mubr.f32.gmra.mxu0 %v3166
      %v3168 = vpop.f32.mrf.mxu0
      %v3169 = vadd.f32 %v3000, %v3168
      %v3170 = vpop.f32.mrf.mxu0
      %3171 = vmatprep.mubr.f32.mxu0 0.0
      %v3172 = vand.u32 %v2639, 4294901760
      %v3173 = vsub.f32 %v2639, %v3172
      %3174 = vmatmul.mubr.f32.gmra.mxu0 %v3173
      %v3175 = vpop.f32.mrf.mxu0
      %v3176 = vadd.f32 %v3006, %v3175
      %v3177 = vpop.f32.mrf.mxu0
      %3178 = vmatprep.mubr.f32.mxu0 0.0
      %v3179 = vand.u32 %v2642, 4294901760
      %v3180 = vsub.f32 %v2642, %v3179
      %3181 = vmatmul.mubr.f32.gmra.mxu0 %v3180
      %v3182 = vpop.f32.mrf.mxu0
      %v3183 = vadd.f32 %v3012, %v3182
      %v3184 = vpop.f32.mrf.mxu0
      %3185 = vmatprep.mubr.f32.mxu0 0.0
      %v3186 = vand.u32 %v2645, 4294901760
      %v3187 = vsub.f32 %v2645, %v3186
      %3188 = vmatmul.mubr.f32.gmra.mxu0 %v3187
      %v3189 = vpop.f32.mrf.mxu0
      %v3190 = vadd.f32 %v3018, %v3189
      %v3191 = vpop.f32.mrf.mxu0
      %3192 = vmatprep.mubr.f32.mxu0 0.0
      %v3193 = vand.u32 %v2648, 4294901760
      %v3194 = vsub.f32 %v2648, %v3193
      %3195 = vmatmul.mubr.f32.gmra.mxu0 %v3194
      %v3196 = vpop.f32.mrf.mxu0
      %v3197 = vadd.f32 %v3024, %v3196
      %v3198 = vpop.f32.mrf.mxu0
      %3199 = vmatprep.mubr.f32.mxu0 0.0
      %v3200 = vand.u32 %v2651, 4294901760
      %v3201 = vsub.f32 %v2651, %v3200
      %3202 = vmatmul.mubr.f32.gmra.mxu0 %v3201
      %v3203 = vpop.f32.mrf.mxu0
      %v3204 = vadd.f32 %v3030, %v3203
      %v3205 = vpop.f32.mrf.mxu0
      %3206 = vmatprep.mubr.f32.mxu0 0.0
      %v3207 = vand.u32 %v2654, 4294901760
      %v3208 = vsub.f32 %v2654, %v3207
      %3209 = vmatmul.mubr.f32.gmra.mxu0 %v3208
      %v3210 = vpop.f32.mrf.mxu0
      %v3211 = vadd.f32 %v3036, %v3210
      %v3212 = vpop.f32.mrf.mxu0
      %3213 = vmatprep.mubr.f32.mxu0 0.0
      %v3214 = vand.u32 %v2657, 4294901760
      %v3215 = vsub.f32 %v2657, %v3214
      %3216 = vmatmul.mubr.f32.gmra.mxu0 %v3215
      %v3217 = vpop.f32.mrf.mxu0
      %v3218 = vadd.f32 %v3042, %v3217
      %v3219 = vpop.f32.mrf.mxu0
      %3220 = vmatprep.mubr.f32.mxu0 0.0
      %v3221 = vand.u32 %v2660, 4294901760
      %v3222 = vsub.f32 %v2660, %v3221
      %3223 = vmatmul.mubr.f32.gmra.mxu0 %v3222
      %v3224 = vpop.f32.mrf.mxu0
      %v3225 = vadd.f32 %v3048, %v3224
      %v3226 = vpop.f32.mrf.mxu0
      %3227 = vmatprep.mubr.f32.mxu0 0.0
      %v3228 = vand.u32 %v2663, 4294901760
      %v3229 = vsub.f32 %v2663, %v3228
      %3230 = vmatmul.mubr.f32.gmra.mxu0 %v3229
      %v3231 = vpop.f32.mrf.mxu0
      %v3232 = vadd.f32 %v3054, %v3231
      %v3233 = vpop.f32.mrf.mxu0
      %3234 = vmatprep.mubr.f32.mxu0 0.0
      %v3235 = vand.u32 %v2666, 4294901760
      %v3236 = vsub.f32 %v2666, %v3235
      %3237 = vmatmul.mubr.f32.gmra.mxu0 %v3236
      %v3238 = vpop.f32.mrf.mxu0
      %v3239 = vadd.f32 %v3060, %v3238
      %v3240 = vpop.f32.mrf.mxu0
      %3241 = vdwg.mxu0
      %3242 = vmatprep.subr.mxu0 0.0
      %3243 = vmatpush1.msra.mxu0 0.0
      %3244 = vmatprep.subr.mxu0 0.0
      %3245 = vmatpush1.msra.mxu0 0.0
      %3246 = vmatprep.subr.mxu0 0.0
      %3247 = vmatpush1.msra.mxu0 0.0
      %3248 = vmatprep.subr.mxu0 0.0
      %3249 = vmatpush1.msra.mxu0 0.0
      %3250 = vmatprep.subr.mxu0 0.0
      %3251 = vmatpush1.msra.mxu0 0.0
      %3252 = vmatprep.subr.mxu0 0.0
      %3253 = vmatpush1.msra.mxu0 0.0
      %3254 = vmatprep.subr.mxu0 0.0
      %3255 = vmatpush1.msra.mxu0 0.0
      %3256 = vmatprep.subr.mxu0 0.0
      %3257 = vmatpush1.msra.mxu0 0.0
      %3258 = vmatprep.subr.mxu0 0.0
      %3259 = vmatpush1.msra.mxu0 0.0
      %3260 = vmatprep.subr.mxu0 0.0
      %3261 = vmatpush1.msra.mxu0 0.0
      %3262 = vmatprep.subr.mxu0 0.0
      %3263 = vmatpush1.msra.mxu0 0.0
      %3264 = vmatprep.subr.mxu0 0.0
      %3265 = vmatpush1.msra.mxu0 0.0
      %3266 = vmatprep.subr.mxu0 0.0
      %3267 = vmatpush1.msra.mxu0 0.0
      %3268 = vmatprep.subr.mxu0 0.0
      %3269 = vmatpush1.msra.mxu0 0.0
      %3270 = vmatprep.subr.mxu0 0.0
      %3271 = vmatpush1.msra.mxu0 0.0
      %3272 = vmatprep.subr.mxu0 0.0
      %v3273 = vand.u32 %v2669, 4294901760
      %3274 = vmatpush1.msra.mxu0 %v3273
      %3275 = vmatprep.subr.mxu0 0.0
      %3276 = vmatpush2.msra.mxu0 0.0
      %3277 = vmatprep.subr.mxu0 0.0
      %3278 = vmatpush2.msra.mxu0 0.0
      %3279 = vmatprep.subr.mxu0 0.0
      %3280 = vmatpush2.msra.mxu0 0.0
      %3281 = vmatprep.subr.mxu0 0.0
      %3282 = vmatpush2.msra.mxu0 0.0
      %3283 = vmatprep.subr.mxu0 0.0
      %3284 = vmatpush2.msra.mxu0 0.0
      %3285 = vmatprep.subr.mxu0 0.0
      %3286 = vmatpush2.msra.mxu0 0.0
      %3287 = vmatprep.subr.mxu0 0.0
      %3288 = vmatpush2.msra.mxu0 0.0
      %3289 = vmatprep.subr.mxu0 0.0
      %3290 = vmatpush2.msra.mxu0 0.0
      %3291 = vmatprep.subr.mxu0 0.0
      %3292 = vmatpush2.msra.mxu0 0.0
      %3293 = vmatprep.subr.mxu0 0.0
      %3294 = vmatpush2.msra.mxu0 0.0
      %3295 = vmatprep.subr.mxu0 0.0
      %3296 = vmatpush2.msra.mxu0 0.0
      %3297 = vmatprep.subr.mxu0 0.0
      %3298 = vmatpush2.msra.mxu0 0.0
      %3299 = vmatprep.subr.mxu0 0.0
      %3300 = vmatpush2.msra.mxu0 0.0
      %3301 = vmatprep.subr.mxu0 0.0
      %3302 = vmatpush2.msra.mxu0 0.0
      %3303 = vmatprep.subr.mxu0 0.0
      %3304 = vmatpush2.msra.mxu0 0.0
      %3305 = vmatprep.subr.mxu0 0.0
      %3306 = vmatpush2.msra.mxu0 0.0
      %3307 = vmatprep.mubr.f32.mxu0 0.0
      %v3308 = vand.u32 %v2621, 4294901760
      %v3309 = vsub.f32 %v2621, %v3308
      %v3310 = vand.u32 %v3309, 4294901760
      %3311 = vmatmul.mubr.f32.gmra.mxu0 %v3310
      %v3312 = vpop.f32.mrf.mxu0
      %v3313 = vadd.f32 %v3134, %v3312
      %v3314 = vpop.f32.mrf.mxu0
      %3315 = vmatprep.mubr.f32.mxu0 0.0
      %v3316 = vand.u32 %v2624, 4294901760
      %v3317 = vsub.f32 %v2624, %v3316
      %v3318 = vand.u32 %v3317, 4294901760
      %3319 = vmatmul.mubr.f32.gmra.mxu0 %v3318
      %v3320 = vpop.f32.mrf.mxu0
      %v3321 = vadd.f32 %v3141, %v3320
      %v3322 = vpop.f32.mrf.mxu0
      %3323 = vmatprep.mubr.f32.mxu0 0.0
      %v3324 = vand.u32 %v2627, 4294901760
      %v3325 = vsub.f32 %v2627, %v3324
      %v3326 = vand.u32 %v3325, 4294901760
      %3327 = vmatmul.mubr.f32.gmra.mxu0 %v3326
      %v3328 = vpop.f32.mrf.mxu0
      %v3329 = vadd.f32 %v3148, %v3328
      %v3330 = vpop.f32.mrf.mxu0
      %3331 = vmatprep.mubr.f32.mxu0 0.0
      %v3332 = vand.u32 %v2630, 4294901760
      %v3333 = vsub.f32 %v2630, %v3332
      %v3334 = vand.u32 %v3333, 4294901760
      %3335 = vmatmul.mubr.f32.gmra.mxu0 %v3334
      %v3336 = vpop.f32.mrf.mxu0
      %v3337 = vadd.f32 %v3155, %v3336
      %v3338 = vpop.f32.mrf.mxu0
      %3339 = vmatprep.mubr.f32.mxu0 0.0
      %v3340 = vand.u32 %v2633, 4294901760
      %v3341 = vsub.f32 %v2633, %v3340
      %v3342 = vand.u32 %v3341, 4294901760
      %3343 = vmatmul.mubr.f32.gmra.mxu0 %v3342
      %v3344 = vpop.f32.mrf.mxu0
      %v3345 = vadd.f32 %v3162, %v3344
      %v3346 = vpop.f32.mrf.mxu0
      %3347 = vmatprep.mubr.f32.mxu0 0.0
      %v3348 = vand.u32 %v2636, 4294901760
      %v3349 = vsub.f32 %v2636, %v3348
      %v3350 = vand.u32 %v3349, 4294901760
      %3351 = vmatmul.mubr.f32.gmra.mxu0 %v3350
      %v3352 = vpop.f32.mrf.mxu0
      %v3353 = vadd.f32 %v3169, %v3352
      %v3354 = vpop.f32.mrf.mxu0
      %3355 = vmatprep.mubr.f32.mxu0 0.0
      %v3356 = vand.u32 %v2639, 4294901760
      %v3357 = vsub.f32 %v2639, %v3356
      %v3358 = vand.u32 %v3357, 4294901760
      %3359 = vmatmul.mubr.f32.gmra.mxu0 %v3358
      %v3360 = vpop.f32.mrf.mxu0
      %v3361 = vadd.f32 %v3176, %v3360
      %v3362 = vpop.f32.mrf.mxu0
      %3363 = vmatprep.mubr.f32.mxu0 0.0
      %v3364 = vand.u32 %v2642, 4294901760
      %v3365 = vsub.f32 %v2642, %v3364
      %v3366 = vand.u32 %v3365, 4294901760
      %3367 = vmatmul.mubr.f32.gmra.mxu0 %v3366
      %v3368 = vpop.f32.mrf.mxu0
      %v3369 = vadd.f32 %v3183, %v3368
      %v3370 = vpop.f32.mrf.mxu0
      %3371 = vmatprep.mubr.f32.mxu0 0.0
      %v3372 = vand.u32 %v2645, 4294901760
      %v3373 = vsub.f32 %v2645, %v3372
      %v3374 = vand.u32 %v3373, 4294901760
      %3375 = vmatmul.mubr.f32.gmra.mxu0 %v3374
      %v3376 = vpop.f32.mrf.mxu0
      %v3377 = vadd.f32 %v3190, %v3376
      %v3378 = vpop.f32.mrf.mxu0
      %3379 = vmatprep.mubr.f32.mxu0 0.0
      %v3380 = vand.u32 %v2648, 4294901760
      %v3381 = vsub.f32 %v2648, %v3380
      %v3382 = vand.u32 %v3381, 4294901760
      %3383 = vmatmul.mubr.f32.gmra.mxu0 %v3382
      %v3384 = vpop.f32.mrf.mxu0
      %v3385 = vadd.f32 %v3197, %v3384
      %v3386 = vpop.f32.mrf.mxu0
      %3387 = vmatprep.mubr.f32.mxu0 0.0
      %v3388 = vand.u32 %v2651, 4294901760
      %v3389 = vsub.f32 %v2651, %v3388
      %v3390 = vand.u32 %v3389, 4294901760
      %3391 = vmatmul.mubr.f32.gmra.mxu0 %v3390
      %v3392 = vpop.f32.mrf.mxu0
      %v3393 = vadd.f32 %v3204, %v3392
      %v3394 = vpop.f32.mrf.mxu0
      %3395 = vmatprep.mubr.f32.mxu0 0.0
      %v3396 = vand.u32 %v2654, 4294901760
      %v3397 = vsub.f32 %v2654, %v3396
      %v3398 = vand.u32 %v3397, 4294901760
      %3399 = vmatmul.mubr.f32.gmra.mxu0 %v3398
      %v3400 = vpop.f32.mrf.mxu0
      %v3401 = vadd.f32 %v3211, %v3400
      %v3402 = vpop.f32.mrf.mxu0
      %3403 = vmatprep.mubr.f32.mxu0 0.0
      %v3404 = vand.u32 %v2657, 4294901760
      %v3405 = vsub.f32 %v2657, %v3404
      %v3406 = vand.u32 %v3405, 4294901760
      %3407 = vmatmul.mubr.f32.gmra.mxu0 %v3406
      %v3408 = vpop.f32.mrf.mxu0
      %v3409 = vadd.f32 %v3218, %v3408
      %v3410 = vpop.f32.mrf.mxu0
      %3411 = vmatprep.mubr.f32.mxu0 0.0
      %v3412 = vand.u32 %v2660, 4294901760
      %v3413 = vsub.f32 %v2660, %v3412
      %v3414 = vand.u32 %v3413, 4294901760
      %3415 = vmatmul.mubr.f32.gmra.mxu0 %v3414
      %v3416 = vpop.f32.mrf.mxu0
      %v3417 = vadd.f32 %v3225, %v3416
      %v3418 = vpop.f32.mrf.mxu0
      %3419 = vmatprep.mubr.f32.mxu0 0.0
      %v3420 = vand.u32 %v2663, 4294901760
      %v3421 = vsub.f32 %v2663, %v3420
      %v3422 = vand.u32 %v3421, 4294901760
      %3423 = vmatmul.mubr.f32.gmra.mxu0 %v3422
      %v3424 = vpop.f32.mrf.mxu0
      %v3425 = vadd.f32 %v3232, %v3424
      %v3426 = vpop.f32.mrf.mxu0
      %3427 = vmatprep.mubr.f32.mxu0 0.0
      %v3428 = vand.u32 %v2666, 4294901760
      %v3429 = vsub.f32 %v2666, %v3428
      %v3430 = vand.u32 %v3429, 4294901760
      %3431 = vmatmul.mubr.f32.gmra.mxu0 %v3430
      %v3432 = vpop.f32.mrf.mxu0
      %v3433 = vadd.f32 %v3239, %v3432
      %v3434 = vpop.f32.mrf.mxu0
      %3435 = vdwg.mxu0
      %3436 = vmatprep.subr.mxu0 0.0
      %3437 = vmatpush1.msra.mxu0 0.0
      %3438 = vmatprep.subr.mxu0 0.0
      %3439 = vmatpush1.msra.mxu0 0.0
      %3440 = vmatprep.subr.mxu0 0.0
      %3441 = vmatpush1.msra.mxu0 0.0
      %3442 = vmatprep.subr.mxu0 0.0
      %3443 = vmatpush1.msra.mxu0 0.0
      %3444 = vmatprep.subr.mxu0 0.0
      %3445 = vmatpush1.msra.mxu0 0.0
      %3446 = vmatprep.subr.mxu0 0.0
      %3447 = vmatpush1.msra.mxu0 0.0
      %3448 = vmatprep.subr.mxu0 0.0
      %3449 = vmatpush1.msra.mxu0 0.0
      %3450 = vmatprep.subr.mxu0 0.0
      %3451 = vmatpush1.msra.mxu0 0.0
      %3452 = vmatprep.subr.mxu0 0.0
      %3453 = vmatpush1.msra.mxu0 0.0
      %3454 = vmatprep.subr.mxu0 0.0
      %3455 = vmatpush1.msra.mxu0 0.0
      %3456 = vmatprep.subr.mxu0 0.0
      %3457 = vmatpush1.msra.mxu0 0.0
      %3458 = vmatprep.subr.mxu0 0.0
      %3459 = vmatpush1.msra.mxu0 0.0
      %3460 = vmatprep.subr.mxu0 0.0
      %3461 = vmatpush1.msra.mxu0 0.0
      %3462 = vmatprep.subr.mxu0 0.0
      %3463 = vmatpush1.msra.mxu0 0.0
      %3464 = vmatprep.subr.mxu0 0.0
      %3465 = vmatpush1.msra.mxu0 0.0
      %3466 = vmatprep.subr.mxu0 0.0
      %v3467 = vand.u32 %v2669, 4294901760
      %v3468 = vsub.f32 %v2669, %v3467
      %v3469 = vand.u32 %v3468, 4294901760
      %3470 = vmatpush1.msra.mxu0 %v3469
      %3471 = vmatprep.subr.mxu0 0.0
      %3472 = vmatpush2.msra.mxu0 0.0
      %3473 = vmatprep.subr.mxu0 0.0
      %3474 = vmatpush2.msra.mxu0 0.0
      %3475 = vmatprep.subr.mxu0 0.0
      %3476 = vmatpush2.msra.mxu0 0.0
      %3477 = vmatprep.subr.mxu0 0.0
      %3478 = vmatpush2.msra.mxu0 0.0
      %3479 = vmatprep.subr.mxu0 0.0
      %3480 = vmatpush2.msra.mxu0 0.0
      %3481 = vmatprep.subr.mxu0 0.0
      %3482 = vmatpush2.msra.mxu0 0.0
      %3483 = vmatprep.subr.mxu0 0.0
      %3484 = vmatpush2.msra.mxu0 0.0
      %3485 = vmatprep.subr.mxu0 0.0
      %3486 = vmatpush2.msra.mxu0 0.0
      %3487 = vmatprep.subr.mxu0 0.0
      %3488 = vmatpush2.msra.mxu0 0.0
      %3489 = vmatprep.subr.mxu0 0.0
      %3490 = vmatpush2.msra.mxu0 0.0
      %3491 = vmatprep.subr.mxu0 0.0
      %3492 = vmatpush2.msra.mxu0 0.0
      %3493 = vmatprep.subr.mxu0 0.0
      %3494 = vmatpush2.msra.mxu0 0.0
      %3495 = vmatprep.subr.mxu0 0.0
      %3496 = vmatpush2.msra.mxu0 0.0
      %3497 = vmatprep.subr.mxu0 0.0
      %3498 = vmatpush2.msra.mxu0 0.0
      %3499 = vmatprep.subr.mxu0 0.0
      %3500 = vmatpush2.msra.mxu0 0.0
      %3501 = vmatprep.subr.mxu0 0.0
      %3502 = vmatpush2.msra.mxu0 0.0
      %3503 = vmatprep.mubr.f32.mxu0 0.0
      %v3504 = vand.u32 %v2621, 4294901760
      %3505 = vmatmul.mubr.f32.gmra.mxu0 %v3504
      %v3506 = vpop.f32.mrf.mxu0
      %v3507 = vadd.f32 %v3313, %v3506
      %v3508 = vpop.f32.mrf.mxu0
      %3509 = vmatprep.mubr.f32.mxu0 0.0
      %v3510 = vand.u32 %v2624, 4294901760
      %3511 = vmatmul.mubr.f32.gmra.mxu0 %v3510
      %v3512 = vpop.f32.mrf.mxu0
      %v3513 = vadd.f32 %v3321, %v3512
      %v3514 = vpop.f32.mrf.mxu0
      %3515 = vmatprep.mubr.f32.mxu0 0.0
      %v3516 = vand.u32 %v2627, 4294901760
      %3517 = vmatmul.mubr.f32.gmra.mxu0 %v3516
      %v3518 = vpop.f32.mrf.mxu0
      %v3519 = vadd.f32 %v3329, %v3518
      %v3520 = vpop.f32.mrf.mxu0
      %3521 = vmatprep.mubr.f32.mxu0 0.0
      %v3522 = vand.u32 %v2630, 4294901760
      %3523 = vmatmul.mubr.f32.gmra.mxu0 %v3522
      %v3524 = vpop.f32.mrf.mxu0
      %v3525 = vadd.f32 %v3337, %v3524
      %v3526 = vpop.f32.mrf.mxu0
      %3527 = vmatprep.mubr.f32.mxu0 0.0
      %v3528 = vand.u32 %v2633, 4294901760
      %3529 = vmatmul.mubr.f32.gmra.mxu0 %v3528
      %v3530 = vpop.f32.mrf.mxu0
      %v3531 = vadd.f32 %v3345, %v3530
      %v3532 = vpop.f32.mrf.mxu0
      %3533 = vmatprep.mubr.f32.mxu0 0.0
      %v3534 = vand.u32 %v2636, 4294901760
      %3535 = vmatmul.mubr.f32.gmra.mxu0 %v3534
      %v3536 = vpop.f32.mrf.mxu0
      %v3537 = vadd.f32 %v3353, %v3536
      %v3538 = vpop.f32.mrf.mxu0
      %3539 = vmatprep.mubr.f32.mxu0 0.0
      %v3540 = vand.u32 %v2639, 4294901760
      %3541 = vmatmul.mubr.f32.gmra.mxu0 %v3540
      %v3542 = vpop.f32.mrf.mxu0
      %v3543 = vadd.f32 %v3361, %v3542
      %v3544 = vpop.f32.mrf.mxu0
      %3545 = vmatprep.mubr.f32.mxu0 0.0
      %v3546 = vand.u32 %v2642, 4294901760
      %3547 = vmatmul.mubr.f32.gmra.mxu0 %v3546
      %v3548 = vpop.f32.mrf.mxu0
      %v3549 = vadd.f32 %v3369, %v3548
      %v3550 = vpop.f32.mrf.mxu0
      %3551 = vmatprep.mubr.f32.mxu0 0.0
      %v3552 = vand.u32 %v2645, 4294901760
      %3553 = vmatmul.mubr.f32.gmra.mxu0 %v3552
      %v3554 = vpop.f32.mrf.mxu0
      %v3555 = vadd.f32 %v3377, %v3554
      %v3556 = vpop.f32.mrf.mxu0
      %3557 = vmatprep.mubr.f32.mxu0 0.0
      %v3558 = vand.u32 %v2648, 4294901760
      %3559 = vmatmul.mubr.f32.gmra.mxu0 %v3558
      %v3560 = vpop.f32.mrf.mxu0
      %v3561 = vadd.f32 %v3385, %v3560
      %v3562 = vpop.f32.mrf.mxu0
      %3563 = vmatprep.mubr.f32.mxu0 0.0
      %v3564 = vand.u32 %v2651, 4294901760
      %3565 = vmatmul.mubr.f32.gmra.mxu0 %v3564
      %v3566 = vpop.f32.mrf.mxu0
      %v3567 = vadd.f32 %v3393, %v3566
      %v3568 = vpop.f32.mrf.mxu0
      %3569 = vmatprep.mubr.f32.mxu0 0.0
      %v3570 = vand.u32 %v2654, 4294901760
      %3571 = vmatmul.mubr.f32.gmra.mxu0 %v3570
      %v3572 = vpop.f32.mrf.mxu0
      %v3573 = vadd.f32 %v3401, %v3572
      %v3574 = vpop.f32.mrf.mxu0
      %3575 = vmatprep.mubr.f32.mxu0 0.0
      %v3576 = vand.u32 %v2657, 4294901760
      %3577 = vmatmul.mubr.f32.gmra.mxu0 %v3576
      %v3578 = vpop.f32.mrf.mxu0
      %v3579 = vadd.f32 %v3409, %v3578
      %v3580 = vpop.f32.mrf.mxu0
      %3581 = vmatprep.mubr.f32.mxu0 0.0
      %v3582 = vand.u32 %v2660, 4294901760
      %3583 = vmatmul.mubr.f32.gmra.mxu0 %v3582
      %v3584 = vpop.f32.mrf.mxu0
      %v3585 = vadd.f32 %v3417, %v3584
      %v3586 = vpop.f32.mrf.mxu0
      %3587 = vmatprep.mubr.f32.mxu0 0.0
      %v3588 = vand.u32 %v2663, 4294901760
      %3589 = vmatmul.mubr.f32.gmra.mxu0 %v3588
      %v3590 = vpop.f32.mrf.mxu0
      %v3591 = vadd.f32 %v3425, %v3590
      %v3592 = vpop.f32.mrf.mxu0
      %3593 = vmatprep.mubr.f32.mxu0 0.0
      %v3594 = vand.u32 %v2666, 4294901760
      %3595 = vmatmul.mubr.f32.gmra.mxu0 %v3594
      %v3596 = vpop.f32.mrf.mxu0
      %v3597 = vadd.f32 %v3433, %v3596
      %v3598 = vpop.f32.mrf.mxu0
      %3599 = vdwg.mxu0
      %3600 = vmatprep.subr.mxu0 0.0
      %3601 = vmatpush1.msra.mxu0 0.0
      %3602 = vmatprep.subr.mxu0 0.0
      %3603 = vmatpush1.msra.mxu0 0.0
      %3604 = vmatprep.subr.mxu0 0.0
      %3605 = vmatpush1.msra.mxu0 0.0
      %3606 = vmatprep.subr.mxu0 0.0
      %3607 = vmatpush1.msra.mxu0 0.0
      %3608 = vmatprep.subr.mxu0 0.0
      %3609 = vmatpush1.msra.mxu0 0.0
      %3610 = vmatprep.subr.mxu0 0.0
      %3611 = vmatpush1.msra.mxu0 0.0
      %3612 = vmatprep.subr.mxu0 0.0
      %3613 = vmatpush1.msra.mxu0 0.0
      %3614 = vmatprep.subr.mxu0 0.0
      %3615 = vmatpush1.msra.mxu0 0.0
      %3616 = vmatprep.subr.mxu0 0.0
      %3617 = vmatpush1.msra.mxu0 0.0
      %3618 = vmatprep.subr.mxu0 0.0
      %3619 = vmatpush1.msra.mxu0 0.0
      %3620 = vmatprep.subr.mxu0 0.0
      %3621 = vmatpush1.msra.mxu0 0.0
      %3622 = vmatprep.subr.mxu0 0.0
      %3623 = vmatpush1.msra.mxu0 0.0
      %3624 = vmatprep.subr.mxu0 0.0
      %3625 = vmatpush1.msra.mxu0 0.0
      %3626 = vmatprep.subr.mxu0 0.0
      %3627 = vmatpush1.msra.mxu0 0.0
      %3628 = vmatprep.subr.mxu0 0.0
      %3629 = vmatpush1.msra.mxu0 0.0
      %3630 = vmatprep.subr.mxu0 0.0
      %v3631 = vand.u32 %v2669, 4294901760
      %3632 = vmatpush1.msra.mxu0 %v3631
      %3633 = vmatprep.subr.mxu0 0.0
      %3634 = vmatpush2.msra.mxu0 0.0
      %3635 = vmatprep.subr.mxu0 0.0
      %3636 = vmatpush2.msra.mxu0 0.0
      %3637 = vmatprep.subr.mxu0 0.0
      %3638 = vmatpush2.msra.mxu0 0.0
      %3639 = vmatprep.subr.mxu0 0.0
      %3640 = vmatpush2.msra.mxu0 0.0
      %3641 = vmatprep.subr.mxu0 0.0
      %3642 = vmatpush2.msra.mxu0 0.0
      %3643 = vmatprep.subr.mxu0 0.0
      %3644 = vmatpush2.msra.mxu0 0.0
      %3645 = vmatprep.subr.mxu0 0.0
      %3646 = vmatpush2.msra.mxu0 0.0
      %3647 = vmatprep.subr.mxu0 0.0
      %3648 = vmatpush2.msra.mxu0 0.0
      %3649 = vmatprep.subr.mxu0 0.0
      %3650 = vmatpush2.msra.mxu0 0.0
      %3651 = vmatprep.subr.mxu0 0.0
      %3652 = vmatpush2.msra.mxu0 0.0
      %3653 = vmatprep.subr.mxu0 0.0
      %3654 = vmatpush2.msra.mxu0 0.0
      %3655 = vmatprep.subr.mxu0 0.0
      %3656 = vmatpush2.msra.mxu0 0.0
      %3657 = vmatprep.subr.mxu0 0.0
      %3658 = vmatpush2.msra.mxu0 0.0
      %3659 = vmatprep.subr.mxu0 0.0
      %3660 = vmatpush2.msra.mxu0 0.0
      %3661 = vmatprep.subr.mxu0 0.0
      %3662 = vmatpush2.msra.mxu0 0.0
      %3663 = vmatprep.subr.mxu0 0.0
      %3664 = vmatpush2.msra.mxu0 0.0
      %3665 = vmatprep.mubr.f32.mxu0 0.0
      %v3666 = vand.u32 %v2621, 4294901760
      %3667 = vmatmul.mubr.f32.gmra.mxu0 %v3666
      %v3668 = vpop.f32.mrf.mxu0
      %v3669 = vadd.f32 %v3507, %v3668
      %v3670 = vpop.f32.mrf.mxu0
      %3671 = vmatprep.mubr.f32.mxu0 0.0
      %v3672 = vand.u32 %v2624, 4294901760
      %3673 = vmatmul.mubr.f32.gmra.mxu0 %v3672
      %v3674 = vpop.f32.mrf.mxu0
      %v3675 = vadd.f32 %v3513, %v3674
      %v3676 = vpop.f32.mrf.mxu0
      %3677 = vmatprep.mubr.f32.mxu0 0.0
      %v3678 = vand.u32 %v2627, 4294901760
      %3679 = vmatmul.mubr.f32.gmra.mxu0 %v3678
      %v3680 = vpop.f32.mrf.mxu0
      %v3681 = vadd.f32 %v3519, %v3680
      %v3682 = vpop.f32.mrf.mxu0
      %3683 = vmatprep.mubr.f32.mxu0 0.0
      %v3684 = vand.u32 %v2630, 4294901760
      %3685 = vmatmul.mubr.f32.gmra.mxu0 %v3684
      %v3686 = vpop.f32.mrf.mxu0
      %v3687 = vadd.f32 %v3525, %v3686
      %v3688 = vpop.f32.mrf.mxu0
      %3689 = vmatprep.mubr.f32.mxu0 0.0
      %v3690 = vand.u32 %v2633, 4294901760
      %3691 = vmatmul.mubr.f32.gmra.mxu0 %v3690
      %v3692 = vpop.f32.mrf.mxu0
      %v3693 = vadd.f32 %v3531, %v3692
      %v3694 = vpop.f32.mrf.mxu0
      %3695 = vmatprep.mubr.f32.mxu0 0.0
      %v3696 = vand.u32 %v2636, 4294901760
      %3697 = vmatmul.mubr.f32.gmra.mxu0 %v3696
      %v3698 = vpop.f32.mrf.mxu0
      %v3699 = vadd.f32 %v3537, %v3698
      %v3700 = vpop.f32.mrf.mxu0
      %3701 = vmatprep.mubr.f32.mxu0 0.0
      %v3702 = vand.u32 %v2639, 4294901760
      %3703 = vmatmul.mubr.f32.gmra.mxu0 %v3702
      %v3704 = vpop.f32.mrf.mxu0
      %v3705 = vadd.f32 %v3543, %v3704
      %v3706 = vpop.f32.mrf.mxu0
      %3707 = vmatprep.mubr.f32.mxu0 0.0
      %v3708 = vand.u32 %v2642, 4294901760
      %3709 = vmatmul.mubr.f32.gmra.mxu0 %v3708
      %v3710 = vpop.f32.mrf.mxu0
      %v3711 = vadd.f32 %v3549, %v3710
      %v3712 = vpop.f32.mrf.mxu0
      %3713 = vmatprep.mubr.f32.mxu0 0.0
      %v3714 = vand.u32 %v2645, 4294901760
      %3715 = vmatmul.mubr.f32.gmra.mxu0 %v3714
      %v3716 = vpop.f32.mrf.mxu0
      %v3717 = vadd.f32 %v3555, %v3716
      %v3718 = vpop.f32.mrf.mxu0
      %3719 = vmatprep.mubr.f32.mxu0 0.0
      %v3720 = vand.u32 %v2648, 4294901760
      %3721 = vmatmul.mubr.f32.gmra.mxu0 %v3720
      %v3722 = vpop.f32.mrf.mxu0
      %v3723 = vadd.f32 %v3561, %v3722
      %v3724 = vpop.f32.mrf.mxu0
      %3725 = vmatprep.mubr.f32.mxu0 0.0
      %v3726 = vand.u32 %v2651, 4294901760
      %3727 = vmatmul.mubr.f32.gmra.mxu0 %v3726
      %v3728 = vpop.f32.mrf.mxu0
      %v3729 = vadd.f32 %v3567, %v3728
      %v3730 = vpop.f32.mrf.mxu0
      %3731 = vmatprep.mubr.f32.mxu0 0.0
      %v3732 = vand.u32 %v2654, 4294901760
      %3733 = vmatmul.mubr.f32.gmra.mxu0 %v3732
      %v3734 = vpop.f32.mrf.mxu0
      %v3735 = vadd.f32 %v3573, %v3734
      %v3736 = vpop.f32.mrf.mxu0
      %3737 = vmatprep.mubr.f32.mxu0 0.0
      %v3738 = vand.u32 %v2657, 4294901760
      %3739 = vmatmul.mubr.f32.gmra.mxu0 %v3738
      %v3740 = vpop.f32.mrf.mxu0
      %v3741 = vadd.f32 %v3579, %v3740
      %v3742 = vpop.f32.mrf.mxu0
      %3743 = vmatprep.mubr.f32.mxu0 0.0
      %v3744 = vand.u32 %v2660, 4294901760
      %3745 = vmatmul.mubr.f32.gmra.mxu0 %v3744
      %v3746 = vpop.f32.mrf.mxu0
      %v3747 = vadd.f32 %v3585, %v3746
      %v3748 = vpop.f32.mrf.mxu0
      %3749 = vmatprep.mubr.f32.mxu0 0.0
      %v3750 = vand.u32 %v2663, 4294901760
      %3751 = vmatmul.mubr.f32.gmra.mxu0 %v3750
      %v3752 = vpop.f32.mrf.mxu0
      %v3753 = vadd.f32 %v3591, %v3752
      %v3754 = vpop.f32.mrf.mxu0
      %3755 = vmatprep.mubr.f32.mxu0 0.0
      %v3756 = vand.u32 %v2666, 4294901760
      %3757 = vmatmul.mubr.f32.gmra.mxu0 %v3756
      %v3758 = vpop.f32.mrf.mxu0
      %v3759 = vadd.f32 %v3597, %v3758
      %v3760 = vpop.f32.mrf.mxu0
      %3761 = vdwg.mxu0
      %v3762 = vadd.f32 %v2509, %v3669
      %v3763 = vadd.f32 %v2515, %v3675
      %v3764 = vadd.f32 %v2521, %v3681
      %v3765 = vadd.f32 %v2527, %v3687
      %v3766 = vadd.f32 %v2533, %v3693
      %v3767 = vadd.f32 %v2539, %v3699
      %v3768 = vadd.f32 %v2545, %v3705
      %v3769 = vadd.f32 %v2551, %v3711
      %v3770 = vadd.f32 %v2557, %v3717
      %v3771 = vadd.f32 %v2563, %v3723
      %v3772 = vadd.f32 %v2569, %v3729
      %v3773 = vadd.f32 %v2575, %v3735
      %v3774 = vadd.f32 %v2581, %v3741
      %v3775 = vadd.f32 %v2587, %v3747
      %v3776 = vadd.f32 %v2593, %v3753
      %v3777 = vadd.f32 %v2599, %v3759
      %s3778 = smul.u32 %s277, 24
      %s3779 = scalar_lea.vmem %s265, %s3778
      %v3780 = vld [vmem:[%s3779 + $0x1] sm:$0xff]
      %v3781 = vld [vmem:[%s3779 + $0x9] sm:$0xff]
      %v3782 = vld [vmem:[%s3779 + $0x19] sm:$0xff]
      %v3783 = vld [vmem:[%s3779 + $0x21] sm:$0xff]
      %v3784 = vld [vmem:[%s3779 + $0x31] sm:$0xff]
      %v3785 = vld [vmem:[%s3779 + $0x39] sm:$0xff]
      %v3786 = vld [vmem:[%s3779 + $0x49] sm:$0xff]
      %v3787 = vld [vmem:[%s3779 + $0x51] sm:$0xff]
      %v3788 = vld [vmem:[%s3779 + $0x61] sm:$0xff]
      %v3789 = vld [vmem:[%s3779 + $0x69] sm:$0xff]
      %v3790 = vld [vmem:[%s3779 + $0x79] sm:$0xff]
      %v3791 = vld [vmem:[%s3779 + $0x81] sm:$0xff]
      %v3792 = vld [vmem:[%s3779 + $0x91] sm:$0xff]
      %v3793 = vld [vmem:[%s3779 + $0x99] sm:$0xff]
      %v3794 = vld [vmem:[%s3779 + $0xa9] sm:$0xff]
      %v3795 = vld [vmem:[%s3779 + $0xb1] sm:$0xff]
      %v3796 = vld [vmem:[%s2] sm:$0xf]
      %v3798 = vsel %vm316, %v3780, 0
      %v3801 = vsel %vm316, %v3781, 0
      %v3804 = vsel %vm316, %v3782, 0
      %v3807 = vsel %vm316, %v3783, 0
      %v3810 = vsel %vm316, %v3784, 0
      %v3813 = vsel %vm316, %v3785, 0
      %v3816 = vsel %vm316, %v3786, 0
      %v3819 = vsel %vm316, %v3787, 0
      %v3822 = vsel %vm316, %v3788, 0
      %v3825 = vsel %vm316, %v3789, 0
      %v3828 = vsel %vm316, %v3790, 0
      %v3831 = vsel %vm316, %v3791, 0
      %v3834 = vsel %vm316, %v3792, 0
      %v3837 = vsel %vm316, %v3793, 0
      %v3840 = vsel %vm316, %v3794, 0
      %v3843 = vsel %vm316, %v3795, 0
      %v3846 = vsel %vm365, %v3796, 0
      %3848 = vmatprep.subr.mxu0 0.0
      %3849 = vmatpush1.msra.mxu0 0.0
      %3850 = vmatprep.subr.mxu0 0.0
      %3851 = vmatpush1.msra.mxu0 0.0
      %3852 = vmatprep.subr.mxu0 0.0
      %3853 = vmatpush1.msra.mxu0 0.0
      %3854 = vmatprep.subr.mxu0 0.0
      %3855 = vmatpush1.msra.mxu0 0.0
      %3856 = vmatprep.subr.mxu0 0.0
      %3857 = vmatpush1.msra.mxu0 0.0
      %3858 = vmatprep.subr.mxu0 0.0
      %3859 = vmatpush1.msra.mxu0 0.0
      %3860 = vmatprep.subr.mxu0 0.0
      %3861 = vmatpush1.msra.mxu0 0.0
      %3862 = vmatprep.subr.mxu0 0.0
      %3863 = vmatpush1.msra.mxu0 0.0
      %3864 = vmatprep.subr.mxu0 0.0
      %3865 = vmatpush1.msra.mxu0 0.0
      %3866 = vmatprep.subr.mxu0 0.0
      %3867 = vmatpush1.msra.mxu0 0.0
      %3868 = vmatprep.subr.mxu0 0.0
      %3869 = vmatpush1.msra.mxu0 0.0
      %3870 = vmatprep.subr.mxu0 0.0
      %3871 = vmatpush1.msra.mxu0 0.0
      %3872 = vmatprep.subr.mxu0 0.0
      %3873 = vmatpush1.msra.mxu0 0.0
      %3874 = vmatprep.subr.mxu0 0.0
      %3875 = vmatpush1.msra.mxu0 0.0
      %3876 = vmatprep.subr.mxu0 0.0
      %3877 = vmatpush1.msra.mxu0 0.0
      %3878 = vmatprep.subr.mxu0 0.0
      %v3879 = vand.u32 %v3846, 4294901760
      %3880 = vmatpush1.msra.mxu0 %v3879
      %3881 = vmatprep.subr.mxu0 0.0
      %3882 = vmatpush2.msra.mxu0 0.0
      %3883 = vmatprep.subr.mxu0 0.0
      %3884 = vmatpush2.msra.mxu0 0.0
      %3885 = vmatprep.subr.mxu0 0.0
      %3886 = vmatpush2.msra.mxu0 0.0
      %3887 = vmatprep.subr.mxu0 0.0
      %3888 = vmatpush2.msra.mxu0 0.0
      %3889 = vmatprep.subr.mxu0 0.0
      %3890 = vmatpush2.msra.mxu0 0.0
      %3891 = vmatprep.subr.mxu0 0.0
      %3892 = vmatpush2.msra.mxu0 0.0
      %3893 = vmatprep.subr.mxu0 0.0
      %3894 = vmatpush2.msra.mxu0 0.0
      %3895 = vmatprep.subr.mxu0 0.0
      %3896 = vmatpush2.msra.mxu0 0.0
      %3897 = vmatprep.subr.mxu0 0.0
      %3898 = vmatpush2.msra.mxu0 0.0
      %3899 = vmatprep.subr.mxu0 0.0
      %3900 = vmatpush2.msra.mxu0 0.0
      %3901 = vmatprep.subr.mxu0 0.0
      %3902 = vmatpush2.msra.mxu0 0.0
      %3903 = vmatprep.subr.mxu0 0.0
      %3904 = vmatpush2.msra.mxu0 0.0
      %3905 = vmatprep.subr.mxu0 0.0
      %3906 = vmatpush2.msra.mxu0 0.0
      %3907 = vmatprep.subr.mxu0 0.0
      %3908 = vmatpush2.msra.mxu0 0.0
      %3909 = vmatprep.subr.mxu0 0.0
      %3910 = vmatpush2.msra.mxu0 0.0
      %3911 = vmatprep.subr.mxu0 0.0
      %3912 = vmatpush2.msra.mxu0 0.0
      %3913 = vmatprep.mubr.f32.mxu0 0.0
      %v3914 = vand.u32 %v3798, 4294901760
      %v3915 = vsub.f32 %v3798, %v3914
      %v3916 = vand.u32 %v3915, 4294901760
      %v3917 = vsub.f32 %v3915, %v3916
      %v3918 = vand.u32 %v3917, 4294901760
      %3919 = vmatmul.mubr.f32.gmra.mxu0 %v3918
      %v3920 = vpop.f32.mrf.mxu0
      %v3921 = vadd.f32 0.0, %v3920
      %v3922 = vpop.f32.mrf.mxu0
      %3923 = vmatprep.mubr.f32.mxu0 0.0
      %v3924 = vand.u32 %v3801, 4294901760
      %v3925 = vsub.f32 %v3801, %v3924
      %v3926 = vand.u32 %v3925, 4294901760
      %v3927 = vsub.f32 %v3925, %v3926
      %v3928 = vand.u32 %v3927, 4294901760
      %3929 = vmatmul.mubr.f32.gmra.mxu0 %v3928
      %v3930 = vpop.f32.mrf.mxu0
      %v3931 = vadd.f32 0.0, %v3930
      %v3932 = vpop.f32.mrf.mxu0
      %3933 = vmatprep.mubr.f32.mxu0 0.0
      %v3934 = vand.u32 %v3804, 4294901760
      %v3935 = vsub.f32 %v3804, %v3934
      %v3936 = vand.u32 %v3935, 4294901760
      %v3937 = vsub.f32 %v3935, %v3936
      %v3938 = vand.u32 %v3937, 4294901760
      %3939 = vmatmul.mubr.f32.gmra.mxu0 %v3938
      %v3940 = vpop.f32.mrf.mxu0
      %v3941 = vadd.f32 0.0, %v3940
      %v3942 = vpop.f32.mrf.mxu0
      %3943 = vmatprep.mubr.f32.mxu0 0.0
      %v3944 = vand.u32 %v3807, 4294901760
      %v3945 = vsub.f32 %v3807, %v3944
      %v3946 = vand.u32 %v3945, 4294901760
      %v3947 = vsub.f32 %v3945, %v3946
      %v3948 = vand.u32 %v3947, 4294901760
      %3949 = vmatmul.mubr.f32.gmra.mxu0 %v3948
      %v3950 = vpop.f32.mrf.mxu0
      %v3951 = vadd.f32 0.0, %v3950
      %v3952 = vpop.f32.mrf.mxu0
      %3953 = vmatprep.mubr.f32.mxu0 0.0
      %v3954 = vand.u32 %v3810, 4294901760
      %v3955 = vsub.f32 %v3810, %v3954
      %v3956 = vand.u32 %v3955, 4294901760
      %v3957 = vsub.f32 %v3955, %v3956
      %v3958 = vand.u32 %v3957, 4294901760
      %3959 = vmatmul.mubr.f32.gmra.mxu0 %v3958
      %v3960 = vpop.f32.mrf.mxu0
      %v3961 = vadd.f32 0.0, %v3960
      %v3962 = vpop.f32.mrf.mxu0
      %3963 = vmatprep.mubr.f32.mxu0 0.0
      %v3964 = vand.u32 %v3813, 4294901760
      %v3965 = vsub.f32 %v3813, %v3964
      %v3966 = vand.u32 %v3965, 4294901760
      %v3967 = vsub.f32 %v3965, %v3966
      %v3968 = vand.u32 %v3967, 4294901760
      %3969 = vmatmul.mubr.f32.gmra.mxu0 %v3968
      %v3970 = vpop.f32.mrf.mxu0
      %v3971 = vadd.f32 0.0, %v3970
      %v3972 = vpop.f32.mrf.mxu0
      %3973 = vmatprep.mubr.f32.mxu0 0.0
      %v3974 = vand.u32 %v3816, 4294901760
      %v3975 = vsub.f32 %v3816, %v3974
      %v3976 = vand.u32 %v3975, 4294901760
      %v3977 = vsub.f32 %v3975, %v3976
      %v3978 = vand.u32 %v3977, 4294901760
      %3979 = vmatmul.mubr.f32.gmra.mxu0 %v3978
      %v3980 = vpop.f32.mrf.mxu0
      %v3981 = vadd.f32 0.0, %v3980
      %v3982 = vpop.f32.mrf.mxu0
      %3983 = vmatprep.mubr.f32.mxu0 0.0
      %v3984 = vand.u32 %v3819, 4294901760
      %v3985 = vsub.f32 %v3819, %v3984
      %v3986 = vand.u32 %v3985, 4294901760
      %v3987 = vsub.f32 %v3985, %v3986
      %v3988 = vand.u32 %v3987, 4294901760
      %3989 = vmatmul.mubr.f32.gmra.mxu0 %v3988
      %v3990 = vpop.f32.mrf.mxu0
      %v3991 = vadd.f32 0.0, %v3990
      %v3992 = vpop.f32.mrf.mxu0
      %3993 = vmatprep.mubr.f32.mxu0 0.0
      %v3994 = vand.u32 %v3822, 4294901760
      %v3995 = vsub.f32 %v3822, %v3994
      %v3996 = vand.u32 %v3995, 4294901760
      %v3997 = vsub.f32 %v3995, %v3996
      %v3998 = vand.u32 %v3997, 4294901760
      %3999 = vmatmul.mubr.f32.gmra.mxu0 %v3998
      %v4000 = vpop.f32.mrf.mxu0
      %v4001 = vadd.f32 0.0, %v4000
      %v4002 = vpop.f32.mrf.mxu0
      %4003 = vmatprep.mubr.f32.mxu0 0.0
      %v4004 = vand.u32 %v3825, 4294901760
      %v4005 = vsub.f32 %v3825, %v4004
      %v4006 = vand.u32 %v4005, 4294901760
      %v4007 = vsub.f32 %v4005, %v4006
      %v4008 = vand.u32 %v4007, 4294901760
      %4009 = vmatmul.mubr.f32.gmra.mxu0 %v4008
      %v4010 = vpop.f32.mrf.mxu0
      %v4011 = vadd.f32 0.0, %v4010
      %v4012 = vpop.f32.mrf.mxu0
      %4013 = vmatprep.mubr.f32.mxu0 0.0
      %v4014 = vand.u32 %v3828, 4294901760
      %v4015 = vsub.f32 %v3828, %v4014
      %v4016 = vand.u32 %v4015, 4294901760
      %v4017 = vsub.f32 %v4015, %v4016
      %v4018 = vand.u32 %v4017, 4294901760
      %4019 = vmatmul.mubr.f32.gmra.mxu0 %v4018
      %v4020 = vpop.f32.mrf.mxu0
      %v4021 = vadd.f32 0.0, %v4020
      %v4022 = vpop.f32.mrf.mxu0
      %4023 = vmatprep.mubr.f32.mxu0 0.0
      %v4024 = vand.u32 %v3831, 4294901760
      %v4025 = vsub.f32 %v3831, %v4024
      %v4026 = vand.u32 %v4025, 4294901760
      %v4027 = vsub.f32 %v4025, %v4026
      %v4028 = vand.u32 %v4027, 4294901760
      %4029 = vmatmul.mubr.f32.gmra.mxu0 %v4028
      %v4030 = vpop.f32.mrf.mxu0
      %v4031 = vadd.f32 0.0, %v4030
      %v4032 = vpop.f32.mrf.mxu0
      %4033 = vmatprep.mubr.f32.mxu0 0.0
      %v4034 = vand.u32 %v3834, 4294901760
      %v4035 = vsub.f32 %v3834, %v4034
      %v4036 = vand.u32 %v4035, 4294901760
      %v4037 = vsub.f32 %v4035, %v4036
      %v4038 = vand.u32 %v4037, 4294901760
      %4039 = vmatmul.mubr.f32.gmra.mxu0 %v4038
      %v4040 = vpop.f32.mrf.mxu0
      %v4041 = vadd.f32 0.0, %v4040
      %v4042 = vpop.f32.mrf.mxu0
      %4043 = vmatprep.mubr.f32.mxu0 0.0
      %v4044 = vand.u32 %v3837, 4294901760
      %v4045 = vsub.f32 %v3837, %v4044
      %v4046 = vand.u32 %v4045, 4294901760
      %v4047 = vsub.f32 %v4045, %v4046
      %v4048 = vand.u32 %v4047, 4294901760
      %4049 = vmatmul.mubr.f32.gmra.mxu0 %v4048
      %v4050 = vpop.f32.mrf.mxu0
      %v4051 = vadd.f32 0.0, %v4050
      %v4052 = vpop.f32.mrf.mxu0
      %4053 = vmatprep.mubr.f32.mxu0 0.0
      %v4054 = vand.u32 %v3840, 4294901760
      %v4055 = vsub.f32 %v3840, %v4054
      %v4056 = vand.u32 %v4055, 4294901760
      %v4057 = vsub.f32 %v4055, %v4056
      %v4058 = vand.u32 %v4057, 4294901760
      %4059 = vmatmul.mubr.f32.gmra.mxu0 %v4058
      %v4060 = vpop.f32.mrf.mxu0
      %v4061 = vadd.f32 0.0, %v4060
      %v4062 = vpop.f32.mrf.mxu0
      %4063 = vmatprep.mubr.f32.mxu0 0.0
      %v4064 = vand.u32 %v3843, 4294901760
      %v4065 = vsub.f32 %v3843, %v4064
      %v4066 = vand.u32 %v4065, 4294901760
      %v4067 = vsub.f32 %v4065, %v4066
      %v4068 = vand.u32 %v4067, 4294901760
      %4069 = vmatmul.mubr.f32.gmra.mxu0 %v4068
      %v4070 = vpop.f32.mrf.mxu0
      %v4071 = vadd.f32 0.0, %v4070
      %v4072 = vpop.f32.mrf.mxu0
      %4073 = vdwg.mxu0
      %4074 = vmatprep.subr.mxu0 0.0
      %4075 = vmatpush1.msra.mxu0 0.0
      %4076 = vmatprep.subr.mxu0 0.0
      %4077 = vmatpush1.msra.mxu0 0.0
      %4078 = vmatprep.subr.mxu0 0.0
      %4079 = vmatpush1.msra.mxu0 0.0
      %4080 = vmatprep.subr.mxu0 0.0
      %4081 = vmatpush1.msra.mxu0 0.0
      %4082 = vmatprep.subr.mxu0 0.0
      %4083 = vmatpush1.msra.mxu0 0.0
      %4084 = vmatprep.subr.mxu0 0.0
      %4085 = vmatpush1.msra.mxu0 0.0
      %4086 = vmatprep.subr.mxu0 0.0
      %4087 = vmatpush1.msra.mxu0 0.0
      %4088 = vmatprep.subr.mxu0 0.0
      %4089 = vmatpush1.msra.mxu0 0.0
      %4090 = vmatprep.subr.mxu0 0.0
      %4091 = vmatpush1.msra.mxu0 0.0
      %4092 = vmatprep.subr.mxu0 0.0
      %4093 = vmatpush1.msra.mxu0 0.0
      %4094 = vmatprep.subr.mxu0 0.0
      %4095 = vmatpush1.msra.mxu0 0.0
      %4096 = vmatprep.subr.mxu0 0.0
      %4097 = vmatpush1.msra.mxu0 0.0
      %4098 = vmatprep.subr.mxu0 0.0
      %4099 = vmatpush1.msra.mxu0 0.0
      %4100 = vmatprep.subr.mxu0 0.0
      %4101 = vmatpush1.msra.mxu0 0.0
      %4102 = vmatprep.subr.mxu0 0.0
      %4103 = vmatpush1.msra.mxu0 0.0
      %4104 = vmatprep.subr.mxu0 0.0
      %v4105 = vand.u32 %v3846, 4294901760
      %v4106 = vsub.f32 %v3846, %v4105
      %v4107 = vand.u32 %v4106, 4294901760
      %v4108 = vsub.f32 %v4106, %v4107
      %v4109 = vand.u32 %v4108, 4294901760
      %4110 = vmatpush1.msra.mxu0 %v4109
      %4111 = vmatprep.subr.mxu0 0.0
      %4112 = vmatpush2.msra.mxu0 0.0
      %4113 = vmatprep.subr.mxu0 0.0
      %4114 = vmatpush2.msra.mxu0 0.0
      %4115 = vmatprep.subr.mxu0 0.0
      %4116 = vmatpush2.msra.mxu0 0.0
      %4117 = vmatprep.subr.mxu0 0.0
      %4118 = vmatpush2.msra.mxu0 0.0
      %4119 = vmatprep.subr.mxu0 0.0
      %4120 = vmatpush2.msra.mxu0 0.0
      %4121 = vmatprep.subr.mxu0 0.0
      %4122 = vmatpush2.msra.mxu0 0.0
      %4123 = vmatprep.subr.mxu0 0.0
      %4124 = vmatpush2.msra.mxu0 0.0
      %4125 = vmatprep.subr.mxu0 0.0
      %4126 = vmatpush2.msra.mxu0 0.0
      %4127 = vmatprep.subr.mxu0 0.0
      %4128 = vmatpush2.msra.mxu0 0.0
      %4129 = vmatprep.subr.mxu0 0.0
      %4130 = vmatpush2.msra.mxu0 0.0
      %4131 = vmatprep.subr.mxu0 0.0
      %4132 = vmatpush2.msra.mxu0 0.0
      %4133 = vmatprep.subr.mxu0 0.0
      %4134 = vmatpush2.msra.mxu0 0.0
      %4135 = vmatprep.subr.mxu0 0.0
      %4136 = vmatpush2.msra.mxu0 0.0
      %4137 = vmatprep.subr.mxu0 0.0
      %4138 = vmatpush2.msra.mxu0 0.0
      %4139 = vmatprep.subr.mxu0 0.0
      %4140 = vmatpush2.msra.mxu0 0.0
      %4141 = vmatprep.subr.mxu0 0.0
      %4142 = vmatpush2.msra.mxu0 0.0
      %4143 = vmatprep.mubr.f32.mxu0 0.0
      %v4144 = vand.u32 %v3798, 4294901760
      %4145 = vmatmul.mubr.f32.gmra.mxu0 %v4144
      %v4146 = vpop.f32.mrf.mxu0
      %v4147 = vadd.f32 %v3921, %v4146
      %v4148 = vpop.f32.mrf.mxu0
      %4149 = vmatprep.mubr.f32.mxu0 0.0
      %v4150 = vand.u32 %v3801, 4294901760
      %4151 = vmatmul.mubr.f32.gmra.mxu0 %v4150
      %v4152 = vpop.f32.mrf.mxu0
      %v4153 = vadd.f32 %v3931, %v4152
      %v4154 = vpop.f32.mrf.mxu0
      %4155 = vmatprep.mubr.f32.mxu0 0.0
      %v4156 = vand.u32 %v3804, 4294901760
      %4157 = vmatmul.mubr.f32.gmra.mxu0 %v4156
      %v4158 = vpop.f32.mrf.mxu0
      %v4159 = vadd.f32 %v3941, %v4158
      %v4160 = vpop.f32.mrf.mxu0
      %4161 = vmatprep.mubr.f32.mxu0 0.0
      %v4162 = vand.u32 %v3807, 4294901760
      %4163 = vmatmul.mubr.f32.gmra.mxu0 %v4162
      %v4164 = vpop.f32.mrf.mxu0
      %v4165 = vadd.f32 %v3951, %v4164
      %v4166 = vpop.f32.mrf.mxu0
      %4167 = vmatprep.mubr.f32.mxu0 0.0
      %v4168 = vand.u32 %v3810, 4294901760
      %4169 = vmatmul.mubr.f32.gmra.mxu0 %v4168
      %v4170 = vpop.f32.mrf.mxu0
      %v4171 = vadd.f32 %v3961, %v4170
      %v4172 = vpop.f32.mrf.mxu0
      %4173 = vmatprep.mubr.f32.mxu0 0.0
      %v4174 = vand.u32 %v3813, 4294901760
      %4175 = vmatmul.mubr.f32.gmra.mxu0 %v4174
      %v4176 = vpop.f32.mrf.mxu0
      %v4177 = vadd.f32 %v3971, %v4176
      %v4178 = vpop.f32.mrf.mxu0
      %4179 = vmatprep.mubr.f32.mxu0 0.0
      %v4180 = vand.u32 %v3816, 4294901760
      %4181 = vmatmul.mubr.f32.gmra.mxu0 %v4180
      %v4182 = vpop.f32.mrf.mxu0
      %v4183 = vadd.f32 %v3981, %v4182
      %v4184 = vpop.f32.mrf.mxu0
      %4185 = vmatprep.mubr.f32.mxu0 0.0
      %v4186 = vand.u32 %v3819, 4294901760
      %4187 = vmatmul.mubr.f32.gmra.mxu0 %v4186
      %v4188 = vpop.f32.mrf.mxu0
      %v4189 = vadd.f32 %v3991, %v4188
      %v4190 = vpop.f32.mrf.mxu0
      %4191 = vmatprep.mubr.f32.mxu0 0.0
      %v4192 = vand.u32 %v3822, 4294901760
      %4193 = vmatmul.mubr.f32.gmra.mxu0 %v4192
      %v4194 = vpop.f32.mrf.mxu0
      %v4195 = vadd.f32 %v4001, %v4194
      %v4196 = vpop.f32.mrf.mxu0
      %4197 = vmatprep.mubr.f32.mxu0 0.0
      %v4198 = vand.u32 %v3825, 4294901760
      %4199 = vmatmul.mubr.f32.gmra.mxu0 %v4198
      %v4200 = vpop.f32.mrf.mxu0
      %v4201 = vadd.f32 %v4011, %v4200
      %v4202 = vpop.f32.mrf.mxu0
      %4203 = vmatprep.mubr.f32.mxu0 0.0
      %v4204 = vand.u32 %v3828, 4294901760
      %4205 = vmatmul.mubr.f32.gmra.mxu0 %v4204
      %v4206 = vpop.f32.mrf.mxu0
      %v4207 = vadd.f32 %v4021, %v4206
      %v4208 = vpop.f32.mrf.mxu0
      %4209 = vmatprep.mubr.f32.mxu0 0.0
      %v4210 = vand.u32 %v3831, 4294901760
      %4211 = vmatmul.mubr.f32.gmra.mxu0 %v4210
      %v4212 = vpop.f32.mrf.mxu0
      %v4213 = vadd.f32 %v4031, %v4212
      %v4214 = vpop.f32.mrf.mxu0
      %4215 = vmatprep.mubr.f32.mxu0 0.0
      %v4216 = vand.u32 %v3834, 4294901760
      %4217 = vmatmul.mubr.f32.gmra.mxu0 %v4216
      %v4218 = vpop.f32.mrf.mxu0
      %v4219 = vadd.f32 %v4041, %v4218
      %v4220 = vpop.f32.mrf.mxu0
      %4221 = vmatprep.mubr.f32.mxu0 0.0
      %v4222 = vand.u32 %v3837, 4294901760
      %4223 = vmatmul.mubr.f32.gmra.mxu0 %v4222
      %v4224 = vpop.f32.mrf.mxu0
      %v4225 = vadd.f32 %v4051, %v4224
      %v4226 = vpop.f32.mrf.mxu0
      %4227 = vmatprep.mubr.f32.mxu0 0.0
      %v4228 = vand.u32 %v3840, 4294901760
      %4229 = vmatmul.mubr.f32.gmra.mxu0 %v4228
      %v4230 = vpop.f32.mrf.mxu0
      %v4231 = vadd.f32 %v4061, %v4230
      %v4232 = vpop.f32.mrf.mxu0
      %4233 = vmatprep.mubr.f32.mxu0 0.0
      %v4234 = vand.u32 %v3843, 4294901760
      %4235 = vmatmul.mubr.f32.gmra.mxu0 %v4234
      %v4236 = vpop.f32.mrf.mxu0
      %v4237 = vadd.f32 %v4071, %v4236
      %v4238 = vpop.f32.mrf.mxu0
      %4239 = vdwg.mxu0
      %4240 = vmatprep.subr.mxu0 0.0
      %4241 = vmatpush1.msra.mxu0 0.0
      %4242 = vmatprep.subr.mxu0 0.0
      %4243 = vmatpush1.msra.mxu0 0.0
      %4244 = vmatprep.subr.mxu0 0.0
      %4245 = vmatpush1.msra.mxu0 0.0
      %4246 = vmatprep.subr.mxu0 0.0
      %4247 = vmatpush1.msra.mxu0 0.0
      %4248 = vmatprep.subr.mxu0 0.0
      %4249 = vmatpush1.msra.mxu0 0.0
      %4250 = vmatprep.subr.mxu0 0.0
      %4251 = vmatpush1.msra.mxu0 0.0
      %4252 = vmatprep.subr.mxu0 0.0
      %4253 = vmatpush1.msra.mxu0 0.0
      %4254 = vmatprep.subr.mxu0 0.0
      %4255 = vmatpush1.msra.mxu0 0.0
      %4256 = vmatprep.subr.mxu0 0.0
      %4257 = vmatpush1.msra.mxu0 0.0
      %4258 = vmatprep.subr.mxu0 0.0
      %4259 = vmatpush1.msra.mxu0 0.0
      %4260 = vmatprep.subr.mxu0 0.0
      %4261 = vmatpush1.msra.mxu0 0.0
      %4262 = vmatprep.subr.mxu0 0.0
      %4263 = vmatpush1.msra.mxu0 0.0
      %4264 = vmatprep.subr.mxu0 0.0
      %4265 = vmatpush1.msra.mxu0 0.0
      %4266 = vmatprep.subr.mxu0 0.0
      %4267 = vmatpush1.msra.mxu0 0.0
      %4268 = vmatprep.subr.mxu0 0.0
      %4269 = vmatpush1.msra.mxu0 0.0
      %4270 = vmatprep.subr.mxu0 0.0
      %v4271 = vand.u32 %v3846, 4294901760
      %v4272 = vsub.f32 %v3846, %v4271
      %4273 = vmatpush1.msra.mxu0 %v4272
      %4274 = vmatprep.subr.mxu0 0.0
      %4275 = vmatpush2.msra.mxu0 0.0
      %4276 = vmatprep.subr.mxu0 0.0
      %4277 = vmatpush2.msra.mxu0 0.0
      %4278 = vmatprep.subr.mxu0 0.0
      %4279 = vmatpush2.msra.mxu0 0.0
      %4280 = vmatprep.subr.mxu0 0.0
      %4281 = vmatpush2.msra.mxu0 0.0
      %4282 = vmatprep.subr.mxu0 0.0
      %4283 = vmatpush2.msra.mxu0 0.0
      %4284 = vmatprep.subr.mxu0 0.0
      %4285 = vmatpush2.msra.mxu0 0.0
      %4286 = vmatprep.subr.mxu0 0.0
      %4287 = vmatpush2.msra.mxu0 0.0
      %4288 = vmatprep.subr.mxu0 0.0
      %4289 = vmatpush2.msra.mxu0 0.0
      %4290 = vmatprep.subr.mxu0 0.0
      %4291 = vmatpush2.msra.mxu0 0.0
      %4292 = vmatprep.subr.mxu0 0.0
      %4293 = vmatpush2.msra.mxu0 0.0
      %4294 = vmatprep.subr.mxu0 0.0
      %4295 = vmatpush2.msra.mxu0 0.0
      %4296 = vmatprep.subr.mxu0 0.0
      %4297 = vmatpush2.msra.mxu0 0.0
      %4298 = vmatprep.subr.mxu0 0.0
      %4299 = vmatpush2.msra.mxu0 0.0
      %4300 = vmatprep.subr.mxu0 0.0
      %4301 = vmatpush2.msra.mxu0 0.0
      %4302 = vmatprep.subr.mxu0 0.0
      %4303 = vmatpush2.msra.mxu0 0.0
      %4304 = vmatprep.subr.mxu0 0.0
      %4305 = vmatpush2.msra.mxu0 0.0
      %4306 = vmatprep.mubr.f32.mxu0 0.0
      %v4307 = vand.u32 %v3798, 4294901760
      %v4308 = vsub.f32 %v3798, %v4307
      %4309 = vmatmul.mubr.f32.gmra.mxu0 %v4308
      %v4310 = vpop.f32.mrf.mxu0
      %v4311 = vadd.f32 %v4147, %v4310
      %v4312 = vpop.f32.mrf.mxu0
      %4313 = vmatprep.mubr.f32.mxu0 0.0
      %v4314 = vand.u32 %v3801, 4294901760
      %v4315 = vsub.f32 %v3801, %v4314
      %4316 = vmatmul.mubr.f32.gmra.mxu0 %v4315
      %v4317 = vpop.f32.mrf.mxu0
      %v4318 = vadd.f32 %v4153, %v4317
      %v4319 = vpop.f32.mrf.mxu0
      %4320 = vmatprep.mubr.f32.mxu0 0.0
      %v4321 = vand.u32 %v3804, 4294901760
      %v4322 = vsub.f32 %v3804, %v4321
      %4323 = vmatmul.mubr.f32.gmra.mxu0 %v4322
      %v4324 = vpop.f32.mrf.mxu0
      %v4325 = vadd.f32 %v4159, %v4324
      %v4326 = vpop.f32.mrf.mxu0
      %4327 = vmatprep.mubr.f32.mxu0 0.0
      %v4328 = vand.u32 %v3807, 4294901760
      %v4329 = vsub.f32 %v3807, %v4328
      %4330 = vmatmul.mubr.f32.gmra.mxu0 %v4329
      %v4331 = vpop.f32.mrf.mxu0
      %v4332 = vadd.f32 %v4165, %v4331
      %v4333 = vpop.f32.mrf.mxu0
      %4334 = vmatprep.mubr.f32.mxu0 0.0
      %v4335 = vand.u32 %v3810, 4294901760
      %v4336 = vsub.f32 %v3810, %v4335
      %4337 = vmatmul.mubr.f32.gmra.mxu0 %v4336
      %v4338 = vpop.f32.mrf.mxu0
      %v4339 = vadd.f32 %v4171, %v4338
      %v4340 = vpop.f32.mrf.mxu0
      %4341 = vmatprep.mubr.f32.mxu0 0.0
      %v4342 = vand.u32 %v3813, 4294901760
      %v4343 = vsub.f32 %v3813, %v4342
      %4344 = vmatmul.mubr.f32.gmra.mxu0 %v4343
      %v4345 = vpop.f32.mrf.mxu0
      %v4346 = vadd.f32 %v4177, %v4345
      %v4347 = vpop.f32.mrf.mxu0
      %4348 = vmatprep.mubr.f32.mxu0 0.0
      %v4349 = vand.u32 %v3816, 4294901760
      %v4350 = vsub.f32 %v3816, %v4349
      %4351 = vmatmul.mubr.f32.gmra.mxu0 %v4350
      %v4352 = vpop.f32.mrf.mxu0
      %v4353 = vadd.f32 %v4183, %v4352
      %v4354 = vpop.f32.mrf.mxu0
      %4355 = vmatprep.mubr.f32.mxu0 0.0
      %v4356 = vand.u32 %v3819, 4294901760
      %v4357 = vsub.f32 %v3819, %v4356
      %4358 = vmatmul.mubr.f32.gmra.mxu0 %v4357
      %v4359 = vpop.f32.mrf.mxu0
      %v4360 = vadd.f32 %v4189, %v4359
      %v4361 = vpop.f32.mrf.mxu0
      %4362 = vmatprep.mubr.f32.mxu0 0.0
      %v4363 = vand.u32 %v3822, 4294901760
      %v4364 = vsub.f32 %v3822, %v4363
      %4365 = vmatmul.mubr.f32.gmra.mxu0 %v4364
      %v4366 = vpop.f32.mrf.mxu0
      %v4367 = vadd.f32 %v4195, %v4366
      %v4368 = vpop.f32.mrf.mxu0
      %4369 = vmatprep.mubr.f32.mxu0 0.0
      %v4370 = vand.u32 %v3825, 4294901760
      %v4371 = vsub.f32 %v3825, %v4370
      %4372 = vmatmul.mubr.f32.gmra.mxu0 %v4371
      %v4373 = vpop.f32.mrf.mxu0
      %v4374 = vadd.f32 %v4201, %v4373
      %v4375 = vpop.f32.mrf.mxu0
      %4376 = vmatprep.mubr.f32.mxu0 0.0
      %v4377 = vand.u32 %v3828, 4294901760
      %v4378 = vsub.f32 %v3828, %v4377
      %4379 = vmatmul.mubr.f32.gmra.mxu0 %v4378
      %v4380 = vpop.f32.mrf.mxu0
      %v4381 = vadd.f32 %v4207, %v4380
      %v4382 = vpop.f32.mrf.mxu0
      %4383 = vmatprep.mubr.f32.mxu0 0.0
      %v4384 = vand.u32 %v3831, 4294901760
      %v4385 = vsub.f32 %v3831, %v4384
      %4386 = vmatmul.mubr.f32.gmra.mxu0 %v4385
      %v4387 = vpop.f32.mrf.mxu0
      %v4388 = vadd.f32 %v4213, %v4387
      %v4389 = vpop.f32.mrf.mxu0
      %4390 = vmatprep.mubr.f32.mxu0 0.0
      %v4391 = vand.u32 %v3834, 4294901760
      %v4392 = vsub.f32 %v3834, %v4391
      %4393 = vmatmul.mubr.f32.gmra.mxu0 %v4392
      %v4394 = vpop.f32.mrf.mxu0
      %v4395 = vadd.f32 %v4219, %v4394
      %v4396 = vpop.f32.mrf.mxu0
      %4397 = vmatprep.mubr.f32.mxu0 0.0
      %v4398 = vand.u32 %v3837, 4294901760
      %v4399 = vsub.f32 %v3837, %v4398
      %4400 = vmatmul.mubr.f32.gmra.mxu0 %v4399
      %v4401 = vpop.f32.mrf.mxu0
      %v4402 = vadd.f32 %v4225, %v4401
      %v4403 = vpop.f32.mrf.mxu0
      %4404 = vmatprep.mubr.f32.mxu0 0.0
      %v4405 = vand.u32 %v3840, 4294901760
      %v4406 = vsub.f32 %v3840, %v4405
      %4407 = vmatmul.mubr.f32.gmra.mxu0 %v4406
      %v4408 = vpop.f32.mrf.mxu0
      %v4409 = vadd.f32 %v4231, %v4408
      %v4410 = vpop.f32.mrf.mxu0
      %4411 = vmatprep.mubr.f32.mxu0 0.0
      %v4412 = vand.u32 %v3843, 4294901760
      %v4413 = vsub.f32 %v3843, %v4412
      %4414 = vmatmul.mubr.f32.gmra.mxu0 %v4413
      %v4415 = vpop.f32.mrf.mxu0
      %v4416 = vadd.f32 %v4237, %v4415
      %v4417 = vpop.f32.mrf.mxu0
      %4418 = vdwg.mxu0
      %4419 = vmatprep.subr.mxu0 0.0
      %4420 = vmatpush1.msra.mxu0 0.0
      %4421 = vmatprep.subr.mxu0 0.0
      %4422 = vmatpush1.msra.mxu0 0.0
      %4423 = vmatprep.subr.mxu0 0.0
      %4424 = vmatpush1.msra.mxu0 0.0
      %4425 = vmatprep.subr.mxu0 0.0
      %4426 = vmatpush1.msra.mxu0 0.0
      %4427 = vmatprep.subr.mxu0 0.0
      %4428 = vmatpush1.msra.mxu0 0.0
      %4429 = vmatprep.subr.mxu0 0.0
      %4430 = vmatpush1.msra.mxu0 0.0
      %4431 = vmatprep.subr.mxu0 0.0
      %4432 = vmatpush1.msra.mxu0 0.0
      %4433 = vmatprep.subr.mxu0 0.0
      %4434 = vmatpush1.msra.mxu0 0.0
      %4435 = vmatprep.subr.mxu0 0.0
      %4436 = vmatpush1.msra.mxu0 0.0
      %4437 = vmatprep.subr.mxu0 0.0
      %4438 = vmatpush1.msra.mxu0 0.0
      %4439 = vmatprep.subr.mxu0 0.0
      %4440 = vmatpush1.msra.mxu0 0.0
      %4441 = vmatprep.subr.mxu0 0.0
      %4442 = vmatpush1.msra.mxu0 0.0
      %4443 = vmatprep.subr.mxu0 0.0
      %4444 = vmatpush1.msra.mxu0 0.0
      %4445 = vmatprep.subr.mxu0 0.0
      %4446 = vmatpush1.msra.mxu0 0.0
      %4447 = vmatprep.subr.mxu0 0.0
      %4448 = vmatpush1.msra.mxu0 0.0
      %4449 = vmatprep.subr.mxu0 0.0
      %v4450 = vand.u32 %v3846, 4294901760
      %4451 = vmatpush1.msra.mxu0 %v4450
      %4452 = vmatprep.subr.mxu0 0.0
      %4453 = vmatpush2.msra.mxu0 0.0
      %4454 = vmatprep.subr.mxu0 0.0
      %4455 = vmatpush2.msra.mxu0 0.0
      %4456 = vmatprep.subr.mxu0 0.0
      %4457 = vmatpush2.msra.mxu0 0.0
      %4458 = vmatprep.subr.mxu0 0.0
      %4459 = vmatpush2.msra.mxu0 0.0
      %4460 = vmatprep.subr.mxu0 0.0
      %4461 = vmatpush2.msra.mxu0 0.0
      %4462 = vmatprep.subr.mxu0 0.0
      %4463 = vmatpush2.msra.mxu0 0.0
      %4464 = vmatprep.subr.mxu0 0.0
      %4465 = vmatpush2.msra.mxu0 0.0
      %4466 = vmatprep.subr.mxu0 0.0
      %4467 = vmatpush2.msra.mxu0 0.0
      %4468 = vmatprep.subr.mxu0 0.0
      %4469 = vmatpush2.msra.mxu0 0.0
      %4470 = vmatprep.subr.mxu0 0.0
      %4471 = vmatpush2.msra.mxu0 0.0
      %4472 = vmatprep.subr.mxu0 0.0
      %4473 = vmatpush2.msra.mxu0 0.0
      %4474 = vmatprep.subr.mxu0 0.0
      %4475 = vmatpush2.msra.mxu0 0.0
      %4476 = vmatprep.subr.mxu0 0.0
      %4477 = vmatpush2.msra.mxu0 0.0
      %4478 = vmatprep.subr.mxu0 0.0
      %4479 = vmatpush2.msra.mxu0 0.0
      %4480 = vmatprep.subr.mxu0 0.0
      %4481 = vmatpush2.msra.mxu0 0.0
      %4482 = vmatprep.subr.mxu0 0.0
      %4483 = vmatpush2.msra.mxu0 0.0
      %4484 = vmatprep.mubr.f32.mxu0 0.0
      %v4485 = vand.u32 %v3798, 4294901760
      %v4486 = vsub.f32 %v3798, %v4485
      %v4487 = vand.u32 %v4486, 4294901760
      %4488 = vmatmul.mubr.f32.gmra.mxu0 %v4487
      %v4489 = vpop.f32.mrf.mxu0
      %v4490 = vadd.f32 %v4311, %v4489
      %v4491 = vpop.f32.mrf.mxu0
      %4492 = vmatprep.mubr.f32.mxu0 0.0
      %v4493 = vand.u32 %v3801, 4294901760
      %v4494 = vsub.f32 %v3801, %v4493
      %v4495 = vand.u32 %v4494, 4294901760
      %4496 = vmatmul.mubr.f32.gmra.mxu0 %v4495
      %v4497 = vpop.f32.mrf.mxu0
      %v4498 = vadd.f32 %v4318, %v4497
      %v4499 = vpop.f32.mrf.mxu0
      %4500 = vmatprep.mubr.f32.mxu0 0.0
      %v4501 = vand.u32 %v3804, 4294901760
      %v4502 = vsub.f32 %v3804, %v4501
      %v4503 = vand.u32 %v4502, 4294901760
      %4504 = vmatmul.mubr.f32.gmra.mxu0 %v4503
      %v4505 = vpop.f32.mrf.mxu0
      %v4506 = vadd.f32 %v4325, %v4505
      %v4507 = vpop.f32.mrf.mxu0
      %4508 = vmatprep.mubr.f32.mxu0 0.0
      %v4509 = vand.u32 %v3807, 4294901760
      %v4510 = vsub.f32 %v3807, %v4509
      %v4511 = vand.u32 %v4510, 4294901760
      %4512 = vmatmul.mubr.f32.gmra.mxu0 %v4511
      %v4513 = vpop.f32.mrf.mxu0
      %v4514 = vadd.f32 %v4332, %v4513
      %v4515 = vpop.f32.mrf.mxu0
      %4516 = vmatprep.mubr.f32.mxu0 0.0
      %v4517 = vand.u32 %v3810, 4294901760
      %v4518 = vsub.f32 %v3810, %v4517
      %v4519 = vand.u32 %v4518, 4294901760
      %4520 = vmatmul.mubr.f32.gmra.mxu0 %v4519
      %v4521 = vpop.f32.mrf.mxu0
      %v4522 = vadd.f32 %v4339, %v4521
      %v4523 = vpop.f32.mrf.mxu0
      %4524 = vmatprep.mubr.f32.mxu0 0.0
      %v4525 = vand.u32 %v3813, 4294901760
      %v4526 = vsub.f32 %v3813, %v4525
      %v4527 = vand.u32 %v4526, 4294901760
      %4528 = vmatmul.mubr.f32.gmra.mxu0 %v4527
      %v4529 = vpop.f32.mrf.mxu0
      %v4530 = vadd.f32 %v4346, %v4529
      %v4531 = vpop.f32.mrf.mxu0
      %4532 = vmatprep.mubr.f32.mxu0 0.0
      %v4533 = vand.u32 %v3816, 4294901760
      %v4534 = vsub.f32 %v3816, %v4533
      %v4535 = vand.u32 %v4534, 4294901760
      %4536 = vmatmul.mubr.f32.gmra.mxu0 %v4535
      %v4537 = vpop.f32.mrf.mxu0
      %v4538 = vadd.f32 %v4353, %v4537
      %v4539 = vpop.f32.mrf.mxu0
      %4540 = vmatprep.mubr.f32.mxu0 0.0
      %v4541 = vand.u32 %v3819, 4294901760
      %v4542 = vsub.f32 %v3819, %v4541
      %v4543 = vand.u32 %v4542, 4294901760
      %4544 = vmatmul.mubr.f32.gmra.mxu0 %v4543
      %v4545 = vpop.f32.mrf.mxu0
      %v4546 = vadd.f32 %v4360, %v4545
      %v4547 = vpop.f32.mrf.mxu0
      %4548 = vmatprep.mubr.f32.mxu0 0.0
      %v4549 = vand.u32 %v3822, 4294901760
      %v4550 = vsub.f32 %v3822, %v4549
      %v4551 = vand.u32 %v4550, 4294901760
      %4552 = vmatmul.mubr.f32.gmra.mxu0 %v4551
      %v4553 = vpop.f32.mrf.mxu0
      %v4554 = vadd.f32 %v4367, %v4553
      %v4555 = vpop.f32.mrf.mxu0
      %4556 = vmatprep.mubr.f32.mxu0 0.0
      %v4557 = vand.u32 %v3825, 4294901760
      %v4558 = vsub.f32 %v3825, %v4557
      %v4559 = vand.u32 %v4558, 4294901760
      %4560 = vmatmul.mubr.f32.gmra.mxu0 %v4559
      %v4561 = vpop.f32.mrf.mxu0
      %v4562 = vadd.f32 %v4374, %v4561
      %v4563 = vpop.f32.mrf.mxu0
      %4564 = vmatprep.mubr.f32.mxu0 0.0
      %v4565 = vand.u32 %v3828, 4294901760
      %v4566 = vsub.f32 %v3828, %v4565
      %v4567 = vand.u32 %v4566, 4294901760
      %4568 = vmatmul.mubr.f32.gmra.mxu0 %v4567
      %v4569 = vpop.f32.mrf.mxu0
      %v4570 = vadd.f32 %v4381, %v4569
      %v4571 = vpop.f32.mrf.mxu0
      %4572 = vmatprep.mubr.f32.mxu0 0.0
      %v4573 = vand.u32 %v3831, 4294901760
      %v4574 = vsub.f32 %v3831, %v4573
      %v4575 = vand.u32 %v4574, 4294901760
      %4576 = vmatmul.mubr.f32.gmra.mxu0 %v4575
      %v4577 = vpop.f32.mrf.mxu0
      %v4578 = vadd.f32 %v4388, %v4577
      %v4579 = vpop.f32.mrf.mxu0
      %4580 = vmatprep.mubr.f32.mxu0 0.0
      %v4581 = vand.u32 %v3834, 4294901760
      %v4582 = vsub.f32 %v3834, %v4581
      %v4583 = vand.u32 %v4582, 4294901760
      %4584 = vmatmul.mubr.f32.gmra.mxu0 %v4583
      %v4585 = vpop.f32.mrf.mxu0
      %v4586 = vadd.f32 %v4395, %v4585
      %v4587 = vpop.f32.mrf.mxu0
      %4588 = vmatprep.mubr.f32.mxu0 0.0
      %v4589 = vand.u32 %v3837, 4294901760
      %v4590 = vsub.f32 %v3837, %v4589
      %v4591 = vand.u32 %v4590, 4294901760
      %4592 = vmatmul.mubr.f32.gmra.mxu0 %v4591
      %v4593 = vpop.f32.mrf.mxu0
      %v4594 = vadd.f32 %v4402, %v4593
      %v4595 = vpop.f32.mrf.mxu0
      %4596 = vmatprep.mubr.f32.mxu0 0.0
      %v4597 = vand.u32 %v3840, 4294901760
      %v4598 = vsub.f32 %v3840, %v4597
      %v4599 = vand.u32 %v4598, 4294901760
      %4600 = vmatmul.mubr.f32.gmra.mxu0 %v4599
      %v4601 = vpop.f32.mrf.mxu0
      %v4602 = vadd.f32 %v4409, %v4601
      %v4603 = vpop.f32.mrf.mxu0
      %4604 = vmatprep.mubr.f32.mxu0 0.0
      %v4605 = vand.u32 %v3843, 4294901760
      %v4606 = vsub.f32 %v3843, %v4605
      %v4607 = vand.u32 %v4606, 4294901760
      %4608 = vmatmul.mubr.f32.gmra.mxu0 %v4607
      %v4609 = vpop.f32.mrf.mxu0
      %v4610 = vadd.f32 %v4416, %v4609
      %v4611 = vpop.f32.mrf.mxu0
      %4612 = vdwg.mxu0
      %4613 = vmatprep.subr.mxu0 0.0
      %4614 = vmatpush1.msra.mxu0 0.0
      %4615 = vmatprep.subr.mxu0 0.0
      %4616 = vmatpush1.msra.mxu0 0.0
      %4617 = vmatprep.subr.mxu0 0.0
      %4618 = vmatpush1.msra.mxu0 0.0
      %4619 = vmatprep.subr.mxu0 0.0
      %4620 = vmatpush1.msra.mxu0 0.0
      %4621 = vmatprep.subr.mxu0 0.0
      %4622 = vmatpush1.msra.mxu0 0.0
      %4623 = vmatprep.subr.mxu0 0.0
      %4624 = vmatpush1.msra.mxu0 0.0
      %4625 = vmatprep.subr.mxu0 0.0
      %4626 = vmatpush1.msra.mxu0 0.0
      %4627 = vmatprep.subr.mxu0 0.0
      %4628 = vmatpush1.msra.mxu0 0.0
      %4629 = vmatprep.subr.mxu0 0.0
      %4630 = vmatpush1.msra.mxu0 0.0
      %4631 = vmatprep.subr.mxu0 0.0
      %4632 = vmatpush1.msra.mxu0 0.0
      %4633 = vmatprep.subr.mxu0 0.0
      %4634 = vmatpush1.msra.mxu0 0.0
      %4635 = vmatprep.subr.mxu0 0.0
      %4636 = vmatpush1.msra.mxu0 0.0
      %4637 = vmatprep.subr.mxu0 0.0
      %4638 = vmatpush1.msra.mxu0 0.0
      %4639 = vmatprep.subr.mxu0 0.0
      %4640 = vmatpush1.msra.mxu0 0.0
      %4641 = vmatprep.subr.mxu0 0.0
      %4642 = vmatpush1.msra.mxu0 0.0
      %4643 = vmatprep.subr.mxu0 0.0
      %v4644 = vand.u32 %v3846, 4294901760
      %v4645 = vsub.f32 %v3846, %v4644
      %v4646 = vand.u32 %v4645, 4294901760
      %4647 = vmatpush1.msra.mxu0 %v4646
      %4648 = vmatprep.subr.mxu0 0.0
      %4649 = vmatpush2.msra.mxu0 0.0
      %4650 = vmatprep.subr.mxu0 0.0
      %4651 = vmatpush2.msra.mxu0 0.0
      %4652 = vmatprep.subr.mxu0 0.0
      %4653 = vmatpush2.msra.mxu0 0.0
      %4654 = vmatprep.subr.mxu0 0.0
      %4655 = vmatpush2.msra.mxu0 0.0
      %4656 = vmatprep.subr.mxu0 0.0
      %4657 = vmatpush2.msra.mxu0 0.0
      %4658 = vmatprep.subr.mxu0 0.0
      %4659 = vmatpush2.msra.mxu0 0.0
      %4660 = vmatprep.subr.mxu0 0.0
      %4661 = vmatpush2.msra.mxu0 0.0
      %4662 = vmatprep.subr.mxu0 0.0
      %4663 = vmatpush2.msra.mxu0 0.0
      %4664 = vmatprep.subr.mxu0 0.0
      %4665 = vmatpush2.msra.mxu0 0.0
      %4666 = vmatprep.subr.mxu0 0.0
      %4667 = vmatpush2.msra.mxu0 0.0
      %4668 = vmatprep.subr.mxu0 0.0
      %4669 = vmatpush2.msra.mxu0 0.0
      %4670 = vmatprep.subr.mxu0 0.0
      %4671 = vmatpush2.msra.mxu0 0.0
      %4672 = vmatprep.subr.mxu0 0.0
      %4673 = vmatpush2.msra.mxu0 0.0
      %4674 = vmatprep.subr.mxu0 0.0
      %4675 = vmatpush2.msra.mxu0 0.0
      %4676 = vmatprep.subr.mxu0 0.0
      %4677 = vmatpush2.msra.mxu0 0.0
      %4678 = vmatprep.subr.mxu0 0.0
      %4679 = vmatpush2.msra.mxu0 0.0
      %4680 = vmatprep.mubr.f32.mxu0 0.0
      %v4681 = vand.u32 %v3798, 4294901760
      %4682 = vmatmul.mubr.f32.gmra.mxu0 %v4681
      %v4683 = vpop.f32.mrf.mxu0
      %v4684 = vadd.f32 %v4490, %v4683
      %v4685 = vpop.f32.mrf.mxu0
      %4686 = vmatprep.mubr.f32.mxu0 0.0
      %v4687 = vand.u32 %v3801, 4294901760
      %4688 = vmatmul.mubr.f32.gmra.mxu0 %v4687
      %v4689 = vpop.f32.mrf.mxu0
      %v4690 = vadd.f32 %v4498, %v4689
      %v4691 = vpop.f32.mrf.mxu0
      %4692 = vmatprep.mubr.f32.mxu0 0.0
      %v4693 = vand.u32 %v3804, 4294901760
      %4694 = vmatmul.mubr.f32.gmra.mxu0 %v4693
      %v4695 = vpop.f32.mrf.mxu0
      %v4696 = vadd.f32 %v4506, %v4695
      %v4697 = vpop.f32.mrf.mxu0
      %4698 = vmatprep.mubr.f32.mxu0 0.0
      %v4699 = vand.u32 %v3807, 4294901760
      %4700 = vmatmul.mubr.f32.gmra.mxu0 %v4699
      %v4701 = vpop.f32.mrf.mxu0
      %v4702 = vadd.f32 %v4514, %v4701
      %v4703 = vpop.f32.mrf.mxu0
      %4704 = vmatprep.mubr.f32.mxu0 0.0
      %v4705 = vand.u32 %v3810, 4294901760
      %4706 = vmatmul.mubr.f32.gmra.mxu0 %v4705
      %v4707 = vpop.f32.mrf.mxu0
      %v4708 = vadd.f32 %v4522, %v4707
      %v4709 = vpop.f32.mrf.mxu0
      %4710 = vmatprep.mubr.f32.mxu0 0.0
      %v4711 = vand.u32 %v3813, 4294901760
      %4712 = vmatmul.mubr.f32.gmra.mxu0 %v4711
      %v4713 = vpop.f32.mrf.mxu0
      %v4714 = vadd.f32 %v4530, %v4713
      %v4715 = vpop.f32.mrf.mxu0
      %4716 = vmatprep.mubr.f32.mxu0 0.0
      %v4717 = vand.u32 %v3816, 4294901760
      %4718 = vmatmul.mubr.f32.gmra.mxu0 %v4717
      %v4719 = vpop.f32.mrf.mxu0
      %v4720 = vadd.f32 %v4538, %v4719
      %v4721 = vpop.f32.mrf.mxu0
      %4722 = vmatprep.mubr.f32.mxu0 0.0
      %v4723 = vand.u32 %v3819, 4294901760
      %4724 = vmatmul.mubr.f32.gmra.mxu0 %v4723
      %v4725 = vpop.f32.mrf.mxu0
      %v4726 = vadd.f32 %v4546, %v4725
      %v4727 = vpop.f32.mrf.mxu0
      %4728 = vmatprep.mubr.f32.mxu0 0.0
      %v4729 = vand.u32 %v3822, 4294901760
      %4730 = vmatmul.mubr.f32.gmra.mxu0 %v4729
      %v4731 = vpop.f32.mrf.mxu0
      %v4732 = vadd.f32 %v4554, %v4731
      %v4733 = vpop.f32.mrf.mxu0
      %4734 = vmatprep.mubr.f32.mxu0 0.0
      %v4735 = vand.u32 %v3825, 4294901760
      %4736 = vmatmul.mubr.f32.gmra.mxu0 %v4735
      %v4737 = vpop.f32.mrf.mxu0
      %v4738 = vadd.f32 %v4562, %v4737
      %v4739 = vpop.f32.mrf.mxu0
      %4740 = vmatprep.mubr.f32.mxu0 0.0
      %v4741 = vand.u32 %v3828, 4294901760
      %4742 = vmatmul.mubr.f32.gmra.mxu0 %v4741
      %v4743 = vpop.f32.mrf.mxu0
      %v4744 = vadd.f32 %v4570, %v4743
      %v4745 = vpop.f32.mrf.mxu0
      %4746 = vmatprep.mubr.f32.mxu0 0.0
      %v4747 = vand.u32 %v3831, 4294901760
      %4748 = vmatmul.mubr.f32.gmra.mxu0 %v4747
      %v4749 = vpop.f32.mrf.mxu0
      %v4750 = vadd.f32 %v4578, %v4749
      %v4751 = vpop.f32.mrf.mxu0
      %4752 = vmatprep.mubr.f32.mxu0 0.0
      %v4753 = vand.u32 %v3834, 4294901760
      %4754 = vmatmul.mubr.f32.gmra.mxu0 %v4753
      %v4755 = vpop.f32.mrf.mxu0
      %v4756 = vadd.f32 %v4586, %v4755
      %v4757 = vpop.f32.mrf.mxu0
      %4758 = vmatprep.mubr.f32.mxu0 0.0
      %v4759 = vand.u32 %v3837, 4294901760
      %4760 = vmatmul.mubr.f32.gmra.mxu0 %v4759
      %v4761 = vpop.f32.mrf.mxu0
      %v4762 = vadd.f32 %v4594, %v4761
      %v4763 = vpop.f32.mrf.mxu0
      %4764 = vmatprep.mubr.f32.mxu0 0.0
      %v4765 = vand.u32 %v3840, 4294901760
      %4766 = vmatmul.mubr.f32.gmra.mxu0 %v4765
      %v4767 = vpop.f32.mrf.mxu0
      %v4768 = vadd.f32 %v4602, %v4767
      %v4769 = vpop.f32.mrf.mxu0
      %4770 = vmatprep.mubr.f32.mxu0 0.0
      %v4771 = vand.u32 %v3843, 4294901760
      %4772 = vmatmul.mubr.f32.gmra.mxu0 %v4771
      %v4773 = vpop.f32.mrf.mxu0
      %v4774 = vadd.f32 %v4610, %v4773
      %v4775 = vpop.f32.mrf.mxu0
      %4776 = vdwg.mxu0
      %4777 = vmatprep.subr.mxu0 0.0
      %4778 = vmatpush1.msra.mxu0 0.0
      %4779 = vmatprep.subr.mxu0 0.0
      %4780 = vmatpush1.msra.mxu0 0.0
      %4781 = vmatprep.subr.mxu0 0.0
      %4782 = vmatpush1.msra.mxu0 0.0
      %4783 = vmatprep.subr.mxu0 0.0
      %4784 = vmatpush1.msra.mxu0 0.0
      %4785 = vmatprep.subr.mxu0 0.0
      %4786 = vmatpush1.msra.mxu0 0.0
      %4787 = vmatprep.subr.mxu0 0.0
      %4788 = vmatpush1.msra.mxu0 0.0
      %4789 = vmatprep.subr.mxu0 0.0
      %4790 = vmatpush1.msra.mxu0 0.0
      %4791 = vmatprep.subr.mxu0 0.0
      %4792 = vmatpush1.msra.mxu0 0.0
      %4793 = vmatprep.subr.mxu0 0.0
      %4794 = vmatpush1.msra.mxu0 0.0
      %4795 = vmatprep.subr.mxu0 0.0
      %4796 = vmatpush1.msra.mxu0 0.0
      %4797 = vmatprep.subr.mxu0 0.0
      %4798 = vmatpush1.msra.mxu0 0.0
      %4799 = vmatprep.subr.mxu0 0.0
      %4800 = vmatpush1.msra.mxu0 0.0
      %4801 = vmatprep.subr.mxu0 0.0
      %4802 = vmatpush1.msra.mxu0 0.0
      %4803 = vmatprep.subr.mxu0 0.0
      %4804 = vmatpush1.msra.mxu0 0.0
      %4805 = vmatprep.subr.mxu0 0.0
      %4806 = vmatpush1.msra.mxu0 0.0
      %4807 = vmatprep.subr.mxu0 0.0
      %v4808 = vand.u32 %v3846, 4294901760
      %4809 = vmatpush1.msra.mxu0 %v4808
      %4810 = vmatprep.subr.mxu0 0.0
      %4811 = vmatpush2.msra.mxu0 0.0
      %4812 = vmatprep.subr.mxu0 0.0
      %4813 = vmatpush2.msra.mxu0 0.0
      %4814 = vmatprep.subr.mxu0 0.0
      %4815 = vmatpush2.msra.mxu0 0.0
      %4816 = vmatprep.subr.mxu0 0.0
      %4817 = vmatpush2.msra.mxu0 0.0
      %4818 = vmatprep.subr.mxu0 0.0
      %4819 = vmatpush2.msra.mxu0 0.0
      %4820 = vmatprep.subr.mxu0 0.0
      %4821 = vmatpush2.msra.mxu0 0.0
      %4822 = vmatprep.subr.mxu0 0.0
      %4823 = vmatpush2.msra.mxu0 0.0
      %4824 = vmatprep.subr.mxu0 0.0
      %4825 = vmatpush2.msra.mxu0 0.0
      %4826 = vmatprep.subr.mxu0 0.0
      %4827 = vmatpush2.msra.mxu0 0.0
      %4828 = vmatprep.subr.mxu0 0.0
      %4829 = vmatpush2.msra.mxu0 0.0
      %4830 = vmatprep.subr.mxu0 0.0
      %4831 = vmatpush2.msra.mxu0 0.0
      %4832 = vmatprep.subr.mxu0 0.0
      %4833 = vmatpush2.msra.mxu0 0.0
      %4834 = vmatprep.subr.mxu0 0.0
      %4835 = vmatpush2.msra.mxu0 0.0
      %4836 = vmatprep.subr.mxu0 0.0
      %4837 = vmatpush2.msra.mxu0 0.0
      %4838 = vmatprep.subr.mxu0 0.0
      %4839 = vmatpush2.msra.mxu0 0.0
      %4840 = vmatprep.subr.mxu0 0.0
      %4841 = vmatpush2.msra.mxu0 0.0
      %4842 = vmatprep.mubr.f32.mxu0 0.0
      %v4843 = vand.u32 %v3798, 4294901760
      %4844 = vmatmul.mubr.f32.gmra.mxu0 %v4843
      %v4845 = vpop.f32.mrf.mxu0
      %v4846 = vadd.f32 %v4684, %v4845
      %v4847 = vpop.f32.mrf.mxu0
      %4848 = vmatprep.mubr.f32.mxu0 0.0
      %v4849 = vand.u32 %v3801, 4294901760
      %4850 = vmatmul.mubr.f32.gmra.mxu0 %v4849
      %v4851 = vpop.f32.mrf.mxu0
      %v4852 = vadd.f32 %v4690, %v4851
      %v4853 = vpop.f32.mrf.mxu0
      %4854 = vmatprep.mubr.f32.mxu0 0.0
      %v4855 = vand.u32 %v3804, 4294901760
      %4856 = vmatmul.mubr.f32.gmra.mxu0 %v4855
      %v4857 = vpop.f32.mrf.mxu0
      %v4858 = vadd.f32 %v4696, %v4857
      %v4859 = vpop.f32.mrf.mxu0
      %4860 = vmatprep.mubr.f32.mxu0 0.0
      %v4861 = vand.u32 %v3807, 4294901760
      %4862 = vmatmul.mubr.f32.gmra.mxu0 %v4861
      %v4863 = vpop.f32.mrf.mxu0
      %v4864 = vadd.f32 %v4702, %v4863
      %v4865 = vpop.f32.mrf.mxu0
      %4866 = vmatprep.mubr.f32.mxu0 0.0
      %v4867 = vand.u32 %v3810, 4294901760
      %4868 = vmatmul.mubr.f32.gmra.mxu0 %v4867
      %v4869 = vpop.f32.mrf.mxu0
      %v4870 = vadd.f32 %v4708, %v4869
      %v4871 = vpop.f32.mrf.mxu0
      %4872 = vmatprep.mubr.f32.mxu0 0.0
      %v4873 = vand.u32 %v3813, 4294901760
      %4874 = vmatmul.mubr.f32.gmra.mxu0 %v4873
      %v4875 = vpop.f32.mrf.mxu0
      %v4876 = vadd.f32 %v4714, %v4875
      %v4877 = vpop.f32.mrf.mxu0
      %4878 = vmatprep.mubr.f32.mxu0 0.0
      %v4879 = vand.u32 %v3816, 4294901760
      %4880 = vmatmul.mubr.f32.gmra.mxu0 %v4879
      %v4881 = vpop.f32.mrf.mxu0
      %v4882 = vadd.f32 %v4720, %v4881
      %v4883 = vpop.f32.mrf.mxu0
      %4884 = vmatprep.mubr.f32.mxu0 0.0
      %v4885 = vand.u32 %v3819, 4294901760
      %4886 = vmatmul.mubr.f32.gmra.mxu0 %v4885
      %v4887 = vpop.f32.mrf.mxu0
      %v4888 = vadd.f32 %v4726, %v4887
      %v4889 = vpop.f32.mrf.mxu0
      %4890 = vmatprep.mubr.f32.mxu0 0.0
      %v4891 = vand.u32 %v3822, 4294901760
      %4892 = vmatmul.mubr.f32.gmra.mxu0 %v4891
      %v4893 = vpop.f32.mrf.mxu0
      %v4894 = vadd.f32 %v4732, %v4893
      %v4895 = vpop.f32.mrf.mxu0
      %4896 = vmatprep.mubr.f32.mxu0 0.0
      %v4897 = vand.u32 %v3825, 4294901760
      %4898 = vmatmul.mubr.f32.gmra.mxu0 %v4897
      %v4899 = vpop.f32.mrf.mxu0
      %v4900 = vadd.f32 %v4738, %v4899
      %v4901 = vpop.f32.mrf.mxu0
      %4902 = vmatprep.mubr.f32.mxu0 0.0
      %v4903 = vand.u32 %v3828, 4294901760
      %4904 = vmatmul.mubr.f32.gmra.mxu0 %v4903
      %v4905 = vpop.f32.mrf.mxu0
      %v4906 = vadd.f32 %v4744, %v4905
      %v4907 = vpop.f32.mrf.mxu0
      %4908 = vmatprep.mubr.f32.mxu0 0.0
      %v4909 = vand.u32 %v3831, 4294901760
      %4910 = vmatmul.mubr.f32.gmra.mxu0 %v4909
      %v4911 = vpop.f32.mrf.mxu0
      %v4912 = vadd.f32 %v4750, %v4911
      %v4913 = vpop.f32.mrf.mxu0
      %4914 = vmatprep.mubr.f32.mxu0 0.0
      %v4915 = vand.u32 %v3834, 4294901760
      %4916 = vmatmul.mubr.f32.gmra.mxu0 %v4915
      %v4917 = vpop.f32.mrf.mxu0
      %v4918 = vadd.f32 %v4756, %v4917
      %v4919 = vpop.f32.mrf.mxu0
      %4920 = vmatprep.mubr.f32.mxu0 0.0
      %v4921 = vand.u32 %v3837, 4294901760
      %4922 = vmatmul.mubr.f32.gmra.mxu0 %v4921
      %v4923 = vpop.f32.mrf.mxu0
      %v4924 = vadd.f32 %v4762, %v4923
      %v4925 = vpop.f32.mrf.mxu0
      %4926 = vmatprep.mubr.f32.mxu0 0.0
      %v4927 = vand.u32 %v3840, 4294901760
      %4928 = vmatmul.mubr.f32.gmra.mxu0 %v4927
      %v4929 = vpop.f32.mrf.mxu0
      %v4930 = vadd.f32 %v4768, %v4929
      %v4931 = vpop.f32.mrf.mxu0
      %4932 = vmatprep.mubr.f32.mxu0 0.0
      %v4933 = vand.u32 %v3843, 4294901760
      %4934 = vmatmul.mubr.f32.gmra.mxu0 %v4933
      %v4935 = vpop.f32.mrf.mxu0
      %v4936 = vadd.f32 %v4774, %v4935
      %v4937 = vpop.f32.mrf.mxu0
      %4938 = vdwg.mxu0
      %v4939 = vadd.f32 %v3762, %v4846
      %v4940 = vadd.f32 %v3763, %v4852
      %v4941 = vadd.f32 %v3764, %v4858
      %v4942 = vadd.f32 %v3765, %v4864
      %v4943 = vadd.f32 %v3766, %v4870
      %v4944 = vadd.f32 %v3767, %v4876
      %v4945 = vadd.f32 %v3768, %v4882
      %v4946 = vadd.f32 %v3769, %v4888
      %v4947 = vadd.f32 %v3770, %v4894
      %v4948 = vadd.f32 %v3771, %v4900
      %v4949 = vadd.f32 %v3772, %v4906
      %v4950 = vadd.f32 %v3773, %v4912
      %v4951 = vadd.f32 %v3774, %v4918
      %v4952 = vadd.f32 %v3775, %v4924
      %v4953 = vadd.f32 %v3776, %v4930
      %v4954 = vadd.f32 %v3777, %v4936
      %s4955 = scalar_lea.vmem %s2, 4
      %v4956 = vld [vmem:[%s4955] sm:$0xf]
      %v4958 = vsel %vm365, %v4956, 0
      %4960 = vmatprep.subr.mxu0 0.0
      %4961 = vmatpush1.msra.mxu0 0.0
      %4962 = vmatprep.subr.mxu0 0.0
      %4963 = vmatpush1.msra.mxu0 0.0
      %4964 = vmatprep.subr.mxu0 0.0
      %4965 = vmatpush1.msra.mxu0 0.0
      %4966 = vmatprep.subr.mxu0 0.0
      %4967 = vmatpush1.msra.mxu0 0.0
      %4968 = vmatprep.subr.mxu0 0.0
      %4969 = vmatpush1.msra.mxu0 0.0
      %4970 = vmatprep.subr.mxu0 0.0
      %4971 = vmatpush1.msra.mxu0 0.0
      %4972 = vmatprep.subr.mxu0 0.0
      %4973 = vmatpush1.msra.mxu0 0.0
      %4974 = vmatprep.subr.mxu0 0.0
      %4975 = vmatpush1.msra.mxu0 0.0
      %4976 = vmatprep.subr.mxu0 0.0
      %4977 = vmatpush1.msra.mxu0 0.0
      %4978 = vmatprep.subr.mxu0 0.0
      %4979 = vmatpush1.msra.mxu0 0.0
      %4980 = vmatprep.subr.mxu0 0.0
      %4981 = vmatpush1.msra.mxu0 0.0
      %4982 = vmatprep.subr.mxu0 0.0
      %4983 = vmatpush1.msra.mxu0 0.0
      %4984 = vmatprep.subr.mxu0 0.0
      %4985 = vmatpush1.msra.mxu0 0.0
      %4986 = vmatprep.subr.mxu0 0.0
      %4987 = vmatpush1.msra.mxu0 0.0
      %4988 = vmatprep.subr.mxu0 0.0
      %4989 = vmatpush1.msra.mxu0 0.0
      %4990 = vmatprep.subr.mxu0 0.0
      %v4991 = vand.u32 %v4958, 4294901760
      %4992 = vmatpush1.msra.mxu0 %v4991
      %4993 = vmatprep.subr.mxu0 0.0
      %4994 = vmatpush2.msra.mxu0 0.0
      %4995 = vmatprep.subr.mxu0 0.0
      %4996 = vmatpush2.msra.mxu0 0.0
      %4997 = vmatprep.subr.mxu0 0.0
      %4998 = vmatpush2.msra.mxu0 0.0
      %4999 = vmatprep.subr.mxu0 0.0
      %5000 = vmatpush2.msra.mxu0 0.0
      %5001 = vmatprep.subr.mxu0 0.0
      %5002 = vmatpush2.msra.mxu0 0.0
      %5003 = vmatprep.subr.mxu0 0.0
      %5004 = vmatpush2.msra.mxu0 0.0
      %5005 = vmatprep.subr.mxu0 0.0
      %5006 = vmatpush2.msra.mxu0 0.0
      %5007 = vmatprep.subr.mxu0 0.0
      %5008 = vmatpush2.msra.mxu0 0.0
      %5009 = vmatprep.subr.mxu0 0.0
      %5010 = vmatpush2.msra.mxu0 0.0
      %5011 = vmatprep.subr.mxu0 0.0
      %5012 = vmatpush2.msra.mxu0 0.0
      %5013 = vmatprep.subr.mxu0 0.0
      %5014 = vmatpush2.msra.mxu0 0.0
      %5015 = vmatprep.subr.mxu0 0.0
      %5016 = vmatpush2.msra.mxu0 0.0
      %5017 = vmatprep.subr.mxu0 0.0
      %5018 = vmatpush2.msra.mxu0 0.0
      %5019 = vmatprep.subr.mxu0 0.0
      %5020 = vmatpush2.msra.mxu0 0.0
      %5021 = vmatprep.subr.mxu0 0.0
      %5022 = vmatpush2.msra.mxu0 0.0
      %5023 = vmatprep.subr.mxu0 0.0
      %5024 = vmatpush2.msra.mxu0 0.0
      %5025 = vmatprep.mubr.f32.mxu0 0.0
      %v5026 = vand.u32 %v318, 4294901760
      %v5027 = vsub.f32 %v318, %v5026
      %v5028 = vand.u32 %v5027, 4294901760
      %v5029 = vsub.f32 %v5027, %v5028
      %v5030 = vand.u32 %v5029, 4294901760
      %5031 = vmatmul.mubr.f32.gmra.mxu0 %v5030
      %v5032 = vpop.f32.mrf.mxu0
      %v5033 = vadd.f32 0.0, %v5032
      %v5034 = vpop.f32.mrf.mxu0
      %5035 = vmatprep.mubr.f32.mxu0 0.0
      %v5036 = vand.u32 %v321, 4294901760
      %v5037 = vsub.f32 %v321, %v5036
      %v5038 = vand.u32 %v5037, 4294901760
      %v5039 = vsub.f32 %v5037, %v5038
      %v5040 = vand.u32 %v5039, 4294901760
      %5041 = vmatmul.mubr.f32.gmra.mxu0 %v5040
      %v5042 = vpop.f32.mrf.mxu0
      %v5043 = vadd.f32 0.0, %v5042
      %v5044 = vpop.f32.mrf.mxu0
      %5045 = vmatprep.mubr.f32.mxu0 0.0
      %v5046 = vand.u32 %v324, 4294901760
      %v5047 = vsub.f32 %v324, %v5046
      %v5048 = vand.u32 %v5047, 4294901760
      %v5049 = vsub.f32 %v5047, %v5048
      %v5050 = vand.u32 %v5049, 4294901760
      %5051 = vmatmul.mubr.f32.gmra.mxu0 %v5050
      %v5052 = vpop.f32.mrf.mxu0
      %v5053 = vadd.f32 0.0, %v5052
      %v5054 = vpop.f32.mrf.mxu0
      %5055 = vmatprep.mubr.f32.mxu0 0.0
      %v5056 = vand.u32 %v327, 4294901760
      %v5057 = vsub.f32 %v327, %v5056
      %v5058 = vand.u32 %v5057, 4294901760
      %v5059 = vsub.f32 %v5057, %v5058
      %v5060 = vand.u32 %v5059, 4294901760
      %5061 = vmatmul.mubr.f32.gmra.mxu0 %v5060
      %v5062 = vpop.f32.mrf.mxu0
      %v5063 = vadd.f32 0.0, %v5062
      %v5064 = vpop.f32.mrf.mxu0
      %5065 = vmatprep.mubr.f32.mxu0 0.0
      %v5066 = vand.u32 %v330, 4294901760
      %v5067 = vsub.f32 %v330, %v5066
      %v5068 = vand.u32 %v5067, 4294901760
      %v5069 = vsub.f32 %v5067, %v5068
      %v5070 = vand.u32 %v5069, 4294901760
      %5071 = vmatmul.mubr.f32.gmra.mxu0 %v5070
      %v5072 = vpop.f32.mrf.mxu0
      %v5073 = vadd.f32 0.0, %v5072
      %v5074 = vpop.f32.mrf.mxu0
      %5075 = vmatprep.mubr.f32.mxu0 0.0
      %v5076 = vand.u32 %v333, 4294901760
      %v5077 = vsub.f32 %v333, %v5076
      %v5078 = vand.u32 %v5077, 4294901760
      %v5079 = vsub.f32 %v5077, %v5078
      %v5080 = vand.u32 %v5079, 4294901760
      %5081 = vmatmul.mubr.f32.gmra.mxu0 %v5080
      %v5082 = vpop.f32.mrf.mxu0
      %v5083 = vadd.f32 0.0, %v5082
      %v5084 = vpop.f32.mrf.mxu0
      %5085 = vmatprep.mubr.f32.mxu0 0.0
      %v5086 = vand.u32 %v336, 4294901760
      %v5087 = vsub.f32 %v336, %v5086
      %v5088 = vand.u32 %v5087, 4294901760
      %v5089 = vsub.f32 %v5087, %v5088
      %v5090 = vand.u32 %v5089, 4294901760
      %5091 = vmatmul.mubr.f32.gmra.mxu0 %v5090
      %v5092 = vpop.f32.mrf.mxu0
      %v5093 = vadd.f32 0.0, %v5092
      %v5094 = vpop.f32.mrf.mxu0
      %5095 = vmatprep.mubr.f32.mxu0 0.0
      %v5096 = vand.u32 %v339, 4294901760
      %v5097 = vsub.f32 %v339, %v5096
      %v5098 = vand.u32 %v5097, 4294901760
      %v5099 = vsub.f32 %v5097, %v5098
      %v5100 = vand.u32 %v5099, 4294901760
      %5101 = vmatmul.mubr.f32.gmra.mxu0 %v5100
      %v5102 = vpop.f32.mrf.mxu0
      %v5103 = vadd.f32 0.0, %v5102
      %v5104 = vpop.f32.mrf.mxu0
      %5105 = vmatprep.mubr.f32.mxu0 0.0
      %v5106 = vand.u32 %v342, 4294901760
      %v5107 = vsub.f32 %v342, %v5106
      %v5108 = vand.u32 %v5107, 4294901760
      %v5109 = vsub.f32 %v5107, %v5108
      %v5110 = vand.u32 %v5109, 4294901760
      %5111 = vmatmul.mubr.f32.gmra.mxu0 %v5110
      %v5112 = vpop.f32.mrf.mxu0
      %v5113 = vadd.f32 0.0, %v5112
      %v5114 = vpop.f32.mrf.mxu0
      %5115 = vmatprep.mubr.f32.mxu0 0.0
      %v5116 = vand.u32 %v345, 4294901760
      %v5117 = vsub.f32 %v345, %v5116
      %v5118 = vand.u32 %v5117, 4294901760
      %v5119 = vsub.f32 %v5117, %v5118
      %v5120 = vand.u32 %v5119, 4294901760
      %5121 = vmatmul.mubr.f32.gmra.mxu0 %v5120
      %v5122 = vpop.f32.mrf.mxu0
      %v5123 = vadd.f32 0.0, %v5122
      %v5124 = vpop.f32.mrf.mxu0
      %5125 = vmatprep.mubr.f32.mxu0 0.0
      %v5126 = vand.u32 %v348, 4294901760
      %v5127 = vsub.f32 %v348, %v5126
      %v5128 = vand.u32 %v5127, 4294901760
      %v5129 = vsub.f32 %v5127, %v5128
      %v5130 = vand.u32 %v5129, 4294901760
      %5131 = vmatmul.mubr.f32.gmra.mxu0 %v5130
      %v5132 = vpop.f32.mrf.mxu0
      %v5133 = vadd.f32 0.0, %v5132
      %v5134 = vpop.f32.mrf.mxu0
      %5135 = vmatprep.mubr.f32.mxu0 0.0
      %v5136 = vand.u32 %v351, 4294901760
      %v5137 = vsub.f32 %v351, %v5136
      %v5138 = vand.u32 %v5137, 4294901760
      %v5139 = vsub.f32 %v5137, %v5138
      %v5140 = vand.u32 %v5139, 4294901760
      %5141 = vmatmul.mubr.f32.gmra.mxu0 %v5140
      %v5142 = vpop.f32.mrf.mxu0
      %v5143 = vadd.f32 0.0, %v5142
      %v5144 = vpop.f32.mrf.mxu0
      %5145 = vmatprep.mubr.f32.mxu0 0.0
      %v5146 = vand.u32 %v354, 4294901760
      %v5147 = vsub.f32 %v354, %v5146
      %v5148 = vand.u32 %v5147, 4294901760
      %v5149 = vsub.f32 %v5147, %v5148
      %v5150 = vand.u32 %v5149, 4294901760
      %5151 = vmatmul.mubr.f32.gmra.mxu0 %v5150
      %v5152 = vpop.f32.mrf.mxu0
      %v5153 = vadd.f32 0.0, %v5152
      %v5154 = vpop.f32.mrf.mxu0
      %5155 = vmatprep.mubr.f32.mxu0 0.0
      %v5156 = vand.u32 %v357, 4294901760
      %v5157 = vsub.f32 %v357, %v5156
      %v5158 = vand.u32 %v5157, 4294901760
      %v5159 = vsub.f32 %v5157, %v5158
      %v5160 = vand.u32 %v5159, 4294901760
      %5161 = vmatmul.mubr.f32.gmra.mxu0 %v5160
      %v5162 = vpop.f32.mrf.mxu0
      %v5163 = vadd.f32 0.0, %v5162
      %v5164 = vpop.f32.mrf.mxu0
      %5165 = vmatprep.mubr.f32.mxu0 0.0
      %v5166 = vand.u32 %v360, 4294901760
      %v5167 = vsub.f32 %v360, %v5166
      %v5168 = vand.u32 %v5167, 4294901760
      %v5169 = vsub.f32 %v5167, %v5168
      %v5170 = vand.u32 %v5169, 4294901760
      %5171 = vmatmul.mubr.f32.gmra.mxu0 %v5170
      %v5172 = vpop.f32.mrf.mxu0
      %v5173 = vadd.f32 0.0, %v5172
      %v5174 = vpop.f32.mrf.mxu0
      %5175 = vmatprep.mubr.f32.mxu0 0.0
      %v5176 = vand.u32 %v363, 4294901760
      %v5177 = vsub.f32 %v363, %v5176
      %v5178 = vand.u32 %v5177, 4294901760
      %v5179 = vsub.f32 %v5177, %v5178
      %v5180 = vand.u32 %v5179, 4294901760
      %5181 = vmatmul.mubr.f32.gmra.mxu0 %v5180
      %v5182 = vpop.f32.mrf.mxu0
      %v5183 = vadd.f32 0.0, %v5182
      %v5184 = vpop.f32.mrf.mxu0
      %5185 = vdwg.mxu0
      %5186 = vmatprep.subr.mxu0 0.0
      %5187 = vmatpush1.msra.mxu0 0.0
      %5188 = vmatprep.subr.mxu0 0.0
      %5189 = vmatpush1.msra.mxu0 0.0
      %5190 = vmatprep.subr.mxu0 0.0
      %5191 = vmatpush1.msra.mxu0 0.0
      %5192 = vmatprep.subr.mxu0 0.0
      %5193 = vmatpush1.msra.mxu0 0.0
      %5194 = vmatprep.subr.mxu0 0.0
      %5195 = vmatpush1.msra.mxu0 0.0
      %5196 = vmatprep.subr.mxu0 0.0
      %5197 = vmatpush1.msra.mxu0 0.0
      %5198 = vmatprep.subr.mxu0 0.0
      %5199 = vmatpush1.msra.mxu0 0.0
      %5200 = vmatprep.subr.mxu0 0.0
      %5201 = vmatpush1.msra.mxu0 0.0
      %5202 = vmatprep.subr.mxu0 0.0
      %5203 = vmatpush1.msra.mxu0 0.0
      %5204 = vmatprep.subr.mxu0 0.0
      %5205 = vmatpush1.msra.mxu0 0.0
      %5206 = vmatprep.subr.mxu0 0.0
      %5207 = vmatpush1.msra.mxu0 0.0
      %5208 = vmatprep.subr.mxu0 0.0
      %5209 = vmatpush1.msra.mxu0 0.0
      %5210 = vmatprep.subr.mxu0 0.0
      %5211 = vmatpush1.msra.mxu0 0.0
      %5212 = vmatprep.subr.mxu0 0.0
      %5213 = vmatpush1.msra.mxu0 0.0
      %5214 = vmatprep.subr.mxu0 0.0
      %5215 = vmatpush1.msra.mxu0 0.0
      %5216 = vmatprep.subr.mxu0 0.0
      %v5217 = vand.u32 %v4958, 4294901760
      %v5218 = vsub.f32 %v4958, %v5217
      %v5219 = vand.u32 %v5218, 4294901760
      %v5220 = vsub.f32 %v5218, %v5219
      %v5221 = vand.u32 %v5220, 4294901760
      %5222 = vmatpush1.msra.mxu0 %v5221
      %5223 = vmatprep.subr.mxu0 0.0
      %5224 = vmatpush2.msra.mxu0 0.0
      %5225 = vmatprep.subr.mxu0 0.0
      %5226 = vmatpush2.msra.mxu0 0.0
      %5227 = vmatprep.subr.mxu0 0.0
      %5228 = vmatpush2.msra.mxu0 0.0
      %5229 = vmatprep.subr.mxu0 0.0
      %5230 = vmatpush2.msra.mxu0 0.0
      %5231 = vmatprep.subr.mxu0 0.0
      %5232 = vmatpush2.msra.mxu0 0.0
      %5233 = vmatprep.subr.mxu0 0.0
      %5234 = vmatpush2.msra.mxu0 0.0
      %5235 = vmatprep.subr.mxu0 0.0
      %5236 = vmatpush2.msra.mxu0 0.0
      %5237 = vmatprep.subr.mxu0 0.0
      %5238 = vmatpush2.msra.mxu0 0.0
      %5239 = vmatprep.subr.mxu0 0.0
      %5240 = vmatpush2.msra.mxu0 0.0
      %5241 = vmatprep.subr.mxu0 0.0
      %5242 = vmatpush2.msra.mxu0 0.0
      %5243 = vmatprep.subr.mxu0 0.0
      %5244 = vmatpush2.msra.mxu0 0.0
      %5245 = vmatprep.subr.mxu0 0.0
      %5246 = vmatpush2.msra.mxu0 0.0
      %5247 = vmatprep.subr.mxu0 0.0
      %5248 = vmatpush2.msra.mxu0 0.0
      %5249 = vmatprep.subr.mxu0 0.0
      %5250 = vmatpush2.msra.mxu0 0.0
      %5251 = vmatprep.subr.mxu0 0.0
      %5252 = vmatpush2.msra.mxu0 0.0
      %5253 = vmatprep.subr.mxu0 0.0
      %5254 = vmatpush2.msra.mxu0 0.0
      %5255 = vmatprep.mubr.f32.mxu0 0.0
      %v5256 = vand.u32 %v318, 4294901760
      %5257 = vmatmul.mubr.f32.gmra.mxu0 %v5256
      %v5258 = vpop.f32.mrf.mxu0
      %v5259 = vadd.f32 %v5033, %v5258
      %v5260 = vpop.f32.mrf.mxu0
      %5261 = vmatprep.mubr.f32.mxu0 0.0
      %v5262 = vand.u32 %v321, 4294901760
      %5263 = vmatmul.mubr.f32.gmra.mxu0 %v5262
      %v5264 = vpop.f32.mrf.mxu0
      %v5265 = vadd.f32 %v5043, %v5264
      %v5266 = vpop.f32.mrf.mxu0
      %5267 = vmatprep.mubr.f32.mxu0 0.0
      %v5268 = vand.u32 %v324, 4294901760
      %5269 = vmatmul.mubr.f32.gmra.mxu0 %v5268
      %v5270 = vpop.f32.mrf.mxu0
      %v5271 = vadd.f32 %v5053, %v5270
      %v5272 = vpop.f32.mrf.mxu0
      %5273 = vmatprep.mubr.f32.mxu0 0.0
      %v5274 = vand.u32 %v327, 4294901760
      %5275 = vmatmul.mubr.f32.gmra.mxu0 %v5274
      %v5276 = vpop.f32.mrf.mxu0
      %v5277 = vadd.f32 %v5063, %v5276
      %v5278 = vpop.f32.mrf.mxu0
      %5279 = vmatprep.mubr.f32.mxu0 0.0
      %v5280 = vand.u32 %v330, 4294901760
      %5281 = vmatmul.mubr.f32.gmra.mxu0 %v5280
      %v5282 = vpop.f32.mrf.mxu0
      %v5283 = vadd.f32 %v5073, %v5282
      %v5284 = vpop.f32.mrf.mxu0
      %5285 = vmatprep.mubr.f32.mxu0 0.0
      %v5286 = vand.u32 %v333, 4294901760
      %5287 = vmatmul.mubr.f32.gmra.mxu0 %v5286
      %v5288 = vpop.f32.mrf.mxu0
      %v5289 = vadd.f32 %v5083, %v5288
      %v5290 = vpop.f32.mrf.mxu0
      %5291 = vmatprep.mubr.f32.mxu0 0.0
      %v5292 = vand.u32 %v336, 4294901760
      %5293 = vmatmul.mubr.f32.gmra.mxu0 %v5292
      %v5294 = vpop.f32.mrf.mxu0
      %v5295 = vadd.f32 %v5093, %v5294
      %v5296 = vpop.f32.mrf.mxu0
      %5297 = vmatprep.mubr.f32.mxu0 0.0
      %v5298 = vand.u32 %v339, 4294901760
      %5299 = vmatmul.mubr.f32.gmra.mxu0 %v5298
      %v5300 = vpop.f32.mrf.mxu0
      %v5301 = vadd.f32 %v5103, %v5300
      %v5302 = vpop.f32.mrf.mxu0
      %5303 = vmatprep.mubr.f32.mxu0 0.0
      %v5304 = vand.u32 %v342, 4294901760
      %5305 = vmatmul.mubr.f32.gmra.mxu0 %v5304
      %v5306 = vpop.f32.mrf.mxu0
      %v5307 = vadd.f32 %v5113, %v5306
      %v5308 = vpop.f32.mrf.mxu0
      %5309 = vmatprep.mubr.f32.mxu0 0.0
      %v5310 = vand.u32 %v345, 4294901760
      %5311 = vmatmul.mubr.f32.gmra.mxu0 %v5310
      %v5312 = vpop.f32.mrf.mxu0
      %v5313 = vadd.f32 %v5123, %v5312
      %v5314 = vpop.f32.mrf.mxu0
      %5315 = vmatprep.mubr.f32.mxu0 0.0
      %v5316 = vand.u32 %v348, 4294901760
      %5317 = vmatmul.mubr.f32.gmra.mxu0 %v5316
      %v5318 = vpop.f32.mrf.mxu0
      %v5319 = vadd.f32 %v5133, %v5318
      %v5320 = vpop.f32.mrf.mxu0
      %5321 = vmatprep.mubr.f32.mxu0 0.0
      %v5322 = vand.u32 %v351, 4294901760
      %5323 = vmatmul.mubr.f32.gmra.mxu0 %v5322
      %v5324 = vpop.f32.mrf.mxu0
      %v5325 = vadd.f32 %v5143, %v5324
      %v5326 = vpop.f32.mrf.mxu0
      %5327 = vmatprep.mubr.f32.mxu0 0.0
      %v5328 = vand.u32 %v354, 4294901760
      %5329 = vmatmul.mubr.f32.gmra.mxu0 %v5328
      %v5330 = vpop.f32.mrf.mxu0
      %v5331 = vadd.f32 %v5153, %v5330
      %v5332 = vpop.f32.mrf.mxu0
      %5333 = vmatprep.mubr.f32.mxu0 0.0
      %v5334 = vand.u32 %v357, 4294901760
      %5335 = vmatmul.mubr.f32.gmra.mxu0 %v5334
      %v5336 = vpop.f32.mrf.mxu0
      %v5337 = vadd.f32 %v5163, %v5336
      %v5338 = vpop.f32.mrf.mxu0
      %5339 = vmatprep.mubr.f32.mxu0 0.0
      %v5340 = vand.u32 %v360, 4294901760
      %5341 = vmatmul.mubr.f32.gmra.mxu0 %v5340
      %v5342 = vpop.f32.mrf.mxu0
      %v5343 = vadd.f32 %v5173, %v5342
      %v5344 = vpop.f32.mrf.mxu0
      %5345 = vmatprep.mubr.f32.mxu0 0.0
      %v5346 = vand.u32 %v363, 4294901760
      %5347 = vmatmul.mubr.f32.gmra.mxu0 %v5346
      %v5348 = vpop.f32.mrf.mxu0
      %v5349 = vadd.f32 %v5183, %v5348
      %v5350 = vpop.f32.mrf.mxu0
      %5351 = vdwg.mxu0
      %5352 = vmatprep.subr.mxu0 0.0
      %5353 = vmatpush1.msra.mxu0 0.0
      %5354 = vmatprep.subr.mxu0 0.0
      %5355 = vmatpush1.msra.mxu0 0.0
      %5356 = vmatprep.subr.mxu0 0.0
      %5357 = vmatpush1.msra.mxu0 0.0
      %5358 = vmatprep.subr.mxu0 0.0
      %5359 = vmatpush1.msra.mxu0 0.0
      %5360 = vmatprep.subr.mxu0 0.0
      %5361 = vmatpush1.msra.mxu0 0.0
      %5362 = vmatprep.subr.mxu0 0.0
      %5363 = vmatpush1.msra.mxu0 0.0
      %5364 = vmatprep.subr.mxu0 0.0
      %5365 = vmatpush1.msra.mxu0 0.0
      %5366 = vmatprep.subr.mxu0 0.0
      %5367 = vmatpush1.msra.mxu0 0.0
      %5368 = vmatprep.subr.mxu0 0.0
      %5369 = vmatpush1.msra.mxu0 0.0
      %5370 = vmatprep.subr.mxu0 0.0
      %5371 = vmatpush1.msra.mxu0 0.0
      %5372 = vmatprep.subr.mxu0 0.0
      %5373 = vmatpush1.msra.mxu0 0.0
      %5374 = vmatprep.subr.mxu0 0.0
      %5375 = vmatpush1.msra.mxu0 0.0
      %5376 = vmatprep.subr.mxu0 0.0
      %5377 = vmatpush1.msra.mxu0 0.0
      %5378 = vmatprep.subr.mxu0 0.0
      %5379 = vmatpush1.msra.mxu0 0.0
      %5380 = vmatprep.subr.mxu0 0.0
      %5381 = vmatpush1.msra.mxu0 0.0
      %5382 = vmatprep.subr.mxu0 0.0
      %v5383 = vand.u32 %v4958, 4294901760
      %v5384 = vsub.f32 %v4958, %v5383
      %5385 = vmatpush1.msra.mxu0 %v5384
      %5386 = vmatprep.subr.mxu0 0.0
      %5387 = vmatpush2.msra.mxu0 0.0
      %5388 = vmatprep.subr.mxu0 0.0
      %5389 = vmatpush2.msra.mxu0 0.0
      %5390 = vmatprep.subr.mxu0 0.0
      %5391 = vmatpush2.msra.mxu0 0.0
      %5392 = vmatprep.subr.mxu0 0.0
      %5393 = vmatpush2.msra.mxu0 0.0
      %5394 = vmatprep.subr.mxu0 0.0
      %5395 = vmatpush2.msra.mxu0 0.0
      %5396 = vmatprep.subr.mxu0 0.0
      %5397 = vmatpush2.msra.mxu0 0.0
      %5398 = vmatprep.subr.mxu0 0.0
      %5399 = vmatpush2.msra.mxu0 0.0
      %5400 = vmatprep.subr.mxu0 0.0
      %5401 = vmatpush2.msra.mxu0 0.0
      %5402 = vmatprep.subr.mxu0 0.0
      %5403 = vmatpush2.msra.mxu0 0.0
      %5404 = vmatprep.subr.mxu0 0.0
      %5405 = vmatpush2.msra.mxu0 0.0
      %5406 = vmatprep.subr.mxu0 0.0
      %5407 = vmatpush2.msra.mxu0 0.0
      %5408 = vmatprep.subr.mxu0 0.0
      %5409 = vmatpush2.msra.mxu0 0.0
      %5410 = vmatprep.subr.mxu0 0.0
      %5411 = vmatpush2.msra.mxu0 0.0
      %5412 = vmatprep.subr.mxu0 0.0
      %5413 = vmatpush2.msra.mxu0 0.0
      %5414 = vmatprep.subr.mxu0 0.0
      %5415 = vmatpush2.msra.mxu0 0.0
      %5416 = vmatprep.subr.mxu0 0.0
      %5417 = vmatpush2.msra.mxu0 0.0
      %5418 = vmatprep.mubr.f32.mxu0 0.0
      %v5419 = vand.u32 %v318, 4294901760
      %v5420 = vsub.f32 %v318, %v5419
      %5421 = vmatmul.mubr.f32.gmra.mxu0 %v5420
      %v5422 = vpop.f32.mrf.mxu0
      %v5423 = vadd.f32 %v5259, %v5422
      %v5424 = vpop.f32.mrf.mxu0
      %5425 = vmatprep.mubr.f32.mxu0 0.0
      %v5426 = vand.u32 %v321, 4294901760
      %v5427 = vsub.f32 %v321, %v5426
      %5428 = vmatmul.mubr.f32.gmra.mxu0 %v5427
      %v5429 = vpop.f32.mrf.mxu0
      %v5430 = vadd.f32 %v5265, %v5429
      %v5431 = vpop.f32.mrf.mxu0
      %5432 = vmatprep.mubr.f32.mxu0 0.0
      %v5433 = vand.u32 %v324, 4294901760
      %v5434 = vsub.f32 %v324, %v5433
      %5435 = vmatmul.mubr.f32.gmra.mxu0 %v5434
      %v5436 = vpop.f32.mrf.mxu0
      %v5437 = vadd.f32 %v5271, %v5436
      %v5438 = vpop.f32.mrf.mxu0
      %5439 = vmatprep.mubr.f32.mxu0 0.0
      %v5440 = vand.u32 %v327, 4294901760
      %v5441 = vsub.f32 %v327, %v5440
      %5442 = vmatmul.mubr.f32.gmra.mxu0 %v5441
      %v5443 = vpop.f32.mrf.mxu0
      %v5444 = vadd.f32 %v5277, %v5443
      %v5445 = vpop.f32.mrf.mxu0
      %5446 = vmatprep.mubr.f32.mxu0 0.0
      %v5447 = vand.u32 %v330, 4294901760
      %v5448 = vsub.f32 %v330, %v5447
      %5449 = vmatmul.mubr.f32.gmra.mxu0 %v5448
      %v5450 = vpop.f32.mrf.mxu0
      %v5451 = vadd.f32 %v5283, %v5450
      %v5452 = vpop.f32.mrf.mxu0
      %5453 = vmatprep.mubr.f32.mxu0 0.0
      %v5454 = vand.u32 %v333, 4294901760
      %v5455 = vsub.f32 %v333, %v5454
      %5456 = vmatmul.mubr.f32.gmra.mxu0 %v5455
      %v5457 = vpop.f32.mrf.mxu0
      %v5458 = vadd.f32 %v5289, %v5457
      %v5459 = vpop.f32.mrf.mxu0
      %5460 = vmatprep.mubr.f32.mxu0 0.0
      %v5461 = vand.u32 %v336, 4294901760
      %v5462 = vsub.f32 %v336, %v5461
      %5463 = vmatmul.mubr.f32.gmra.mxu0 %v5462
      %v5464 = vpop.f32.mrf.mxu0
      %v5465 = vadd.f32 %v5295, %v5464
      %v5466 = vpop.f32.mrf.mxu0
      %5467 = vmatprep.mubr.f32.mxu0 0.0
      %v5468 = vand.u32 %v339, 4294901760
      %v5469 = vsub.f32 %v339, %v5468
      %5470 = vmatmul.mubr.f32.gmra.mxu0 %v5469
      %v5471 = vpop.f32.mrf.mxu0
      %v5472 = vadd.f32 %v5301, %v5471
      %v5473 = vpop.f32.mrf.mxu0
      %5474 = vmatprep.mubr.f32.mxu0 0.0
      %v5475 = vand.u32 %v342, 4294901760
      %v5476 = vsub.f32 %v342, %v5475
      %5477 = vmatmul.mubr.f32.gmra.mxu0 %v5476
      %v5478 = vpop.f32.mrf.mxu0
      %v5479 = vadd.f32 %v5307, %v5478
      %v5480 = vpop.f32.mrf.mxu0
      %5481 = vmatprep.mubr.f32.mxu0 0.0
      %v5482 = vand.u32 %v345, 4294901760
      %v5483 = vsub.f32 %v345, %v5482
      %5484 = vmatmul.mubr.f32.gmra.mxu0 %v5483
      %v5485 = vpop.f32.mrf.mxu0
      %v5486 = vadd.f32 %v5313, %v5485
      %v5487 = vpop.f32.mrf.mxu0
      %5488 = vmatprep.mubr.f32.mxu0 0.0
      %v5489 = vand.u32 %v348, 4294901760
      %v5490 = vsub.f32 %v348, %v5489
      %5491 = vmatmul.mubr.f32.gmra.mxu0 %v5490
      %v5492 = vpop.f32.mrf.mxu0
      %v5493 = vadd.f32 %v5319, %v5492
      %v5494 = vpop.f32.mrf.mxu0
      %5495 = vmatprep.mubr.f32.mxu0 0.0
      %v5496 = vand.u32 %v351, 4294901760
      %v5497 = vsub.f32 %v351, %v5496
      %5498 = vmatmul.mubr.f32.gmra.mxu0 %v5497
      %v5499 = vpop.f32.mrf.mxu0
      %v5500 = vadd.f32 %v5325, %v5499
      %v5501 = vpop.f32.mrf.mxu0
      %5502 = vmatprep.mubr.f32.mxu0 0.0
      %v5503 = vand.u32 %v354, 4294901760
      %v5504 = vsub.f32 %v354, %v5503
      %5505 = vmatmul.mubr.f32.gmra.mxu0 %v5504
      %v5506 = vpop.f32.mrf.mxu0
      %v5507 = vadd.f32 %v5331, %v5506
      %v5508 = vpop.f32.mrf.mxu0
      %5509 = vmatprep.mubr.f32.mxu0 0.0
      %v5510 = vand.u32 %v357, 4294901760
      %v5511 = vsub.f32 %v357, %v5510
      %5512 = vmatmul.mubr.f32.gmra.mxu0 %v5511
      %v5513 = vpop.f32.mrf.mxu0
      %v5514 = vadd.f32 %v5337, %v5513
      %v5515 = vpop.f32.mrf.mxu0
      %5516 = vmatprep.mubr.f32.mxu0 0.0
      %v5517 = vand.u32 %v360, 4294901760
      %v5518 = vsub.f32 %v360, %v5517
      %5519 = vmatmul.mubr.f32.gmra.mxu0 %v5518
      %v5520 = vpop.f32.mrf.mxu0
      %v5521 = vadd.f32 %v5343, %v5520
      %v5522 = vpop.f32.mrf.mxu0
      %5523 = vmatprep.mubr.f32.mxu0 0.0
      %v5524 = vand.u32 %v363, 4294901760
      %v5525 = vsub.f32 %v363, %v5524
      %5526 = vmatmul.mubr.f32.gmra.mxu0 %v5525
      %v5527 = vpop.f32.mrf.mxu0
      %v5528 = vadd.f32 %v5349, %v5527
      %v5529 = vpop.f32.mrf.mxu0
      %5530 = vdwg.mxu0
      %5531 = vmatprep.subr.mxu0 0.0
      %5532 = vmatpush1.msra.mxu0 0.0
      %5533 = vmatprep.subr.mxu0 0.0
      %5534 = vmatpush1.msra.mxu0 0.0
      %5535 = vmatprep.subr.mxu0 0.0
      %5536 = vmatpush1.msra.mxu0 0.0
      %5537 = vmatprep.subr.mxu0 0.0
      %5538 = vmatpush1.msra.mxu0 0.0
      %5539 = vmatprep.subr.mxu0 0.0
      %5540 = vmatpush1.msra.mxu0 0.0
      %5541 = vmatprep.subr.mxu0 0.0
      %5542 = vmatpush1.msra.mxu0 0.0
      %5543 = vmatprep.subr.mxu0 0.0
      %5544 = vmatpush1.msra.mxu0 0.0
      %5545 = vmatprep.subr.mxu0 0.0
      %5546 = vmatpush1.msra.mxu0 0.0
      %5547 = vmatprep.subr.mxu0 0.0
      %5548 = vmatpush1.msra.mxu0 0.0
      %5549 = vmatprep.subr.mxu0 0.0
      %5550 = vmatpush1.msra.mxu0 0.0
      %5551 = vmatprep.subr.mxu0 0.0
      %5552 = vmatpush1.msra.mxu0 0.0
      %5553 = vmatprep.subr.mxu0 0.0
      %5554 = vmatpush1.msra.mxu0 0.0
      %5555 = vmatprep.subr.mxu0 0.0
      %5556 = vmatpush1.msra.mxu0 0.0
      %5557 = vmatprep.subr.mxu0 0.0
      %5558 = vmatpush1.msra.mxu0 0.0
      %5559 = vmatprep.subr.mxu0 0.0
      %5560 = vmatpush1.msra.mxu0 0.0
      %5561 = vmatprep.subr.mxu0 0.0
      %v5562 = vand.u32 %v4958, 4294901760
      %5563 = vmatpush1.msra.mxu0 %v5562
      %5564 = vmatprep.subr.mxu0 0.0
      %5565 = vmatpush2.msra.mxu0 0.0
      %5566 = vmatprep.subr.mxu0 0.0
      %5567 = vmatpush2.msra.mxu0 0.0
      %5568 = vmatprep.subr.mxu0 0.0
      %5569 = vmatpush2.msra.mxu0 0.0
      %5570 = vmatprep.subr.mxu0 0.0
      %5571 = vmatpush2.msra.mxu0 0.0
      %5572 = vmatprep.subr.mxu0 0.0
      %5573 = vmatpush2.msra.mxu0 0.0
      %5574 = vmatprep.subr.mxu0 0.0
      %5575 = vmatpush2.msra.mxu0 0.0
      %5576 = vmatprep.subr.mxu0 0.0
      %5577 = vmatpush2.msra.mxu0 0.0
      %5578 = vmatprep.subr.mxu0 0.0
      %5579 = vmatpush2.msra.mxu0 0.0
      %5580 = vmatprep.subr.mxu0 0.0
      %5581 = vmatpush2.msra.mxu0 0.0
      %5582 = vmatprep.subr.mxu0 0.0
      %5583 = vmatpush2.msra.mxu0 0.0
      %5584 = vmatprep.subr.mxu0 0.0
      %5585 = vmatpush2.msra.mxu0 0.0
      %5586 = vmatprep.subr.mxu0 0.0
      %5587 = vmatpush2.msra.mxu0 0.0
      %5588 = vmatprep.subr.mxu0 0.0
      %5589 = vmatpush2.msra.mxu0 0.0
      %5590 = vmatprep.subr.mxu0 0.0
      %5591 = vmatpush2.msra.mxu0 0.0
      %5592 = vmatprep.subr.mxu0 0.0
      %5593 = vmatpush2.msra.mxu0 0.0
      %5594 = vmatprep.subr.mxu0 0.0
      %5595 = vmatpush2.msra.mxu0 0.0
      %5596 = vmatprep.mubr.f32.mxu0 0.0
      %v5597 = vand.u32 %v318, 4294901760
      %v5598 = vsub.f32 %v318, %v5597
      %v5599 = vand.u32 %v5598, 4294901760
      %5600 = vmatmul.mubr.f32.gmra.mxu0 %v5599
      %v5601 = vpop.f32.mrf.mxu0
      %v5602 = vadd.f32 %v5423, %v5601
      %v5603 = vpop.f32.mrf.mxu0
      %5604 = vmatprep.mubr.f32.mxu0 0.0
      %v5605 = vand.u32 %v321, 4294901760
      %v5606 = vsub.f32 %v321, %v5605
      %v5607 = vand.u32 %v5606, 4294901760
      %5608 = vmatmul.mubr.f32.gmra.mxu0 %v5607
      %v5609 = vpop.f32.mrf.mxu0
      %v5610 = vadd.f32 %v5430, %v5609
      %v5611 = vpop.f32.mrf.mxu0
      %5612 = vmatprep.mubr.f32.mxu0 0.0
      %v5613 = vand.u32 %v324, 4294901760
      %v5614 = vsub.f32 %v324, %v5613
      %v5615 = vand.u32 %v5614, 4294901760
      %5616 = vmatmul.mubr.f32.gmra.mxu0 %v5615
      %v5617 = vpop.f32.mrf.mxu0
      %v5618 = vadd.f32 %v5437, %v5617
      %v5619 = vpop.f32.mrf.mxu0
      %5620 = vmatprep.mubr.f32.mxu0 0.0
      %v5621 = vand.u32 %v327, 4294901760
      %v5622 = vsub.f32 %v327, %v5621
      %v5623 = vand.u32 %v5622, 4294901760
      %5624 = vmatmul.mubr.f32.gmra.mxu0 %v5623
      %v5625 = vpop.f32.mrf.mxu0
      %v5626 = vadd.f32 %v5444, %v5625
      %v5627 = vpop.f32.mrf.mxu0
      %5628 = vmatprep.mubr.f32.mxu0 0.0
      %v5629 = vand.u32 %v330, 4294901760
      %v5630 = vsub.f32 %v330, %v5629
      %v5631 = vand.u32 %v5630, 4294901760
      %5632 = vmatmul.mubr.f32.gmra.mxu0 %v5631
      %v5633 = vpop.f32.mrf.mxu0
      %v5634 = vadd.f32 %v5451, %v5633
      %v5635 = vpop.f32.mrf.mxu0
      %5636 = vmatprep.mubr.f32.mxu0 0.0
      %v5637 = vand.u32 %v333, 4294901760
      %v5638 = vsub.f32 %v333, %v5637
      %v5639 = vand.u32 %v5638, 4294901760
      %5640 = vmatmul.mubr.f32.gmra.mxu0 %v5639
      %v5641 = vpop.f32.mrf.mxu0
      %v5642 = vadd.f32 %v5458, %v5641
      %v5643 = vpop.f32.mrf.mxu0
      %5644 = vmatprep.mubr.f32.mxu0 0.0
      %v5645 = vand.u32 %v336, 4294901760
      %v5646 = vsub.f32 %v336, %v5645
      %v5647 = vand.u32 %v5646, 4294901760
      %5648 = vmatmul.mubr.f32.gmra.mxu0 %v5647
      %v5649 = vpop.f32.mrf.mxu0
      %v5650 = vadd.f32 %v5465, %v5649
      %v5651 = vpop.f32.mrf.mxu0
      %5652 = vmatprep.mubr.f32.mxu0 0.0
      %v5653 = vand.u32 %v339, 4294901760
      %v5654 = vsub.f32 %v339, %v5653
      %v5655 = vand.u32 %v5654, 4294901760
      %5656 = vmatmul.mubr.f32.gmra.mxu0 %v5655
      %v5657 = vpop.f32.mrf.mxu0
      %v5658 = vadd.f32 %v5472, %v5657
      %v5659 = vpop.f32.mrf.mxu0
      %5660 = vmatprep.mubr.f32.mxu0 0.0
      %v5661 = vand.u32 %v342, 4294901760
      %v5662 = vsub.f32 %v342, %v5661
      %v5663 = vand.u32 %v5662, 4294901760
      %5664 = vmatmul.mubr.f32.gmra.mxu0 %v5663
      %v5665 = vpop.f32.mrf.mxu0
      %v5666 = vadd.f32 %v5479, %v5665
      %v5667 = vpop.f32.mrf.mxu0
      %5668 = vmatprep.mubr.f32.mxu0 0.0
      %v5669 = vand.u32 %v345, 4294901760
      %v5670 = vsub.f32 %v345, %v5669
      %v5671 = vand.u32 %v5670, 4294901760
      %5672 = vmatmul.mubr.f32.gmra.mxu0 %v5671
      %v5673 = vpop.f32.mrf.mxu0
      %v5674 = vadd.f32 %v5486, %v5673
      %v5675 = vpop.f32.mrf.mxu0
      %5676 = vmatprep.mubr.f32.mxu0 0.0
      %v5677 = vand.u32 %v348, 4294901760
      %v5678 = vsub.f32 %v348, %v5677
      %v5679 = vand.u32 %v5678, 4294901760
      %5680 = vmatmul.mubr.f32.gmra.mxu0 %v5679
      %v5681 = vpop.f32.mrf.mxu0
      %v5682 = vadd.f32 %v5493, %v5681
      %v5683 = vpop.f32.mrf.mxu0
      %5684 = vmatprep.mubr.f32.mxu0 0.0
      %v5685 = vand.u32 %v351, 4294901760
      %v5686 = vsub.f32 %v351, %v5685
      %v5687 = vand.u32 %v5686, 4294901760
      %5688 = vmatmul.mubr.f32.gmra.mxu0 %v5687
      %v5689 = vpop.f32.mrf.mxu0
      %v5690 = vadd.f32 %v5500, %v5689
      %v5691 = vpop.f32.mrf.mxu0
      %5692 = vmatprep.mubr.f32.mxu0 0.0
      %v5693 = vand.u32 %v354, 4294901760
      %v5694 = vsub.f32 %v354, %v5693
      %v5695 = vand.u32 %v5694, 4294901760
      %5696 = vmatmul.mubr.f32.gmra.mxu0 %v5695
      %v5697 = vpop.f32.mrf.mxu0
      %v5698 = vadd.f32 %v5507, %v5697
      %v5699 = vpop.f32.mrf.mxu0
      %5700 = vmatprep.mubr.f32.mxu0 0.0
      %v5701 = vand.u32 %v357, 4294901760
      %v5702 = vsub.f32 %v357, %v5701
      %v5703 = vand.u32 %v5702, 4294901760
      %5704 = vmatmul.mubr.f32.gmra.mxu0 %v5703
      %v5705 = vpop.f32.mrf.mxu0
      %v5706 = vadd.f32 %v5514, %v5705
      %v5707 = vpop.f32.mrf.mxu0
      %5708 = vmatprep.mubr.f32.mxu0 0.0
      %v5709 = vand.u32 %v360, 4294901760
      %v5710 = vsub.f32 %v360, %v5709
      %v5711 = vand.u32 %v5710, 4294901760
      %5712 = vmatmul.mubr.f32.gmra.mxu0 %v5711
      %v5713 = vpop.f32.mrf.mxu0
      %v5714 = vadd.f32 %v5521, %v5713
      %v5715 = vpop.f32.mrf.mxu0
      %5716 = vmatprep.mubr.f32.mxu0 0.0
      %v5717 = vand.u32 %v363, 4294901760
      %v5718 = vsub.f32 %v363, %v5717
      %v5719 = vand.u32 %v5718, 4294901760
      %5720 = vmatmul.mubr.f32.gmra.mxu0 %v5719
      %v5721 = vpop.f32.mrf.mxu0
      %v5722 = vadd.f32 %v5528, %v5721
      %v5723 = vpop.f32.mrf.mxu0
      %5724 = vdwg.mxu0
      %5725 = vmatprep.subr.mxu0 0.0
      %5726 = vmatpush1.msra.mxu0 0.0
      %5727 = vmatprep.subr.mxu0 0.0
      %5728 = vmatpush1.msra.mxu0 0.0
      %5729 = vmatprep.subr.mxu0 0.0
      %5730 = vmatpush1.msra.mxu0 0.0
      %5731 = vmatprep.subr.mxu0 0.0
      %5732 = vmatpush1.msra.mxu0 0.0
      %5733 = vmatprep.subr.mxu0 0.0
      %5734 = vmatpush1.msra.mxu0 0.0
      %5735 = vmatprep.subr.mxu0 0.0
      %5736 = vmatpush1.msra.mxu0 0.0
      %5737 = vmatprep.subr.mxu0 0.0
      %5738 = vmatpush1.msra.mxu0 0.0
      %5739 = vmatprep.subr.mxu0 0.0
      %5740 = vmatpush1.msra.mxu0 0.0
      %5741 = vmatprep.subr.mxu0 0.0
      %5742 = vmatpush1.msra.mxu0 0.0
      %5743 = vmatprep.subr.mxu0 0.0
      %5744 = vmatpush1.msra.mxu0 0.0
      %5745 = vmatprep.subr.mxu0 0.0
      %5746 = vmatpush1.msra.mxu0 0.0
      %5747 = vmatprep.subr.mxu0 0.0
      %5748 = vmatpush1.msra.mxu0 0.0
      %5749 = vmatprep.subr.mxu0 0.0
      %5750 = vmatpush1.msra.mxu0 0.0
      %5751 = vmatprep.subr.mxu0 0.0
      %5752 = vmatpush1.msra.mxu0 0.0
      %5753 = vmatprep.subr.mxu0 0.0
      %5754 = vmatpush1.msra.mxu0 0.0
      %5755 = vmatprep.subr.mxu0 0.0
      %v5756 = vand.u32 %v4958, 4294901760
      %v5757 = vsub.f32 %v4958, %v5756
      %v5758 = vand.u32 %v5757, 4294901760
      %5759 = vmatpush1.msra.mxu0 %v5758
      %5760 = vmatprep.subr.mxu0 0.0
      %5761 = vmatpush2.msra.mxu0 0.0
      %5762 = vmatprep.subr.mxu0 0.0
      %5763 = vmatpush2.msra.mxu0 0.0
      %5764 = vmatprep.subr.mxu0 0.0
      %5765 = vmatpush2.msra.mxu0 0.0
      %5766 = vmatprep.subr.mxu0 0.0
      %5767 = vmatpush2.msra.mxu0 0.0
      %5768 = vmatprep.subr.mxu0 0.0
      %5769 = vmatpush2.msra.mxu0 0.0
      %5770 = vmatprep.subr.mxu0 0.0
      %5771 = vmatpush2.msra.mxu0 0.0
      %5772 = vmatprep.subr.mxu0 0.0
      %5773 = vmatpush2.msra.mxu0 0.0
      %5774 = vmatprep.subr.mxu0 0.0
      %5775 = vmatpush2.msra.mxu0 0.0
      %5776 = vmatprep.subr.mxu0 0.0
      %5777 = vmatpush2.msra.mxu0 0.0
      %5778 = vmatprep.subr.mxu0 0.0
      %5779 = vmatpush2.msra.mxu0 0.0
      %5780 = vmatprep.subr.mxu0 0.0
      %5781 = vmatpush2.msra.mxu0 0.0
      %5782 = vmatprep.subr.mxu0 0.0
      %5783 = vmatpush2.msra.mxu0 0.0
      %5784 = vmatprep.subr.mxu0 0.0
      %5785 = vmatpush2.msra.mxu0 0.0
      %5786 = vmatprep.subr.mxu0 0.0
      %5787 = vmatpush2.msra.mxu0 0.0
      %5788 = vmatprep.subr.mxu0 0.0
      %5789 = vmatpush2.msra.mxu0 0.0
      %5790 = vmatprep.subr.mxu0 0.0
      %5791 = vmatpush2.msra.mxu0 0.0
      %5792 = vmatprep.mubr.f32.mxu0 0.0
      %v5793 = vand.u32 %v318, 4294901760
      %5794 = vmatmul.mubr.f32.gmra.mxu0 %v5793
      %v5795 = vpop.f32.mrf.mxu0
      %v5796 = vadd.f32 %v5602, %v5795
      %v5797 = vpop.f32.mrf.mxu0
      %5798 = vmatprep.mubr.f32.mxu0 0.0
      %v5799 = vand.u32 %v321, 4294901760
      %5800 = vmatmul.mubr.f32.gmra.mxu0 %v5799
      %v5801 = vpop.f32.mrf.mxu0
      %v5802 = vadd.f32 %v5610, %v5801
      %v5803 = vpop.f32.mrf.mxu0
      %5804 = vmatprep.mubr.f32.mxu0 0.0
      %v5805 = vand.u32 %v324, 4294901760
      %5806 = vmatmul.mubr.f32.gmra.mxu0 %v5805
      %v5807 = vpop.f32.mrf.mxu0
      %v5808 = vadd.f32 %v5618, %v5807
      %v5809 = vpop.f32.mrf.mxu0
      %5810 = vmatprep.mubr.f32.mxu0 0.0
      %v5811 = vand.u32 %v327, 4294901760
      %5812 = vmatmul.mubr.f32.gmra.mxu0 %v5811
      %v5813 = vpop.f32.mrf.mxu0
      %v5814 = vadd.f32 %v5626, %v5813
      %v5815 = vpop.f32.mrf.mxu0
      %5816 = vmatprep.mubr.f32.mxu0 0.0
      %v5817 = vand.u32 %v330, 4294901760
      %5818 = vmatmul.mubr.f32.gmra.mxu0 %v5817
      %v5819 = vpop.f32.mrf.mxu0
      %v5820 = vadd.f32 %v5634, %v5819
      %v5821 = vpop.f32.mrf.mxu0
      %5822 = vmatprep.mubr.f32.mxu0 0.0
      %v5823 = vand.u32 %v333, 4294901760
      %5824 = vmatmul.mubr.f32.gmra.mxu0 %v5823
      %v5825 = vpop.f32.mrf.mxu0
      %v5826 = vadd.f32 %v5642, %v5825
      %v5827 = vpop.f32.mrf.mxu0
      %5828 = vmatprep.mubr.f32.mxu0 0.0
      %v5829 = vand.u32 %v336, 4294901760
      %5830 = vmatmul.mubr.f32.gmra.mxu0 %v5829
      %v5831 = vpop.f32.mrf.mxu0
      %v5832 = vadd.f32 %v5650, %v5831
      %v5833 = vpop.f32.mrf.mxu0
      %5834 = vmatprep.mubr.f32.mxu0 0.0
      %v5835 = vand.u32 %v339, 4294901760
      %5836 = vmatmul.mubr.f32.gmra.mxu0 %v5835
      %v5837 = vpop.f32.mrf.mxu0
      %v5838 = vadd.f32 %v5658, %v5837
      %v5839 = vpop.f32.mrf.mxu0
      %5840 = vmatprep.mubr.f32.mxu0 0.0
      %v5841 = vand.u32 %v342, 4294901760
      %5842 = vmatmul.mubr.f32.gmra.mxu0 %v5841
      %v5843 = vpop.f32.mrf.mxu0
      %v5844 = vadd.f32 %v5666, %v5843
      %v5845 = vpop.f32.mrf.mxu0
      %5846 = vmatprep.mubr.f32.mxu0 0.0
      %v5847 = vand.u32 %v345, 4294901760
      %5848 = vmatmul.mubr.f32.gmra.mxu0 %v5847
      %v5849 = vpop.f32.mrf.mxu0
      %v5850 = vadd.f32 %v5674, %v5849
      %v5851 = vpop.f32.mrf.mxu0
      %5852 = vmatprep.mubr.f32.mxu0 0.0
      %v5853 = vand.u32 %v348, 4294901760
      %5854 = vmatmul.mubr.f32.gmra.mxu0 %v5853
      %v5855 = vpop.f32.mrf.mxu0
      %v5856 = vadd.f32 %v5682, %v5855
      %v5857 = vpop.f32.mrf.mxu0
      %5858 = vmatprep.mubr.f32.mxu0 0.0
      %v5859 = vand.u32 %v351, 4294901760
      %5860 = vmatmul.mubr.f32.gmra.mxu0 %v5859
      %v5861 = vpop.f32.mrf.mxu0
      %v5862 = vadd.f32 %v5690, %v5861
      %v5863 = vpop.f32.mrf.mxu0
      %5864 = vmatprep.mubr.f32.mxu0 0.0
      %v5865 = vand.u32 %v354, 4294901760
      %5866 = vmatmul.mubr.f32.gmra.mxu0 %v5865
      %v5867 = vpop.f32.mrf.mxu0
      %v5868 = vadd.f32 %v5698, %v5867
      %v5869 = vpop.f32.mrf.mxu0
      %5870 = vmatprep.mubr.f32.mxu0 0.0
      %v5871 = vand.u32 %v357, 4294901760
      %5872 = vmatmul.mubr.f32.gmra.mxu0 %v5871
      %v5873 = vpop.f32.mrf.mxu0
      %v5874 = vadd.f32 %v5706, %v5873
      %v5875 = vpop.f32.mrf.mxu0
      %5876 = vmatprep.mubr.f32.mxu0 0.0
      %v5877 = vand.u32 %v360, 4294901760
      %5878 = vmatmul.mubr.f32.gmra.mxu0 %v5877
      %v5879 = vpop.f32.mrf.mxu0
      %v5880 = vadd.f32 %v5714, %v5879
      %v5881 = vpop.f32.mrf.mxu0
      %5882 = vmatprep.mubr.f32.mxu0 0.0
      %v5883 = vand.u32 %v363, 4294901760
      %5884 = vmatmul.mubr.f32.gmra.mxu0 %v5883
      %v5885 = vpop.f32.mrf.mxu0
      %v5886 = vadd.f32 %v5722, %v5885
      %v5887 = vpop.f32.mrf.mxu0
      %5888 = vdwg.mxu0
      %5889 = vmatprep.subr.mxu0 0.0
      %5890 = vmatpush1.msra.mxu0 0.0
      %5891 = vmatprep.subr.mxu0 0.0
      %5892 = vmatpush1.msra.mxu0 0.0
      %5893 = vmatprep.subr.mxu0 0.0
      %5894 = vmatpush1.msra.mxu0 0.0
      %5895 = vmatprep.subr.mxu0 0.0
      %5896 = vmatpush1.msra.mxu0 0.0
      %5897 = vmatprep.subr.mxu0 0.0
      %5898 = vmatpush1.msra.mxu0 0.0
      %5899 = vmatprep.subr.mxu0 0.0
      %5900 = vmatpush1.msra.mxu0 0.0
      %5901 = vmatprep.subr.mxu0 0.0
      %5902 = vmatpush1.msra.mxu0 0.0
      %5903 = vmatprep.subr.mxu0 0.0
      %5904 = vmatpush1.msra.mxu0 0.0
      %5905 = vmatprep.subr.mxu0 0.0
      %5906 = vmatpush1.msra.mxu0 0.0
      %5907 = vmatprep.subr.mxu0 0.0
      %5908 = vmatpush1.msra.mxu0 0.0
      %5909 = vmatprep.subr.mxu0 0.0
      %5910 = vmatpush1.msra.mxu0 0.0
      %5911 = vmatprep.subr.mxu0 0.0
      %5912 = vmatpush1.msra.mxu0 0.0
      %5913 = vmatprep.subr.mxu0 0.0
      %5914 = vmatpush1.msra.mxu0 0.0
      %5915 = vmatprep.subr.mxu0 0.0
      %5916 = vmatpush1.msra.mxu0 0.0
      %5917 = vmatprep.subr.mxu0 0.0
      %5918 = vmatpush1.msra.mxu0 0.0
      %5919 = vmatprep.subr.mxu0 0.0
      %v5920 = vand.u32 %v4958, 4294901760
      %5921 = vmatpush1.msra.mxu0 %v5920
      %5922 = vmatprep.subr.mxu0 0.0
      %5923 = vmatpush2.msra.mxu0 0.0
      %5924 = vmatprep.subr.mxu0 0.0
      %5925 = vmatpush2.msra.mxu0 0.0
      %5926 = vmatprep.subr.mxu0 0.0
      %5927 = vmatpush2.msra.mxu0 0.0
      %5928 = vmatprep.subr.mxu0 0.0
      %5929 = vmatpush2.msra.mxu0 0.0
      %5930 = vmatprep.subr.mxu0 0.0
      %5931 = vmatpush2.msra.mxu0 0.0
      %5932 = vmatprep.subr.mxu0 0.0
      %5933 = vmatpush2.msra.mxu0 0.0
      %5934 = vmatprep.subr.mxu0 0.0
      %5935 = vmatpush2.msra.mxu0 0.0
      %5936 = vmatprep.subr.mxu0 0.0
      %5937 = vmatpush2.msra.mxu0 0.0
      %5938 = vmatprep.subr.mxu0 0.0
      %5939 = vmatpush2.msra.mxu0 0.0
      %5940 = vmatprep.subr.mxu0 0.0
      %5941 = vmatpush2.msra.mxu0 0.0
      %5942 = vmatprep.subr.mxu0 0.0
      %5943 = vmatpush2.msra.mxu0 0.0
      %5944 = vmatprep.subr.mxu0 0.0
      %5945 = vmatpush2.msra.mxu0 0.0
      %5946 = vmatprep.subr.mxu0 0.0
      %5947 = vmatpush2.msra.mxu0 0.0
      %5948 = vmatprep.subr.mxu0 0.0
      %5949 = vmatpush2.msra.mxu0 0.0
      %5950 = vmatprep.subr.mxu0 0.0
      %5951 = vmatpush2.msra.mxu0 0.0
      %5952 = vmatprep.subr.mxu0 0.0
      %5953 = vmatpush2.msra.mxu0 0.0
      %5954 = vmatprep.mubr.f32.mxu0 0.0
      %v5955 = vand.u32 %v318, 4294901760
      %5956 = vmatmul.mubr.f32.gmra.mxu0 %v5955
      %v5957 = vpop.f32.mrf.mxu0
      %v5958 = vadd.f32 %v5796, %v5957
      %v5959 = vpop.f32.mrf.mxu0
      %5960 = vmatprep.mubr.f32.mxu0 0.0
      %v5961 = vand.u32 %v321, 4294901760
      %5962 = vmatmul.mubr.f32.gmra.mxu0 %v5961
      %v5963 = vpop.f32.mrf.mxu0
      %v5964 = vadd.f32 %v5802, %v5963
      %v5965 = vpop.f32.mrf.mxu0
      %5966 = vmatprep.mubr.f32.mxu0 0.0
      %v5967 = vand.u32 %v324, 4294901760
      %5968 = vmatmul.mubr.f32.gmra.mxu0 %v5967
      %v5969 = vpop.f32.mrf.mxu0
      %v5970 = vadd.f32 %v5808, %v5969
      %v5971 = vpop.f32.mrf.mxu0
      %5972 = vmatprep.mubr.f32.mxu0 0.0
      %v5973 = vand.u32 %v327, 4294901760
      %5974 = vmatmul.mubr.f32.gmra.mxu0 %v5973
      %v5975 = vpop.f32.mrf.mxu0
      %v5976 = vadd.f32 %v5814, %v5975
      %v5977 = vpop.f32.mrf.mxu0
      %5978 = vmatprep.mubr.f32.mxu0 0.0
      %v5979 = vand.u32 %v330, 4294901760
      %5980 = vmatmul.mubr.f32.gmra.mxu0 %v5979
      %v5981 = vpop.f32.mrf.mxu0
      %v5982 = vadd.f32 %v5820, %v5981
      %v5983 = vpop.f32.mrf.mxu0
      %5984 = vmatprep.mubr.f32.mxu0 0.0
      %v5985 = vand.u32 %v333, 4294901760
      %5986 = vmatmul.mubr.f32.gmra.mxu0 %v5985
      %v5987 = vpop.f32.mrf.mxu0
      %v5988 = vadd.f32 %v5826, %v5987
      %v5989 = vpop.f32.mrf.mxu0
      %5990 = vmatprep.mubr.f32.mxu0 0.0
      %v5991 = vand.u32 %v336, 4294901760
      %5992 = vmatmul.mubr.f32.gmra.mxu0 %v5991
      %v5993 = vpop.f32.mrf.mxu0
      %v5994 = vadd.f32 %v5832, %v5993
      %v5995 = vpop.f32.mrf.mxu0
      %5996 = vmatprep.mubr.f32.mxu0 0.0
      %v5997 = vand.u32 %v339, 4294901760
      %5998 = vmatmul.mubr.f32.gmra.mxu0 %v5997
      %v5999 = vpop.f32.mrf.mxu0
      %v6000 = vadd.f32 %v5838, %v5999
      %v6001 = vpop.f32.mrf.mxu0
      %6002 = vmatprep.mubr.f32.mxu0 0.0
      %v6003 = vand.u32 %v342, 4294901760
      %6004 = vmatmul.mubr.f32.gmra.mxu0 %v6003
      %v6005 = vpop.f32.mrf.mxu0
      %v6006 = vadd.f32 %v5844, %v6005
      %v6007 = vpop.f32.mrf.mxu0
      %6008 = vmatprep.mubr.f32.mxu0 0.0
      %v6009 = vand.u32 %v345, 4294901760
      %6010 = vmatmul.mubr.f32.gmra.mxu0 %v6009
      %v6011 = vpop.f32.mrf.mxu0
      %v6012 = vadd.f32 %v5850, %v6011
      %v6013 = vpop.f32.mrf.mxu0
      %6014 = vmatprep.mubr.f32.mxu0 0.0
      %v6015 = vand.u32 %v348, 4294901760
      %6016 = vmatmul.mubr.f32.gmra.mxu0 %v6015
      %v6017 = vpop.f32.mrf.mxu0
      %v6018 = vadd.f32 %v5856, %v6017
      %v6019 = vpop.f32.mrf.mxu0
      %6020 = vmatprep.mubr.f32.mxu0 0.0
      %v6021 = vand.u32 %v351, 4294901760
      %6022 = vmatmul.mubr.f32.gmra.mxu0 %v6021
      %v6023 = vpop.f32.mrf.mxu0
      %v6024 = vadd.f32 %v5862, %v6023
      %v6025 = vpop.f32.mrf.mxu0
      %6026 = vmatprep.mubr.f32.mxu0 0.0
      %v6027 = vand.u32 %v354, 4294901760
      %6028 = vmatmul.mubr.f32.gmra.mxu0 %v6027
      %v6029 = vpop.f32.mrf.mxu0
      %v6030 = vadd.f32 %v5868, %v6029
      %v6031 = vpop.f32.mrf.mxu0
      %6032 = vmatprep.mubr.f32.mxu0 0.0
      %v6033 = vand.u32 %v357, 4294901760
      %6034 = vmatmul.mubr.f32.gmra.mxu0 %v6033
      %v6035 = vpop.f32.mrf.mxu0
      %v6036 = vadd.f32 %v5874, %v6035
      %v6037 = vpop.f32.mrf.mxu0
      %6038 = vmatprep.mubr.f32.mxu0 0.0
      %v6039 = vand.u32 %v360, 4294901760
      %6040 = vmatmul.mubr.f32.gmra.mxu0 %v6039
      %v6041 = vpop.f32.mrf.mxu0
      %v6042 = vadd.f32 %v5880, %v6041
      %v6043 = vpop.f32.mrf.mxu0
      %6044 = vmatprep.mubr.f32.mxu0 0.0
      %v6045 = vand.u32 %v363, 4294901760
      %6046 = vmatmul.mubr.f32.gmra.mxu0 %v6045
      %v6047 = vpop.f32.mrf.mxu0
      %v6048 = vadd.f32 %v5886, %v6047
      %v6049 = vpop.f32.mrf.mxu0
      %6050 = vdwg.mxu0
      %v6051 = vadd.f32 %v4939, %v5958
      %v6052 = vadd.f32 %v4940, %v5964
      %v6053 = vadd.f32 %v4941, %v5970
      %v6054 = vadd.f32 %v4942, %v5976
      %v6055 = vadd.f32 %v4943, %v5982
      %v6056 = vadd.f32 %v4944, %v5988
      %v6057 = vadd.f32 %v4945, %v5994
      %v6058 = vadd.f32 %v4946, %v6000
      %v6059 = vadd.f32 %v4947, %v6006
      %v6060 = vadd.f32 %v4948, %v6012
      %v6061 = vadd.f32 %v4949, %v6018
      %v6062 = vadd.f32 %v4950, %v6024
      %v6063 = vadd.f32 %v4951, %v6030
      %v6064 = vadd.f32 %v4952, %v6036
      %v6065 = vadd.f32 %v4953, %v6042
      %v6066 = vadd.f32 %v4954, %v6048
      %s6067 = sadd.s32 %s277, 2
      %s6068 = smul.u32 %s6067, 24
      %s6069 = scalar_lea.vmem %s265, %s6068
      %v6070 = vld [vmem:[%s6069 + $0x1] sm:$0xff]
      %v6071 = vld [vmem:[%s6069 + $0x9] sm:$0xff]
      %v6072 = vld [vmem:[%s6069 + $0x19] sm:$0xff]
      %v6073 = vld [vmem:[%s6069 + $0x21] sm:$0xff]
      %v6074 = vld [vmem:[%s6069 + $0x31] sm:$0xff]
      %v6075 = vld [vmem:[%s6069 + $0x39] sm:$0xff]
      %v6076 = vld [vmem:[%s6069 + $0x49] sm:$0xff]
      %v6077 = vld [vmem:[%s6069 + $0x51] sm:$0xff]
      %v6078 = vld [vmem:[%s6069 + $0x61] sm:$0xff]
      %v6079 = vld [vmem:[%s6069 + $0x69] sm:$0xff]
      %v6080 = vld [vmem:[%s6069 + $0x79] sm:$0xff]
      %v6081 = vld [vmem:[%s6069 + $0x81] sm:$0xff]
      %v6082 = vld [vmem:[%s6069 + $0x91] sm:$0xff]
      %v6083 = vld [vmem:[%s6069 + $0x99] sm:$0xff]
      %v6084 = vld [vmem:[%s6069 + $0xa9] sm:$0xff]
      %v6085 = vld [vmem:[%s6069 + $0xb1] sm:$0xff]
      %s6086 = scalar_lea.vmem %s2, 8
      %v6087 = vld [vmem:[%s6086] sm:$0xf]
      %v6089 = vsel %vm316, %v6070, 0
      %v6092 = vsel %vm316, %v6071, 0
      %v6095 = vsel %vm316, %v6072, 0
      %v6098 = vsel %vm316, %v6073, 0
      %v6101 = vsel %vm316, %v6074, 0
      %v6104 = vsel %vm316, %v6075, 0
      %v6107 = vsel %vm316, %v6076, 0
      %v6110 = vsel %vm316, %v6077, 0
      %v6113 = vsel %vm316, %v6078, 0
      %v6116 = vsel %vm316, %v6079, 0
      %v6119 = vsel %vm316, %v6080, 0
      %v6122 = vsel %vm316, %v6081, 0
      %v6125 = vsel %vm316, %v6082, 0
      %v6128 = vsel %vm316, %v6083, 0
      %v6131 = vsel %vm316, %v6084, 0
      %v6134 = vsel %vm316, %v6085, 0
      %v6137 = vsel %vm365, %v6087, 0
      %6139 = vmatprep.subr.mxu0 0.0
      %6140 = vmatpush1.msra.mxu0 0.0
      %6141 = vmatprep.subr.mxu0 0.0
      %6142 = vmatpush1.msra.mxu0 0.0
      %6143 = vmatprep.subr.mxu0 0.0
      %6144 = vmatpush1.msra.mxu0 0.0
      %6145 = vmatprep.subr.mxu0 0.0
      %6146 = vmatpush1.msra.mxu0 0.0
      %6147 = vmatprep.subr.mxu0 0.0
      %6148 = vmatpush1.msra.mxu0 0.0
      %6149 = vmatprep.subr.mxu0 0.0
      %6150 = vmatpush1.msra.mxu0 0.0
      %6151 = vmatprep.subr.mxu0 0.0
      %6152 = vmatpush1.msra.mxu0 0.0
      %6153 = vmatprep.subr.mxu0 0.0
      %6154 = vmatpush1.msra.mxu0 0.0
      %6155 = vmatprep.subr.mxu0 0.0
      %6156 = vmatpush1.msra.mxu0 0.0
      %6157 = vmatprep.subr.mxu0 0.0
      %6158 = vmatpush1.msra.mxu0 0.0
      %6159 = vmatprep.subr.mxu0 0.0
      %6160 = vmatpush1.msra.mxu0 0.0
      %6161 = vmatprep.subr.mxu0 0.0
      %6162 = vmatpush1.msra.mxu0 0.0
      %6163 = vmatprep.subr.mxu0 0.0
      %6164 = vmatpush1.msra.mxu0 0.0
      %6165 = vmatprep.subr.mxu0 0.0
      %6166 = vmatpush1.msra.mxu0 0.0
      %6167 = vmatprep.subr.mxu0 0.0
      %6168 = vmatpush1.msra.mxu0 0.0
      %6169 = vmatprep.subr.mxu0 0.0
      %v6170 = vand.u32 %v6137, 4294901760
      %6171 = vmatpush1.msra.mxu0 %v6170
      %6172 = vmatprep.subr.mxu0 0.0
      %6173 = vmatpush2.msra.mxu0 0.0
      %6174 = vmatprep.subr.mxu0 0.0
      %6175 = vmatpush2.msra.mxu0 0.0
      %6176 = vmatprep.subr.mxu0 0.0
      %6177 = vmatpush2.msra.mxu0 0.0
      %6178 = vmatprep.subr.mxu0 0.0
      %6179 = vmatpush2.msra.mxu0 0.0
      %6180 = vmatprep.subr.mxu0 0.0
      %6181 = vmatpush2.msra.mxu0 0.0
      %6182 = vmatprep.subr.mxu0 0.0
      %6183 = vmatpush2.msra.mxu0 0.0
      %6184 = vmatprep.subr.mxu0 0.0
      %6185 = vmatpush2.msra.mxu0 0.0
      %6186 = vmatprep.subr.mxu0 0.0
      %6187 = vmatpush2.msra.mxu0 0.0
      %6188 = vmatprep.subr.mxu0 0.0
      %6189 = vmatpush2.msra.mxu0 0.0
      %6190 = vmatprep.subr.mxu0 0.0
      %6191 = vmatpush2.msra.mxu0 0.0
      %6192 = vmatprep.subr.mxu0 0.0
      %6193 = vmatpush2.msra.mxu0 0.0
      %6194 = vmatprep.subr.mxu0 0.0
      %6195 = vmatpush2.msra.mxu0 0.0
      %6196 = vmatprep.subr.mxu0 0.0
      %6197 = vmatpush2.msra.mxu0 0.0
      %6198 = vmatprep.subr.mxu0 0.0
      %6199 = vmatpush2.msra.mxu0 0.0
      %6200 = vmatprep.subr.mxu0 0.0
      %6201 = vmatpush2.msra.mxu0 0.0
      %6202 = vmatprep.subr.mxu0 0.0
      %6203 = vmatpush2.msra.mxu0 0.0
      %6204 = vmatprep.mubr.f32.mxu0 0.0
      %v6205 = vand.u32 %v6089, 4294901760
      %v6206 = vsub.f32 %v6089, %v6205
      %v6207 = vand.u32 %v6206, 4294901760
      %v6208 = vsub.f32 %v6206, %v6207
      %v6209 = vand.u32 %v6208, 4294901760
      %6210 = vmatmul.mubr.f32.gmra.mxu0 %v6209
      %v6211 = vpop.f32.mrf.mxu0
      %v6212 = vadd.f32 0.0, %v6211
      %v6213 = vpop.f32.mrf.mxu0
      %6214 = vmatprep.mubr.f32.mxu0 0.0
      %v6215 = vand.u32 %v6092, 4294901760
      %v6216 = vsub.f32 %v6092, %v6215
      %v6217 = vand.u32 %v6216, 4294901760
      %v6218 = vsub.f32 %v6216, %v6217
      %v6219 = vand.u32 %v6218, 4294901760
      %6220 = vmatmul.mubr.f32.gmra.mxu0 %v6219
      %v6221 = vpop.f32.mrf.mxu0
      %v6222 = vadd.f32 0.0, %v6221
      %v6223 = vpop.f32.mrf.mxu0
      %6224 = vmatprep.mubr.f32.mxu0 0.0
      %v6225 = vand.u32 %v6095, 4294901760
      %v6226 = vsub.f32 %v6095, %v6225
      %v6227 = vand.u32 %v6226, 4294901760
      %v6228 = vsub.f32 %v6226, %v6227
      %v6229 = vand.u32 %v6228, 4294901760
      %6230 = vmatmul.mubr.f32.gmra.mxu0 %v6229
      %v6231 = vpop.f32.mrf.mxu0
      %v6232 = vadd.f32 0.0, %v6231
      %v6233 = vpop.f32.mrf.mxu0
      %6234 = vmatprep.mubr.f32.mxu0 0.0
      %v6235 = vand.u32 %v6098, 4294901760
      %v6236 = vsub.f32 %v6098, %v6235
      %v6237 = vand.u32 %v6236, 4294901760
      %v6238 = vsub.f32 %v6236, %v6237
      %v6239 = vand.u32 %v6238, 4294901760
      %6240 = vmatmul.mubr.f32.gmra.mxu0 %v6239
      %v6241 = vpop.f32.mrf.mxu0
      %v6242 = vadd.f32 0.0, %v6241
      %v6243 = vpop.f32.mrf.mxu0
      %6244 = vmatprep.mubr.f32.mxu0 0.0
      %v6245 = vand.u32 %v6101, 4294901760
      %v6246 = vsub.f32 %v6101, %v6245
      %v6247 = vand.u32 %v6246, 4294901760
      %v6248 = vsub.f32 %v6246, %v6247
      %v6249 = vand.u32 %v6248, 4294901760
      %6250 = vmatmul.mubr.f32.gmra.mxu0 %v6249
      %v6251 = vpop.f32.mrf.mxu0
      %v6252 = vadd.f32 0.0, %v6251
      %v6253 = vpop.f32.mrf.mxu0
      %6254 = vmatprep.mubr.f32.mxu0 0.0
      %v6255 = vand.u32 %v6104, 4294901760
      %v6256 = vsub.f32 %v6104, %v6255
      %v6257 = vand.u32 %v6256, 4294901760
      %v6258 = vsub.f32 %v6256, %v6257
      %v6259 = vand.u32 %v6258, 4294901760
      %6260 = vmatmul.mubr.f32.gmra.mxu0 %v6259
      %v6261 = vpop.f32.mrf.mxu0
      %v6262 = vadd.f32 0.0, %v6261
      %v6263 = vpop.f32.mrf.mxu0
      %6264 = vmatprep.mubr.f32.mxu0 0.0
      %v6265 = vand.u32 %v6107, 4294901760
      %v6266 = vsub.f32 %v6107, %v6265
      %v6267 = vand.u32 %v6266, 4294901760
      %v6268 = vsub.f32 %v6266, %v6267
      %v6269 = vand.u32 %v6268, 4294901760
      %6270 = vmatmul.mubr.f32.gmra.mxu0 %v6269
      %v6271 = vpop.f32.mrf.mxu0
      %v6272 = vadd.f32 0.0, %v6271
      %v6273 = vpop.f32.mrf.mxu0
      %6274 = vmatprep.mubr.f32.mxu0 0.0
      %v6275 = vand.u32 %v6110, 4294901760
      %v6276 = vsub.f32 %v6110, %v6275
      %v6277 = vand.u32 %v6276, 4294901760
      %v6278 = vsub.f32 %v6276, %v6277
      %v6279 = vand.u32 %v6278, 4294901760
      %6280 = vmatmul.mubr.f32.gmra.mxu0 %v6279
      %v6281 = vpop.f32.mrf.mxu0
      %v6282 = vadd.f32 0.0, %v6281
      %v6283 = vpop.f32.mrf.mxu0
      %6284 = vmatprep.mubr.f32.mxu0 0.0
      %v6285 = vand.u32 %v6113, 4294901760
      %v6286 = vsub.f32 %v6113, %v6285
      %v6287 = vand.u32 %v6286, 4294901760
      %v6288 = vsub.f32 %v6286, %v6287
      %v6289 = vand.u32 %v6288, 4294901760
      %6290 = vmatmul.mubr.f32.gmra.mxu0 %v6289
      %v6291 = vpop.f32.mrf.mxu0
      %v6292 = vadd.f32 0.0, %v6291
      %v6293 = vpop.f32.mrf.mxu0
      %6294 = vmatprep.mubr.f32.mxu0 0.0
      %v6295 = vand.u32 %v6116, 4294901760
      %v6296 = vsub.f32 %v6116, %v6295
      %v6297 = vand.u32 %v6296, 4294901760
      %v6298 = vsub.f32 %v6296, %v6297
      %v6299 = vand.u32 %v6298, 4294901760
      %6300 = vmatmul.mubr.f32.gmra.mxu0 %v6299
      %v6301 = vpop.f32.mrf.mxu0
      %v6302 = vadd.f32 0.0, %v6301
      %v6303 = vpop.f32.mrf.mxu0
      %6304 = vmatprep.mubr.f32.mxu0 0.0
      %v6305 = vand.u32 %v6119, 4294901760
      %v6306 = vsub.f32 %v6119, %v6305
      %v6307 = vand.u32 %v6306, 4294901760
      %v6308 = vsub.f32 %v6306, %v6307
      %v6309 = vand.u32 %v6308, 4294901760
      %6310 = vmatmul.mubr.f32.gmra.mxu0 %v6309
      %v6311 = vpop.f32.mrf.mxu0
      %v6312 = vadd.f32 0.0, %v6311
      %v6313 = vpop.f32.mrf.mxu0
      %6314 = vmatprep.mubr.f32.mxu0 0.0
      %v6315 = vand.u32 %v6122, 4294901760
      %v6316 = vsub.f32 %v6122, %v6315
      %v6317 = vand.u32 %v6316, 4294901760
      %v6318 = vsub.f32 %v6316, %v6317
      %v6319 = vand.u32 %v6318, 4294901760
      %6320 = vmatmul.mubr.f32.gmra.mxu0 %v6319
      %v6321 = vpop.f32.mrf.mxu0
      %v6322 = vadd.f32 0.0, %v6321
      %v6323 = vpop.f32.mrf.mxu0
      %6324 = vmatprep.mubr.f32.mxu0 0.0
      %v6325 = vand.u32 %v6125, 4294901760
      %v6326 = vsub.f32 %v6125, %v6325
      %v6327 = vand.u32 %v6326, 4294901760
      %v6328 = vsub.f32 %v6326, %v6327
      %v6329 = vand.u32 %v6328, 4294901760
      %6330 = vmatmul.mubr.f32.gmra.mxu0 %v6329
      %v6331 = vpop.f32.mrf.mxu0
      %v6332 = vadd.f32 0.0, %v6331
      %v6333 = vpop.f32.mrf.mxu0
      %6334 = vmatprep.mubr.f32.mxu0 0.0
      %v6335 = vand.u32 %v6128, 4294901760
      %v6336 = vsub.f32 %v6128, %v6335
      %v6337 = vand.u32 %v6336, 4294901760
      %v6338 = vsub.f32 %v6336, %v6337
      %v6339 = vand.u32 %v6338, 4294901760
      %6340 = vmatmul.mubr.f32.gmra.mxu0 %v6339
      %v6341 = vpop.f32.mrf.mxu0
      %v6342 = vadd.f32 0.0, %v6341
      %v6343 = vpop.f32.mrf.mxu0
      %6344 = vmatprep.mubr.f32.mxu0 0.0
      %v6345 = vand.u32 %v6131, 4294901760
      %v6346 = vsub.f32 %v6131, %v6345
      %v6347 = vand.u32 %v6346, 4294901760
      %v6348 = vsub.f32 %v6346, %v6347
      %v6349 = vand.u32 %v6348, 4294901760
      %6350 = vmatmul.mubr.f32.gmra.mxu0 %v6349
      %v6351 = vpop.f32.mrf.mxu0
      %v6352 = vadd.f32 0.0, %v6351
      %v6353 = vpop.f32.mrf.mxu0
      %6354 = vmatprep.mubr.f32.mxu0 0.0
      %v6355 = vand.u32 %v6134, 4294901760
      %v6356 = vsub.f32 %v6134, %v6355
      %v6357 = vand.u32 %v6356, 4294901760
      %v6358 = vsub.f32 %v6356, %v6357
      %v6359 = vand.u32 %v6358, 4294901760
      %6360 = vmatmul.mubr.f32.gmra.mxu0 %v6359
      %v6361 = vpop.f32.mrf.mxu0
      %v6362 = vadd.f32 0.0, %v6361
      %v6363 = vpop.f32.mrf.mxu0
      %6364 = vdwg.mxu0
      %6365 = vmatprep.subr.mxu0 0.0
      %6366 = vmatpush1.msra.mxu0 0.0
      %6367 = vmatprep.subr.mxu0 0.0
      %6368 = vmatpush1.msra.mxu0 0.0
      %6369 = vmatprep.subr.mxu0 0.0
      %6370 = vmatpush1.msra.mxu0 0.0
      %6371 = vmatprep.subr.mxu0 0.0
      %6372 = vmatpush1.msra.mxu0 0.0
      %6373 = vmatprep.subr.mxu0 0.0
      %6374 = vmatpush1.msra.mxu0 0.0
      %6375 = vmatprep.subr.mxu0 0.0
      %6376 = vmatpush1.msra.mxu0 0.0
      %6377 = vmatprep.subr.mxu0 0.0
      %6378 = vmatpush1.msra.mxu0 0.0
      %6379 = vmatprep.subr.mxu0 0.0
      %6380 = vmatpush1.msra.mxu0 0.0
      %6381 = vmatprep.subr.mxu0 0.0
      %6382 = vmatpush1.msra.mxu0 0.0
      %6383 = vmatprep.subr.mxu0 0.0
      %6384 = vmatpush1.msra.mxu0 0.0
      %6385 = vmatprep.subr.mxu0 0.0
      %6386 = vmatpush1.msra.mxu0 0.0
      %6387 = vmatprep.subr.mxu0 0.0
      %6388 = vmatpush1.msra.mxu0 0.0
      %6389 = vmatprep.subr.mxu0 0.0
      %6390 = vmatpush1.msra.mxu0 0.0
      %6391 = vmatprep.subr.mxu0 0.0
      %6392 = vmatpush1.msra.mxu0 0.0
      %6393 = vmatprep.subr.mxu0 0.0
      %6394 = vmatpush1.msra.mxu0 0.0
      %6395 = vmatprep.subr.mxu0 0.0
      %v6396 = vand.u32 %v6137, 4294901760
      %v6397 = vsub.f32 %v6137, %v6396
      %v6398 = vand.u32 %v6397, 4294901760
      %v6399 = vsub.f32 %v6397, %v6398
      %v6400 = vand.u32 %v6399, 4294901760
      %6401 = vmatpush1.msra.mxu0 %v6400
      %6402 = vmatprep.subr.mxu0 0.0
      %6403 = vmatpush2.msra.mxu0 0.0
      %6404 = vmatprep.subr.mxu0 0.0
      %6405 = vmatpush2.msra.mxu0 0.0
      %6406 = vmatprep.subr.mxu0 0.0
      %6407 = vmatpush2.msra.mxu0 0.0
      %6408 = vmatprep.subr.mxu0 0.0
      %6409 = vmatpush2.msra.mxu0 0.0
      %6410 = vmatprep.subr.mxu0 0.0
      %6411 = vmatpush2.msra.mxu0 0.0
      %6412 = vmatprep.subr.mxu0 0.0
      %6413 = vmatpush2.msra.mxu0 0.0
      %6414 = vmatprep.subr.mxu0 0.0
      %6415 = vmatpush2.msra.mxu0 0.0
      %6416 = vmatprep.subr.mxu0 0.0
      %6417 = vmatpush2.msra.mxu0 0.0
      %6418 = vmatprep.subr.mxu0 0.0
      %6419 = vmatpush2.msra.mxu0 0.0
      %6420 = vmatprep.subr.mxu0 0.0
      %6421 = vmatpush2.msra.mxu0 0.0
      %6422 = vmatprep.subr.mxu0 0.0
      %6423 = vmatpush2.msra.mxu0 0.0
      %6424 = vmatprep.subr.mxu0 0.0
      %6425 = vmatpush2.msra.mxu0 0.0
      %6426 = vmatprep.subr.mxu0 0.0
      %6427 = vmatpush2.msra.mxu0 0.0
      %6428 = vmatprep.subr.mxu0 0.0
      %6429 = vmatpush2.msra.mxu0 0.0
      %6430 = vmatprep.subr.mxu0 0.0
      %6431 = vmatpush2.msra.mxu0 0.0
      %6432 = vmatprep.subr.mxu0 0.0
      %6433 = vmatpush2.msra.mxu0 0.0
      %6434 = vmatprep.mubr.f32.mxu0 0.0
      %v6435 = vand.u32 %v6089, 4294901760
      %6436 = vmatmul.mubr.f32.gmra.mxu0 %v6435
      %v6437 = vpop.f32.mrf.mxu0
      %v6438 = vadd.f32 %v6212, %v6437
      %v6439 = vpop.f32.mrf.mxu0
      %6440 = vmatprep.mubr.f32.mxu0 0.0
      %v6441 = vand.u32 %v6092, 4294901760
      %6442 = vmatmul.mubr.f32.gmra.mxu0 %v6441
      %v6443 = vpop.f32.mrf.mxu0
      %v6444 = vadd.f32 %v6222, %v6443
      %v6445 = vpop.f32.mrf.mxu0
      %6446 = vmatprep.mubr.f32.mxu0 0.0
      %v6447 = vand.u32 %v6095, 4294901760
      %6448 = vmatmul.mubr.f32.gmra.mxu0 %v6447
      %v6449 = vpop.f32.mrf.mxu0
      %v6450 = vadd.f32 %v6232, %v6449
      %v6451 = vpop.f32.mrf.mxu0
      %6452 = vmatprep.mubr.f32.mxu0 0.0
      %v6453 = vand.u32 %v6098, 4294901760
      %6454 = vmatmul.mubr.f32.gmra.mxu0 %v6453
      %v6455 = vpop.f32.mrf.mxu0
      %v6456 = vadd.f32 %v6242, %v6455
      %v6457 = vpop.f32.mrf.mxu0
      %6458 = vmatprep.mubr.f32.mxu0 0.0
      %v6459 = vand.u32 %v6101, 4294901760
      %6460 = vmatmul.mubr.f32.gmra.mxu0 %v6459
      %v6461 = vpop.f32.mrf.mxu0
      %v6462 = vadd.f32 %v6252, %v6461
      %v6463 = vpop.f32.mrf.mxu0
      %6464 = vmatprep.mubr.f32.mxu0 0.0
      %v6465 = vand.u32 %v6104, 4294901760
      %6466 = vmatmul.mubr.f32.gmra.mxu0 %v6465
      %v6467 = vpop.f32.mrf.mxu0
      %v6468 = vadd.f32 %v6262, %v6467
      %v6469 = vpop.f32.mrf.mxu0
      %6470 = vmatprep.mubr.f32.mxu0 0.0
      %v6471 = vand.u32 %v6107, 4294901760
      %6472 = vmatmul.mubr.f32.gmra.mxu0 %v6471
      %v6473 = vpop.f32.mrf.mxu0
      %v6474 = vadd.f32 %v6272, %v6473
      %v6475 = vpop.f32.mrf.mxu0
      %6476 = vmatprep.mubr.f32.mxu0 0.0
      %v6477 = vand.u32 %v6110, 4294901760
      %6478 = vmatmul.mubr.f32.gmra.mxu0 %v6477
      %v6479 = vpop.f32.mrf.mxu0
      %v6480 = vadd.f32 %v6282, %v6479
      %v6481 = vpop.f32.mrf.mxu0
      %6482 = vmatprep.mubr.f32.mxu0 0.0
      %v6483 = vand.u32 %v6113, 4294901760
      %6484 = vmatmul.mubr.f32.gmra.mxu0 %v6483
      %v6485 = vpop.f32.mrf.mxu0
      %v6486 = vadd.f32 %v6292, %v6485
      %v6487 = vpop.f32.mrf.mxu0
      %6488 = vmatprep.mubr.f32.mxu0 0.0
      %v6489 = vand.u32 %v6116, 4294901760
      %6490 = vmatmul.mubr.f32.gmra.mxu0 %v6489
      %v6491 = vpop.f32.mrf.mxu0
      %v6492 = vadd.f32 %v6302, %v6491
      %v6493 = vpop.f32.mrf.mxu0
      %6494 = vmatprep.mubr.f32.mxu0 0.0
      %v6495 = vand.u32 %v6119, 4294901760
      %6496 = vmatmul.mubr.f32.gmra.mxu0 %v6495
      %v6497 = vpop.f32.mrf.mxu0
      %v6498 = vadd.f32 %v6312, %v6497
      %v6499 = vpop.f32.mrf.mxu0
      %6500 = vmatprep.mubr.f32.mxu0 0.0
      %v6501 = vand.u32 %v6122, 4294901760
      %6502 = vmatmul.mubr.f32.gmra.mxu0 %v6501
      %v6503 = vpop.f32.mrf.mxu0
      %v6504 = vadd.f32 %v6322, %v6503
      %v6505 = vpop.f32.mrf.mxu0
      %6506 = vmatprep.mubr.f32.mxu0 0.0
      %v6507 = vand.u32 %v6125, 4294901760
      %6508 = vmatmul.mubr.f32.gmra.mxu0 %v6507
      %v6509 = vpop.f32.mrf.mxu0
      %v6510 = vadd.f32 %v6332, %v6509
      %v6511 = vpop.f32.mrf.mxu0
      %6512 = vmatprep.mubr.f32.mxu0 0.0
      %v6513 = vand.u32 %v6128, 4294901760
      %6514 = vmatmul.mubr.f32.gmra.mxu0 %v6513
      %v6515 = vpop.f32.mrf.mxu0
      %v6516 = vadd.f32 %v6342, %v6515
      %v6517 = vpop.f32.mrf.mxu0
      %6518 = vmatprep.mubr.f32.mxu0 0.0
      %v6519 = vand.u32 %v6131, 4294901760
      %6520 = vmatmul.mubr.f32.gmra.mxu0 %v6519
      %v6521 = vpop.f32.mrf.mxu0
      %v6522 = vadd.f32 %v6352, %v6521
      %v6523 = vpop.f32.mrf.mxu0
      %6524 = vmatprep.mubr.f32.mxu0 0.0
      %v6525 = vand.u32 %v6134, 4294901760
      %6526 = vmatmul.mubr.f32.gmra.mxu0 %v6525
      %v6527 = vpop.f32.mrf.mxu0
      %v6528 = vadd.f32 %v6362, %v6527
      %v6529 = vpop.f32.mrf.mxu0
      %6530 = vdwg.mxu0
      %6531 = vmatprep.subr.mxu0 0.0
      %6532 = vmatpush1.msra.mxu0 0.0
      %6533 = vmatprep.subr.mxu0 0.0
      %6534 = vmatpush1.msra.mxu0 0.0
      %6535 = vmatprep.subr.mxu0 0.0
      %6536 = vmatpush1.msra.mxu0 0.0
      %6537 = vmatprep.subr.mxu0 0.0
      %6538 = vmatpush1.msra.mxu0 0.0
      %6539 = vmatprep.subr.mxu0 0.0
      %6540 = vmatpush1.msra.mxu0 0.0
      %6541 = vmatprep.subr.mxu0 0.0
      %6542 = vmatpush1.msra.mxu0 0.0
      %6543 = vmatprep.subr.mxu0 0.0
      %6544 = vmatpush1.msra.mxu0 0.0
      %6545 = vmatprep.subr.mxu0 0.0
      %6546 = vmatpush1.msra.mxu0 0.0
      %6547 = vmatprep.subr.mxu0 0.0
      %6548 = vmatpush1.msra.mxu0 0.0
      %6549 = vmatprep.subr.mxu0 0.0
      %6550 = vmatpush1.msra.mxu0 0.0
      %6551 = vmatprep.subr.mxu0 0.0
      %6552 = vmatpush1.msra.mxu0 0.0
      %6553 = vmatprep.subr.mxu0 0.0
      %6554 = vmatpush1.msra.mxu0 0.0
      %6555 = vmatprep.subr.mxu0 0.0
      %6556 = vmatpush1.msra.mxu0 0.0
      %6557 = vmatprep.subr.mxu0 0.0
      %6558 = vmatpush1.msra.mxu0 0.0
      %6559 = vmatprep.subr.mxu0 0.0
      %6560 = vmatpush1.msra.mxu0 0.0
      %6561 = vmatprep.subr.mxu0 0.0
      %v6562 = vand.u32 %v6137, 4294901760
      %v6563 = vsub.f32 %v6137, %v6562
      %6564 = vmatpush1.msra.mxu0 %v6563
      %6565 = vmatprep.subr.mxu0 0.0
      %6566 = vmatpush2.msra.mxu0 0.0
      %6567 = vmatprep.subr.mxu0 0.0
      %6568 = vmatpush2.msra.mxu0 0.0
      %6569 = vmatprep.subr.mxu0 0.0
      %6570 = vmatpush2.msra.mxu0 0.0
      %6571 = vmatprep.subr.mxu0 0.0
      %6572 = vmatpush2.msra.mxu0 0.0
      %6573 = vmatprep.subr.mxu0 0.0
      %6574 = vmatpush2.msra.mxu0 0.0
      %6575 = vmatprep.subr.mxu0 0.0
      %6576 = vmatpush2.msra.mxu0 0.0
      %6577 = vmatprep.subr.mxu0 0.0
      %6578 = vmatpush2.msra.mxu0 0.0
      %6579 = vmatprep.subr.mxu0 0.0
      %6580 = vmatpush2.msra.mxu0 0.0
      %6581 = vmatprep.subr.mxu0 0.0
      %6582 = vmatpush2.msra.mxu0 0.0
      %6583 = vmatprep.subr.mxu0 0.0
      %6584 = vmatpush2.msra.mxu0 0.0
      %6585 = vmatprep.subr.mxu0 0.0
      %6586 = vmatpush2.msra.mxu0 0.0
      %6587 = vmatprep.subr.mxu0 0.0
      %6588 = vmatpush2.msra.mxu0 0.0
      %6589 = vmatprep.subr.mxu0 0.0
      %6590 = vmatpush2.msra.mxu0 0.0
      %6591 = vmatprep.subr.mxu0 0.0
      %6592 = vmatpush2.msra.mxu0 0.0
      %6593 = vmatprep.subr.mxu0 0.0
      %6594 = vmatpush2.msra.mxu0 0.0
      %6595 = vmatprep.subr.mxu0 0.0
      %6596 = vmatpush2.msra.mxu0 0.0
      %6597 = vmatprep.mubr.f32.mxu0 0.0
      %v6598 = vand.u32 %v6089, 4294901760
      %v6599 = vsub.f32 %v6089, %v6598
      %6600 = vmatmul.mubr.f32.gmra.mxu0 %v6599
      %v6601 = vpop.f32.mrf.mxu0
      %v6602 = vadd.f32 %v6438, %v6601
      %v6603 = vpop.f32.mrf.mxu0
      %6604 = vmatprep.mubr.f32.mxu0 0.0
      %v6605 = vand.u32 %v6092, 4294901760
      %v6606 = vsub.f32 %v6092, %v6605
      %6607 = vmatmul.mubr.f32.gmra.mxu0 %v6606
      %v6608 = vpop.f32.mrf.mxu0
      %v6609 = vadd.f32 %v6444, %v6608
      %v6610 = vpop.f32.mrf.mxu0
      %6611 = vmatprep.mubr.f32.mxu0 0.0
      %v6612 = vand.u32 %v6095, 4294901760
      %v6613 = vsub.f32 %v6095, %v6612
      %6614 = vmatmul.mubr.f32.gmra.mxu0 %v6613
      %v6615 = vpop.f32.mrf.mxu0
      %v6616 = vadd.f32 %v6450, %v6615
      %v6617 = vpop.f32.mrf.mxu0
      %6618 = vmatprep.mubr.f32.mxu0 0.0
      %v6619 = vand.u32 %v6098, 4294901760
      %v6620 = vsub.f32 %v6098, %v6619
      %6621 = vmatmul.mubr.f32.gmra.mxu0 %v6620
      %v6622 = vpop.f32.mrf.mxu0
      %v6623 = vadd.f32 %v6456, %v6622
      %v6624 = vpop.f32.mrf.mxu0
      %6625 = vmatprep.mubr.f32.mxu0 0.0
      %v6626 = vand.u32 %v6101, 4294901760
      %v6627 = vsub.f32 %v6101, %v6626
      %6628 = vmatmul.mubr.f32.gmra.mxu0 %v6627
      %v6629 = vpop.f32.mrf.mxu0
      %v6630 = vadd.f32 %v6462, %v6629
      %v6631 = vpop.f32.mrf.mxu0
      %6632 = vmatprep.mubr.f32.mxu0 0.0
      %v6633 = vand.u32 %v6104, 4294901760
      %v6634 = vsub.f32 %v6104, %v6633
      %6635 = vmatmul.mubr.f32.gmra.mxu0 %v6634
      %v6636 = vpop.f32.mrf.mxu0
      %v6637 = vadd.f32 %v6468, %v6636
      %v6638 = vpop.f32.mrf.mxu0
      %6639 = vmatprep.mubr.f32.mxu0 0.0
      %v6640 = vand.u32 %v6107, 4294901760
      %v6641 = vsub.f32 %v6107, %v6640
      %6642 = vmatmul.mubr.f32.gmra.mxu0 %v6641
      %v6643 = vpop.f32.mrf.mxu0
      %v6644 = vadd.f32 %v6474, %v6643
      %v6645 = vpop.f32.mrf.mxu0
      %6646 = vmatprep.mubr.f32.mxu0 0.0
      %v6647 = vand.u32 %v6110, 4294901760
      %v6648 = vsub.f32 %v6110, %v6647
      %6649 = vmatmul.mubr.f32.gmra.mxu0 %v6648
      %v6650 = vpop.f32.mrf.mxu0
      %v6651 = vadd.f32 %v6480, %v6650
      %v6652 = vpop.f32.mrf.mxu0
      %6653 = vmatprep.mubr.f32.mxu0 0.0
      %v6654 = vand.u32 %v6113, 4294901760
      %v6655 = vsub.f32 %v6113, %v6654
      %6656 = vmatmul.mubr.f32.gmra.mxu0 %v6655
      %v6657 = vpop.f32.mrf.mxu0
      %v6658 = vadd.f32 %v6486, %v6657
      %v6659 = vpop.f32.mrf.mxu0
      %6660 = vmatprep.mubr.f32.mxu0 0.0
      %v6661 = vand.u32 %v6116, 4294901760
      %v6662 = vsub.f32 %v6116, %v6661
      %6663 = vmatmul.mubr.f32.gmra.mxu0 %v6662
      %v6664 = vpop.f32.mrf.mxu0
      %v6665 = vadd.f32 %v6492, %v6664
      %v6666 = vpop.f32.mrf.mxu0
      %6667 = vmatprep.mubr.f32.mxu0 0.0
      %v6668 = vand.u32 %v6119, 4294901760
      %v6669 = vsub.f32 %v6119, %v6668
      %6670 = vmatmul.mubr.f32.gmra.mxu0 %v6669
      %v6671 = vpop.f32.mrf.mxu0
      %v6672 = vadd.f32 %v6498, %v6671
      %v6673 = vpop.f32.mrf.mxu0
      %6674 = vmatprep.mubr.f32.mxu0 0.0
      %v6675 = vand.u32 %v6122, 4294901760
      %v6676 = vsub.f32 %v6122, %v6675
      %6677 = vmatmul.mubr.f32.gmra.mxu0 %v6676
      %v6678 = vpop.f32.mrf.mxu0
      %v6679 = vadd.f32 %v6504, %v6678
      %v6680 = vpop.f32.mrf.mxu0
      %6681 = vmatprep.mubr.f32.mxu0 0.0
      %v6682 = vand.u32 %v6125, 4294901760
      %v6683 = vsub.f32 %v6125, %v6682
      %6684 = vmatmul.mubr.f32.gmra.mxu0 %v6683
      %v6685 = vpop.f32.mrf.mxu0
      %v6686 = vadd.f32 %v6510, %v6685
      %v6687 = vpop.f32.mrf.mxu0
      %6688 = vmatprep.mubr.f32.mxu0 0.0
      %v6689 = vand.u32 %v6128, 4294901760
      %v6690 = vsub.f32 %v6128, %v6689
      %6691 = vmatmul.mubr.f32.gmra.mxu0 %v6690
      %v6692 = vpop.f32.mrf.mxu0
      %v6693 = vadd.f32 %v6516, %v6692
      %v6694 = vpop.f32.mrf.mxu0
      %6695 = vmatprep.mubr.f32.mxu0 0.0
      %v6696 = vand.u32 %v6131, 4294901760
      %v6697 = vsub.f32 %v6131, %v6696
      %6698 = vmatmul.mubr.f32.gmra.mxu0 %v6697
      %v6699 = vpop.f32.mrf.mxu0
      %v6700 = vadd.f32 %v6522, %v6699
      %v6701 = vpop.f32.mrf.mxu0
      %6702 = vmatprep.mubr.f32.mxu0 0.0
      %v6703 = vand.u32 %v6134, 4294901760
      %v6704 = vsub.f32 %v6134, %v6703
      %6705 = vmatmul.mubr.f32.gmra.mxu0 %v6704
      %v6706 = vpop.f32.mrf.mxu0
      %v6707 = vadd.f32 %v6528, %v6706
      %v6708 = vpop.f32.mrf.mxu0
      %6709 = vdwg.mxu0
      %6710 = vmatprep.subr.mxu0 0.0
      %6711 = vmatpush1.msra.mxu0 0.0
      %6712 = vmatprep.subr.mxu0 0.0
      %6713 = vmatpush1.msra.mxu0 0.0
      %6714 = vmatprep.subr.mxu0 0.0
      %6715 = vmatpush1.msra.mxu0 0.0
      %6716 = vmatprep.subr.mxu0 0.0
      %6717 = vmatpush1.msra.mxu0 0.0
      %6718 = vmatprep.subr.mxu0 0.0
      %6719 = vmatpush1.msra.mxu0 0.0
      %6720 = vmatprep.subr.mxu0 0.0
      %6721 = vmatpush1.msra.mxu0 0.0
      %6722 = vmatprep.subr.mxu0 0.0
      %6723 = vmatpush1.msra.mxu0 0.0
      %6724 = vmatprep.subr.mxu0 0.0
      %6725 = vmatpush1.msra.mxu0 0.0
      %6726 = vmatprep.subr.mxu0 0.0
      %6727 = vmatpush1.msra.mxu0 0.0
      %6728 = vmatprep.subr.mxu0 0.0
      %6729 = vmatpush1.msra.mxu0 0.0
      %6730 = vmatprep.subr.mxu0 0.0
      %6731 = vmatpush1.msra.mxu0 0.0
      %6732 = vmatprep.subr.mxu0 0.0
      %6733 = vmatpush1.msra.mxu0 0.0
      %6734 = vmatprep.subr.mxu0 0.0
      %6735 = vmatpush1.msra.mxu0 0.0
      %6736 = vmatprep.subr.mxu0 0.0
      %6737 = vmatpush1.msra.mxu0 0.0
      %6738 = vmatprep.subr.mxu0 0.0
      %6739 = vmatpush1.msra.mxu0 0.0
      %6740 = vmatprep.subr.mxu0 0.0
      %v6741 = vand.u32 %v6137, 4294901760
      %6742 = vmatpush1.msra.mxu0 %v6741
      %6743 = vmatprep.subr.mxu0 0.0
      %6744 = vmatpush2.msra.mxu0 0.0
      %6745 = vmatprep.subr.mxu0 0.0
      %6746 = vmatpush2.msra.mxu0 0.0
      %6747 = vmatprep.subr.mxu0 0.0
      %6748 = vmatpush2.msra.mxu0 0.0
      %6749 = vmatprep.subr.mxu0 0.0
      %6750 = vmatpush2.msra.mxu0 0.0
      %6751 = vmatprep.subr.mxu0 0.0
      %6752 = vmatpush2.msra.mxu0 0.0
      %6753 = vmatprep.subr.mxu0 0.0
      %6754 = vmatpush2.msra.mxu0 0.0
      %6755 = vmatprep.subr.mxu0 0.0
      %6756 = vmatpush2.msra.mxu0 0.0
      %6757 = vmatprep.subr.mxu0 0.0
      %6758 = vmatpush2.msra.mxu0 0.0
      %6759 = vmatprep.subr.mxu0 0.0
      %6760 = vmatpush2.msra.mxu0 0.0
      %6761 = vmatprep.subr.mxu0 0.0
      %6762 = vmatpush2.msra.mxu0 0.0
      %6763 = vmatprep.subr.mxu0 0.0
      %6764 = vmatpush2.msra.mxu0 0.0
      %6765 = vmatprep.subr.mxu0 0.0
      %6766 = vmatpush2.msra.mxu0 0.0
      %6767 = vmatprep.subr.mxu0 0.0
      %6768 = vmatpush2.msra.mxu0 0.0
      %6769 = vmatprep.subr.mxu0 0.0
      %6770 = vmatpush2.msra.mxu0 0.0
      %6771 = vmatprep.subr.mxu0 0.0
      %6772 = vmatpush2.msra.mxu0 0.0
      %6773 = vmatprep.subr.mxu0 0.0
      %6774 = vmatpush2.msra.mxu0 0.0
      %6775 = vmatprep.mubr.f32.mxu0 0.0
      %v6776 = vand.u32 %v6089, 4294901760
      %v6777 = vsub.f32 %v6089, %v6776
      %v6778 = vand.u32 %v6777, 4294901760
      %6779 = vmatmul.mubr.f32.gmra.mxu0 %v6778
      %v6780 = vpop.f32.mrf.mxu0
      %v6781 = vadd.f32 %v6602, %v6780
      %v6782 = vpop.f32.mrf.mxu0
      %6783 = vmatprep.mubr.f32.mxu0 0.0
      %v6784 = vand.u32 %v6092, 4294901760
      %v6785 = vsub.f32 %v6092, %v6784
      %v6786 = vand.u32 %v6785, 4294901760
      %6787 = vmatmul.mubr.f32.gmra.mxu0 %v6786
      %v6788 = vpop.f32.mrf.mxu0
      %v6789 = vadd.f32 %v6609, %v6788
      %v6790 = vpop.f32.mrf.mxu0
      %6791 = vmatprep.mubr.f32.mxu0 0.0
      %v6792 = vand.u32 %v6095, 4294901760
      %v6793 = vsub.f32 %v6095, %v6792
      %v6794 = vand.u32 %v6793, 4294901760
      %6795 = vmatmul.mubr.f32.gmra.mxu0 %v6794
      %v6796 = vpop.f32.mrf.mxu0
      %v6797 = vadd.f32 %v6616, %v6796
      %v6798 = vpop.f32.mrf.mxu0
      %6799 = vmatprep.mubr.f32.mxu0 0.0
      %v6800 = vand.u32 %v6098, 4294901760
      %v6801 = vsub.f32 %v6098, %v6800
      %v6802 = vand.u32 %v6801, 4294901760
      %6803 = vmatmul.mubr.f32.gmra.mxu0 %v6802
      %v6804 = vpop.f32.mrf.mxu0
      %v6805 = vadd.f32 %v6623, %v6804
      %v6806 = vpop.f32.mrf.mxu0
      %6807 = vmatprep.mubr.f32.mxu0 0.0
      %v6808 = vand.u32 %v6101, 4294901760
      %v6809 = vsub.f32 %v6101, %v6808
      %v6810 = vand.u32 %v6809, 4294901760
      %6811 = vmatmul.mubr.f32.gmra.mxu0 %v6810
      %v6812 = vpop.f32.mrf.mxu0
      %v6813 = vadd.f32 %v6630, %v6812
      %v6814 = vpop.f32.mrf.mxu0
      %6815 = vmatprep.mubr.f32.mxu0 0.0
      %v6816 = vand.u32 %v6104, 4294901760
      %v6817 = vsub.f32 %v6104, %v6816
      %v6818 = vand.u32 %v6817, 4294901760
      %6819 = vmatmul.mubr.f32.gmra.mxu0 %v6818
      %v6820 = vpop.f32.mrf.mxu0
      %v6821 = vadd.f32 %v6637, %v6820
      %v6822 = vpop.f32.mrf.mxu0
      %6823 = vmatprep.mubr.f32.mxu0 0.0
      %v6824 = vand.u32 %v6107, 4294901760
      %v6825 = vsub.f32 %v6107, %v6824
      %v6826 = vand.u32 %v6825, 4294901760
      %6827 = vmatmul.mubr.f32.gmra.mxu0 %v6826
      %v6828 = vpop.f32.mrf.mxu0
      %v6829 = vadd.f32 %v6644, %v6828
      %v6830 = vpop.f32.mrf.mxu0
      %6831 = vmatprep.mubr.f32.mxu0 0.0
      %v6832 = vand.u32 %v6110, 4294901760
      %v6833 = vsub.f32 %v6110, %v6832
      %v6834 = vand.u32 %v6833, 4294901760
      %6835 = vmatmul.mubr.f32.gmra.mxu0 %v6834
      %v6836 = vpop.f32.mrf.mxu0
      %v6837 = vadd.f32 %v6651, %v6836
      %v6838 = vpop.f32.mrf.mxu0
      %6839 = vmatprep.mubr.f32.mxu0 0.0
      %v6840 = vand.u32 %v6113, 4294901760
      %v6841 = vsub.f32 %v6113, %v6840
      %v6842 = vand.u32 %v6841, 4294901760
      %6843 = vmatmul.mubr.f32.gmra.mxu0 %v6842
      %v6844 = vpop.f32.mrf.mxu0
      %v6845 = vadd.f32 %v6658, %v6844
      %v6846 = vpop.f32.mrf.mxu0
      %6847 = vmatprep.mubr.f32.mxu0 0.0
      %v6848 = vand.u32 %v6116, 4294901760
      %v6849 = vsub.f32 %v6116, %v6848
      %v6850 = vand.u32 %v6849, 4294901760
      %6851 = vmatmul.mubr.f32.gmra.mxu0 %v6850
      %v6852 = vpop.f32.mrf.mxu0
      %v6853 = vadd.f32 %v6665, %v6852
      %v6854 = vpop.f32.mrf.mxu0
      %6855 = vmatprep.mubr.f32.mxu0 0.0
      %v6856 = vand.u32 %v6119, 4294901760
      %v6857 = vsub.f32 %v6119, %v6856
      %v6858 = vand.u32 %v6857, 4294901760
      %6859 = vmatmul.mubr.f32.gmra.mxu0 %v6858
      %v6860 = vpop.f32.mrf.mxu0
      %v6861 = vadd.f32 %v6672, %v6860
      %v6862 = vpop.f32.mrf.mxu0
      %6863 = vmatprep.mubr.f32.mxu0 0.0
      %v6864 = vand.u32 %v6122, 4294901760
      %v6865 = vsub.f32 %v6122, %v6864
      %v6866 = vand.u32 %v6865, 4294901760
      %6867 = vmatmul.mubr.f32.gmra.mxu0 %v6866
      %v6868 = vpop.f32.mrf.mxu0
      %v6869 = vadd.f32 %v6679, %v6868
      %v6870 = vpop.f32.mrf.mxu0
      %6871 = vmatprep.mubr.f32.mxu0 0.0
      %v6872 = vand.u32 %v6125, 4294901760
      %v6873 = vsub.f32 %v6125, %v6872
      %v6874 = vand.u32 %v6873, 4294901760
      %6875 = vmatmul.mubr.f32.gmra.mxu0 %v6874
      %v6876 = vpop.f32.mrf.mxu0
      %v6877 = vadd.f32 %v6686, %v6876
      %v6878 = vpop.f32.mrf.mxu0
      %6879 = vmatprep.mubr.f32.mxu0 0.0
      %v6880 = vand.u32 %v6128, 4294901760
      %v6881 = vsub.f32 %v6128, %v6880
      %v6882 = vand.u32 %v6881, 4294901760
      %6883 = vmatmul.mubr.f32.gmra.mxu0 %v6882
      %v6884 = vpop.f32.mrf.mxu0
      %v6885 = vadd.f32 %v6693, %v6884
      %v6886 = vpop.f32.mrf.mxu0
      %6887 = vmatprep.mubr.f32.mxu0 0.0
      %v6888 = vand.u32 %v6131, 4294901760
      %v6889 = vsub.f32 %v6131, %v6888
      %v6890 = vand.u32 %v6889, 4294901760
      %6891 = vmatmul.mubr.f32.gmra.mxu0 %v6890
      %v6892 = vpop.f32.mrf.mxu0
      %v6893 = vadd.f32 %v6700, %v6892
      %v6894 = vpop.f32.mrf.mxu0
      %6895 = vmatprep.mubr.f32.mxu0 0.0
      %v6896 = vand.u32 %v6134, 4294901760
      %v6897 = vsub.f32 %v6134, %v6896
      %v6898 = vand.u32 %v6897, 4294901760
      %6899 = vmatmul.mubr.f32.gmra.mxu0 %v6898
      %v6900 = vpop.f32.mrf.mxu0
      %v6901 = vadd.f32 %v6707, %v6900
      %v6902 = vpop.f32.mrf.mxu0
      %6903 = vdwg.mxu0
      %6904 = vmatprep.subr.mxu0 0.0
      %6905 = vmatpush1.msra.mxu0 0.0
      %6906 = vmatprep.subr.mxu0 0.0
      %6907 = vmatpush1.msra.mxu0 0.0
      %6908 = vmatprep.subr.mxu0 0.0
      %6909 = vmatpush1.msra.mxu0 0.0
      %6910 = vmatprep.subr.mxu0 0.0
      %6911 = vmatpush1.msra.mxu0 0.0
      %6912 = vmatprep.subr.mxu0 0.0
      %6913 = vmatpush1.msra.mxu0 0.0
      %6914 = vmatprep.subr.mxu0 0.0
      %6915 = vmatpush1.msra.mxu0 0.0
      %6916 = vmatprep.subr.mxu0 0.0
      %6917 = vmatpush1.msra.mxu0 0.0
      %6918 = vmatprep.subr.mxu0 0.0
      %6919 = vmatpush1.msra.mxu0 0.0
      %6920 = vmatprep.subr.mxu0 0.0
      %6921 = vmatpush1.msra.mxu0 0.0
      %6922 = vmatprep.subr.mxu0 0.0
      %6923 = vmatpush1.msra.mxu0 0.0
      %6924 = vmatprep.subr.mxu0 0.0
      %6925 = vmatpush1.msra.mxu0 0.0
      %6926 = vmatprep.subr.mxu0 0.0
      %6927 = vmatpush1.msra.mxu0 0.0
      %6928 = vmatprep.subr.mxu0 0.0
      %6929 = vmatpush1.msra.mxu0 0.0
      %6930 = vmatprep.subr.mxu0 0.0
      %6931 = vmatpush1.msra.mxu0 0.0
      %6932 = vmatprep.subr.mxu0 0.0
      %6933 = vmatpush1.msra.mxu0 0.0
      %6934 = vmatprep.subr.mxu0 0.0
      %v6935 = vand.u32 %v6137, 4294901760
      %v6936 = vsub.f32 %v6137, %v6935
      %v6937 = vand.u32 %v6936, 4294901760
      %6938 = vmatpush1.msra.mxu0 %v6937
      %6939 = vmatprep.subr.mxu0 0.0
      %6940 = vmatpush2.msra.mxu0 0.0
      %6941 = vmatprep.subr.mxu0 0.0
      %6942 = vmatpush2.msra.mxu0 0.0
      %6943 = vmatprep.subr.mxu0 0.0
      %6944 = vmatpush2.msra.mxu0 0.0
      %6945 = vmatprep.subr.mxu0 0.0
      %6946 = vmatpush2.msra.mxu0 0.0
      %6947 = vmatprep.subr.mxu0 0.0
      %6948 = vmatpush2.msra.mxu0 0.0
      %6949 = vmatprep.subr.mxu0 0.0
      %6950 = vmatpush2.msra.mxu0 0.0
      %6951 = vmatprep.subr.mxu0 0.0
      %6952 = vmatpush2.msra.mxu0 0.0
      %6953 = vmatprep.subr.mxu0 0.0
      %6954 = vmatpush2.msra.mxu0 0.0
      %6955 = vmatprep.subr.mxu0 0.0
      %6956 = vmatpush2.msra.mxu0 0.0
      %6957 = vmatprep.subr.mxu0 0.0
      %6958 = vmatpush2.msra.mxu0 0.0
      %6959 = vmatprep.subr.mxu0 0.0
      %6960 = vmatpush2.msra.mxu0 0.0
      %6961 = vmatprep.subr.mxu0 0.0
      %6962 = vmatpush2.msra.mxu0 0.0
      %6963 = vmatprep.subr.mxu0 0.0
      %6964 = vmatpush2.msra.mxu0 0.0
      %6965 = vmatprep.subr.mxu0 0.0
      %6966 = vmatpush2.msra.mxu0 0.0
      %6967 = vmatprep.subr.mxu0 0.0
      %6968 = vmatpush2.msra.mxu0 0.0
      %6969 = vmatprep.subr.mxu0 0.0
      %6970 = vmatpush2.msra.mxu0 0.0
      %6971 = vmatprep.mubr.f32.mxu0 0.0
      %v6972 = vand.u32 %v6089, 4294901760
      %6973 = vmatmul.mubr.f32.gmra.mxu0 %v6972
      %v6974 = vpop.f32.mrf.mxu0
      %v6975 = vadd.f32 %v6781, %v6974
      %v6976 = vpop.f32.mrf.mxu0
      %6977 = vmatprep.mubr.f32.mxu0 0.0
      %v6978 = vand.u32 %v6092, 4294901760
      %6979 = vmatmul.mubr.f32.gmra.mxu0 %v6978
      %v6980 = vpop.f32.mrf.mxu0
      %v6981 = vadd.f32 %v6789, %v6980
      %v6982 = vpop.f32.mrf.mxu0
      %6983 = vmatprep.mubr.f32.mxu0 0.0
      %v6984 = vand.u32 %v6095, 4294901760
      %6985 = vmatmul.mubr.f32.gmra.mxu0 %v6984
      %v6986 = vpop.f32.mrf.mxu0
      %v6987 = vadd.f32 %v6797, %v6986
      %v6988 = vpop.f32.mrf.mxu0
      %6989 = vmatprep.mubr.f32.mxu0 0.0
      %v6990 = vand.u32 %v6098, 4294901760
      %6991 = vmatmul.mubr.f32.gmra.mxu0 %v6990
      %v6992 = vpop.f32.mrf.mxu0
      %v6993 = vadd.f32 %v6805, %v6992
      %v6994 = vpop.f32.mrf.mxu0
      %6995 = vmatprep.mubr.f32.mxu0 0.0
      %v6996 = vand.u32 %v6101, 4294901760
      %6997 = vmatmul.mubr.f32.gmra.mxu0 %v6996
      %v6998 = vpop.f32.mrf.mxu0
      %v6999 = vadd.f32 %v6813, %v6998
      %v7000 = vpop.f32.mrf.mxu0
      %7001 = vmatprep.mubr.f32.mxu0 0.0
      %v7002 = vand.u32 %v6104, 4294901760
      %7003 = vmatmul.mubr.f32.gmra.mxu0 %v7002
      %v7004 = vpop.f32.mrf.mxu0
      %v7005 = vadd.f32 %v6821, %v7004
      %v7006 = vpop.f32.mrf.mxu0
      %7007 = vmatprep.mubr.f32.mxu0 0.0
      %v7008 = vand.u32 %v6107, 4294901760
      %7009 = vmatmul.mubr.f32.gmra.mxu0 %v7008
      %v7010 = vpop.f32.mrf.mxu0
      %v7011 = vadd.f32 %v6829, %v7010
      %v7012 = vpop.f32.mrf.mxu0
      %7013 = vmatprep.mubr.f32.mxu0 0.0
      %v7014 = vand.u32 %v6110, 4294901760
      %7015 = vmatmul.mubr.f32.gmra.mxu0 %v7014
      %v7016 = vpop.f32.mrf.mxu0
      %v7017 = vadd.f32 %v6837, %v7016
      %v7018 = vpop.f32.mrf.mxu0
      %7019 = vmatprep.mubr.f32.mxu0 0.0
      %v7020 = vand.u32 %v6113, 4294901760
      %7021 = vmatmul.mubr.f32.gmra.mxu0 %v7020
      %v7022 = vpop.f32.mrf.mxu0
      %v7023 = vadd.f32 %v6845, %v7022
      %v7024 = vpop.f32.mrf.mxu0
      %7025 = vmatprep.mubr.f32.mxu0 0.0
      %v7026 = vand.u32 %v6116, 4294901760
      %7027 = vmatmul.mubr.f32.gmra.mxu0 %v7026
      %v7028 = vpop.f32.mrf.mxu0
      %v7029 = vadd.f32 %v6853, %v7028
      %v7030 = vpop.f32.mrf.mxu0
      %7031 = vmatprep.mubr.f32.mxu0 0.0
      %v7032 = vand.u32 %v6119, 4294901760
      %7033 = vmatmul.mubr.f32.gmra.mxu0 %v7032
      %v7034 = vpop.f32.mrf.mxu0
      %v7035 = vadd.f32 %v6861, %v7034
      %v7036 = vpop.f32.mrf.mxu0
      %7037 = vmatprep.mubr.f32.mxu0 0.0
      %v7038 = vand.u32 %v6122, 4294901760
      %7039 = vmatmul.mubr.f32.gmra.mxu0 %v7038
      %v7040 = vpop.f32.mrf.mxu0
      %v7041 = vadd.f32 %v6869, %v7040
      %v7042 = vpop.f32.mrf.mxu0
      %7043 = vmatprep.mubr.f32.mxu0 0.0
      %v7044 = vand.u32 %v6125, 4294901760
      %7045 = vmatmul.mubr.f32.gmra.mxu0 %v7044
      %v7046 = vpop.f32.mrf.mxu0
      %v7047 = vadd.f32 %v6877, %v7046
      %v7048 = vpop.f32.mrf.mxu0
      %7049 = vmatprep.mubr.f32.mxu0 0.0
      %v7050 = vand.u32 %v6128, 4294901760
      %7051 = vmatmul.mubr.f32.gmra.mxu0 %v7050
      %v7052 = vpop.f32.mrf.mxu0
      %v7053 = vadd.f32 %v6885, %v7052
      %v7054 = vpop.f32.mrf.mxu0
      %7055 = vmatprep.mubr.f32.mxu0 0.0
      %v7056 = vand.u32 %v6131, 4294901760
      %7057 = vmatmul.mubr.f32.gmra.mxu0 %v7056
      %v7058 = vpop.f32.mrf.mxu0
      %v7059 = vadd.f32 %v6893, %v7058
      %v7060 = vpop.f32.mrf.mxu0
      %7061 = vmatprep.mubr.f32.mxu0 0.0
      %v7062 = vand.u32 %v6134, 4294901760
      %7063 = vmatmul.mubr.f32.gmra.mxu0 %v7062
      %v7064 = vpop.f32.mrf.mxu0
      %v7065 = vadd.f32 %v6901, %v7064
      %v7066 = vpop.f32.mrf.mxu0
      %7067 = vdwg.mxu0
      %7068 = vmatprep.subr.mxu0 0.0
      %7069 = vmatpush1.msra.mxu0 0.0
      %7070 = vmatprep.subr.mxu0 0.0
      %7071 = vmatpush1.msra.mxu0 0.0
      %7072 = vmatprep.subr.mxu0 0.0
      %7073 = vmatpush1.msra.mxu0 0.0
      %7074 = vmatprep.subr.mxu0 0.0
      %7075 = vmatpush1.msra.mxu0 0.0
      %7076 = vmatprep.subr.mxu0 0.0
      %7077 = vmatpush1.msra.mxu0 0.0
      %7078 = vmatprep.subr.mxu0 0.0
      %7079 = vmatpush1.msra.mxu0 0.0
      %7080 = vmatprep.subr.mxu0 0.0
      %7081 = vmatpush1.msra.mxu0 0.0
      %7082 = vmatprep.subr.mxu0 0.0
      %7083 = vmatpush1.msra.mxu0 0.0
      %7084 = vmatprep.subr.mxu0 0.0
      %7085 = vmatpush1.msra.mxu0 0.0
      %7086 = vmatprep.subr.mxu0 0.0
      %7087 = vmatpush1.msra.mxu0 0.0
      %7088 = vmatprep.subr.mxu0 0.0
      %7089 = vmatpush1.msra.mxu0 0.0
      %7090 = vmatprep.subr.mxu0 0.0
      %7091 = vmatpush1.msra.mxu0 0.0
      %7092 = vmatprep.subr.mxu0 0.0
      %7093 = vmatpush1.msra.mxu0 0.0
      %7094 = vmatprep.subr.mxu0 0.0
      %7095 = vmatpush1.msra.mxu0 0.0
      %7096 = vmatprep.subr.mxu0 0.0
      %7097 = vmatpush1.msra.mxu0 0.0
      %7098 = vmatprep.subr.mxu0 0.0
      %v7099 = vand.u32 %v6137, 4294901760
      %7100 = vmatpush1.msra.mxu0 %v7099
      %7101 = vmatprep.subr.mxu0 0.0
      %7102 = vmatpush2.msra.mxu0 0.0
      %7103 = vmatprep.subr.mxu0 0.0
      %7104 = vmatpush2.msra.mxu0 0.0
      %7105 = vmatprep.subr.mxu0 0.0
      %7106 = vmatpush2.msra.mxu0 0.0
      %7107 = vmatprep.subr.mxu0 0.0
      %7108 = vmatpush2.msra.mxu0 0.0
      %7109 = vmatprep.subr.mxu0 0.0
      %7110 = vmatpush2.msra.mxu0 0.0
      %7111 = vmatprep.subr.mxu0 0.0
      %7112 = vmatpush2.msra.mxu0 0.0
      %7113 = vmatprep.subr.mxu0 0.0
      %7114 = vmatpush2.msra.mxu0 0.0
      %7115 = vmatprep.subr.mxu0 0.0
      %7116 = vmatpush2.msra.mxu0 0.0
      %7117 = vmatprep.subr.mxu0 0.0
      %7118 = vmatpush2.msra.mxu0 0.0
      %7119 = vmatprep.subr.mxu0 0.0
      %7120 = vmatpush2.msra.mxu0 0.0
      %7121 = vmatprep.subr.mxu0 0.0
      %7122 = vmatpush2.msra.mxu0 0.0
      %7123 = vmatprep.subr.mxu0 0.0
      %7124 = vmatpush2.msra.mxu0 0.0
      %7125 = vmatprep.subr.mxu0 0.0
      %7126 = vmatpush2.msra.mxu0 0.0
      %7127 = vmatprep.subr.mxu0 0.0
      %7128 = vmatpush2.msra.mxu0 0.0
      %7129 = vmatprep.subr.mxu0 0.0
      %7130 = vmatpush2.msra.mxu0 0.0
      %7131 = vmatprep.subr.mxu0 0.0
      %7132 = vmatpush2.msra.mxu0 0.0
      %7133 = vmatprep.mubr.f32.mxu0 0.0
      %v7134 = vand.u32 %v6089, 4294901760
      %7135 = vmatmul.mubr.f32.gmra.mxu0 %v7134
      %v7136 = vpop.f32.mrf.mxu0
      %v7137 = vadd.f32 %v6975, %v7136
      %v7138 = vpop.f32.mrf.mxu0
      %7139 = vmatprep.mubr.f32.mxu0 0.0
      %v7140 = vand.u32 %v6092, 4294901760
      %7141 = vmatmul.mubr.f32.gmra.mxu0 %v7140
      %v7142 = vpop.f32.mrf.mxu0
      %v7143 = vadd.f32 %v6981, %v7142
      %v7144 = vpop.f32.mrf.mxu0
      %7145 = vmatprep.mubr.f32.mxu0 0.0
      %v7146 = vand.u32 %v6095, 4294901760
      %7147 = vmatmul.mubr.f32.gmra.mxu0 %v7146
      %v7148 = vpop.f32.mrf.mxu0
      %v7149 = vadd.f32 %v6987, %v7148
      %v7150 = vpop.f32.mrf.mxu0
      %7151 = vmatprep.mubr.f32.mxu0 0.0
      %v7152 = vand.u32 %v6098, 4294901760
      %7153 = vmatmul.mubr.f32.gmra.mxu0 %v7152
      %v7154 = vpop.f32.mrf.mxu0
      %v7155 = vadd.f32 %v6993, %v7154
      %v7156 = vpop.f32.mrf.mxu0
      %7157 = vmatprep.mubr.f32.mxu0 0.0
      %v7158 = vand.u32 %v6101, 4294901760
      %7159 = vmatmul.mubr.f32.gmra.mxu0 %v7158
      %v7160 = vpop.f32.mrf.mxu0
      %v7161 = vadd.f32 %v6999, %v7160
      %v7162 = vpop.f32.mrf.mxu0
      %7163 = vmatprep.mubr.f32.mxu0 0.0
      %v7164 = vand.u32 %v6104, 4294901760
      %7165 = vmatmul.mubr.f32.gmra.mxu0 %v7164
      %v7166 = vpop.f32.mrf.mxu0
      %v7167 = vadd.f32 %v7005, %v7166
      %v7168 = vpop.f32.mrf.mxu0
      %7169 = vmatprep.mubr.f32.mxu0 0.0
      %v7170 = vand.u32 %v6107, 4294901760
      %7171 = vmatmul.mubr.f32.gmra.mxu0 %v7170
      %v7172 = vpop.f32.mrf.mxu0
      %v7173 = vadd.f32 %v7011, %v7172
      %v7174 = vpop.f32.mrf.mxu0
      %7175 = vmatprep.mubr.f32.mxu0 0.0
      %v7176 = vand.u32 %v6110, 4294901760
      %7177 = vmatmul.mubr.f32.gmra.mxu0 %v7176
      %v7178 = vpop.f32.mrf.mxu0
      %v7179 = vadd.f32 %v7017, %v7178
      %v7180 = vpop.f32.mrf.mxu0
      %7181 = vmatprep.mubr.f32.mxu0 0.0
      %v7182 = vand.u32 %v6113, 4294901760
      %7183 = vmatmul.mubr.f32.gmra.mxu0 %v7182
      %v7184 = vpop.f32.mrf.mxu0
      %v7185 = vadd.f32 %v7023, %v7184
      %v7186 = vpop.f32.mrf.mxu0
      %7187 = vmatprep.mubr.f32.mxu0 0.0
      %v7188 = vand.u32 %v6116, 4294901760
      %7189 = vmatmul.mubr.f32.gmra.mxu0 %v7188
      %v7190 = vpop.f32.mrf.mxu0
      %v7191 = vadd.f32 %v7029, %v7190
      %v7192 = vpop.f32.mrf.mxu0
      %7193 = vmatprep.mubr.f32.mxu0 0.0
      %v7194 = vand.u32 %v6119, 4294901760
      %7195 = vmatmul.mubr.f32.gmra.mxu0 %v7194
      %v7196 = vpop.f32.mrf.mxu0
      %v7197 = vadd.f32 %v7035, %v7196
      %v7198 = vpop.f32.mrf.mxu0
      %7199 = vmatprep.mubr.f32.mxu0 0.0
      %v7200 = vand.u32 %v6122, 4294901760
      %7201 = vmatmul.mubr.f32.gmra.mxu0 %v7200
      %v7202 = vpop.f32.mrf.mxu0
      %v7203 = vadd.f32 %v7041, %v7202
      %v7204 = vpop.f32.mrf.mxu0
      %7205 = vmatprep.mubr.f32.mxu0 0.0
      %v7206 = vand.u32 %v6125, 4294901760
      %7207 = vmatmul.mubr.f32.gmra.mxu0 %v7206
      %v7208 = vpop.f32.mrf.mxu0
      %v7209 = vadd.f32 %v7047, %v7208
      %v7210 = vpop.f32.mrf.mxu0
      %7211 = vmatprep.mubr.f32.mxu0 0.0
      %v7212 = vand.u32 %v6128, 4294901760
      %7213 = vmatmul.mubr.f32.gmra.mxu0 %v7212
      %v7214 = vpop.f32.mrf.mxu0
      %v7215 = vadd.f32 %v7053, %v7214
      %v7216 = vpop.f32.mrf.mxu0
      %7217 = vmatprep.mubr.f32.mxu0 0.0
      %v7218 = vand.u32 %v6131, 4294901760
      %7219 = vmatmul.mubr.f32.gmra.mxu0 %v7218
      %v7220 = vpop.f32.mrf.mxu0
      %v7221 = vadd.f32 %v7059, %v7220
      %v7222 = vpop.f32.mrf.mxu0
      %7223 = vmatprep.mubr.f32.mxu0 0.0
      %v7224 = vand.u32 %v6134, 4294901760
      %7225 = vmatmul.mubr.f32.gmra.mxu0 %v7224
      %v7226 = vpop.f32.mrf.mxu0
      %v7227 = vadd.f32 %v7065, %v7226
      %v7228 = vpop.f32.mrf.mxu0
      %7229 = vdwg.mxu0
      %v7230 = vadd.f32 %v6051, %v7137
      %v7231 = vadd.f32 %v6052, %v7143
      %v7232 = vadd.f32 %v6053, %v7149
      %v7233 = vadd.f32 %v6054, %v7155
      %v7234 = vadd.f32 %v6055, %v7161
      %v7235 = vadd.f32 %v6056, %v7167
      %v7236 = vadd.f32 %v6057, %v7173
      %v7237 = vadd.f32 %v6058, %v7179
      %v7238 = vadd.f32 %v6059, %v7185
      %v7239 = vadd.f32 %v6060, %v7191
      %v7240 = vadd.f32 %v6061, %v7197
      %v7241 = vadd.f32 %v6062, %v7203
      %v7242 = vadd.f32 %v6063, %v7209
      %v7243 = vadd.f32 %v6064, %v7215
      %v7244 = vadd.f32 %v6065, %v7221
      %v7245 = vadd.f32 %v6066, %v7227
      %v7246 = vld [vmem:[%s3] sm:$0x1]
      %v7248 = vlaneseq
      %v7249 = vshrl.u32 %v7248, 7
      %v7250 = vsub.s32 0, %v7249
      %v7251 = vrot.slane %v7246, %v7250
      %v7253 = vmul.f32 %v7230, %v7251
      %v7254 = vmul.f32 %v7231, %v7251
      %v7255 = vmul.f32 %v7232, %v7251
      %v7256 = vmul.f32 %v7233, %v7251
      %v7257 = vmul.f32 %v7234, %v7251
      %v7258 = vmul.f32 %v7235, %v7251
      %v7259 = vmul.f32 %v7236, %v7251
      %v7260 = vmul.f32 %v7237, %v7251
      %v7261 = vmul.f32 %v7238, %v7251
      %v7262 = vmul.f32 %v7239, %v7251
      %v7263 = vmul.f32 %v7240, %v7251
      %v7264 = vmul.f32 %v7241, %v7251
      %v7265 = vmul.f32 %v7242, %v7251
      %v7266 = vmul.f32 %v7243, %v7251
      %v7267 = vmul.f32 %v7244, %v7251
      %v7268 = vmul.f32 %v7245, %v7251
      %v7269 = vld [vmem:[%s4] sm:$0x1]
      %v7271 = vlaneseq
      %v7272 = vshrl.u32 %v7271, 7
      %v7273 = vsub.s32 0, %v7272
      %v7274 = vrot.slane %v7269, %v7273
      %v7276 = vadd.f32 %v7253, %v7274
      %v7277 = vadd.f32 %v7254, %v7274
      %v7278 = vadd.f32 %v7255, %v7274
      %v7279 = vadd.f32 %v7256, %v7274
      %v7280 = vadd.f32 %v7257, %v7274
      %v7281 = vadd.f32 %v7258, %v7274
      %v7282 = vadd.f32 %v7259, %v7274
      %v7283 = vadd.f32 %v7260, %v7274
      %v7284 = vadd.f32 %v7261, %v7274
      %v7285 = vadd.f32 %v7262, %v7274
      %v7286 = vadd.f32 %v7263, %v7274
      %v7287 = vadd.f32 %v7264, %v7274
      %v7288 = vadd.f32 %v7265, %v7274
      %v7289 = vadd.f32 %v7266, %v7274
      %v7290 = vadd.f32 %v7267, %v7274
      %v7291 = vadd.f32 %v7268, %v7274
      %vm7292 = vcmp.ge.f32.partialorder %v7276, 0.0
      %vm7293 = vcmp.ge.f32.partialorder %v7277, 0.0
      %vm7294 = vcmp.ge.f32.partialorder %v7278, 0.0
      %vm7295 = vcmp.ge.f32.partialorder %v7279, 0.0
      %vm7296 = vcmp.ge.f32.partialorder %v7280, 0.0
      %vm7297 = vcmp.ge.f32.partialorder %v7281, 0.0
      %vm7298 = vcmp.ge.f32.partialorder %v7282, 0.0
      %vm7299 = vcmp.ge.f32.partialorder %v7283, 0.0
      %vm7300 = vcmp.ge.f32.partialorder %v7284, 0.0
      %vm7301 = vcmp.ge.f32.partialorder %v7285, 0.0
      %vm7302 = vcmp.ge.f32.partialorder %v7286, 0.0
      %vm7303 = vcmp.ge.f32.partialorder %v7287, 0.0
      %vm7304 = vcmp.ge.f32.partialorder %v7288, 0.0
      %vm7305 = vcmp.ge.f32.partialorder %v7289, 0.0
      %vm7306 = vcmp.ge.f32.partialorder %v7290, 0.0
      %vm7307 = vcmp.ge.f32.partialorder %v7291, 0.0
      %v7308 = vld [vmem:[%s5] sm:$0x1]
      %v7310 = vlaneseq
      %v7311 = vshrl.u32 %v7310, 7
      %v7312 = vsub.s32 0, %v7311
      %v7313 = vrot.slane %v7308, %v7312
      %v7315 = vmul.f32 %v7276, %v7313
      %v7316 = vmul.f32 %v7277, %v7313
      %v7317 = vmul.f32 %v7278, %v7313
      %v7318 = vmul.f32 %v7279, %v7313
      %v7319 = vmul.f32 %v7280, %v7313
      %v7320 = vmul.f32 %v7281, %v7313
      %v7321 = vmul.f32 %v7282, %v7313
      %v7322 = vmul.f32 %v7283, %v7313
      %v7323 = vmul.f32 %v7284, %v7313
      %v7324 = vmul.f32 %v7285, %v7313
      %v7325 = vmul.f32 %v7286, %v7313
      %v7326 = vmul.f32 %v7287, %v7313
      %v7327 = vmul.f32 %v7288, %v7313
      %v7328 = vmul.f32 %v7289, %v7313
      %v7329 = vmul.f32 %v7290, %v7313
      %v7330 = vmul.f32 %v7291, %v7313
      %v7331 = vsel %vm7292, %v7276, %v7315
      %v7332 = vsel %vm7293, %v7277, %v7316
      %v7333 = vsel %vm7294, %v7278, %v7317
      %v7334 = vsel %vm7295, %v7279, %v7318
      %v7335 = vsel %vm7296, %v7280, %v7319
      %v7336 = vsel %vm7297, %v7281, %v7320
      %v7337 = vsel %vm7298, %v7282, %v7321
      %v7338 = vsel %vm7299, %v7283, %v7322
      %v7339 = vsel %vm7300, %v7284, %v7323
      %v7340 = vsel %vm7301, %v7285, %v7324
      %v7341 = vsel %vm7302, %v7286, %v7325
      %v7342 = vsel %vm7303, %v7287, %v7326
      %v7343 = vsel %vm7304, %v7288, %v7327
      %v7344 = vsel %vm7305, %v7289, %v7328
      %v7345 = vsel %vm7306, %v7290, %v7329
      %v7346 = vsel %vm7307, %v7291, %v7330
      %vm7347 = vcmask 64512
      %7348 = vst.msk [vmem:[%s275] sm:$0xff] %vm7347, %v7331
      %7349 = vst.msk [vmem:[%s275 + $0x8] sm:$0xff] %vm7347, %v7332
      %7350 = vst.msk [vmem:[%s275 + $0x10] sm:$0xff] %vm7347, %v7333
      %7351 = vst.msk [vmem:[%s275 + $0x18] sm:$0xff] %vm7347, %v7334
      %7352 = vst.msk [vmem:[%s275 + $0x20] sm:$0xff] %vm7347, %v7335
      %7353 = vst.msk [vmem:[%s275 + $0x28] sm:$0xff] %vm7347, %v7336
      %7354 = vst.msk [vmem:[%s275 + $0x30] sm:$0xff] %vm7347, %v7337
      %7355 = vst.msk [vmem:[%s275 + $0x38] sm:$0xff] %vm7347, %v7338
      %7356 = vst.msk [vmem:[%s275 + $0x40] sm:$0xff] %vm7347, %v7339
      %7357 = vst.msk [vmem:[%s275 + $0x48] sm:$0xff] %vm7347, %v7340
      %7358 = vst.msk [vmem:[%s275 + $0x50] sm:$0xff] %vm7347, %v7341
      %7359 = vst.msk [vmem:[%s275 + $0x58] sm:$0xff] %vm7347, %v7342
      %7360 = vst.msk [vmem:[%s275 + $0x60] sm:$0xff] %vm7347, %v7343
      %7361 = vst.msk [vmem:[%s275 + $0x68] sm:$0xff] %vm7347, %v7344
      %7362 = vst.msk [vmem:[%s275 + $0x70] sm:$0xff] %vm7347, %v7345
      %7363 = vst.msk [vmem:[%s275 + $0x78] sm:$0xff] %vm7347, %v7346
      %s7364 = smul.u32 8, %s22
      %p7365 = scmp.lt.s32.totalorder %s21, 1
      %s7366 = scalar_select %p7365, %s21, 1
      %p7367 = scmp.lt.s32.totalorder %s7364, 15
      %s7368 = scalar_select %p7367, %s7364, 15
      %s7369 = smul.addr %s7368, 2
      %s7370 = smul.addr %s7366, 32
      %s7371 = sadd.s32 %s7369, %s7370
      %s7372 = smul.addr %s7371, 8
      %s7373 = scalar_lea.vmem %s6, %s7372
      // Predicated region
      $region45: #{tpu_custom_call.1} parent=43 // pred_check
        %p7374 = pneg %p180
      $region46: #{tpu_custom_call.1} parent=43 // pred_check_branch
        %7376 = sbr.rel (%p7374) target = $region48
      $region47: #{tpu_custom_call.1} parent=43 // pred_region
        %s7377 = smul.u32 8, %s22
      $region48: #{tpu_custom_call.1} parent=43 // pred_fallthru
        _
    $region44: #{tpu_custom_call.1} parent=5 // pred_fallthru
      _
    %p7378 = scmp.le.s32.totalorder 2, %s12
    // Predicated region
    $region49: #{tpu_custom_call.1} parent=5 // pred_check
      %p7379 = pneg %p7378
    $region50: #{tpu_custom_call.1} parent=5 // pred_check_branch
      %7381 = sbr.rel (%p7379) target = $region52
    $region51: #{tpu_custom_call.1} parent=5 // pred_region
      %s7382 = ssub.s32 %s12, 2
      // Predicated region
      $region53: #{tpu_custom_call.1} parent=51 // pred_check
        %p7383 = pneg %p186
      $region54: #{tpu_custom_call.1} parent=51 // pred_check_branch
        %7385 = sbr.rel (%p7383) target = $region56
      $region55: #{tpu_custom_call.1} parent=51 // pred_region
        %s7386 = smul.u32 8, %s24
        %p7387 = scmp.lt.s32.totalorder %s23, 1
        %s7388 = scalar_select %p7387, %s23, 1
        %p7389 = scmp.lt.s32.totalorder %s7386, 15
        %s7390 = scalar_select %p7389, %s7386, 15
        %s7391 = smul.addr %s7390, 2
        %s7392 = smul.addr %s7388, 32
        %s7393 = sadd.s32 %s7391, %s7392
        %s7394 = smul.addr %s7393, 8
        %s7395 = scalar_lea.vmem %s6, %s7394
      $region56: #{tpu_custom_call.1} parent=51 // pred_fallthru
        _
    $region52: #{tpu_custom_call.1} parent=5 // pred_fallthru
      _
  $region6: #{tpu_custom_call.1} parent=0 // loop_footer
    %s16 = sadd.s32 1, %s12
  $region7: #{tpu_custom_call.1} parent=0 // loop_footer_branch
    %11 = sbr.rel target = $region3
  $region8: #{tpu_custom_call.1} parent=0 // loop_exit
    _

</llo_original>
